<compile_context>
chip_gen: v6e
topology: v6e:2x2x1
jax: 0.10.0
libtpu: 0.0.40
codegen_flags: <defaults>
</compile_context>

<pallas_src>
import jax
import jax.numpy as jnp
from jax.experimental import pallas as pl
from jax.experimental.pallas import tpu as pltpu


def _round_up(x, m):
    return (x + m - 1) // m * m


# ----------------------------- Pallas kernel -------------------------------- #

def _make_kernel(B, C, dims_n, dims_e, L4T):
    """dims = (LP, L2, L2P, L2M, L4, feat_position_offset)."""

    def branch(x3_ref, w1_ref, b1_ref, w2_ref, b2_ref,
               h1_s, p1_s, im2_s, h2_s, p2_s, dims):
        LP, L2, L2P, L2M, L4, off_l = dims
        zero_row = jnp.zeros((1, C), jnp.float32)

        # conv1 (in_ch=1, k=3, "same") + ReLU: three VPU FMAs over the whole batch.
        x3 = x3_ref[...]                                     # (B*LP, 3) shifted windows
        h1 = b1_ref[...]                                     # (1, C) broadcasts
        for k in range(3):
            h1 = h1 + x3[:, k:k + 1] * w1_ref[k:k + 1, :]
        h1_s[...] = jnp.maximum(h1, 0.0)                     # (B*LP, C)

        # max_pool1d(k=2) -> zero-bordered conv2 input (only border rows zeroed).
        for b in range(B):
            ev = h1_s[pl.ds(b * LP, L2, stride=2), :]
            od = h1_s[pl.ds(b * LP + 1, L2, stride=2), :]
            p1_s[pl.ds(b * L2P + 1, L2), :] = jnp.maximum(ev, od)
            p1_s[pl.ds(b * L2P, 1), :] = zero_row            # "same" pad: left border
            p1_s[pl.ds(b * L2P + L2 + 1, 1), :] = zero_row   # "same" pad: right border

        # im2col: three full-width shifted copies per sample (lanes k*C..(k+1)*C).
        for b in range(B):
            for k in range(3):
                im2_s[pl.ds(b * L2M, L2), pl.ds(k * C, C)] = \
                    p1_s[pl.ds(b * L2P + k, L2), :]
            if L2M > L2:                                     # keep pad rows deterministic
                im2_s[pl.ds(b * L2M + L2, L2M - L2), :] = \
                    jnp.zeros((L2M - L2, 3 * C), jnp.float32)

        # conv2 (C->C, k=3, "same") as ONE im2col matmul + bias + ReLU.
        h2 = jnp.dot(im2_s[...], w2_ref[...], preferred_element_type=jnp.float32)
        h2_s[...] = jnp.maximum(h2 + b2_ref[...], 0.0)       # (B*L2M, C)

        # second max_pool1d(k=2) into the per-sample-contiguous pooled buffer.
        for b in range(B):
            ev = h2_s[pl.ds(b * L2M, L4, stride=2), :]
            od = h2_s[pl.ds(b * L2M + 1, L4, stride=2), :]
            p2_s[pl.ds(b * L4T + off_l, L4), :] = jnp.maximum(ev, od)

    def kernel(x3n_ref, x3e_ref,
               w1n_ref, b1n_ref, w2n_ref, b2n_ref,
               w1e_ref, b1e_ref, w2e_ref, b2e_ref,
               wfc1_ref, bfc1_ref, wfc2_ref, bfc2_ref,
               out_ref,
               h1n_s, p1n_s, im2n_s, h2n_s,
               h1e_s, p1e_s, im2e_s, h2e_s,
               p2_s, feat_s):
        branch(x3n_ref, w1n_ref, b1n_ref, w2n_ref, b2n_ref,
               h1n_s, p1n_s, im2n_s, h2n_s, p2_s, dims_n)
        branch(x3e_ref, w1e_ref, b1e_ref, w2e_ref, b2e_ref,
               h1e_s, p1e_s, im2e_s, h2e_s, p2_s, dims_e)

        # Flatten: one lane-dense (B, C) write per position (fc1 weights were
        # pre-permuted in the wrapper to match this position-major order).
        for l in range(L4T):
            rows = [p2_s[pl.ds(b * L4T + l, 1), :] for b in range(B)]
            blk = rows[0] if B == 1 else jnp.concatenate(rows, axis=0)   # (B, C)
            feat_s[:, pl.ds(l * C, C)] = blk

        # MLP head, (B, K) @ (K, H) orientation. Dropout(p=0.3) is identity in eval.
        z = jnp.dot(feat_s[...], wfc1_ref[...], preferred_element_type=jnp.float32)
        z = jnp.maximum(z + bfc1_ref[...], 0.0)              # (B, H)
        out_ref[...] = (jnp.dot(z, wfc2_ref[...], preferred_element_type=jnp.float32)
                        + bfc2_ref[...])                     # (B, NC)

    return kernel


# --------------------------- JAX wrapper ------------------------------------ #

@jax.jit
def cnn_model_forward(params, x_nodes, x_edges):
    f32 = jnp.float32
    B, Ln = x_nodes.shape
    Be, Le = x_edges.shape
    assert B == Be
    assert Ln % 4 == 0 and Le % 4 == 0, "sequence lengths must be divisible by 4"

    C = params["w_c1n"].shape[0]
    H, K = params["w_fc1"].shape
    NC = params["w_fc2"].shape[0]
    L2n, L4n = Ln // 2, Ln // 4
    L2e, L4e = Le // 2, Le // 4
    L4T = L4n + L4e
    assert K == C * L4T

    # per-sample block sizes, rounded up to multiples of 8 sublanes
    LPn, LPe = _round_up(Ln + 2, 8), _round_up(Le + 2, 8)
    L2Pn, L2Pe = _round_up(L2n + 2, 8), _round_up(L2e + 2, 8)
    L2Mn, L2Me = _round_up(L2n, 8), _round_up(L2e, 8)

    def make_x3(x, L, LP):
        # per-sample layout: [0, x_0..x_{L-1}, 0, zeros...]; then 3 shifted copies
        xp = jnp.zeros((B, LP), f32).at[:, 1:L + 1].set(x.astype(f32))
        flat = jnp.concatenate([xp.reshape(-1), jnp.zeros((2,), f32)])
        return jnp.stack([flat[0:B * LP], flat[1:B * LP + 1], flat[2:B * LP + 2]],
                         axis=1)                              # (B*LP, 3)

    x3n = make_x3(x_nodes, Ln, LPn)
    x3e = make_x3(x_edges, Le, LPe)

    # weight preprocessing (constant-folded / hoisted under jit)
    w1n = params["w_c1n"][:, 0, :].T                          # (3, C)
    w1e = params["w_c1e"][:, 0, :].T
    w2n = jnp.transpose(params["w_c2n"], (2, 1, 0)).reshape(3 * C, C)  # im2col weight
    w2e = jnp.transpose(params["w_c2e"], (2, 1, 0)).reshape(3 * C, C)
    b1n = params["b_c1n"].reshape(1, C)
    b1e = params["b_c1e"].reshape(1, C)
    b2n = params["b_c2n"].reshape(1, C)
    b2e = params["b_c2e"].reshape(1, C)

    # fc1: permute the K axis once so the PyTorch channel-major flatten order
    # (c*L4 + l) becomes the kernel's position-major order (l*C + c).
    wfc1 = params["w_fc1"]
    wn = wfc1[:, :C * L4n].reshape(H, C, L4n).transpose(2, 1, 0).reshape(L4n * C, H)
    we = wfc1[:, C * L4n:].reshape(H, C, L4e).transpose(2, 1, 0).reshape(L4e * C, H)
    wfc1p = jnp.concatenate([wn, we], axis=0)                 # (K, H)
    bfc1 = params["b_fc1"].reshape(1, H)
    wfc2t = params["w_fc2"].T                                 # (H, NC)
    bfc2 = params["b_fc2"].reshape(1, NC)

    dims_n = (LPn, L2n, L2Pn, L2Mn, L4n, 0)
    dims_e = (LPe, L2e, L2Pe, L2Me, L4e, L4n)
    kernel = _make_kernel(B, C, dims_n, dims_e, L4T)

    vmem = pl.BlockSpec(memory_space=pltpu.MemorySpace.VMEM)
    out = pl.pallas_call(
        kernel,
        out_shape=jax.ShapeDtypeStruct((B, NC), f32),
        in_specs=[vmem] * 14,
        out_specs=vmem,
        scratch_shapes=[
            pltpu.VMEM((B * LPn, C), f32),       # node conv1 output
            pltpu.VMEM((B * L2Pn, C), f32),      # node pool1, zero-bordered
            pltpu.VMEM((B * L2Mn, 3 * C), f32),  # node conv2 im2col input
            pltpu.VMEM((B * L2Mn, C), f32),      # node conv2 output
            pltpu.VMEM((B * LPe, C), f32),       # edge conv1 output
            pltpu.VMEM((B * L2Pe, C), f32),      # edge pool1, zero-bordered
            pltpu.VMEM((B * L2Me, 3 * C), f32),  # edge conv2 im2col input
            pltpu.VMEM((B * L2Me, C), f32),      # edge conv2 output
            pltpu.VMEM((B * L4T, C), f32),       # pooled features (per-sample rows)
            pltpu.VMEM((B, K), f32),             # flattened features (B, K)
        ],
    )(x3n, x3e,
      w1n, b1n, w2n, b2n,
      w1e, b1e, w2e, b2e,
      wfc1p, bfc1, wfc2t, bfc2)
    return out                                                # (B, NC)


# ------------------------- pure-JAX reference check ------------------------- #

def _reference_forward(params, x_nodes, x_edges):
    def conv1d(x, w, b):  # x (B,Cin,L), w (Cout,Cin,3)
        y = jax.lax.conv_general_dilated(
            x, w, window_strides=(1,), padding=((1, 1),),
            dimension_numbers=("NCH", "OIH", "NCH"))
        return y + b[None, :, None]

    def maxpool(x):
        B, C, L = x.shape
        return x[:, :, : (L // 2) * 2].reshape(B, C, L // 2, 2).max(-1)

    def branch(x, w1, b1, w2, b2):
        x = x[:, None, :]
        x = maxpool(jax.nn.relu(conv1d(x, w1, b1)))
        x = maxpool(jax.nn.relu(conv1d(x, w2, b2)))
        return x.reshape(x.shape[0], -1)

    fn = branch(x_nodes, params["w_c1n"], params["b_c1n"], params["w_c2n"], params["b_c2n"])
    fe = branch(x_edges, params["w_c1e"], params["b_c1e"], params["w_c2e"], params["b_c2e"])
    f = jnp.concatenate([fn, fe], axis=1)
    h = jax.nn.relu(f @ params["w_fc1"].T + params["b_fc1"])
    return h @ params["w_fc2"].T + params["b_fc2"]


# ----------------------------------- main ----------------------------------- #

if __name__ == "__main__":
    # fc1 expects nhid*(38+45) features => nfeat_node=152 (->38), nfeat_edge=180 (->45)
    nfeat_node, nfeat_edge, nhid, n_classes, batch = 152, 180, 32, 4, 2

    key = jax.random.PRNGKey(0)
    keys = jax.random.split(key, 14)

    def init(k, shape, scale=0.1):
        return scale * jax.random.normal(k, shape, dtype=jnp.float32)

    params = dict(
        w_c1n=init(keys[0], (nhid, 1, 3)),        b_c1n=init(keys[1], (nhid,)),
        w_c2n=init(keys[2], (nhid, nhid, 3)),     b_c2n=init(keys[3], (nhid,)),
        w_c1e=init(keys[4], (nhid, 1, 3)),        b_c1e=init(keys[5], (nhid,)),
        w_c2e=init(keys[6], (nhid, nhid, 3)),     b_c2e=init(keys[7], (nhid,)),
        w_fc1=init(keys[8], (nhid, nhid * (38 + 45))), b_fc1=init(keys[9], (nhid,)),
        w_fc2=init(keys[10], (n_classes, nhid)),  b_fc2=init(keys[11], (n_classes,)),
    )

    x_nodes = jax.random.normal(keys[12], (batch, nfeat_node), dtype=jnp.float32)
    x_edges = jax.random.normal(keys[13], (batch, nfeat_edge), dtype=jnp.float32)

    out = cnn_model_forward(params, x_nodes, x_edges)
    out = jax.block_until_ready(out)

    ref = _reference_forward(params, x_nodes, x_edges)
    assert out.shape == (batch, n_classes)
    assert jnp.allclose(out, ref, atol=1e-3, rtol=1e-3), "Pallas output != reference"

    print("KERNEL_OK")
</pallas_src>

<mosaic_0001>
module attributes {stable_mosaic.version = 11 : i64} {
  func.func @kernel(%arg0: memref<320x3xf32, #tpu.memory_space<vmem>>, %arg1: memref<368x3xf32, #tpu.memory_space<vmem>>, %arg2: memref<3x32xf32, #tpu.memory_space<vmem>>, %arg3: memref<1x32xf32, #tpu.memory_space<vmem>>, %arg4: memref<96x32xf32, #tpu.memory_space<vmem>>, %arg5: memref<1x32xf32, #tpu.memory_space<vmem>>, %arg6: memref<3x32xf32, #tpu.memory_space<vmem>>, %arg7: memref<1x32xf32, #tpu.memory_space<vmem>>, %arg8: memref<96x32xf32, #tpu.memory_space<vmem>>, %arg9: memref<1x32xf32, #tpu.memory_space<vmem>>, %arg10: memref<2656x32xf32, #tpu.memory_space<vmem>>, %arg11: memref<1x32xf32, #tpu.memory_space<vmem>>, %arg12: memref<32x4xf32, #tpu.memory_space<vmem>>, %arg13: memref<1x4xf32, #tpu.memory_space<vmem>>, %arg14: memref<2x4xf32, #tpu.memory_space<vmem>>, %arg15: memref<320x32xf32, #tpu.memory_space<vmem>>, %arg16: memref<160x32xf32, #tpu.memory_space<vmem>>, %arg17: memref<160x96xf32, #tpu.memory_space<vmem>>, %arg18: memref<160x32xf32, #tpu.memory_space<vmem>>, %arg19: memref<368x32xf32, #tpu.memory_space<vmem>>, %arg20: memref<192x32xf32, #tpu.memory_space<vmem>>, %arg21: memref<192x96xf32, #tpu.memory_space<vmem>>, %arg22: memref<192x32xf32, #tpu.memory_space<vmem>>, %arg23: memref<166x32xf32, #tpu.memory_space<vmem>>, %arg24: memref<2x2656xf32, #tpu.memory_space<vmem>>) attributes {dimension_semantics = [], scalar_prefetch = 0 : i64, scratch_operands = 10 : i64, tpu.core_type = #tpu.core_type<tc>} {
    %cst = arith.constant 0.000000e+00 : f32
    %0 = vector.broadcast %cst : f32 to vector<1x32xf32>
    %c0 = arith.constant 0 : index
    %c0_0 = arith.constant 0 : index
    %1 = vector.load %arg0[%c0, %c0_0] : memref<320x3xf32, #tpu.memory_space<vmem>>, vector<320x3xf32>
    %c0_1 = arith.constant 0 : index
    %c0_2 = arith.constant 0 : index
    %2 = vector.load %arg3[%c0_1, %c0_2] : memref<1x32xf32, #tpu.memory_space<vmem>>, vector<1x32xf32>
    %3 = vector.extract_strided_slice %1 {offsets = [0, 0], sizes = [320, 1], strides = [1, 1]} : vector<320x3xf32> to vector<320x1xf32>
    %c0_3 = arith.constant 0 : index
    %c0_4 = arith.constant 0 : index
    %4 = vector.load %arg2[%c0_3, %c0_4] : memref<3x32xf32, #tpu.memory_space<vmem>>, vector<1x32xf32>
    %5 = vector.broadcast %3 : vector<320x1xf32> to vector<320x32xf32>
    %6 = vector.broadcast %4 : vector<1x32xf32> to vector<320x32xf32>
    %7 = arith.mulf %5, %6 : vector<320x32xf32>
    %8 = vector.broadcast %2 : vector<1x32xf32> to vector<320x32xf32>
    %9 = arith.addf %8, %7 : vector<320x32xf32>
    %10 = vector.extract_strided_slice %1 {offsets = [0, 1], sizes = [320, 1], strides = [1, 1]} : vector<320x3xf32> to vector<320x1xf32>
    %c1 = arith.constant 1 : index
    %c0_5 = arith.constant 0 : index
    %11 = vector.load %arg2[%c1, %c0_5] : memref<3x32xf32, #tpu.memory_space<vmem>>, vector<1x32xf32>
    %12 = vector.broadcast %10 : vector<320x1xf32> to vector<320x32xf32>
    %13 = vector.broadcast %11 : vector<1x32xf32> to vector<320x32xf32>
    %14 = arith.mulf %12, %13 : vector<320x32xf32>
    %15 = arith.addf %9, %14 : vector<320x32xf32>
    %16 = vector.extract_strided_slice %1 {offsets = [0, 2], sizes = [320, 1], strides = [1, 1]} : vector<320x3xf32> to vector<320x1xf32>
    %c2 = arith.constant 2 : index
    %c0_6 = arith.constant 0 : index
    %17 = vector.load %arg2[%c2, %c0_6] : memref<3x32xf32, #tpu.memory_space<vmem>>, vector<1x32xf32>
    %18 = vector.broadcast %16 : vector<320x1xf32> to vector<320x32xf32>
    %19 = vector.broadcast %17 : vector<1x32xf32> to vector<320x32xf32>
    %20 = arith.mulf %18, %19 : vector<320x32xf32>
    %21 = arith.addf %15, %20 : vector<320x32xf32>
    %cst_7 = arith.constant 0.000000e+00 : f32
    %22 = vector.broadcast %cst_7 : f32 to vector<320x32xf32>
    %23 = arith.maximumf %21, %22 : vector<320x32xf32>
    %c0_8 = arith.constant 0 : index
    %c0_9 = arith.constant 0 : index
    %24 = vector.load %arg15[%c0_8, %c0_9] : memref<320x32xf32, #tpu.memory_space<vmem>>, vector<320x32xf32>
    tpu.vector_store %arg15[%c0_8, %c0_9], %23 {strides = array<i32>} : memref<320x32xf32, #tpu.memory_space<vmem>>, vector<320x32xf32>,
    %c0_10 = arith.constant 0 : index
    %c0_11 = arith.constant 0 : index
    %25 = tpu.strided_load %arg15[%c0_10, %c0_11] {strides = array<i32: 2, 1>} : memref<320x32xf32, #tpu.memory_space<vmem>>, vector<76x32xf32>
    %c1_12 = arith.constant 1 : index
    %c0_13 = arith.constant 0 : index
    %26 = tpu.strided_load %arg15[%c1_12, %c0_13] {strides = array<i32: 2, 1>} : memref<320x32xf32, #tpu.memory_space<vmem>>, vector<76x32xf32>
    %27 = arith.maximumf %25, %26 : vector<76x32xf32>
    %c1_14 = arith.constant 1 : index
    %c0_15 = arith.constant 0 : index
    %28 = vector.load %arg16[%c1_14, %c0_15] : memref<160x32xf32, #tpu.memory_space<vmem>>, vector<76x32xf32>
    tpu.vector_store %arg16[%c1_14, %c0_15], %27 {strides = array<i32>} : memref<160x32xf32, #tpu.memory_space<vmem>>, vector<76x32xf32>,
    %c0_16 = arith.constant 0 : index
    %c0_17 = arith.constant 0 : index
    %29 = vector.load %arg16[%c0_16, %c0_17] : memref<160x32xf32, #tpu.memory_space<vmem>>, vector<1x32xf32>
    tpu.vector_store %arg16[%c0_16, %c0_17], %0 {strides = array<i32>} : memref<160x32xf32, #tpu.memory_space<vmem>>, vector<1x32xf32>,
    %c77 = arith.constant 77 : index
    %c0_18 = arith.constant 0 : index
    %30 = vector.load %arg16[%c77, %c0_18] : memref<160x32xf32, #tpu.memory_space<vmem>>, vector<1x32xf32>
    tpu.vector_store %arg16[%c77, %c0_18], %0 {strides = array<i32>} : memref<160x32xf32, #tpu.memory_space<vmem>>, vector<1x32xf32>,
    %c160 = arith.constant 160 : index
    %c0_19 = arith.constant 0 : index
    %31 = tpu.strided_load %arg15[%c160, %c0_19] {strides = array<i32: 2, 1>} : memref<320x32xf32, #tpu.memory_space<vmem>>, vector<76x32xf32>
    %c161 = arith.constant 161 : index
    %c0_20 = arith.constant 0 : index
    %32 = tpu.strided_load %arg15[%c161, %c0_20] {strides = array<i32: 2, 1>} : memref<320x32xf32, #tpu.memory_space<vmem>>, vector<76x32xf32>
    %33 = arith.maximumf %31, %32 : vector<76x32xf32>
    %c81 = arith.constant 81 : index
    %c0_21 = arith.constant 0 : index
    %34 = vector.load %arg16[%c81, %c0_21] : memref<160x32xf32, #tpu.memory_space<vmem>>, vector<76x32xf32>
    tpu.vector_store %arg16[%c81, %c0_21], %33 {strides = array<i32>} : memref<160x32xf32, #tpu.memory_space<vmem>>, vector<76x32xf32>,
    %c80 = arith.constant 80 : index
    %c0_22 = arith.constant 0 : index
    %35 = vector.load %arg16[%c80, %c0_22] : memref<160x32xf32, #tpu.memory_space<vmem>>, vector<1x32xf32>
    tpu.vector_store %arg16[%c80, %c0_22], %0 {strides = array<i32>} : memref<160x32xf32, #tpu.memory_space<vmem>>, vector<1x32xf32>,
    %c157 = arith.constant 157 : index
    %c0_23 = arith.constant 0 : index
    %36 = vector.load %arg16[%c157, %c0_23] : memref<160x32xf32, #tpu.memory_space<vmem>>, vector<1x32xf32>
    tpu.vector_store %arg16[%c157, %c0_23], %0 {strides = array<i32>} : memref<160x32xf32, #tpu.memory_space<vmem>>, vector<1x32xf32>,
    %c0_24 = arith.constant 0 : index
    %c0_25 = arith.constant 0 : index
    %37 = vector.load %arg16[%c0_24, %c0_25] : memref<160x32xf32, #tpu.memory_space<vmem>>, vector<76x32xf32>
    %c0_26 = arith.constant 0 : index
    %c0_27 = arith.constant 0 : index
    %38 = vector.load %arg17[%c0_26, %c0_27] : memref<160x96xf32, #tpu.memory_space<vmem>>, vector<76x32xf32>
    tpu.vector_store %arg17[%c0_26, %c0_27], %37 {strides = array<i32>} : memref<160x96xf32, #tpu.memory_space<vmem>>, vector<76x32xf32>,
    %c1_28 = arith.constant 1 : index
    %c0_29 = arith.constant 0 : index
    %39 = vector.load %arg16[%c1_28, %c0_29] : memref<160x32xf32, #tpu.memory_space<vmem>>, vector<76x32xf32>
    %c0_30 = arith.constant 0 : index
    %c32 = arith.constant 32 : index
    %40 = vector.load %arg17[%c0_30, %c32] : memref<160x96xf32, #tpu.memory_space<vmem>>, vector<76x32xf32>
    tpu.vector_store %arg17[%c0_30, %c32], %39 {strides = array<i32>} : memref<160x96xf32, #tpu.memory_space<vmem>>, vector<76x32xf32>,
    %c2_31 = arith.constant 2 : index
    %c0_32 = arith.constant 0 : index
    %41 = vector.load %arg16[%c2_31, %c0_32] : memref<160x32xf32, #tpu.memory_space<vmem>>, vector<76x32xf32>
    %c0_33 = arith.constant 0 : index
    %c64 = arith.constant 64 : index
    %42 = vector.load %arg17[%c0_33, %c64] : memref<160x96xf32, #tpu.memory_space<vmem>>, vector<76x32xf32>
    tpu.vector_store %arg17[%c0_33, %c64], %41 {strides = array<i32>} : memref<160x96xf32, #tpu.memory_space<vmem>>, vector<76x32xf32>,
    %cst_34 = arith.constant 0.000000e+00 : f32
    %43 = vector.broadcast %cst_34 : f32 to vector<4x96xf32>
    %c76 = arith.constant 76 : index
    %c0_35 = arith.constant 0 : index
    %44 = vector.load %arg17[%c76, %c0_35] : memref<160x96xf32, #tpu.memory_space<vmem>>, vector<4x96xf32>
    tpu.vector_store %arg17[%c76, %c0_35], %43 {strides = array<i32>} : memref<160x96xf32, #tpu.memory_space<vmem>>, vector<4x96xf32>,
    %c80_36 = arith.constant 80 : index
    %c0_37 = arith.constant 0 : index
    %45 = vector.load %arg16[%c80_36, %c0_37] : memref<160x32xf32, #tpu.memory_space<vmem>>, vector<76x32xf32>
    %c80_38 = arith.constant 80 : index
    %c0_39 = arith.constant 0 : index
    %46 = vector.load %arg17[%c80_38, %c0_39] : memref<160x96xf32, #tpu.memory_space<vmem>>, vector<76x32xf32>
    tpu.vector_store %arg17[%c80_38, %c0_39], %45 {strides = array<i32>} : memref<160x96xf32, #tpu.memory_space<vmem>>, vector<76x32xf32>,
    %c81_40 = arith.constant 81 : index
    %c0_41 = arith.constant 0 : index
    %47 = vector.load %arg16[%c81_40, %c0_41] : memref<160x32xf32, #tpu.memory_space<vmem>>, vector<76x32xf32>
    %c80_42 = arith.constant 80 : index
    %c32_43 = arith.constant 32 : index
    %48 = vector.load %arg17[%c80_42, %c32_43] : memref<160x96xf32, #tpu.memory_space<vmem>>, vector<76x32xf32>
    tpu.vector_store %arg17[%c80_42, %c32_43], %47 {strides = array<i32>} : memref<160x96xf32, #tpu.memory_space<vmem>>, vector<76x32xf32>,
    %c82 = arith.constant 82 : index
    %c0_44 = arith.constant 0 : index
    %49 = vector.load %arg16[%c82, %c0_44] : memref<160x32xf32, #tpu.memory_space<vmem>>, vector<76x32xf32>
    %c80_45 = arith.constant 80 : index
    %c64_46 = arith.constant 64 : index
    %50 = vector.load %arg17[%c80_45, %c64_46] : memref<160x96xf32, #tpu.memory_space<vmem>>, vector<76x32xf32>
    tpu.vector_store %arg17[%c80_45, %c64_46], %49 {strides = array<i32>} : memref<160x96xf32, #tpu.memory_space<vmem>>, vector<76x32xf32>,
    %cst_47 = arith.constant 0.000000e+00 : f32
    %51 = vector.broadcast %cst_47 : f32 to vector<4x96xf32>
    %c156 = arith.constant 156 : index
    %c0_48 = arith.constant 0 : index
    %52 = vector.load %arg17[%c156, %c0_48] : memref<160x96xf32, #tpu.memory_space<vmem>>, vector<4x96xf32>
    tpu.vector_store %arg17[%c156, %c0_48], %51 {strides = array<i32>} : memref<160x96xf32, #tpu.memory_space<vmem>>, vector<4x96xf32>,
    %c0_49 = arith.constant 0 : index
    %c0_50 = arith.constant 0 : index
    %53 = vector.load %arg17[%c0_49, %c0_50] : memref<160x96xf32, #tpu.memory_space<vmem>>, vector<160x96xf32>
    %c0_51 = arith.constant 0 : index
    %c0_52 = arith.constant 0 : index
    %54 = vector.load %arg4[%c0_51, %c0_52] : memref<96x32xf32, #tpu.memory_space<vmem>>, vector<96x32xf32>
    %cst_53 = arith.constant dense<0.000000e+00> : vector<160x32xf32>
    %55 = tpu.matmul %53, %54, %cst_53 {dimension_numbers = #tpu.dot_dimension_numbers<[1], [0], [0], [1], [0, 0, 1, 1], [], []>} : vector<160x96xf32>, vector<96x32xf32>, vector<160x32xf32> -> vector<160x32xf32>
    %c0_54 = arith.constant 0 : index
    %c0_55 = arith.constant 0 : index
    %56 = vector.load %arg5[%c0_54, %c0_55] : memref<1x32xf32, #tpu.memory_space<vmem>>, vector<1x32xf32>
    %57 = vector.broadcast %56 : vector<1x32xf32> to vector<160x32xf32>
    %58 = arith.addf %55, %57 : vector<160x32xf32>
    %cst_56 = arith.constant 0.000000e+00 : f32
    %59 = vector.broadcast %cst_56 : f32 to vector<160x32xf32>
    %60 = arith.maximumf %58, %59 : vector<160x32xf32>
    %c0_57 = arith.constant 0 : index
    %c0_58 = arith.constant 0 : index
    %61 = vector.load %arg18[%c0_57, %c0_58] : memref<160x32xf32, #tpu.memory_space<vmem>>, vector<160x32xf32>
    tpu.vector_store %arg18[%c0_57, %c0_58], %60 {strides = array<i32>} : memref<160x32xf32, #tpu.memory_space<vmem>>, vector<160x32xf32>,
    %c0_59 = arith.constant 0 : index
    %c0_60 = arith.constant 0 : index
    %62 = tpu.strided_load %arg18[%c0_59, %c0_60] {strides = array<i32: 2, 1>} : memref<160x32xf32, #tpu.memory_space<vmem>>, vector<38x32xf32>
    %c1_61 = arith.constant 1 : index
    %c0_62 = arith.constant 0 : index
    %63 = tpu.strided_load %arg18[%c1_61, %c0_62] {strides = array<i32: 2, 1>} : memref<160x32xf32, #tpu.memory_space<vmem>>, vector<38x32xf32>
    %64 = arith.maximumf %62, %63 : vector<38x32xf32>
    %c0_63 = arith.constant 0 : index
    %c0_64 = arith.constant 0 : index
    %65 = vector.load %arg23[%c0_63, %c0_64] : memref<166x32xf32, #tpu.memory_space<vmem>>, vector<38x32xf32>
    tpu.vector_store %arg23[%c0_63, %c0_64], %64 {strides = array<i32>} : memref<166x32xf32, #tpu.memory_space<vmem>>, vector<38x32xf32>,
    %c80_65 = arith.constant 80 : index
    %c0_66 = arith.constant 0 : index
    %66 = tpu.strided_load %arg18[%c80_65, %c0_66] {strides = array<i32: 2, 1>} : memref<160x32xf32, #tpu.memory_space<vmem>>, vector<38x32xf32>
    %c81_67 = arith.constant 81 : index
    %c0_68 = arith.constant 0 : index
    %67 = tpu.strided_load %arg18[%c81_67, %c0_68] {strides = array<i32: 2, 1>} : memref<160x32xf32, #tpu.memory_space<vmem>>, vector<38x32xf32>
    %68 = arith.maximumf %66, %67 : vector<38x32xf32>
    %c83 = arith.constant 83 : index
    %c0_69 = arith.constant 0 : index
    %69 = vector.load %arg23[%c83, %c0_69] : memref<166x32xf32, #tpu.memory_space<vmem>>, vector<38x32xf32>
    tpu.vector_store %arg23[%c83, %c0_69], %68 {strides = array<i32>} : memref<166x32xf32, #tpu.memory_space<vmem>>, vector<38x32xf32>,
    %cst_70 = arith.constant 0.000000e+00 : f32
    %70 = vector.broadcast %cst_70 : f32 to vector<1x32xf32>
    %c0_71 = arith.constant 0 : index
    %c0_72 = arith.constant 0 : index
    %71 = vector.load %arg1[%c0_71, %c0_72] : memref<368x3xf32, #tpu.memory_space<vmem>>, vector<368x3xf32>
    %c0_73 = arith.constant 0 : index
    %c0_74 = arith.constant 0 : index
    %72 = vector.load %arg7[%c0_73, %c0_74] : memref<1x32xf32, #tpu.memory_space<vmem>>, vector<1x32xf32>
    %73 = vector.extract_strided_slice %71 {offsets = [0, 0], sizes = [368, 1], strides = [1, 1]} : vector<368x3xf32> to vector<368x1xf32>
    %c0_75 = arith.constant 0 : index
    %c0_76 = arith.constant 0 : index
    %74 = vector.load %arg6[%c0_75, %c0_76] : memref<3x32xf32, #tpu.memory_space<vmem>>, vector<1x32xf32>
    %75 = vector.broadcast %73 : vector<368x1xf32> to vector<368x32xf32>
    %76 = vector.broadcast %74 : vector<1x32xf32> to vector<368x32xf32>
    %77 = arith.mulf %75, %76 : vector<368x32xf32>
    %78 = vector.broadcast %72 : vector<1x32xf32> to vector<368x32xf32>
    %79 = arith.addf %78, %77 : vector<368x32xf32>
    %80 = vector.extract_strided_slice %71 {offsets = [0, 1], sizes = [368, 1], strides = [1, 1]} : vector<368x3xf32> to vector<368x1xf32>
    %c1_77 = arith.constant 1 : index
    %c0_78 = arith.constant 0 : index
    %81 = vector.load %arg6[%c1_77, %c0_78] : memref<3x32xf32, #tpu.memory_space<vmem>>, vector<1x32xf32>
    %82 = vector.broadcast %80 : vector<368x1xf32> to vector<368x32xf32>
    %83 = vector.broadcast %81 : vector<1x32xf32> to vector<368x32xf32>
    %84 = arith.mulf %82, %83 : vector<368x32xf32>
    %85 = arith.addf %79, %84 : vector<368x32xf32>
    %86 = vector.extract_strided_slice %71 {offsets = [0, 2], sizes = [368, 1], strides = [1, 1]} : vector<368x3xf32> to vector<368x1xf32>
    %c2_79 = arith.constant 2 : index
    %c0_80 = arith.constant 0 : index
    %87 = vector.load %arg6[%c2_79, %c0_80] : memref<3x32xf32, #tpu.memory_space<vmem>>, vector<1x32xf32>
    %88 = vector.broadcast %86 : vector<368x1xf32> to vector<368x32xf32>
    %89 = vector.broadcast %87 : vector<1x32xf32> to vector<368x32xf32>
    %90 = arith.mulf %88, %89 : vector<368x32xf32>
    %91 = arith.addf %85, %90 : vector<368x32xf32>
    %cst_81 = arith.constant 0.000000e+00 : f32
    %92 = vector.broadcast %cst_81 : f32 to vector<368x32xf32>
    %93 = arith.maximumf %91, %92 : vector<368x32xf32>
    %c0_82 = arith.constant 0 : index
    %c0_83 = arith.constant 0 : index
    %94 = vector.load %arg19[%c0_82, %c0_83] : memref<368x32xf32, #tpu.memory_space<vmem>>, vector<368x32xf32>
    tpu.vector_store %arg19[%c0_82, %c0_83], %93 {strides = array<i32>} : memref<368x32xf32, #tpu.memory_space<vmem>>, vector<368x32xf32>,
    %c0_84 = arith.constant 0 : index
    %c0_85 = arith.constant 0 : index
    %95 = tpu.strided_load %arg19[%c0_84, %c0_85] {strides = array<i32: 2, 1>} : memref<368x32xf32, #tpu.memory_space<vmem>>, vector<90x32xf32>
    %c1_86 = arith.constant 1 : index
    %c0_87 = arith.constant 0 : index
    %96 = tpu.strided_load %arg19[%c1_86, %c0_87] {strides = array<i32: 2, 1>} : memref<368x32xf32, #tpu.memory_space<vmem>>, vector<90x32xf32>
    %97 = arith.maximumf %95, %96 : vector<90x32xf32>
    %c1_88 = arith.constant 1 : index
    %c0_89 = arith.constant 0 : index
    %98 = vector.load %arg20[%c1_88, %c0_89] : memref<192x32xf32, #tpu.memory_space<vmem>>, vector<90x32xf32>
    tpu.vector_store %arg20[%c1_88, %c0_89], %97 {strides = array<i32>} : memref<192x32xf32, #tpu.memory_space<vmem>>, vector<90x32xf32>,
    %c0_90 = arith.constant 0 : index
    %c0_91 = arith.constant 0 : index
    %99 = vector.load %arg20[%c0_90, %c0_91] : memref<192x32xf32, #tpu.memory_space<vmem>>, vector<1x32xf32>
    tpu.vector_store %arg20[%c0_90, %c0_91], %70 {strides = array<i32>} : memref<192x32xf32, #tpu.memory_space<vmem>>, vector<1x32xf32>,
    %c91 = arith.constant 91 : index
    %c0_92 = arith.constant 0 : index
    %100 = vector.load %arg20[%c91, %c0_92] : memref<192x32xf32, #tpu.memory_space<vmem>>, vector<1x32xf32>
    tpu.vector_store %arg20[%c91, %c0_92], %70 {strides = array<i32>} : memref<192x32xf32, #tpu.memory_space<vmem>>, vector<1x32xf32>,
    %c184 = arith.constant 184 : index
    %c0_93 = arith.constant 0 : index
    %101 = tpu.strided_load %arg19[%c184, %c0_93] {strides = array<i32: 2, 1>} : memref<368x32xf32, #tpu.memory_space<vmem>>, vector<90x32xf32>
    %c185 = arith.constant 185 : index
    %c0_94 = arith.constant 0 : index
    %102 = tpu.strided_load %arg19[%c185, %c0_94] {strides = array<i32: 2, 1>} : memref<368x32xf32, #tpu.memory_space<vmem>>, vector<90x32xf32>
    %103 = arith.maximumf %101, %102 : vector<90x32xf32>
    %c97 = arith.constant 97 : index
    %c0_95 = arith.constant 0 : index
    %104 = vector.load %arg20[%c97, %c0_95] : memref<192x32xf32, #tpu.memory_space<vmem>>, vector<90x32xf32>
    tpu.vector_store %arg20[%c97, %c0_95], %103 {strides = array<i32>} : memref<192x32xf32, #tpu.memory_space<vmem>>, vector<90x32xf32>,
    %c96 = arith.constant 96 : index
    %c0_96 = arith.constant 0 : index
    %105 = vector.load %arg20[%c96, %c0_96] : memref<192x32xf32, #tpu.memory_space<vmem>>, vector<1x32xf32>
    tpu.vector_store %arg20[%c96, %c0_96], %70 {strides = array<i32>} : memref<192x32xf32, #tpu.memory_space<vmem>>, vector<1x32xf32>,
    %c187 = arith.constant 187 : index
    %c0_97 = arith.constant 0 : index
    %106 = vector.load %arg20[%c187, %c0_97] : memref<192x32xf32, #tpu.memory_space<vmem>>, vector<1x32xf32>
    tpu.vector_store %arg20[%c187, %c0_97], %70 {strides = array<i32>} : memref<192x32xf32, #tpu.memory_space<vmem>>, vector<1x32xf32>,
    %c0_98 = arith.constant 0 : index
    %c0_99 = arith.constant 0 : index
    %107 = vector.load %arg20[%c0_98, %c0_99] : memref<192x32xf32, #tpu.memory_space<vmem>>, vector<90x32xf32>
    %c0_100 = arith.constant 0 : index
    %c0_101 = arith.constant 0 : index
    %108 = vector.load %arg21[%c0_100, %c0_101] : memref<192x96xf32, #tpu.memory_space<vmem>>, vector<90x32xf32>
    tpu.vector_store %arg21[%c0_100, %c0_101], %107 {strides = array<i32>} : memref<192x96xf32, #tpu.memory_space<vmem>>, vector<90x32xf32>,
    %c1_102 = arith.constant 1 : index
    %c0_103 = arith.constant 0 : index
    %109 = vector.load %arg20[%c1_102, %c0_103] : memref<192x32xf32, #tpu.memory_space<vmem>>, vector<90x32xf32>
    %c0_104 = arith.constant 0 : index
    %c32_105 = arith.constant 32 : index
    %110 = vector.load %arg21[%c0_104, %c32_105] : memref<192x96xf32, #tpu.memory_space<vmem>>, vector<90x32xf32>
    tpu.vector_store %arg21[%c0_104, %c32_105], %109 {strides = array<i32>} : memref<192x96xf32, #tpu.memory_space<vmem>>, vector<90x32xf32>,
    %c2_106 = arith.constant 2 : index
    %c0_107 = arith.constant 0 : index
    %111 = vector.load %arg20[%c2_106, %c0_107] : memref<192x32xf32, #tpu.memory_space<vmem>>, vector<90x32xf32>
    %c0_108 = arith.constant 0 : index
    %c64_109 = arith.constant 64 : index
    %112 = vector.load %arg21[%c0_108, %c64_109] : memref<192x96xf32, #tpu.memory_space<vmem>>, vector<90x32xf32>
    tpu.vector_store %arg21[%c0_108, %c64_109], %111 {strides = array<i32>} : memref<192x96xf32, #tpu.memory_space<vmem>>, vector<90x32xf32>,
    %cst_110 = arith.constant 0.000000e+00 : f32
    %113 = vector.broadcast %cst_110 : f32 to vector<6x96xf32>
    %c90 = arith.constant 90 : index
    %c0_111 = arith.constant 0 : index
    %114 = vector.load %arg21[%c90, %c0_111] : memref<192x96xf32, #tpu.memory_space<vmem>>, vector<6x96xf32>
    tpu.vector_store %arg21[%c90, %c0_111], %113 {strides = array<i32>} : memref<192x96xf32, #tpu.memory_space<vmem>>, vector<6x96xf32>,
    %c96_112 = arith.constant 96 : index
    %c0_113 = arith.constant 0 : index
    %115 = vector.load %arg20[%c96_112, %c0_113] : memref<192x32xf32, #tpu.memory_space<vmem>>, vector<90x32xf32>
    %c96_114 = arith.constant 96 : index
    %c0_115 = arith.constant 0 : index
    %116 = vector.load %arg21[%c96_114, %c0_115] : memref<192x96xf32, #tpu.memory_space<vmem>>, vector<90x32xf32>
    tpu.vector_store %arg21[%c96_114, %c0_115], %115 {strides = array<i32>} : memref<192x96xf32, #tpu.memory_space<vmem>>, vector<90x32xf32>,
    %c97_116 = arith.constant 97 : index
    %c0_117 = arith.constant 0 : index
    %117 = vector.load %arg20[%c97_116, %c0_117] : memref<192x32xf32, #tpu.memory_space<vmem>>, vector<90x32xf32>
    %c96_118 = arith.constant 96 : index
    %c32_119 = arith.constant 32 : index
    %118 = vector.load %arg21[%c96_118, %c32_119] : memref<192x96xf32, #tpu.memory_space<vmem>>, vector<90x32xf32>
    tpu.vector_store %arg21[%c96_118, %c32_119], %117 {strides = array<i32>} : memref<192x96xf32, #tpu.memory_space<vmem>>, vector<90x32xf32>,
    %c98 = arith.constant 98 : index
    %c0_120 = arith.constant 0 : index
    %119 = vector.load %arg20[%c98, %c0_120] : memref<192x32xf32, #tpu.memory_space<vmem>>, vector<90x32xf32>
    %c96_121 = arith.constant 96 : index
    %c64_122 = arith.constant 64 : index
    %120 = vector.load %arg21[%c96_121, %c64_122] : memref<192x96xf32, #tpu.memory_space<vmem>>, vector<90x32xf32>
    tpu.vector_store %arg21[%c96_121, %c64_122], %119 {strides = array<i32>} : memref<192x96xf32, #tpu.memory_space<vmem>>, vector<90x32xf32>,
    %cst_123 = arith.constant 0.000000e+00 : f32
    %121 = vector.broadcast %cst_123 : f32 to vector<6x96xf32>
    %c186 = arith.constant 186 : index
    %c0_124 = arith.constant 0 : index
    %122 = vector.load %arg21[%c186, %c0_124] : memref<192x96xf32, #tpu.memory_space<vmem>>, vector<6x96xf32>
    tpu.vector_store %arg21[%c186, %c0_124], %121 {strides = array<i32>} : memref<192x96xf32, #tpu.memory_space<vmem>>, vector<6x96xf32>,
    %c0_125 = arith.constant 0 : index
    %c0_126 = arith.constant 0 : index
    %123 = vector.load %arg21[%c0_125, %c0_126] : memref<192x96xf32, #tpu.memory_space<vmem>>, vector<192x96xf32>
    %c0_127 = arith.constant 0 : index
    %c0_128 = arith.constant 0 : index
    %124 = vector.load %arg8[%c0_127, %c0_128] : memref<96x32xf32, #tpu.memory_space<vmem>>, vector<96x32xf32>
    %cst_129 = arith.constant dense<0.000000e+00> : vector<192x32xf32>
    %125 = tpu.matmul %123, %124, %cst_129 {dimension_numbers = #tpu.dot_dimension_numbers<[1], [0], [0], [1], [0, 0, 1, 1], [], []>} : vector<192x96xf32>, vector<96x32xf32>, vector<192x32xf32> -> vector<192x32xf32>
    %c0_130 = arith.constant 0 : index
    %c0_131 = arith.constant 0 : index
    %126 = vector.load %arg9[%c0_130, %c0_131] : memref<1x32xf32, #tpu.memory_space<vmem>>, vector<1x32xf32>
    %127 = vector.broadcast %126 : vector<1x32xf32> to vector<192x32xf32>
    %128 = arith.addf %125, %127 : vector<192x32xf32>
    %cst_132 = arith.constant 0.000000e+00 : f32
    %129 = vector.broadcast %cst_132 : f32 to vector<192x32xf32>
    %130 = arith.maximumf %128, %129 : vector<192x32xf32>
    %c0_133 = arith.constant 0 : index
    %c0_134 = arith.constant 0 : index
    %131 = vector.load %arg22[%c0_133, %c0_134] : memref<192x32xf32, #tpu.memory_space<vmem>>, vector<192x32xf32>
    tpu.vector_store %arg22[%c0_133, %c0_134], %130 {strides = array<i32>} : memref<192x32xf32, #tpu.memory_space<vmem>>, vector<192x32xf32>,
    %c0_135 = arith.constant 0 : index
    %c0_136 = arith.constant 0 : index
    %132 = tpu.strided_load %arg22[%c0_135, %c0_136] {strides = array<i32: 2, 1>} : memref<192x32xf32, #tpu.memory_space<vmem>>, vector<45x32xf32>
    %c1_137 = arith.constant 1 : index
    %c0_138 = arith.constant 0 : index
    %133 = tpu.strided_load %arg22[%c1_137, %c0_138] {strides = array<i32: 2, 1>} : memref<192x32xf32, #tpu.memory_space<vmem>>, vector<45x32xf32>
    %134 = arith.maximumf %132, %133 : vector<45x32xf32>
    %c38 = arith.constant 38 : index
    %c0_139 = arith.constant 0 : index
    %135 = vector.load %arg23[%c38, %c0_139] : memref<166x32xf32, #tpu.memory_space<vmem>>, vector<45x32xf32>
    tpu.vector_store %arg23[%c38, %c0_139], %134 {strides = array<i32>} : memref<166x32xf32, #tpu.memory_space<vmem>>, vector<45x32xf32>,
    %c96_140 = arith.constant 96 : index
    %c0_141 = arith.constant 0 : index
    %136 = tpu.strided_load %arg22[%c96_140, %c0_141] {strides = array<i32: 2, 1>} : memref<192x32xf32, #tpu.memory_space<vmem>>, vector<45x32xf32>
    %c97_142 = arith.constant 97 : index
    %c0_143 = arith.constant 0 : index
    %137 = tpu.strided_load %arg22[%c97_142, %c0_143] {strides = array<i32: 2, 1>} : memref<192x32xf32, #tpu.memory_space<vmem>>, vector<45x32xf32>
    %138 = arith.maximumf %136, %137 : vector<45x32xf32>
    %c121 = arith.constant 121 : index
    %c0_144 = arith.constant 0 : index
    %139 = vector.load %arg23[%c121, %c0_144] : memref<166x32xf32, #tpu.memory_space<vmem>>, vector<45x32xf32>
    tpu.vector_store %arg23[%c121, %c0_144], %138 {strides = array<i32>} : memref<166x32xf32, #tpu.memory_space<vmem>>, vector<45x32xf32>,
    %c0_145 = arith.constant 0 : index
    %c0_146 = arith.constant 0 : index
    %140 = vector.load %arg23[%c0_145, %c0_146] : memref<166x32xf32, #tpu.memory_space<vmem>>, vector<1x32xf32>
    %c83_147 = arith.constant 83 : index
    %c0_148 = arith.constant 0 : index
    %141 = vector.load %arg23[%c83_147, %c0_148] : memref<166x32xf32, #tpu.memory_space<vmem>>, vector<1x32xf32>
    %142 = tpu.concatenate %140, %141 in 0 : vector<1x32xf32>, vector<1x32xf32> -> vector<2x32xf32>
    %c0_149 = arith.constant 0 : index
    %c0_150 = arith.constant 0 : index
    %143 = vector.load %arg24[%c0_149, %c0_150] : memref<2x2656xf32, #tpu.memory_space<vmem>>, vector<2x32xf32>
    tpu.vector_store %arg24[%c0_149, %c0_150], %142 {strides = array<i32>} : memref<2x2656xf32, #tpu.memory_space<vmem>>, vector<2x32xf32>,
    %c1_151 = arith.constant 1 : index
    %c0_152 = arith.constant 0 : index
    %144 = vector.load %arg23[%c1_151, %c0_152] : memref<166x32xf32, #tpu.memory_space<vmem>>, vector<1x32xf32>
    %c84 = arith.constant 84 : index
    %c0_153 = arith.constant 0 : index
    %145 = vector.load %arg23[%c84, %c0_153] : memref<166x32xf32, #tpu.memory_space<vmem>>, vector<1x32xf32>
    %146 = tpu.concatenate %144, %145 in 0 : vector<1x32xf32>, vector<1x32xf32> -> vector<2x32xf32>
    %c0_154 = arith.constant 0 : index
    %c32_155 = arith.constant 32 : index
    %147 = vector.load %arg24[%c0_154, %c32_155] : memref<2x2656xf32, #tpu.memory_space<vmem>>, vector<2x32xf32>
    tpu.vector_store %arg24[%c0_154, %c32_155], %146 {strides = array<i32>} : memref<2x2656xf32, #tpu.memory_space<vmem>>, vector<2x32xf32>,
    %c2_156 = arith.constant 2 : index
    %c0_157 = arith.constant 0 : index
    %148 = vector.load %arg23[%c2_156, %c0_157] : memref<166x32xf32, #tpu.memory_space<vmem>>, vector<1x32xf32>
    %c85 = arith.constant 85 : index
    %c0_158 = arith.constant 0 : index
    %149 = vector.load %arg23[%c85, %c0_158] : memref<166x32xf32, #tpu.memory_space<vmem>>, vector<1x32xf32>
    %150 = tpu.concatenate %148, %149 in 0 : vector<1x32xf32>, vector<1x32xf32> -> vector<2x32xf32>
    %c0_159 = arith.constant 0 : index
    %c64_160 = arith.constant 64 : index
    %151 = vector.load %arg24[%c0_159, %c64_160] : memref<2x2656xf32, #tpu.memory_space<vmem>>, vector<2x32xf32>
    tpu.vector_store %arg24[%c0_159, %c64_160], %150 {strides = array<i32>} : memref<2x2656xf32, #tpu.memory_space<vmem>>, vector<2x32xf32>,
    %c3 = arith.constant 3 : index
    %c0_161 = arith.constant 0 : index
    %152 = vector.load %arg23[%c3, %c0_161] : memref<166x32xf32, #tpu.memory_space<vmem>>, vector<1x32xf32>
    %c86 = arith.constant 86 : index
    %c0_162 = arith.constant 0 : index
    %153 = vector.load %arg23[%c86, %c0_162] : memref<166x32xf32, #tpu.memory_space<vmem>>, vector<1x32xf32>
    %154 = tpu.concatenate %152, %153 in 0 : vector<1x32xf32>, vector<1x32xf32> -> vector<2x32xf32>
    %c0_163 = arith.constant 0 : index
    %c96_164 = arith.constant 96 : index
    %155 = vector.load %arg24[%c0_163, %c96_164] : memref<2x2656xf32, #tpu.memory_space<vmem>>, vector<2x32xf32>
    tpu.vector_store %arg24[%c0_163, %c96_164], %154 {strides = array<i32>} : memref<2x2656xf32, #tpu.memory_space<vmem>>, vector<2x32xf32>,
    %c4 = arith.constant 4 : index
    %c0_165 = arith.constant 0 : index
    %156 = vector.load %arg23[%c4, %c0_165] : memref<166x32xf32, #tpu.memory_space<vmem>>, vector<1x32xf32>
    %c87 = arith.constant 87 : index
    %c0_166 = arith.constant 0 : index
    %157 = vector.load %arg23[%c87, %c0_166] : memref<166x32xf32, #tpu.memory_space<vmem>>, vector<1x32xf32>
    %158 = tpu.concatenate %156, %157 in 0 : vector<1x32xf32>, vector<1x32xf32> -> vector<2x32xf32>
    %c0_167 = arith.constant 0 : index
    %c128 = arith.constant 128 : index
    %159 = vector.load %arg24[%c0_167, %c128] : memref<2x2656xf32, #tpu.memory_space<vmem>>, vector<2x32xf32>
    tpu.vector_store %arg24[%c0_167, %c128], %158 {strides = array<i32>} : memref<2x2656xf32, #tpu.memory_space<vmem>>, vector<2x32xf32>,
    %c5 = arith.constant 5 : index
    %c0_168 = arith.constant 0 : index
    %160 = vector.load %arg23[%c5, %c0_168] : memref<166x32xf32, #tpu.memory_space<vmem>>, vector<1x32xf32>
    %c88 = arith.constant 88 : index
    %c0_169 = arith.constant 0 : index
    %161 = vector.load %arg23[%c88, %c0_169] : memref<166x32xf32, #tpu.memory_space<vmem>>, vector<1x32xf32>
    %162 = tpu.concatenate %160, %161 in 0 : vector<1x32xf32>, vector<1x32xf32> -> vector<2x32xf32>
    %c0_170 = arith.constant 0 : index
    %c160_171 = arith.constant 160 : index
    %163 = vector.load %arg24[%c0_170, %c160_171] : memref<2x2656xf32, #tpu.memory_space<vmem>>, vector<2x32xf32>
    tpu.vector_store %arg24[%c0_170, %c160_171], %162 {strides = array<i32>} : memref<2x2656xf32, #tpu.memory_space<vmem>>, vector<2x32xf32>,
    %c6 = arith.constant 6 : index
    %c0_172 = arith.constant 0 : index
    %164 = vector.load %arg23[%c6, %c0_172] : memref<166x32xf32, #tpu.memory_space<vmem>>, vector<1x32xf32>
    %c89 = arith.constant 89 : index
    %c0_173 = arith.constant 0 : index
    %165 = vector.load %arg23[%c89, %c0_173] : memref<166x32xf32, #tpu.memory_space<vmem>>, vector<1x32xf32>
    %166 = tpu.concatenate %164, %165 in 0 : vector<1x32xf32>, vector<1x32xf32> -> vector<2x32xf32>
    %c0_174 = arith.constant 0 : index
    %c192 = arith.constant 192 : index
    %167 = vector.load %arg24[%c0_174, %c192] : memref<2x2656xf32, #tpu.memory_space<vmem>>, vector<2x32xf32>
    tpu.vector_store %arg24[%c0_174, %c192], %166 {strides = array<i32>} : memref<2x2656xf32, #tpu.memory_space<vmem>>, vector<2x32xf32>,
    %c7 = arith.constant 7 : index
    %c0_175 = arith.constant 0 : index
    %168 = vector.load %arg23[%c7, %c0_175] : memref<166x32xf32, #tpu.memory_space<vmem>>, vector<1x32xf32>
    %c90_176 = arith.constant 90 : index
    %c0_177 = arith.constant 0 : index
    %169 = vector.load %arg23[%c90_176, %c0_177] : memref<166x32xf32, #tpu.memory_space<vmem>>, vector<1x32xf32>
    %170 = tpu.concatenate %168, %169 in 0 : vector<1x32xf32>, vector<1x32xf32> -> vector<2x32xf32>
    %c0_178 = arith.constant 0 : index
    %c224 = arith.constant 224 : index
    %171 = vector.load %arg24[%c0_178, %c224] : memref<2x2656xf32, #tpu.memory_space<vmem>>, vector<2x32xf32>
    tpu.vector_store %arg24[%c0_178, %c224], %170 {strides = array<i32>} : memref<2x2656xf32, #tpu.memory_space<vmem>>, vector<2x32xf32>,
    %c8 = arith.constant 8 : index
    %c0_179 = arith.constant 0 : index
    %172 = vector.load %arg23[%c8, %c0_179] : memref<166x32xf32, #tpu.memory_space<vmem>>, vector<1x32xf32>
    %c91_180 = arith.constant 91 : index
    %c0_181 = arith.constant 0 : index
    %173 = vector.load %arg23[%c91_180, %c0_181] : memref<166x32xf32, #tpu.memory_space<vmem>>, vector<1x32xf32>
    %174 = tpu.concatenate %172, %173 in 0 : vector<1x32xf32>, vector<1x32xf32> -> vector<2x32xf32>
    %c0_182 = arith.constant 0 : index
    %c256 = arith.constant 256 : index
    %175 = vector.load %arg24[%c0_182, %c256] : memref<2x2656xf32, #tpu.memory_space<vmem>>, vector<2x32xf32>
    tpu.vector_store %arg24[%c0_182, %c256], %174 {strides = array<i32>} : memref<2x2656xf32, #tpu.memory_space<vmem>>, vector<2x32xf32>,
    %c9 = arith.constant 9 : index
    %c0_183 = arith.constant 0 : index
    %176 = vector.load %arg23[%c9, %c0_183] : memref<166x32xf32, #tpu.memory_space<vmem>>, vector<1x32xf32>
    %c92 = arith.constant 92 : index
    %c0_184 = arith.constant 0 : index
    %177 = vector.load %arg23[%c92, %c0_184] : memref<166x32xf32, #tpu.memory_space<vmem>>, vector<1x32xf32>
    %178 = tpu.concatenate %176, %177 in 0 : vector<1x32xf32>, vector<1x32xf32> -> vector<2x32xf32>
    %c0_185 = arith.constant 0 : index
    %c288 = arith.constant 288 : index
    %179 = vector.load %arg24[%c0_185, %c288] : memref<2x2656xf32, #tpu.memory_space<vmem>>, vector<2x32xf32>
    tpu.vector_store %arg24[%c0_185, %c288], %178 {strides = array<i32>} : memref<2x2656xf32, #tpu.memory_space<vmem>>, vector<2x32xf32>,
    %c10 = arith.constant 10 : index
    %c0_186 = arith.constant 0 : index
    %180 = vector.load %arg23[%c10, %c0_186] : memref<166x32xf32, #tpu.memory_space<vmem>>, vector<1x32xf32>
    %c93 = arith.constant 93 : index
    %c0_187 = arith.constant 0 : index
    %181 = vector.load %arg23[%c93, %c0_187] : memref<166x32xf32, #tpu.memory_space<vmem>>, vector<1x32xf32>
    %182 = tpu.concatenate %180, %181 in 0 : vector<1x32xf32>, vector<1x32xf32> -> vector<2x32xf32>
    %c0_188 = arith.constant 0 : index
    %c320 = arith.constant 320 : index
    %183 = vector.load %arg24[%c0_188, %c320] : memref<2x2656xf32, #tpu.memory_space<vmem>>, vector<2x32xf32>
    tpu.vector_store %arg24[%c0_188, %c320], %182 {strides = array<i32>} : memref<2x2656xf32, #tpu.memory_space<vmem>>, vector<2x32xf32>,
    %c11 = arith.constant 11 : index
    %c0_189 = arith.constant 0 : index
    %184 = vector.load %arg23[%c11, %c0_189] : memref<166x32xf32, #tpu.memory_space<vmem>>, vector<1x32xf32>
    %c94 = arith.constant 94 : index
    %c0_190 = arith.constant 0 : index
    %185 = vector.load %arg23[%c94, %c0_190] : memref<166x32xf32, #tpu.memory_space<vmem>>, vector<1x32xf32>
    %186 = tpu.concatenate %184, %185 in 0 : vector<1x32xf32>, vector<1x32xf32> -> vector<2x32xf32>
    %c0_191 = arith.constant 0 : index
    %c352 = arith.constant 352 : index
    %187 = vector.load %arg24[%c0_191, %c352] : memref<2x2656xf32, #tpu.memory_space<vmem>>, vector<2x32xf32>
    tpu.vector_store %arg24[%c0_191, %c352], %186 {strides = array<i32>} : memref<2x2656xf32, #tpu.memory_space<vmem>>, vector<2x32xf32>,
    %c12 = arith.constant 12 : index
    %c0_192 = arith.constant 0 : index
    %188 = vector.load %arg23[%c12, %c0_192] : memref<166x32xf32, #tpu.memory_space<vmem>>, vector<1x32xf32>
    %c95 = arith.constant 95 : index
    %c0_193 = arith.constant 0 : index
    %189 = vector.load %arg23[%c95, %c0_193] : memref<166x32xf32, #tpu.memory_space<vmem>>, vector<1x32xf32>
    %190 = tpu.concatenate %188, %189 in 0 : vector<1x32xf32>, vector<1x32xf32> -> vector<2x32xf32>
    %c0_194 = arith.constant 0 : index
    %c384 = arith.constant 384 : index
    %191 = vector.load %arg24[%c0_194, %c384] : memref<2x2656xf32, #tpu.memory_space<vmem>>, vector<2x32xf32>
    tpu.vector_store %arg24[%c0_194, %c384], %190 {strides = array<i32>} : memref<2x2656xf32, #tpu.memory_space<vmem>>, vector<2x32xf32>,
    %c13 = arith.constant 13 : index
    %c0_195 = arith.constant 0 : index
    %192 = vector.load %arg23[%c13, %c0_195] : memref<166x32xf32, #tpu.memory_space<vmem>>, vector<1x32xf32>
    %c96_196 = arith.constant 96 : index
    %c0_197 = arith.constant 0 : index
    %193 = vector.load %arg23[%c96_196, %c0_197] : memref<166x32xf32, #tpu.memory_space<vmem>>, vector<1x32xf32>
    %194 = tpu.concatenate %192, %193 in 0 : vector<1x32xf32>, vector<1x32xf32> -> vector<2x32xf32>
    %c0_198 = arith.constant 0 : index
    %c416 = arith.constant 416 : index
    %195 = vector.load %arg24[%c0_198, %c416] : memref<2x2656xf32, #tpu.memory_space<vmem>>, vector<2x32xf32>
    tpu.vector_store %arg24[%c0_198, %c416], %194 {strides = array<i32>} : memref<2x2656xf32, #tpu.memory_space<vmem>>, vector<2x32xf32>,
    %c14 = arith.constant 14 : index
    %c0_199 = arith.constant 0 : index
    %196 = vector.load %arg23[%c14, %c0_199] : memref<166x32xf32, #tpu.memory_space<vmem>>, vector<1x32xf32>
    %c97_200 = arith.constant 97 : index
    %c0_201 = arith.constant 0 : index
    %197 = vector.load %arg23[%c97_200, %c0_201] : memref<166x32xf32, #tpu.memory_space<vmem>>, vector<1x32xf32>
    %198 = tpu.concatenate %196, %197 in 0 : vector<1x32xf32>, vector<1x32xf32> -> vector<2x32xf32>
    %c0_202 = arith.constant 0 : index
    %c448 = arith.constant 448 : index
    %199 = vector.load %arg24[%c0_202, %c448] : memref<2x2656xf32, #tpu.memory_space<vmem>>, vector<2x32xf32>
    tpu.vector_store %arg24[%c0_202, %c448], %198 {strides = array<i32>} : memref<2x2656xf32, #tpu.memory_space<vmem>>, vector<2x32xf32>,
    %c15 = arith.constant 15 : index
    %c0_203 = arith.constant 0 : index
    %200 = vector.load %arg23[%c15, %c0_203] : memref<166x32xf32, #tpu.memory_space<vmem>>, vector<1x32xf32>
    %c98_204 = arith.constant 98 : index
    %c0_205 = arith.constant 0 : index
    %201 = vector.load %arg23[%c98_204, %c0_205] : memref<166x32xf32, #tpu.memory_space<vmem>>, vector<1x32xf32>
    %202 = tpu.concatenate %200, %201 in 0 : vector<1x32xf32>, vector<1x32xf32> -> vector<2x32xf32>
    %c0_206 = arith.constant 0 : index
    %c480 = arith.constant 480 : index
    %203 = vector.load %arg24[%c0_206, %c480] : memref<2x2656xf32, #tpu.memory_space<vmem>>, vector<2x32xf32>
    tpu.vector_store %arg24[%c0_206, %c480], %202 {strides = array<i32>} : memref<2x2656xf32, #tpu.memory_space<vmem>>, vector<2x32xf32>,
    %c16 = arith.constant 16 : index
    %c0_207 = arith.constant 0 : index
    %204 = vector.load %arg23[%c16, %c0_207] : memref<166x32xf32, #tpu.memory_space<vmem>>, vector<1x32xf32>
    %c99 = arith.constant 99 : index
    %c0_208 = arith.constant 0 : index
    %205 = vector.load %arg23[%c99, %c0_208] : memref<166x32xf32, #tpu.memory_space<vmem>>, vector<1x32xf32>
    %206 = tpu.concatenate %204, %205 in 0 : vector<1x32xf32>, vector<1x32xf32> -> vector<2x32xf32>
    %c0_209 = arith.constant 0 : index
    %c512 = arith.constant 512 : index
    %207 = vector.load %arg24[%c0_209, %c512] : memref<2x2656xf32, #tpu.memory_space<vmem>>, vector<2x32xf32>
    tpu.vector_store %arg24[%c0_209, %c512], %206 {strides = array<i32>} : memref<2x2656xf32, #tpu.memory_space<vmem>>, vector<2x32xf32>,
    %c17 = arith.constant 17 : index
    %c0_210 = arith.constant 0 : index
    %208 = vector.load %arg23[%c17, %c0_210] : memref<166x32xf32, #tpu.memory_space<vmem>>, vector<1x32xf32>
    %c100 = arith.constant 100 : index
    %c0_211 = arith.constant 0 : index
    %209 = vector.load %arg23[%c100, %c0_211] : memref<166x32xf32, #tpu.memory_space<vmem>>, vector<1x32xf32>
    %210 = tpu.concatenate %208, %209 in 0 : vector<1x32xf32>, vector<1x32xf32> -> vector<2x32xf32>
    %c0_212 = arith.constant 0 : index
    %c544 = arith.constant 544 : index
    %211 = vector.load %arg24[%c0_212, %c544] : memref<2x2656xf32, #tpu.memory_space<vmem>>, vector<2x32xf32>
    tpu.vector_store %arg24[%c0_212, %c544], %210 {strides = array<i32>} : memref<2x2656xf32, #tpu.memory_space<vmem>>, vector<2x32xf32>,
    %c18 = arith.constant 18 : index
    %c0_213 = arith.constant 0 : index
    %212 = vector.load %arg23[%c18, %c0_213] : memref<166x32xf32, #tpu.memory_space<vmem>>, vector<1x32xf32>
    %c101 = arith.constant 101 : index
    %c0_214 = arith.constant 0 : index
    %213 = vector.load %arg23[%c101, %c0_214] : memref<166x32xf32, #tpu.memory_space<vmem>>, vector<1x32xf32>
    %214 = tpu.concatenate %212, %213 in 0 : vector<1x32xf32>, vector<1x32xf32> -> vector<2x32xf32>
    %c0_215 = arith.constant 0 : index
    %c576 = arith.constant 576 : index
    %215 = vector.load %arg24[%c0_215, %c576] : memref<2x2656xf32, #tpu.memory_space<vmem>>, vector<2x32xf32>
    tpu.vector_store %arg24[%c0_215, %c576], %214 {strides = array<i32>} : memref<2x2656xf32, #tpu.memory_space<vmem>>, vector<2x32xf32>,
    %c19 = arith.constant 19 : index
    %c0_216 = arith.constant 0 : index
    %216 = vector.load %arg23[%c19, %c0_216] : memref<166x32xf32, #tpu.memory_space<vmem>>, vector<1x32xf32>
    %c102 = arith.constant 102 : index
    %c0_217 = arith.constant 0 : index
    %217 = vector.load %arg23[%c102, %c0_217] : memref<166x32xf32, #tpu.memory_space<vmem>>, vector<1x32xf32>
    %218 = tpu.concatenate %216, %217 in 0 : vector<1x32xf32>, vector<1x32xf32> -> vector<2x32xf32>
    %c0_218 = arith.constant 0 : index
    %c608 = arith.constant 608 : index
    %219 = vector.load %arg24[%c0_218, %c608] : memref<2x2656xf32, #tpu.memory_space<vmem>>, vector<2x32xf32>
    tpu.vector_store %arg24[%c0_218, %c608], %218 {strides = array<i32>} : memref<2x2656xf32, #tpu.memory_space<vmem>>, vector<2x32xf32>,
    %c20 = arith.constant 20 : index
    %c0_219 = arith.constant 0 : index
    %220 = vector.load %arg23[%c20, %c0_219] : memref<166x32xf32, #tpu.memory_space<vmem>>, vector<1x32xf32>
    %c103 = arith.constant 103 : index
    %c0_220 = arith.constant 0 : index
    %221 = vector.load %arg23[%c103, %c0_220] : memref<166x32xf32, #tpu.memory_space<vmem>>, vector<1x32xf32>
    %222 = tpu.concatenate %220, %221 in 0 : vector<1x32xf32>, vector<1x32xf32> -> vector<2x32xf32>
    %c0_221 = arith.constant 0 : index
    %c640 = arith.constant 640 : index
    %223 = vector.load %arg24[%c0_221, %c640] : memref<2x2656xf32, #tpu.memory_space<vmem>>, vector<2x32xf32>
    tpu.vector_store %arg24[%c0_221, %c640], %222 {strides = array<i32>} : memref<2x2656xf32, #tpu.memory_space<vmem>>, vector<2x32xf32>,
    %c21 = arith.constant 21 : index
    %c0_222 = arith.constant 0 : index
    %224 = vector.load %arg23[%c21, %c0_222] : memref<166x32xf32, #tpu.memory_space<vmem>>, vector<1x32xf32>
    %c104 = arith.constant 104 : index
    %c0_223 = arith.constant 0 : index
    %225 = vector.load %arg23[%c104, %c0_223] : memref<166x32xf32, #tpu.memory_space<vmem>>, vector<1x32xf32>
    %226 = tpu.concatenate %224, %225 in 0 : vector<1x32xf32>, vector<1x32xf32> -> vector<2x32xf32>
    %c0_224 = arith.constant 0 : index
    %c672 = arith.constant 672 : index
    %227 = vector.load %arg24[%c0_224, %c672] : memref<2x2656xf32, #tpu.memory_space<vmem>>, vector<2x32xf32>
    tpu.vector_store %arg24[%c0_224, %c672], %226 {strides = array<i32>} : memref<2x2656xf32, #tpu.memory_space<vmem>>, vector<2x32xf32>,
    %c22 = arith.constant 22 : index
    %c0_225 = arith.constant 0 : index
    %228 = vector.load %arg23[%c22, %c0_225] : memref<166x32xf32, #tpu.memory_space<vmem>>, vector<1x32xf32>
    %c105 = arith.constant 105 : index
    %c0_226 = arith.constant 0 : index
    %229 = vector.load %arg23[%c105, %c0_226] : memref<166x32xf32, #tpu.memory_space<vmem>>, vector<1x32xf32>
    %230 = tpu.concatenate %228, %229 in 0 : vector<1x32xf32>, vector<1x32xf32> -> vector<2x32xf32>
    %c0_227 = arith.constant 0 : index
    %c704 = arith.constant 704 : index
    %231 = vector.load %arg24[%c0_227, %c704] : memref<2x2656xf32, #tpu.memory_space<vmem>>, vector<2x32xf32>
    tpu.vector_store %arg24[%c0_227, %c704], %230 {strides = array<i32>} : memref<2x2656xf32, #tpu.memory_space<vmem>>, vector<2x32xf32>,
    %c23 = arith.constant 23 : index
    %c0_228 = arith.constant 0 : index
    %232 = vector.load %arg23[%c23, %c0_228] : memref<166x32xf32, #tpu.memory_space<vmem>>, vector<1x32xf32>
    %c106 = arith.constant 106 : index
    %c0_229 = arith.constant 0 : index
    %233 = vector.load %arg23[%c106, %c0_229] : memref<166x32xf32, #tpu.memory_space<vmem>>, vector<1x32xf32>
    %234 = tpu.concatenate %232, %233 in 0 : vector<1x32xf32>, vector<1x32xf32> -> vector<2x32xf32>
    %c0_230 = arith.constant 0 : index
    %c736 = arith.constant 736 : index
    %235 = vector.load %arg24[%c0_230, %c736] : memref<2x2656xf32, #tpu.memory_space<vmem>>, vector<2x32xf32>
    tpu.vector_store %arg24[%c0_230, %c736], %234 {strides = array<i32>} : memref<2x2656xf32, #tpu.memory_space<vmem>>, vector<2x32xf32>,
    %c24 = arith.constant 24 : index
    %c0_231 = arith.constant 0 : index
    %236 = vector.load %arg23[%c24, %c0_231] : memref<166x32xf32, #tpu.memory_space<vmem>>, vector<1x32xf32>
    %c107 = arith.constant 107 : index
    %c0_232 = arith.constant 0 : index
    %237 = vector.load %arg23[%c107, %c0_232] : memref<166x32xf32, #tpu.memory_space<vmem>>, vector<1x32xf32>
    %238 = tpu.concatenate %236, %237 in 0 : vector<1x32xf32>, vector<1x32xf32> -> vector<2x32xf32>
    %c0_233 = arith.constant 0 : index
    %c768 = arith.constant 768 : index
    %239 = vector.load %arg24[%c0_233, %c768] : memref<2x2656xf32, #tpu.memory_space<vmem>>, vector<2x32xf32>
    tpu.vector_store %arg24[%c0_233, %c768], %238 {strides = array<i32>} : memref<2x2656xf32, #tpu.memory_space<vmem>>, vector<2x32xf32>,
    %c25 = arith.constant 25 : index
    %c0_234 = arith.constant 0 : index
    %240 = vector.load %arg23[%c25, %c0_234] : memref<166x32xf32, #tpu.memory_space<vmem>>, vector<1x32xf32>
    %c108 = arith.constant 108 : index
    %c0_235 = arith.constant 0 : index
    %241 = vector.load %arg23[%c108, %c0_235] : memref<166x32xf32, #tpu.memory_space<vmem>>, vector<1x32xf32>
    %242 = tpu.concatenate %240, %241 in 0 : vector<1x32xf32>, vector<1x32xf32> -> vector<2x32xf32>
    %c0_236 = arith.constant 0 : index
    %c800 = arith.constant 800 : index
    %243 = vector.load %arg24[%c0_236, %c800] : memref<2x2656xf32, #tpu.memory_space<vmem>>, vector<2x32xf32>
    tpu.vector_store %arg24[%c0_236, %c800], %242 {strides = array<i32>} : memref<2x2656xf32, #tpu.memory_space<vmem>>, vector<2x32xf32>,
    %c26 = arith.constant 26 : index
    %c0_237 = arith.constant 0 : index
    %244 = vector.load %arg23[%c26, %c0_237] : memref<166x32xf32, #tpu.memory_space<vmem>>, vector<1x32xf32>
    %c109 = arith.constant 109 : index
    %c0_238 = arith.constant 0 : index
    %245 = vector.load %arg23[%c109, %c0_238] : memref<166x32xf32, #tpu.memory_space<vmem>>, vector<1x32xf32>
    %246 = tpu.concatenate %244, %245 in 0 : vector<1x32xf32>, vector<1x32xf32> -> vector<2x32xf32>
    %c0_239 = arith.constant 0 : index
    %c832 = arith.constant 832 : index
    %247 = vector.load %arg24[%c0_239, %c832] : memref<2x2656xf32, #tpu.memory_space<vmem>>, vector<2x32xf32>
    tpu.vector_store %arg24[%c0_239, %c832], %246 {strides = array<i32>} : memref<2x2656xf32, #tpu.memory_space<vmem>>, vector<2x32xf32>,
    %c27 = arith.constant 27 : index
    %c0_240 = arith.constant 0 : index
    %248 = vector.load %arg23[%c27, %c0_240] : memref<166x32xf32, #tpu.memory_space<vmem>>, vector<1x32xf32>
    %c110 = arith.constant 110 : index
    %c0_241 = arith.constant 0 : index
    %249 = vector.load %arg23[%c110, %c0_241] : memref<166x32xf32, #tpu.memory_space<vmem>>, vector<1x32xf32>
    %250 = tpu.concatenate %248, %249 in 0 : vector<1x32xf32>, vector<1x32xf32> -> vector<2x32xf32>
    %c0_242 = arith.constant 0 : index
    %c864 = arith.constant 864 : index
    %251 = vector.load %arg24[%c0_242, %c864] : memref<2x2656xf32, #tpu.memory_space<vmem>>, vector<2x32xf32>
    tpu.vector_store %arg24[%c0_242, %c864], %250 {strides = array<i32>} : memref<2x2656xf32, #tpu.memory_space<vmem>>, vector<2x32xf32>,
    %c28 = arith.constant 28 : index
    %c0_243 = arith.constant 0 : index
    %252 = vector.load %arg23[%c28, %c0_243] : memref<166x32xf32, #tpu.memory_space<vmem>>, vector<1x32xf32>
    %c111 = arith.constant 111 : index
    %c0_244 = arith.constant 0 : index
    %253 = vector.load %arg23[%c111, %c0_244] : memref<166x32xf32, #tpu.memory_space<vmem>>, vector<1x32xf32>
    %254 = tpu.concatenate %252, %253 in 0 : vector<1x32xf32>, vector<1x32xf32> -> vector<2x32xf32>
    %c0_245 = arith.constant 0 : index
    %c896 = arith.constant 896 : index
    %255 = vector.load %arg24[%c0_245, %c896] : memref<2x2656xf32, #tpu.memory_space<vmem>>, vector<2x32xf32>
    tpu.vector_store %arg24[%c0_245, %c896], %254 {strides = array<i32>} : memref<2x2656xf32, #tpu.memory_space<vmem>>, vector<2x32xf32>,
    %c29 = arith.constant 29 : index
    %c0_246 = arith.constant 0 : index
    %256 = vector.load %arg23[%c29, %c0_246] : memref<166x32xf32, #tpu.memory_space<vmem>>, vector<1x32xf32>
    %c112 = arith.constant 112 : index
    %c0_247 = arith.constant 0 : index
    %257 = vector.load %arg23[%c112, %c0_247] : memref<166x32xf32, #tpu.memory_space<vmem>>, vector<1x32xf32>
    %258 = tpu.concatenate %256, %257 in 0 : vector<1x32xf32>, vector<1x32xf32> -> vector<2x32xf32>
    %c0_248 = arith.constant 0 : index
    %c928 = arith.constant 928 : index
    %259 = vector.load %arg24[%c0_248, %c928] : memref<2x2656xf32, #tpu.memory_space<vmem>>, vector<2x32xf32>
    tpu.vector_store %arg24[%c0_248, %c928], %258 {strides = array<i32>} : memref<2x2656xf32, #tpu.memory_space<vmem>>, vector<2x32xf32>,
    %c30 = arith.constant 30 : index
    %c0_249 = arith.constant 0 : index
    %260 = vector.load %arg23[%c30, %c0_249] : memref<166x32xf32, #tpu.memory_space<vmem>>, vector<1x32xf32>
    %c113 = arith.constant 113 : index
    %c0_250 = arith.constant 0 : index
    %261 = vector.load %arg23[%c113, %c0_250] : memref<166x32xf32, #tpu.memory_space<vmem>>, vector<1x32xf32>
    %262 = tpu.concatenate %260, %261 in 0 : vector<1x32xf32>, vector<1x32xf32> -> vector<2x32xf32>
    %c0_251 = arith.constant 0 : index
    %c960 = arith.constant 960 : index
    %263 = vector.load %arg24[%c0_251, %c960] : memref<2x2656xf32, #tpu.memory_space<vmem>>, vector<2x32xf32>
    tpu.vector_store %arg24[%c0_251, %c960], %262 {strides = array<i32>} : memref<2x2656xf32, #tpu.memory_space<vmem>>, vector<2x32xf32>,
    %c31 = arith.constant 31 : index
    %c0_252 = arith.constant 0 : index
    %264 = vector.load %arg23[%c31, %c0_252] : memref<166x32xf32, #tpu.memory_space<vmem>>, vector<1x32xf32>
    %c114 = arith.constant 114 : index
    %c0_253 = arith.constant 0 : index
    %265 = vector.load %arg23[%c114, %c0_253] : memref<166x32xf32, #tpu.memory_space<vmem>>, vector<1x32xf32>
    %266 = tpu.concatenate %264, %265 in 0 : vector<1x32xf32>, vector<1x32xf32> -> vector<2x32xf32>
    %c0_254 = arith.constant 0 : index
    %c992 = arith.constant 992 : index
    %267 = vector.load %arg24[%c0_254, %c992] : memref<2x2656xf32, #tpu.memory_space<vmem>>, vector<2x32xf32>
    tpu.vector_store %arg24[%c0_254, %c992], %266 {strides = array<i32>} : memref<2x2656xf32, #tpu.memory_space<vmem>>, vector<2x32xf32>,
    %c32_255 = arith.constant 32 : index
    %c0_256 = arith.constant 0 : index
    %268 = vector.load %arg23[%c32_255, %c0_256] : memref<166x32xf32, #tpu.memory_space<vmem>>, vector<1x32xf32>
    %c115 = arith.constant 115 : index
    %c0_257 = arith.constant 0 : index
    %269 = vector.load %arg23[%c115, %c0_257] : memref<166x32xf32, #tpu.memory_space<vmem>>, vector<1x32xf32>
    %270 = tpu.concatenate %268, %269 in 0 : vector<1x32xf32>, vector<1x32xf32> -> vector<2x32xf32>
    %c0_258 = arith.constant 0 : index
    %c1024 = arith.constant 1024 : index
    %271 = vector.load %arg24[%c0_258, %c1024] : memref<2x2656xf32, #tpu.memory_space<vmem>>, vector<2x32xf32>
    tpu.vector_store %arg24[%c0_258, %c1024], %270 {strides = array<i32>} : memref<2x2656xf32, #tpu.memory_space<vmem>>, vector<2x32xf32>,
    %c33 = arith.constant 33 : index
    %c0_259 = arith.constant 0 : index
    %272 = vector.load %arg23[%c33, %c0_259] : memref<166x32xf32, #tpu.memory_space<vmem>>, vector<1x32xf32>
    %c116 = arith.constant 116 : index
    %c0_260 = arith.constant 0 : index
    %273 = vector.load %arg23[%c116, %c0_260] : memref<166x32xf32, #tpu.memory_space<vmem>>, vector<1x32xf32>
    %274 = tpu.concatenate %272, %273 in 0 : vector<1x32xf32>, vector<1x32xf32> -> vector<2x32xf32>
    %c0_261 = arith.constant 0 : index
    %c1056 = arith.constant 1056 : index
    %275 = vector.load %arg24[%c0_261, %c1056] : memref<2x2656xf32, #tpu.memory_space<vmem>>, vector<2x32xf32>
    tpu.vector_store %arg24[%c0_261, %c1056], %274 {strides = array<i32>} : memref<2x2656xf32, #tpu.memory_space<vmem>>, vector<2x32xf32>,
    %c34 = arith.constant 34 : index
    %c0_262 = arith.constant 0 : index
    %276 = vector.load %arg23[%c34, %c0_262] : memref<166x32xf32, #tpu.memory_space<vmem>>, vector<1x32xf32>
    %c117 = arith.constant 117 : index
    %c0_263 = arith.constant 0 : index
    %277 = vector.load %arg23[%c117, %c0_263] : memref<166x32xf32, #tpu.memory_space<vmem>>, vector<1x32xf32>
    %278 = tpu.concatenate %276, %277 in 0 : vector<1x32xf32>, vector<1x32xf32> -> vector<2x32xf32>
    %c0_264 = arith.constant 0 : index
    %c1088 = arith.constant 1088 : index
    %279 = vector.load %arg24[%c0_264, %c1088] : memref<2x2656xf32, #tpu.memory_space<vmem>>, vector<2x32xf32>
    tpu.vector_store %arg24[%c0_264, %c1088], %278 {strides = array<i32>} : memref<2x2656xf32, #tpu.memory_space<vmem>>, vector<2x32xf32>,
    %c35 = arith.constant 35 : index
    %c0_265 = arith.constant 0 : index
    %280 = vector.load %arg23[%c35, %c0_265] : memref<166x32xf32, #tpu.memory_space<vmem>>, vector<1x32xf32>
    %c118 = arith.constant 118 : index
    %c0_266 = arith.constant 0 : index
    %281 = vector.load %arg23[%c118, %c0_266] : memref<166x32xf32, #tpu.memory_space<vmem>>, vector<1x32xf32>
    %282 = tpu.concatenate %280, %281 in 0 : vector<1x32xf32>, vector<1x32xf32> -> vector<2x32xf32>
    %c0_267 = arith.constant 0 : index
    %c1120 = arith.constant 1120 : index
    %283 = vector.load %arg24[%c0_267, %c1120] : memref<2x2656xf32, #tpu.memory_space<vmem>>, vector<2x32xf32>
    tpu.vector_store %arg24[%c0_267, %c1120], %282 {strides = array<i32>} : memref<2x2656xf32, #tpu.memory_space<vmem>>, vector<2x32xf32>,
    %c36 = arith.constant 36 : index
    %c0_268 = arith.constant 0 : index
    %284 = vector.load %arg23[%c36, %c0_268] : memref<166x32xf32, #tpu.memory_space<vmem>>, vector<1x32xf32>
    %c119 = arith.constant 119 : index
    %c0_269 = arith.constant 0 : index
    %285 = vector.load %arg23[%c119, %c0_269] : memref<166x32xf32, #tpu.memory_space<vmem>>, vector<1x32xf32>
    %286 = tpu.concatenate %284, %285 in 0 : vector<1x32xf32>, vector<1x32xf32> -> vector<2x32xf32>
    %c0_270 = arith.constant 0 : index
    %c1152 = arith.constant 1152 : index
    %287 = vector.load %arg24[%c0_270, %c1152] : memref<2x2656xf32, #tpu.memory_space<vmem>>, vector<2x32xf32>
    tpu.vector_store %arg24[%c0_270, %c1152], %286 {strides = array<i32>} : memref<2x2656xf32, #tpu.memory_space<vmem>>, vector<2x32xf32>,
    %c37 = arith.constant 37 : index
    %c0_271 = arith.constant 0 : index
    %288 = vector.load %arg23[%c37, %c0_271] : memref<166x32xf32, #tpu.memory_space<vmem>>, vector<1x32xf32>
    %c120 = arith.constant 120 : index
    %c0_272 = arith.constant 0 : index
    %289 = vector.load %arg23[%c120, %c0_272] : memref<166x32xf32, #tpu.memory_space<vmem>>, vector<1x32xf32>
    %290 = tpu.concatenate %288, %289 in 0 : vector<1x32xf32>, vector<1x32xf32> -> vector<2x32xf32>
    %c0_273 = arith.constant 0 : index
    %c1184 = arith.constant 1184 : index
    %291 = vector.load %arg24[%c0_273, %c1184] : memref<2x2656xf32, #tpu.memory_space<vmem>>, vector<2x32xf32>
    tpu.vector_store %arg24[%c0_273, %c1184], %290 {strides = array<i32>} : memref<2x2656xf32, #tpu.memory_space<vmem>>, vector<2x32xf32>,
    %c38_274 = arith.constant 38 : index
    %c0_275 = arith.constant 0 : index
    %292 = vector.load %arg23[%c38_274, %c0_275] : memref<166x32xf32, #tpu.memory_space<vmem>>, vector<1x32xf32>
    %c121_276 = arith.constant 121 : index
    %c0_277 = arith.constant 0 : index
    %293 = vector.load %arg23[%c121_276, %c0_277] : memref<166x32xf32, #tpu.memory_space<vmem>>, vector<1x32xf32>
    %294 = tpu.concatenate %292, %293 in 0 : vector<1x32xf32>, vector<1x32xf32> -> vector<2x32xf32>
    %c0_278 = arith.constant 0 : index
    %c1216 = arith.constant 1216 : index
    %295 = vector.load %arg24[%c0_278, %c1216] : memref<2x2656xf32, #tpu.memory_space<vmem>>, vector<2x32xf32>
    tpu.vector_store %arg24[%c0_278, %c1216], %294 {strides = array<i32>} : memref<2x2656xf32, #tpu.memory_space<vmem>>, vector<2x32xf32>,
    %c39 = arith.constant 39 : index
    %c0_279 = arith.constant 0 : index
    %296 = vector.load %arg23[%c39, %c0_279] : memref<166x32xf32, #tpu.memory_space<vmem>>, vector<1x32xf32>
    %c122 = arith.constant 122 : index
    %c0_280 = arith.constant 0 : index
    %297 = vector.load %arg23[%c122, %c0_280] : memref<166x32xf32, #tpu.memory_space<vmem>>, vector<1x32xf32>
    %298 = tpu.concatenate %296, %297 in 0 : vector<1x32xf32>, vector<1x32xf32> -> vector<2x32xf32>
    %c0_281 = arith.constant 0 : index
    %c1248 = arith.constant 1248 : index
    %299 = vector.load %arg24[%c0_281, %c1248] : memref<2x2656xf32, #tpu.memory_space<vmem>>, vector<2x32xf32>
    tpu.vector_store %arg24[%c0_281, %c1248], %298 {strides = array<i32>} : memref<2x2656xf32, #tpu.memory_space<vmem>>, vector<2x32xf32>,
    %c40 = arith.constant 40 : index
    %c0_282 = arith.constant 0 : index
    %300 = vector.load %arg23[%c40, %c0_282] : memref<166x32xf32, #tpu.memory_space<vmem>>, vector<1x32xf32>
    %c123 = arith.constant 123 : index
    %c0_283 = arith.constant 0 : index
    %301 = vector.load %arg23[%c123, %c0_283] : memref<166x32xf32, #tpu.memory_space<vmem>>, vector<1x32xf32>
    %302 = tpu.concatenate %300, %301 in 0 : vector<1x32xf32>, vector<1x32xf32> -> vector<2x32xf32>
    %c0_284 = arith.constant 0 : index
    %c1280 = arith.constant 1280 : index
    %303 = vector.load %arg24[%c0_284, %c1280] : memref<2x2656xf32, #tpu.memory_space<vmem>>, vector<2x32xf32>
    tpu.vector_store %arg24[%c0_284, %c1280], %302 {strides = array<i32>} : memref<2x2656xf32, #tpu.memory_space<vmem>>, vector<2x32xf32>,
    %c41 = arith.constant 41 : index
    %c0_285 = arith.constant 0 : index
    %304 = vector.load %arg23[%c41, %c0_285] : memref<166x32xf32, #tpu.memory_space<vmem>>, vector<1x32xf32>
    %c124 = arith.constant 124 : index
    %c0_286 = arith.constant 0 : index
    %305 = vector.load %arg23[%c124, %c0_286] : memref<166x32xf32, #tpu.memory_space<vmem>>, vector<1x32xf32>
    %306 = tpu.concatenate %304, %305 in 0 : vector<1x32xf32>, vector<1x32xf32> -> vector<2x32xf32>
    %c0_287 = arith.constant 0 : index
    %c1312 = arith.constant 1312 : index
    %307 = vector.load %arg24[%c0_287, %c1312] : memref<2x2656xf32, #tpu.memory_space<vmem>>, vector<2x32xf32>
    tpu.vector_store %arg24[%c0_287, %c1312], %306 {strides = array<i32>} : memref<2x2656xf32, #tpu.memory_space<vmem>>, vector<2x32xf32>,
    %c42 = arith.constant 42 : index
    %c0_288 = arith.constant 0 : index
    %308 = vector.load %arg23[%c42, %c0_288] : memref<166x32xf32, #tpu.memory_space<vmem>>, vector<1x32xf32>
    %c125 = arith.constant 125 : index
    %c0_289 = arith.constant 0 : index
    %309 = vector.load %arg23[%c125, %c0_289] : memref<166x32xf32, #tpu.memory_space<vmem>>, vector<1x32xf32>
    %310 = tpu.concatenate %308, %309 in 0 : vector<1x32xf32>, vector<1x32xf32> -> vector<2x32xf32>
    %c0_290 = arith.constant 0 : index
    %c1344 = arith.constant 1344 : index
    %311 = vector.load %arg24[%c0_290, %c1344] : memref<2x2656xf32, #tpu.memory_space<vmem>>, vector<2x32xf32>
    tpu.vector_store %arg24[%c0_290, %c1344], %310 {strides = array<i32>} : memref<2x2656xf32, #tpu.memory_space<vmem>>, vector<2x32xf32>,
    %c43 = arith.constant 43 : index
    %c0_291 = arith.constant 0 : index
    %312 = vector.load %arg23[%c43, %c0_291] : memref<166x32xf32, #tpu.memory_space<vmem>>, vector<1x32xf32>
    %c126 = arith.constant 126 : index
    %c0_292 = arith.constant 0 : index
    %313 = vector.load %arg23[%c126, %c0_292] : memref<166x32xf32, #tpu.memory_space<vmem>>, vector<1x32xf32>
    %314 = tpu.concatenate %312, %313 in 0 : vector<1x32xf32>, vector<1x32xf32> -> vector<2x32xf32>
    %c0_293 = arith.constant 0 : index
    %c1376 = arith.constant 1376 : index
    %315 = vector.load %arg24[%c0_293, %c1376] : memref<2x2656xf32, #tpu.memory_space<vmem>>, vector<2x32xf32>
    tpu.vector_store %arg24[%c0_293, %c1376], %314 {strides = array<i32>} : memref<2x2656xf32, #tpu.memory_space<vmem>>, vector<2x32xf32>,
    %c44 = arith.constant 44 : index
    %c0_294 = arith.constant 0 : index
    %316 = vector.load %arg23[%c44, %c0_294] : memref<166x32xf32, #tpu.memory_space<vmem>>, vector<1x32xf32>
    %c127 = arith.constant 127 : index
    %c0_295 = arith.constant 0 : index
    %317 = vector.load %arg23[%c127, %c0_295] : memref<166x32xf32, #tpu.memory_space<vmem>>, vector<1x32xf32>
    %318 = tpu.concatenate %316, %317 in 0 : vector<1x32xf32>, vector<1x32xf32> -> vector<2x32xf32>
    %c0_296 = arith.constant 0 : index
    %c1408 = arith.constant 1408 : index
    %319 = vector.load %arg24[%c0_296, %c1408] : memref<2x2656xf32, #tpu.memory_space<vmem>>, vector<2x32xf32>
    tpu.vector_store %arg24[%c0_296, %c1408], %318 {strides = array<i32>} : memref<2x2656xf32, #tpu.memory_space<vmem>>, vector<2x32xf32>,
    %c45 = arith.constant 45 : index
    %c0_297 = arith.constant 0 : index
    %320 = vector.load %arg23[%c45, %c0_297] : memref<166x32xf32, #tpu.memory_space<vmem>>, vector<1x32xf32>
    %c128_298 = arith.constant 128 : index
    %c0_299 = arith.constant 0 : index
    %321 = vector.load %arg23[%c128_298, %c0_299] : memref<166x32xf32, #tpu.memory_space<vmem>>, vector<1x32xf32>
    %322 = tpu.concatenate %320, %321 in 0 : vector<1x32xf32>, vector<1x32xf32> -> vector<2x32xf32>
    %c0_300 = arith.constant 0 : index
    %c1440 = arith.constant 1440 : index
    %323 = vector.load %arg24[%c0_300, %c1440] : memref<2x2656xf32, #tpu.memory_space<vmem>>, vector<2x32xf32>
    tpu.vector_store %arg24[%c0_300, %c1440], %322 {strides = array<i32>} : memref<2x2656xf32, #tpu.memory_space<vmem>>, vector<2x32xf32>,
    %c46 = arith.constant 46 : index
    %c0_301 = arith.constant 0 : index
    %324 = vector.load %arg23[%c46, %c0_301] : memref<166x32xf32, #tpu.memory_space<vmem>>, vector<1x32xf32>
    %c129 = arith.constant 129 : index
    %c0_302 = arith.constant 0 : index
    %325 = vector.load %arg23[%c129, %c0_302] : memref<166x32xf32, #tpu.memory_space<vmem>>, vector<1x32xf32>
    %326 = tpu.concatenate %324, %325 in 0 : vector<1x32xf32>, vector<1x32xf32> -> vector<2x32xf32>
    %c0_303 = arith.constant 0 : index
    %c1472 = arith.constant 1472 : index
    %327 = vector.load %arg24[%c0_303, %c1472] : memref<2x2656xf32, #tpu.memory_space<vmem>>, vector<2x32xf32>
    tpu.vector_store %arg24[%c0_303, %c1472], %326 {strides = array<i32>} : memref<2x2656xf32, #tpu.memory_space<vmem>>, vector<2x32xf32>,
    %c47 = arith.constant 47 : index
    %c0_304 = arith.constant 0 : index
    %328 = vector.load %arg23[%c47, %c0_304] : memref<166x32xf32, #tpu.memory_space<vmem>>, vector<1x32xf32>
    %c130 = arith.constant 130 : index
    %c0_305 = arith.constant 0 : index
    %329 = vector.load %arg23[%c130, %c0_305] : memref<166x32xf32, #tpu.memory_space<vmem>>, vector<1x32xf32>
    %330 = tpu.concatenate %328, %329 in 0 : vector<1x32xf32>, vector<1x32xf32> -> vector<2x32xf32>
    %c0_306 = arith.constant 0 : index
    %c1504 = arith.constant 1504 : index
    %331 = vector.load %arg24[%c0_306, %c1504] : memref<2x2656xf32, #tpu.memory_space<vmem>>, vector<2x32xf32>
    tpu.vector_store %arg24[%c0_306, %c1504], %330 {strides = array<i32>} : memref<2x2656xf32, #tpu.memory_space<vmem>>, vector<2x32xf32>,
    %c48 = arith.constant 48 : index
    %c0_307 = arith.constant 0 : index
    %332 = vector.load %arg23[%c48, %c0_307] : memref<166x32xf32, #tpu.memory_space<vmem>>, vector<1x32xf32>
    %c131 = arith.constant 131 : index
    %c0_308 = arith.constant 0 : index
    %333 = vector.load %arg23[%c131, %c0_308] : memref<166x32xf32, #tpu.memory_space<vmem>>, vector<1x32xf32>
    %334 = tpu.concatenate %332, %333 in 0 : vector<1x32xf32>, vector<1x32xf32> -> vector<2x32xf32>
    %c0_309 = arith.constant 0 : index
    %c1536 = arith.constant 1536 : index
    %335 = vector.load %arg24[%c0_309, %c1536] : memref<2x2656xf32, #tpu.memory_space<vmem>>, vector<2x32xf32>
    tpu.vector_store %arg24[%c0_309, %c1536], %334 {strides = array<i32>} : memref<2x2656xf32, #tpu.memory_space<vmem>>, vector<2x32xf32>,
    %c49 = arith.constant 49 : index
    %c0_310 = arith.constant 0 : index
    %336 = vector.load %arg23[%c49, %c0_310] : memref<166x32xf32, #tpu.memory_space<vmem>>, vector<1x32xf32>
    %c132 = arith.constant 132 : index
    %c0_311 = arith.constant 0 : index
    %337 = vector.load %arg23[%c132, %c0_311] : memref<166x32xf32, #tpu.memory_space<vmem>>, vector<1x32xf32>
    %338 = tpu.concatenate %336, %337 in 0 : vector<1x32xf32>, vector<1x32xf32> -> vector<2x32xf32>
    %c0_312 = arith.constant 0 : index
    %c1568 = arith.constant 1568 : index
    %339 = vector.load %arg24[%c0_312, %c1568] : memref<2x2656xf32, #tpu.memory_space<vmem>>, vector<2x32xf32>
    tpu.vector_store %arg24[%c0_312, %c1568], %338 {strides = array<i32>} : memref<2x2656xf32, #tpu.memory_space<vmem>>, vector<2x32xf32>,
    %c50 = arith.constant 50 : index
    %c0_313 = arith.constant 0 : index
    %340 = vector.load %arg23[%c50, %c0_313] : memref<166x32xf32, #tpu.memory_space<vmem>>, vector<1x32xf32>
    %c133 = arith.constant 133 : index
    %c0_314 = arith.constant 0 : index
    %341 = vector.load %arg23[%c133, %c0_314] : memref<166x32xf32, #tpu.memory_space<vmem>>, vector<1x32xf32>
    %342 = tpu.concatenate %340, %341 in 0 : vector<1x32xf32>, vector<1x32xf32> -> vector<2x32xf32>
    %c0_315 = arith.constant 0 : index
    %c1600 = arith.constant 1600 : index
    %343 = vector.load %arg24[%c0_315, %c1600] : memref<2x2656xf32, #tpu.memory_space<vmem>>, vector<2x32xf32>
    tpu.vector_store %arg24[%c0_315, %c1600], %342 {strides = array<i32>} : memref<2x2656xf32, #tpu.memory_space<vmem>>, vector<2x32xf32>,
    %c51 = arith.constant 51 : index
    %c0_316 = arith.constant 0 : index
    %344 = vector.load %arg23[%c51, %c0_316] : memref<166x32xf32, #tpu.memory_space<vmem>>, vector<1x32xf32>
    %c134 = arith.constant 134 : index
    %c0_317 = arith.constant 0 : index
    %345 = vector.load %arg23[%c134, %c0_317] : memref<166x32xf32, #tpu.memory_space<vmem>>, vector<1x32xf32>
    %346 = tpu.concatenate %344, %345 in 0 : vector<1x32xf32>, vector<1x32xf32> -> vector<2x32xf32>
    %c0_318 = arith.constant 0 : index
    %c1632 = arith.constant 1632 : index
    %347 = vector.load %arg24[%c0_318, %c1632] : memref<2x2656xf32, #tpu.memory_space<vmem>>, vector<2x32xf32>
    tpu.vector_store %arg24[%c0_318, %c1632], %346 {strides = array<i32>} : memref<2x2656xf32, #tpu.memory_space<vmem>>, vector<2x32xf32>,
    %c52 = arith.constant 52 : index
    %c0_319 = arith.constant 0 : index
    %348 = vector.load %arg23[%c52, %c0_319] : memref<166x32xf32, #tpu.memory_space<vmem>>, vector<1x32xf32>
    %c135 = arith.constant 135 : index
    %c0_320 = arith.constant 0 : index
    %349 = vector.load %arg23[%c135, %c0_320] : memref<166x32xf32, #tpu.memory_space<vmem>>, vector<1x32xf32>
    %350 = tpu.concatenate %348, %349 in 0 : vector<1x32xf32>, vector<1x32xf32> -> vector<2x32xf32>
    %c0_321 = arith.constant 0 : index
    %c1664 = arith.constant 1664 : index
    %351 = vector.load %arg24[%c0_321, %c1664] : memref<2x2656xf32, #tpu.memory_space<vmem>>, vector<2x32xf32>
    tpu.vector_store %arg24[%c0_321, %c1664], %350 {strides = array<i32>} : memref<2x2656xf32, #tpu.memory_space<vmem>>, vector<2x32xf32>,
    %c53 = arith.constant 53 : index
    %c0_322 = arith.constant 0 : index
    %352 = vector.load %arg23[%c53, %c0_322] : memref<166x32xf32, #tpu.memory_space<vmem>>, vector<1x32xf32>
    %c136 = arith.constant 136 : index
    %c0_323 = arith.constant 0 : index
    %353 = vector.load %arg23[%c136, %c0_323] : memref<166x32xf32, #tpu.memory_space<vmem>>, vector<1x32xf32>
    %354 = tpu.concatenate %352, %353 in 0 : vector<1x32xf32>, vector<1x32xf32> -> vector<2x32xf32>
    %c0_324 = arith.constant 0 : index
    %c1696 = arith.constant 1696 : index
    %355 = vector.load %arg24[%c0_324, %c1696] : memref<2x2656xf32, #tpu.memory_space<vmem>>, vector<2x32xf32>
    tpu.vector_store %arg24[%c0_324, %c1696], %354 {strides = array<i32>} : memref<2x2656xf32, #tpu.memory_space<vmem>>, vector<2x32xf32>,
    %c54 = arith.constant 54 : index
    %c0_325 = arith.constant 0 : index
    %356 = vector.load %arg23[%c54, %c0_325] : memref<166x32xf32, #tpu.memory_space<vmem>>, vector<1x32xf32>
    %c137 = arith.constant 137 : index
    %c0_326 = arith.constant 0 : index
    %357 = vector.load %arg23[%c137, %c0_326] : memref<166x32xf32, #tpu.memory_space<vmem>>, vector<1x32xf32>
    %358 = tpu.concatenate %356, %357 in 0 : vector<1x32xf32>, vector<1x32xf32> -> vector<2x32xf32>
    %c0_327 = arith.constant 0 : index
    %c1728 = arith.constant 1728 : index
    %359 = vector.load %arg24[%c0_327, %c1728] : memref<2x2656xf32, #tpu.memory_space<vmem>>, vector<2x32xf32>
    tpu.vector_store %arg24[%c0_327, %c1728], %358 {strides = array<i32>} : memref<2x2656xf32, #tpu.memory_space<vmem>>, vector<2x32xf32>,
    %c55 = arith.constant 55 : index
    %c0_328 = arith.constant 0 : index
    %360 = vector.load %arg23[%c55, %c0_328] : memref<166x32xf32, #tpu.memory_space<vmem>>, vector<1x32xf32>
    %c138 = arith.constant 138 : index
    %c0_329 = arith.constant 0 : index
    %361 = vector.load %arg23[%c138, %c0_329] : memref<166x32xf32, #tpu.memory_space<vmem>>, vector<1x32xf32>
    %362 = tpu.concatenate %360, %361 in 0 : vector<1x32xf32>, vector<1x32xf32> -> vector<2x32xf32>
    %c0_330 = arith.constant 0 : index
    %c1760 = arith.constant 1760 : index
    %363 = vector.load %arg24[%c0_330, %c1760] : memref<2x2656xf32, #tpu.memory_space<vmem>>, vector<2x32xf32>
    tpu.vector_store %arg24[%c0_330, %c1760], %362 {strides = array<i32>} : memref<2x2656xf32, #tpu.memory_space<vmem>>, vector<2x32xf32>,
    %c56 = arith.constant 56 : index
    %c0_331 = arith.constant 0 : index
    %364 = vector.load %arg23[%c56, %c0_331] : memref<166x32xf32, #tpu.memory_space<vmem>>, vector<1x32xf32>
    %c139 = arith.constant 139 : index
    %c0_332 = arith.constant 0 : index
    %365 = vector.load %arg23[%c139, %c0_332] : memref<166x32xf32, #tpu.memory_space<vmem>>, vector<1x32xf32>
    %366 = tpu.concatenate %364, %365 in 0 : vector<1x32xf32>, vector<1x32xf32> -> vector<2x32xf32>
    %c0_333 = arith.constant 0 : index
    %c1792 = arith.constant 1792 : index
    %367 = vector.load %arg24[%c0_333, %c1792] : memref<2x2656xf32, #tpu.memory_space<vmem>>, vector<2x32xf32>
    tpu.vector_store %arg24[%c0_333, %c1792], %366 {strides = array<i32>} : memref<2x2656xf32, #tpu.memory_space<vmem>>, vector<2x32xf32>,
    %c57 = arith.constant 57 : index
    %c0_334 = arith.constant 0 : index
    %368 = vector.load %arg23[%c57, %c0_334] : memref<166x32xf32, #tpu.memory_space<vmem>>, vector<1x32xf32>
    %c140 = arith.constant 140 : index
    %c0_335 = arith.constant 0 : index
    %369 = vector.load %arg23[%c140, %c0_335] : memref<166x32xf32, #tpu.memory_space<vmem>>, vector<1x32xf32>
    %370 = tpu.concatenate %368, %369 in 0 : vector<1x32xf32>, vector<1x32xf32> -> vector<2x32xf32>
    %c0_336 = arith.constant 0 : index
    %c1824 = arith.constant 1824 : index
    %371 = vector.load %arg24[%c0_336, %c1824] : memref<2x2656xf32, #tpu.memory_space<vmem>>, vector<2x32xf32>
    tpu.vector_store %arg24[%c0_336, %c1824], %370 {strides = array<i32>} : memref<2x2656xf32, #tpu.memory_space<vmem>>, vector<2x32xf32>,
    %c58 = arith.constant 58 : index
    %c0_337 = arith.constant 0 : index
    %372 = vector.load %arg23[%c58, %c0_337] : memref<166x32xf32, #tpu.memory_space<vmem>>, vector<1x32xf32>
    %c141 = arith.constant 141 : index
    %c0_338 = arith.constant 0 : index
    %373 = vector.load %arg23[%c141, %c0_338] : memref<166x32xf32, #tpu.memory_space<vmem>>, vector<1x32xf32>
    %374 = tpu.concatenate %372, %373 in 0 : vector<1x32xf32>, vector<1x32xf32> -> vector<2x32xf32>
    %c0_339 = arith.constant 0 : index
    %c1856 = arith.constant 1856 : index
    %375 = vector.load %arg24[%c0_339, %c1856] : memref<2x2656xf32, #tpu.memory_space<vmem>>, vector<2x32xf32>
    tpu.vector_store %arg24[%c0_339, %c1856], %374 {strides = array<i32>} : memref<2x2656xf32, #tpu.memory_space<vmem>>, vector<2x32xf32>,
    %c59 = arith.constant 59 : index
    %c0_340 = arith.constant 0 : index
    %376 = vector.load %arg23[%c59, %c0_340] : memref<166x32xf32, #tpu.memory_space<vmem>>, vector<1x32xf32>
    %c142 = arith.constant 142 : index
    %c0_341 = arith.constant 0 : index
    %377 = vector.load %arg23[%c142, %c0_341] : memref<166x32xf32, #tpu.memory_space<vmem>>, vector<1x32xf32>
    %378 = tpu.concatenate %376, %377 in 0 : vector<1x32xf32>, vector<1x32xf32> -> vector<2x32xf32>
    %c0_342 = arith.constant 0 : index
    %c1888 = arith.constant 1888 : index
    %379 = vector.load %arg24[%c0_342, %c1888] : memref<2x2656xf32, #tpu.memory_space<vmem>>, vector<2x32xf32>
    tpu.vector_store %arg24[%c0_342, %c1888], %378 {strides = array<i32>} : memref<2x2656xf32, #tpu.memory_space<vmem>>, vector<2x32xf32>,
    %c60 = arith.constant 60 : index
    %c0_343 = arith.constant 0 : index
    %380 = vector.load %arg23[%c60, %c0_343] : memref<166x32xf32, #tpu.memory_space<vmem>>, vector<1x32xf32>
    %c143 = arith.constant 143 : index
    %c0_344 = arith.constant 0 : index
    %381 = vector.load %arg23[%c143, %c0_344] : memref<166x32xf32, #tpu.memory_space<vmem>>, vector<1x32xf32>
    %382 = tpu.concatenate %380, %381 in 0 : vector<1x32xf32>, vector<1x32xf32> -> vector<2x32xf32>
    %c0_345 = arith.constant 0 : index
    %c1920 = arith.constant 1920 : index
    %383 = vector.load %arg24[%c0_345, %c1920] : memref<2x2656xf32, #tpu.memory_space<vmem>>, vector<2x32xf32>
    tpu.vector_store %arg24[%c0_345, %c1920], %382 {strides = array<i32>} : memref<2x2656xf32, #tpu.memory_space<vmem>>, vector<2x32xf32>,
    %c61 = arith.constant 61 : index
    %c0_346 = arith.constant 0 : index
    %384 = vector.load %arg23[%c61, %c0_346] : memref<166x32xf32, #tpu.memory_space<vmem>>, vector<1x32xf32>
    %c144 = arith.constant 144 : index
    %c0_347 = arith.constant 0 : index
    %385 = vector.load %arg23[%c144, %c0_347] : memref<166x32xf32, #tpu.memory_space<vmem>>, vector<1x32xf32>
    %386 = tpu.concatenate %384, %385 in 0 : vector<1x32xf32>, vector<1x32xf32> -> vector<2x32xf32>
    %c0_348 = arith.constant 0 : index
    %c1952 = arith.constant 1952 : index
    %387 = vector.load %arg24[%c0_348, %c1952] : memref<2x2656xf32, #tpu.memory_space<vmem>>, vector<2x32xf32>
    tpu.vector_store %arg24[%c0_348, %c1952], %386 {strides = array<i32>} : memref<2x2656xf32, #tpu.memory_space<vmem>>, vector<2x32xf32>,
    %c62 = arith.constant 62 : index
    %c0_349 = arith.constant 0 : index
    %388 = vector.load %arg23[%c62, %c0_349] : memref<166x32xf32, #tpu.memory_space<vmem>>, vector<1x32xf32>
    %c145 = arith.constant 145 : index
    %c0_350 = arith.constant 0 : index
    %389 = vector.load %arg23[%c145, %c0_350] : memref<166x32xf32, #tpu.memory_space<vmem>>, vector<1x32xf32>
    %390 = tpu.concatenate %388, %389 in 0 : vector<1x32xf32>, vector<1x32xf32> -> vector<2x32xf32>
    %c0_351 = arith.constant 0 : index
    %c1984 = arith.constant 1984 : index
    %391 = vector.load %arg24[%c0_351, %c1984] : memref<2x2656xf32, #tpu.memory_space<vmem>>, vector<2x32xf32>
    tpu.vector_store %arg24[%c0_351, %c1984], %390 {strides = array<i32>} : memref<2x2656xf32, #tpu.memory_space<vmem>>, vector<2x32xf32>,
    %c63 = arith.constant 63 : index
    %c0_352 = arith.constant 0 : index
    %392 = vector.load %arg23[%c63, %c0_352] : memref<166x32xf32, #tpu.memory_space<vmem>>, vector<1x32xf32>
    %c146 = arith.constant 146 : index
    %c0_353 = arith.constant 0 : index
    %393 = vector.load %arg23[%c146, %c0_353] : memref<166x32xf32, #tpu.memory_space<vmem>>, vector<1x32xf32>
    %394 = tpu.concatenate %392, %393 in 0 : vector<1x32xf32>, vector<1x32xf32> -> vector<2x32xf32>
    %c0_354 = arith.constant 0 : index
    %c2016 = arith.constant 2016 : index
    %395 = vector.load %arg24[%c0_354, %c2016] : memref<2x2656xf32, #tpu.memory_space<vmem>>, vector<2x32xf32>
    tpu.vector_store %arg24[%c0_354, %c2016], %394 {strides = array<i32>} : memref<2x2656xf32, #tpu.memory_space<vmem>>, vector<2x32xf32>,
    %c64_355 = arith.constant 64 : index
    %c0_356 = arith.constant 0 : index
    %396 = vector.load %arg23[%c64_355, %c0_356] : memref<166x32xf32, #tpu.memory_space<vmem>>, vector<1x32xf32>
    %c147 = arith.constant 147 : index
    %c0_357 = arith.constant 0 : index
    %397 = vector.load %arg23[%c147, %c0_357] : memref<166x32xf32, #tpu.memory_space<vmem>>, vector<1x32xf32>
    %398 = tpu.concatenate %396, %397 in 0 : vector<1x32xf32>, vector<1x32xf32> -> vector<2x32xf32>
    %c0_358 = arith.constant 0 : index
    %c2048 = arith.constant 2048 : index
    %399 = vector.load %arg24[%c0_358, %c2048] : memref<2x2656xf32, #tpu.memory_space<vmem>>, vector<2x32xf32>
    tpu.vector_store %arg24[%c0_358, %c2048], %398 {strides = array<i32>} : memref<2x2656xf32, #tpu.memory_space<vmem>>, vector<2x32xf32>,
    %c65 = arith.constant 65 : index
    %c0_359 = arith.constant 0 : index
    %400 = vector.load %arg23[%c65, %c0_359] : memref<166x32xf32, #tpu.memory_space<vmem>>, vector<1x32xf32>
    %c148 = arith.constant 148 : index
    %c0_360 = arith.constant 0 : index
    %401 = vector.load %arg23[%c148, %c0_360] : memref<166x32xf32, #tpu.memory_space<vmem>>, vector<1x32xf32>
    %402 = tpu.concatenate %400, %401 in 0 : vector<1x32xf32>, vector<1x32xf32> -> vector<2x32xf32>
    %c0_361 = arith.constant 0 : index
    %c2080 = arith.constant 2080 : index
    %403 = vector.load %arg24[%c0_361, %c2080] : memref<2x2656xf32, #tpu.memory_space<vmem>>, vector<2x32xf32>
    tpu.vector_store %arg24[%c0_361, %c2080], %402 {strides = array<i32>} : memref<2x2656xf32, #tpu.memory_space<vmem>>, vector<2x32xf32>,
    %c66 = arith.constant 66 : index
    %c0_362 = arith.constant 0 : index
    %404 = vector.load %arg23[%c66, %c0_362] : memref<166x32xf32, #tpu.memory_space<vmem>>, vector<1x32xf32>
    %c149 = arith.constant 149 : index
    %c0_363 = arith.constant 0 : index
    %405 = vector.load %arg23[%c149, %c0_363] : memref<166x32xf32, #tpu.memory_space<vmem>>, vector<1x32xf32>
    %406 = tpu.concatenate %404, %405 in 0 : vector<1x32xf32>, vector<1x32xf32> -> vector<2x32xf32>
    %c0_364 = arith.constant 0 : index
    %c2112 = arith.constant 2112 : index
    %407 = vector.load %arg24[%c0_364, %c2112] : memref<2x2656xf32, #tpu.memory_space<vmem>>, vector<2x32xf32>
    tpu.vector_store %arg24[%c0_364, %c2112], %406 {strides = array<i32>} : memref<2x2656xf32, #tpu.memory_space<vmem>>, vector<2x32xf32>,
    %c67 = arith.constant 67 : index
    %c0_365 = arith.constant 0 : index
    %408 = vector.load %arg23[%c67, %c0_365] : memref<166x32xf32, #tpu.memory_space<vmem>>, vector<1x32xf32>
    %c150 = arith.constant 150 : index
    %c0_366 = arith.constant 0 : index
    %409 = vector.load %arg23[%c150, %c0_366] : memref<166x32xf32, #tpu.memory_space<vmem>>, vector<1x32xf32>
    %410 = tpu.concatenate %408, %409 in 0 : vector<1x32xf32>, vector<1x32xf32> -> vector<2x32xf32>
    %c0_367 = arith.constant 0 : index
    %c2144 = arith.constant 2144 : index
    %411 = vector.load %arg24[%c0_367, %c2144] : memref<2x2656xf32, #tpu.memory_space<vmem>>, vector<2x32xf32>
    tpu.vector_store %arg24[%c0_367, %c2144], %410 {strides = array<i32>} : memref<2x2656xf32, #tpu.memory_space<vmem>>, vector<2x32xf32>,
    %c68 = arith.constant 68 : index
    %c0_368 = arith.constant 0 : index
    %412 = vector.load %arg23[%c68, %c0_368] : memref<166x32xf32, #tpu.memory_space<vmem>>, vector<1x32xf32>
    %c151 = arith.constant 151 : index
    %c0_369 = arith.constant 0 : index
    %413 = vector.load %arg23[%c151, %c0_369] : memref<166x32xf32, #tpu.memory_space<vmem>>, vector<1x32xf32>
    %414 = tpu.concatenate %412, %413 in 0 : vector<1x32xf32>, vector<1x32xf32> -> vector<2x32xf32>
    %c0_370 = arith.constant 0 : index
    %c2176 = arith.constant 2176 : index
    %415 = vector.load %arg24[%c0_370, %c2176] : memref<2x2656xf32, #tpu.memory_space<vmem>>, vector<2x32xf32>
    tpu.vector_store %arg24[%c0_370, %c2176], %414 {strides = array<i32>} : memref<2x2656xf32, #tpu.memory_space<vmem>>, vector<2x32xf32>,
    %c69 = arith.constant 69 : index
    %c0_371 = arith.constant 0 : index
    %416 = vector.load %arg23[%c69, %c0_371] : memref<166x32xf32, #tpu.memory_space<vmem>>, vector<1x32xf32>
    %c152 = arith.constant 152 : index
    %c0_372 = arith.constant 0 : index
    %417 = vector.load %arg23[%c152, %c0_372] : memref<166x32xf32, #tpu.memory_space<vmem>>, vector<1x32xf32>
    %418 = tpu.concatenate %416, %417 in 0 : vector<1x32xf32>, vector<1x32xf32> -> vector<2x32xf32>
    %c0_373 = arith.constant 0 : index
    %c2208 = arith.constant 2208 : index
    %419 = vector.load %arg24[%c0_373, %c2208] : memref<2x2656xf32, #tpu.memory_space<vmem>>, vector<2x32xf32>
    tpu.vector_store %arg24[%c0_373, %c2208], %418 {strides = array<i32>} : memref<2x2656xf32, #tpu.memory_space<vmem>>, vector<2x32xf32>,
    %c70 = arith.constant 70 : index
    %c0_374 = arith.constant 0 : index
    %420 = vector.load %arg23[%c70, %c0_374] : memref<166x32xf32, #tpu.memory_space<vmem>>, vector<1x32xf32>
    %c153 = arith.constant 153 : index
    %c0_375 = arith.constant 0 : index
    %421 = vector.load %arg23[%c153, %c0_375] : memref<166x32xf32, #tpu.memory_space<vmem>>, vector<1x32xf32>
    %422 = tpu.concatenate %420, %421 in 0 : vector<1x32xf32>, vector<1x32xf32> -> vector<2x32xf32>
    %c0_376 = arith.constant 0 : index
    %c2240 = arith.constant 2240 : index
    %423 = vector.load %arg24[%c0_376, %c2240] : memref<2x2656xf32, #tpu.memory_space<vmem>>, vector<2x32xf32>
    tpu.vector_store %arg24[%c0_376, %c2240], %422 {strides = array<i32>} : memref<2x2656xf32, #tpu.memory_space<vmem>>, vector<2x32xf32>,
    %c71 = arith.constant 71 : index
    %c0_377 = arith.constant 0 : index
    %424 = vector.load %arg23[%c71, %c0_377] : memref<166x32xf32, #tpu.memory_space<vmem>>, vector<1x32xf32>
    %c154 = arith.constant 154 : index
    %c0_378 = arith.constant 0 : index
    %425 = vector.load %arg23[%c154, %c0_378] : memref<166x32xf32, #tpu.memory_space<vmem>>, vector<1x32xf32>
    %426 = tpu.concatenate %424, %425 in 0 : vector<1x32xf32>, vector<1x32xf32> -> vector<2x32xf32>
    %c0_379 = arith.constant 0 : index
    %c2272 = arith.constant 2272 : index
    %427 = vector.load %arg24[%c0_379, %c2272] : memref<2x2656xf32, #tpu.memory_space<vmem>>, vector<2x32xf32>
    tpu.vector_store %arg24[%c0_379, %c2272], %426 {strides = array<i32>} : memref<2x2656xf32, #tpu.memory_space<vmem>>, vector<2x32xf32>,
    %c72 = arith.constant 72 : index
    %c0_380 = arith.constant 0 : index
    %428 = vector.load %arg23[%c72, %c0_380] : memref<166x32xf32, #tpu.memory_space<vmem>>, vector<1x32xf32>
    %c155 = arith.constant 155 : index
    %c0_381 = arith.constant 0 : index
    %429 = vector.load %arg23[%c155, %c0_381] : memref<166x32xf32, #tpu.memory_space<vmem>>, vector<1x32xf32>
    %430 = tpu.concatenate %428, %429 in 0 : vector<1x32xf32>, vector<1x32xf32> -> vector<2x32xf32>
    %c0_382 = arith.constant 0 : index
    %c2304 = arith.constant 2304 : index
    %431 = vector.load %arg24[%c0_382, %c2304] : memref<2x2656xf32, #tpu.memory_space<vmem>>, vector<2x32xf32>
    tpu.vector_store %arg24[%c0_382, %c2304], %430 {strides = array<i32>} : memref<2x2656xf32, #tpu.memory_space<vmem>>, vector<2x32xf32>,
    %c73 = arith.constant 73 : index
    %c0_383 = arith.constant 0 : index
    %432 = vector.load %arg23[%c73, %c0_383] : memref<166x32xf32, #tpu.memory_space<vmem>>, vector<1x32xf32>
    %c156_384 = arith.constant 156 : index
    %c0_385 = arith.constant 0 : index
    %433 = vector.load %arg23[%c156_384, %c0_385] : memref<166x32xf32, #tpu.memory_space<vmem>>, vector<1x32xf32>
    %434 = tpu.concatenate %432, %433 in 0 : vector<1x32xf32>, vector<1x32xf32> -> vector<2x32xf32>
    %c0_386 = arith.constant 0 : index
    %c2336 = arith.constant 2336 : index
    %435 = vector.load %arg24[%c0_386, %c2336] : memref<2x2656xf32, #tpu.memory_space<vmem>>, vector<2x32xf32>
    tpu.vector_store %arg24[%c0_386, %c2336], %434 {strides = array<i32>} : memref<2x2656xf32, #tpu.memory_space<vmem>>, vector<2x32xf32>,
    %c74 = arith.constant 74 : index
    %c0_387 = arith.constant 0 : index
    %436 = vector.load %arg23[%c74, %c0_387] : memref<166x32xf32, #tpu.memory_space<vmem>>, vector<1x32xf32>
    %c157_388 = arith.constant 157 : index
    %c0_389 = arith.constant 0 : index
    %437 = vector.load %arg23[%c157_388, %c0_389] : memref<166x32xf32, #tpu.memory_space<vmem>>, vector<1x32xf32>
    %438 = tpu.concatenate %436, %437 in 0 : vector<1x32xf32>, vector<1x32xf32> -> vector<2x32xf32>
    %c0_390 = arith.constant 0 : index
    %c2368 = arith.constant 2368 : index
    %439 = vector.load %arg24[%c0_390, %c2368] : memref<2x2656xf32, #tpu.memory_space<vmem>>, vector<2x32xf32>
    tpu.vector_store %arg24[%c0_390, %c2368], %438 {strides = array<i32>} : memref<2x2656xf32, #tpu.memory_space<vmem>>, vector<2x32xf32>,
    %c75 = arith.constant 75 : index
    %c0_391 = arith.constant 0 : index
    %440 = vector.load %arg23[%c75, %c0_391] : memref<166x32xf32, #tpu.memory_space<vmem>>, vector<1x32xf32>
    %c158 = arith.constant 158 : index
    %c0_392 = arith.constant 0 : index
    %441 = vector.load %arg23[%c158, %c0_392] : memref<166x32xf32, #tpu.memory_space<vmem>>, vector<1x32xf32>
    %442 = tpu.concatenate %440, %441 in 0 : vector<1x32xf32>, vector<1x32xf32> -> vector<2x32xf32>
    %c0_393 = arith.constant 0 : index
    %c2400 = arith.constant 2400 : index
    %443 = vector.load %arg24[%c0_393, %c2400] : memref<2x2656xf32, #tpu.memory_space<vmem>>, vector<2x32xf32>
    tpu.vector_store %arg24[%c0_393, %c2400], %442 {strides = array<i32>} : memref<2x2656xf32, #tpu.memory_space<vmem>>, vector<2x32xf32>,
    %c76_394 = arith.constant 76 : index
    %c0_395 = arith.constant 0 : index
    %444 = vector.load %arg23[%c76_394, %c0_395] : memref<166x32xf32, #tpu.memory_space<vmem>>, vector<1x32xf32>
    %c159 = arith.constant 159 : index
    %c0_396 = arith.constant 0 : index
    %445 = vector.load %arg23[%c159, %c0_396] : memref<166x32xf32, #tpu.memory_space<vmem>>, vector<1x32xf32>
    %446 = tpu.concatenate %444, %445 in 0 : vector<1x32xf32>, vector<1x32xf32> -> vector<2x32xf32>
    %c0_397 = arith.constant 0 : index
    %c2432 = arith.constant 2432 : index
    %447 = vector.load %arg24[%c0_397, %c2432] : memref<2x2656xf32, #tpu.memory_space<vmem>>, vector<2x32xf32>
    tpu.vector_store %arg24[%c0_397, %c2432], %446 {strides = array<i32>} : memref<2x2656xf32, #tpu.memory_space<vmem>>, vector<2x32xf32>,
    %c77_398 = arith.constant 77 : index
    %c0_399 = arith.constant 0 : index
    %448 = vector.load %arg23[%c77_398, %c0_399] : memref<166x32xf32, #tpu.memory_space<vmem>>, vector<1x32xf32>
    %c160_400 = arith.constant 160 : index
    %c0_401 = arith.constant 0 : index
    %449 = vector.load %arg23[%c160_400, %c0_401] : memref<166x32xf32, #tpu.memory_space<vmem>>, vector<1x32xf32>
    %450 = tpu.concatenate %448, %449 in 0 : vector<1x32xf32>, vector<1x32xf32> -> vector<2x32xf32>
    %c0_402 = arith.constant 0 : index
    %c2464 = arith.constant 2464 : index
    %451 = vector.load %arg24[%c0_402, %c2464] : memref<2x2656xf32, #tpu.memory_space<vmem>>, vector<2x32xf32>
    tpu.vector_store %arg24[%c0_402, %c2464], %450 {strides = array<i32>} : memref<2x2656xf32, #tpu.memory_space<vmem>>, vector<2x32xf32>,
    %c78 = arith.constant 78 : index
    %c0_403 = arith.constant 0 : index
    %452 = vector.load %arg23[%c78, %c0_403] : memref<166x32xf32, #tpu.memory_space<vmem>>, vector<1x32xf32>
    %c161_404 = arith.constant 161 : index
    %c0_405 = arith.constant 0 : index
    %453 = vector.load %arg23[%c161_404, %c0_405] : memref<166x32xf32, #tpu.memory_space<vmem>>, vector<1x32xf32>
    %454 = tpu.concatenate %452, %453 in 0 : vector<1x32xf32>, vector<1x32xf32> -> vector<2x32xf32>
    %c0_406 = arith.constant 0 : index
    %c2496 = arith.constant 2496 : index
    %455 = vector.load %arg24[%c0_406, %c2496] : memref<2x2656xf32, #tpu.memory_space<vmem>>, vector<2x32xf32>
    tpu.vector_store %arg24[%c0_406, %c2496], %454 {strides = array<i32>} : memref<2x2656xf32, #tpu.memory_space<vmem>>, vector<2x32xf32>,
    %c79 = arith.constant 79 : index
    %c0_407 = arith.constant 0 : index
    %456 = vector.load %arg23[%c79, %c0_407] : memref<166x32xf32, #tpu.memory_space<vmem>>, vector<1x32xf32>
    %c162 = arith.constant 162 : index
    %c0_408 = arith.constant 0 : index
    %457 = vector.load %arg23[%c162, %c0_408] : memref<166x32xf32, #tpu.memory_space<vmem>>, vector<1x32xf32>
    %458 = tpu.concatenate %456, %457 in 0 : vector<1x32xf32>, vector<1x32xf32> -> vector<2x32xf32>
    %c0_409 = arith.constant 0 : index
    %c2528 = arith.constant 2528 : index
    %459 = vector.load %arg24[%c0_409, %c2528] : memref<2x2656xf32, #tpu.memory_space<vmem>>, vector<2x32xf32>
    tpu.vector_store %arg24[%c0_409, %c2528], %458 {strides = array<i32>} : memref<2x2656xf32, #tpu.memory_space<vmem>>, vector<2x32xf32>,
    %c80_410 = arith.constant 80 : index
    %c0_411 = arith.constant 0 : index
    %460 = vector.load %arg23[%c80_410, %c0_411] : memref<166x32xf32, #tpu.memory_space<vmem>>, vector<1x32xf32>
    %c163 = arith.constant 163 : index
    %c0_412 = arith.constant 0 : index
    %461 = vector.load %arg23[%c163, %c0_412] : memref<166x32xf32, #tpu.memory_space<vmem>>, vector<1x32xf32>
    %462 = tpu.concatenate %460, %461 in 0 : vector<1x32xf32>, vector<1x32xf32> -> vector<2x32xf32>
    %c0_413 = arith.constant 0 : index
    %c2560 = arith.constant 2560 : index
    %463 = vector.load %arg24[%c0_413, %c2560] : memref<2x2656xf32, #tpu.memory_space<vmem>>, vector<2x32xf32>
    tpu.vector_store %arg24[%c0_413, %c2560], %462 {strides = array<i32>} : memref<2x2656xf32, #tpu.memory_space<vmem>>, vector<2x32xf32>,
    %c81_414 = arith.constant 81 : index
    %c0_415 = arith.constant 0 : index
    %464 = vector.load %arg23[%c81_414, %c0_415] : memref<166x32xf32, #tpu.memory_space<vmem>>, vector<1x32xf32>
    %c164 = arith.constant 164 : index
    %c0_416 = arith.constant 0 : index
    %465 = vector.load %arg23[%c164, %c0_416] : memref<166x32xf32, #tpu.memory_space<vmem>>, vector<1x32xf32>
    %466 = tpu.concatenate %464, %465 in 0 : vector<1x32xf32>, vector<1x32xf32> -> vector<2x32xf32>
    %c0_417 = arith.constant 0 : index
    %c2592 = arith.constant 2592 : index
    %467 = vector.load %arg24[%c0_417, %c2592] : memref<2x2656xf32, #tpu.memory_space<vmem>>, vector<2x32xf32>
    tpu.vector_store %arg24[%c0_417, %c2592], %466 {strides = array<i32>} : memref<2x2656xf32, #tpu.memory_space<vmem>>, vector<2x32xf32>,
    %c82_418 = arith.constant 82 : index
    %c0_419 = arith.constant 0 : index
    %468 = vector.load %arg23[%c82_418, %c0_419] : memref<166x32xf32, #tpu.memory_space<vmem>>, vector<1x32xf32>
    %c165 = arith.constant 165 : index
    %c0_420 = arith.constant 0 : index
    %469 = vector.load %arg23[%c165, %c0_420] : memref<166x32xf32, #tpu.memory_space<vmem>>, vector<1x32xf32>
    %470 = tpu.concatenate %468, %469 in 0 : vector<1x32xf32>, vector<1x32xf32> -> vector<2x32xf32>
    %c0_421 = arith.constant 0 : index
    %c2624 = arith.constant 2624 : index
    %471 = vector.load %arg24[%c0_421, %c2624] : memref<2x2656xf32, #tpu.memory_space<vmem>>, vector<2x32xf32>
    tpu.vector_store %arg24[%c0_421, %c2624], %470 {strides = array<i32>} : memref<2x2656xf32, #tpu.memory_space<vmem>>, vector<2x32xf32>,
    %c0_422 = arith.constant 0 : index
    %c0_423 = arith.constant 0 : index
    %472 = vector.load %arg24[%c0_422, %c0_423] : memref<2x2656xf32, #tpu.memory_space<vmem>>, vector<2x2656xf32>
    %c0_424 = arith.constant 0 : index
    %c0_425 = arith.constant 0 : index
    %473 = vector.load %arg10[%c0_424, %c0_425] : memref<2656x32xf32, #tpu.memory_space<vmem>>, vector<2656x32xf32>
    %cst_426 = arith.constant dense<0.000000e+00> : vector<2x32xf32>
    %474 = tpu.matmul %472, %473, %cst_426 {dimension_numbers = #tpu.dot_dimension_numbers<[1], [0], [0], [1], [0, 0, 1, 1], [], []>} : vector<2x2656xf32>, vector<2656x32xf32>, vector<2x32xf32> -> vector<2x32xf32>
    %c0_427 = arith.constant 0 : index
    %c0_428 = arith.constant 0 : index
    %475 = vector.load %arg11[%c0_427, %c0_428] : memref<1x32xf32, #tpu.memory_space<vmem>>, vector<1x32xf32>
    %476 = vector.broadcast %475 : vector<1x32xf32> to vector<2x32xf32>
    %477 = arith.addf %474, %476 : vector<2x32xf32>
    %cst_429 = arith.constant 0.000000e+00 : f32
    %478 = vector.broadcast %cst_429 : f32 to vector<2x32xf32>
    %479 = arith.maximumf %477, %478 : vector<2x32xf32>
    %c0_430 = arith.constant 0 : index
    %c0_431 = arith.constant 0 : index
    %480 = vector.load %arg12[%c0_430, %c0_431] : memref<32x4xf32, #tpu.memory_space<vmem>>, vector<32x4xf32>
    %cst_432 = arith.constant dense<0.000000e+00> : vector<2x4xf32>
    %481 = tpu.matmul %479, %480, %cst_432 {dimension_numbers = #tpu.dot_dimension_numbers<[1], [0], [0], [1], [0, 0, 1, 1], [], []>} : vector<2x32xf32>, vector<32x4xf32>, vector<2x4xf32> -> vector<2x4xf32>
    %c0_433 = arith.constant 0 : index
    %c0_434 = arith.constant 0 : index
    %482 = vector.load %arg13[%c0_433, %c0_434] : memref<1x4xf32, #tpu.memory_space<vmem>>, vector<1x4xf32>
    %483 = vector.broadcast %482 : vector<1x4xf32> to vector<2x4xf32>
    %484 = arith.addf %481, %483 : vector<2x4xf32>
    %c0_435 = arith.constant 0 : index
    %c0_436 = arith.constant 0 : index
    %485 = vector.load %arg14[%c0_435, %c0_436] : memref<2x4xf32, #tpu.memory_space<vmem>>, vector<2x4xf32>
    tpu.vector_store %arg14[%c0_435, %c0_436], %484 {strides = array<i32>} : memref<2x4xf32, #tpu.memory_space<vmem>>, vector<2x4xf32>,
    return
  }
}

</mosaic_0001>

<llo_original>
// kernel: cnn_model_forward.1
$region0: #{cnn_model_forward.1}
  #allocation0 [shape = 'u32[]', space=smem, size = 0x4, offset = 0x4, fixed_abs, tag = 'smem constant byte address 0x4 - core index']
  #allocation1 [shape = 'u32[144,128]{1,0:T(1,128)}', space=vmem, size = 0x12000, scoped, tag = 'internal scratch']
  #allocation2 [shape = 'f32[320,32]{1,0:T(8,128)}', space=vmem, size = 0x28000, scoped, tag = 'scratch operand']
  #allocation3 [shape = 'f32[160,32]{1,0:T(8,128)}', space=vmem, size = 0x14000, scoped, tag = 'scratch operand']
  #allocation4 [shape = 'f32[160,96]{1,0:T(8,128)}', space=vmem, size = 0x14000, scoped, tag = 'scratch operand']
  #allocation5 [shape = 'f32[160,32]{1,0:T(8,128)}', space=vmem, size = 0x14000, scoped, tag = 'scratch operand']
  #allocation6 [shape = 'f32[368,32]{1,0:T(8,128)}', space=vmem, size = 0x2e000, scoped, tag = 'scratch operand']
  #allocation7 [shape = 'f32[192,32]{1,0:T(8,128)}', space=vmem, size = 0x18000, scoped, tag = 'scratch operand']
  #allocation8 [shape = 'f32[192,96]{1,0:T(8,128)}', space=vmem, size = 0x18000, scoped, tag = 'scratch operand']
  #allocation9 [shape = 'f32[192,32]{1,0:T(8,128)}', space=vmem, size = 0x18000, scoped, tag = 'scratch operand']
  #allocation10 [shape = 'f32[166,32]{1,0:T(8,128)}', space=vmem, size = 0x15000, scoped, tag = 'scratch operand']
  #allocation11 [shape = 'f32[2,2656]{1,0:T(2,128)}', space=vmem, size = 0x5400, scoped, tag = 'scratch operand']
  %s0 = inlined_call_operand.vmem [shape: f32[320,3], index: 0, kind: input, shape index: {}]
  %s1 = inlined_call_operand.vmem [shape: f32[368,3], index: 1, kind: input, shape index: {}]
  %s2 = inlined_call_operand.vmem [shape: f32[3,32], index: 2, kind: input, shape index: {}]
  %s3 = inlined_call_operand.vmem [shape: f32[1,32], index: 3, kind: input, shape index: {}]
  %s4 = inlined_call_operand.vmem [shape: f32[96,32], index: 4, kind: input, shape index: {}]
  %s5 = inlined_call_operand.vmem [shape: f32[1,32], index: 5, kind: input, shape index: {}]
  %s6 = inlined_call_operand.vmem [shape: f32[3,32], index: 6, kind: input, shape index: {}]
  %s7 = inlined_call_operand.vmem [shape: f32[1,32], index: 7, kind: input, shape index: {}]
  %s8 = inlined_call_operand.vmem [shape: f32[96,32], index: 8, kind: input, shape index: {}]
  %s9 = inlined_call_operand.vmem [shape: f32[1,32], index: 9, kind: input, shape index: {}]
  %s10 = inlined_call_operand.vmem [shape: f32[2656,32], index: 10, kind: input, shape index: {}]
  %s11 = inlined_call_operand.vmem [shape: f32[1,32], index: 11, kind: input, shape index: {}]
  %s12 = inlined_call_operand.vmem [shape: f32[32,4], index: 12, kind: input, shape index: {}]
  %s13 = inlined_call_operand.vmem [shape: f32[1,4], index: 13, kind: input, shape index: {}]
  %s14 = inlined_call_operand.hbm [shape: f32[2,4], index: 14, kind: output, shape index: {}]
  %s15 = sld [smem:[#allocation0]]
  $region66: #{cnn_model_forward.1} parent=0
    _
  %s17 = ssub.s32 1, %s15
  %s18 = scalar_select 0, %s17, %s15
  $region1: #{cnn_model_forward.1} parent=0
    #allocation12 [shape = 'u8[1024]{0}', space=vmem, size = 0x400, scoped, tag = 'output window, operand 0, single buffered']
    #allocation13 [shape = 's32[1]{0}', space=sflag, size = 0x4, scoped, tag = 'scoped memory for cnn_model_forward.1']
    %19 = vsyncpa [#allocation13], 0
    // Predicated region
    $region2: #{cnn_model_forward.1} parent=1 // pred_check
      _
    $region3: #{cnn_model_forward.1} parent=1 // pred_check_branch
      %21 = sbr.rel (0) target = $region5
    $region4: #{cnn_model_forward.1} parent=1 // pred_region
      _
    $region5: #{cnn_model_forward.1} parent=1 // pred_fallthru
      _
    // Predicated region
    $region6: #{cnn_model_forward.1} parent=1 // pred_check
      _
    $region7: #{cnn_model_forward.1} parent=1 // pred_check_branch
      %23 = sbr.rel (0) target = $region9
    $region8: #{cnn_model_forward.1} parent=1 // pred_region
      _
    $region9: #{cnn_model_forward.1} parent=1 // pred_fallthru
      _
    // Predicated region
    $region10: #{cnn_model_forward.1} parent=1 // pred_check
      _
    $region11: #{cnn_model_forward.1} parent=1 // pred_check_branch
      %25 = sbr.rel (0) target = $region13
    $region12: #{cnn_model_forward.1} parent=1 // pred_region
      _
    $region13: #{cnn_model_forward.1} parent=1 // pred_fallthru
      _
    // Predicated region
    $region14: #{cnn_model_forward.1} parent=1 // pred_check
      _
    $region15: #{cnn_model_forward.1} parent=1 // pred_check_branch
      %27 = sbr.rel (0) target = $region17
    $region16: #{cnn_model_forward.1} parent=1 // pred_region
      _
    $region17: #{cnn_model_forward.1} parent=1 // pred_fallthru
      _
    // Predicated region
    $region18: #{cnn_model_forward.1} parent=1 // pred_check
      _
    $region19: #{cnn_model_forward.1} parent=1 // pred_check_branch
      %29 = sbr.rel (0) target = $region21
    $region20: #{cnn_model_forward.1} parent=1 // pred_region
      _
    $region21: #{cnn_model_forward.1} parent=1 // pred_fallthru
      _
    // Predicated region
    $region22: #{cnn_model_forward.1} parent=1 // pred_check
      _
    $region23: #{cnn_model_forward.1} parent=1 // pred_check_branch
      %31 = sbr.rel (0) target = $region25
    $region24: #{cnn_model_forward.1} parent=1 // pred_region
      _
    $region25: #{cnn_model_forward.1} parent=1 // pred_fallthru
      _
    // Predicated region
    $region26: #{cnn_model_forward.1} parent=1 // pred_check
      _
    $region27: #{cnn_model_forward.1} parent=1 // pred_check_branch
      %33 = sbr.rel (0) target = $region29
    $region28: #{cnn_model_forward.1} parent=1 // pred_region
      _
    $region29: #{cnn_model_forward.1} parent=1 // pred_fallthru
      _
    // Predicated region
    $region30: #{cnn_model_forward.1} parent=1 // pred_check
      _
    $region31: #{cnn_model_forward.1} parent=1 // pred_check_branch
      %35 = sbr.rel (0) target = $region33
    $region32: #{cnn_model_forward.1} parent=1 // pred_region
      _
    $region33: #{cnn_model_forward.1} parent=1 // pred_fallthru
      _
    // Predicated region
    $region34: #{cnn_model_forward.1} parent=1 // pred_check
      _
    $region35: #{cnn_model_forward.1} parent=1 // pred_check_branch
      %37 = sbr.rel (0) target = $region37
    $region36: #{cnn_model_forward.1} parent=1 // pred_region
      _
    $region37: #{cnn_model_forward.1} parent=1 // pred_fallthru
      _
    // Predicated region
    $region38: #{cnn_model_forward.1} parent=1 // pred_check
      _
    $region39: #{cnn_model_forward.1} parent=1 // pred_check_branch
      %39 = sbr.rel (0) target = $region41
    $region40: #{cnn_model_forward.1} parent=1 // pred_region
      _
    $region41: #{cnn_model_forward.1} parent=1 // pred_fallthru
      _
    // Predicated region
    $region42: #{cnn_model_forward.1} parent=1 // pred_check
      _
    $region43: #{cnn_model_forward.1} parent=1 // pred_check_branch
      %41 = sbr.rel (0) target = $region45
    $region44: #{cnn_model_forward.1} parent=1 // pred_region
      _
    $region45: #{cnn_model_forward.1} parent=1 // pred_fallthru
      _
    // Predicated region
    $region46: #{cnn_model_forward.1} parent=1 // pred_check
      _
    $region47: #{cnn_model_forward.1} parent=1 // pred_check_branch
      %43 = sbr.rel (0) target = $region49
    $region48: #{cnn_model_forward.1} parent=1 // pred_region
      _
    $region49: #{cnn_model_forward.1} parent=1 // pred_fallthru
      _
    // Predicated region
    $region50: #{cnn_model_forward.1} parent=1 // pred_check
      _
    $region51: #{cnn_model_forward.1} parent=1 // pred_check_branch
      %45 = sbr.rel (0) target = $region53
    $region52: #{cnn_model_forward.1} parent=1 // pred_region
      _
    $region53: #{cnn_model_forward.1} parent=1 // pred_fallthru
      _
    // Predicated region
    $region54: #{cnn_model_forward.1} parent=1 // pred_check
      _
    $region55: #{cnn_model_forward.1} parent=1 // pred_check_branch
      %47 = sbr.rel (0) target = $region57
    $region56: #{cnn_model_forward.1} parent=1 // pred_region
      _
    $region57: #{cnn_model_forward.1} parent=1 // pred_fallthru
      _
    %v48 = vld [vmem:[%s0] sm:$0xff]
    %v49 = vld [vmem:[%s0 + $0x8] sm:$0xff]
    %v50 = vld [vmem:[%s0 + $0x10] sm:$0xff]
    %v51 = vld [vmem:[%s0 + $0x18] sm:$0xff]
    %v52 = vld [vmem:[%s0 + $0x20] sm:$0xff]
    %v53 = vld [vmem:[%s0 + $0x28] sm:$0xff]
    %v54 = vld [vmem:[%s0 + $0x30] sm:$0xff]
    %v55 = vld [vmem:[%s0 + $0x38] sm:$0xff]
    %v56 = vld [vmem:[%s0 + $0x40] sm:$0xff]
    %v57 = vld [vmem:[%s0 + $0x48] sm:$0xff]
    %v58 = vld [vmem:[%s0 + $0x50] sm:$0xff]
    %v59 = vld [vmem:[%s0 + $0x58] sm:$0xff]
    %v60 = vld [vmem:[%s0 + $0x60] sm:$0xff]
    %v61 = vld [vmem:[%s0 + $0x68] sm:$0xff]
    %v62 = vld [vmem:[%s0 + $0x70] sm:$0xff]
    %v63 = vld [vmem:[%s0 + $0x78] sm:$0xff]
    %v64 = vld [vmem:[%s0 + $0x80] sm:$0xff]
    %v65 = vld [vmem:[%s0 + $0x88] sm:$0xff]
    %v66 = vld [vmem:[%s0 + $0x90] sm:$0xff]
    %v67 = vld [vmem:[%s0 + $0x98] sm:$0xff]
    %v68 = vld [vmem:[%s0 + $0xa0] sm:$0xff]
    %v69 = vld [vmem:[%s0 + $0xa8] sm:$0xff]
    %v70 = vld [vmem:[%s0 + $0xb0] sm:$0xff]
    %v71 = vld [vmem:[%s0 + $0xb8] sm:$0xff]
    %v72 = vld [vmem:[%s0 + $0xc0] sm:$0xff]
    %v73 = vld [vmem:[%s0 + $0xc8] sm:$0xff]
    %v74 = vld [vmem:[%s0 + $0xd0] sm:$0xff]
    %v75 = vld [vmem:[%s0 + $0xd8] sm:$0xff]
    %v76 = vld [vmem:[%s0 + $0xe0] sm:$0xff]
    %v77 = vld [vmem:[%s0 + $0xe8] sm:$0xff]
    %v78 = vld [vmem:[%s0 + $0xf0] sm:$0xff]
    %v79 = vld [vmem:[%s0 + $0xf8] sm:$0xff]
    %v80 = vld [vmem:[%s0 + $0x100] sm:$0xff]
    %v81 = vld [vmem:[%s0 + $0x108] sm:$0xff]
    %v82 = vld [vmem:[%s0 + $0x110] sm:$0xff]
    %v83 = vld [vmem:[%s0 + $0x118] sm:$0xff]
    %v84 = vld [vmem:[%s0 + $0x120] sm:$0xff]
    %v85 = vld [vmem:[%s0 + $0x128] sm:$0xff]
    %v86 = vld [vmem:[%s0 + $0x130] sm:$0xff]
    %v87 = vld [vmem:[%s0 + $0x138] sm:$0xff]
    %v88 = vld [vmem:[%s3] sm:$0x1]
    %v89 = vld [vmem:[%s2] sm:$0x1]
    %91 = vset.pattern.permute.xlu0 0
    %92 = vperm.xlu0 %91, %v48
    %v93 = vpop.permute.xlu0 %92
    %96 = vset.pattern.permute.xlu0 0
    %97 = vperm.xlu0 %96, %v49
    %v98 = vpop.permute.xlu0 %97
    %101 = vset.pattern.permute.xlu0 0
    %102 = vperm.xlu0 %101, %v50
    %v103 = vpop.permute.xlu0 %102
    %106 = vset.pattern.permute.xlu0 0
    %107 = vperm.xlu0 %106, %v51
    %v108 = vpop.permute.xlu0 %107
    %111 = vset.pattern.permute.xlu0 0
    %112 = vperm.xlu0 %111, %v52
    %v113 = vpop.permute.xlu0 %112
    %116 = vset.pattern.permute.xlu0 0
    %117 = vperm.xlu0 %116, %v53
    %v118 = vpop.permute.xlu0 %117
    %121 = vset.pattern.permute.xlu0 0
    %122 = vperm.xlu0 %121, %v54
    %v123 = vpop.permute.xlu0 %122
    %126 = vset.pattern.permute.xlu0 0
    %127 = vperm.xlu0 %126, %v55
    %v128 = vpop.permute.xlu0 %127
    %131 = vset.pattern.permute.xlu0 0
    %132 = vperm.xlu0 %131, %v56
    %v133 = vpop.permute.xlu0 %132
    %136 = vset.pattern.permute.xlu0 0
    %137 = vperm.xlu0 %136, %v57
    %v138 = vpop.permute.xlu0 %137
    %141 = vset.pattern.permute.xlu0 0
    %142 = vperm.xlu0 %141, %v58
    %v143 = vpop.permute.xlu0 %142
    %146 = vset.pattern.permute.xlu0 0
    %147 = vperm.xlu0 %146, %v59
    %v148 = vpop.permute.xlu0 %147
    %151 = vset.pattern.permute.xlu0 0
    %152 = vperm.xlu0 %151, %v60
    %v153 = vpop.permute.xlu0 %152
    %156 = vset.pattern.permute.xlu0 0
    %157 = vperm.xlu0 %156, %v61
    %v158 = vpop.permute.xlu0 %157
    %161 = vset.pattern.permute.xlu0 0
    %162 = vperm.xlu0 %161, %v62
    %v163 = vpop.permute.xlu0 %162
    %166 = vset.pattern.permute.xlu0 0
    %167 = vperm.xlu0 %166, %v63
    %v168 = vpop.permute.xlu0 %167
    %171 = vset.pattern.permute.xlu0 0
    %172 = vperm.xlu0 %171, %v64
    %v173 = vpop.permute.xlu0 %172
    %176 = vset.pattern.permute.xlu0 0
    %177 = vperm.xlu0 %176, %v65
    %v178 = vpop.permute.xlu0 %177
    %181 = vset.pattern.permute.xlu0 0
    %182 = vperm.xlu0 %181, %v66
    %v183 = vpop.permute.xlu0 %182
    %186 = vset.pattern.permute.xlu0 0
    %187 = vperm.xlu0 %186, %v67
    %v188 = vpop.permute.xlu0 %187
    %191 = vset.pattern.permute.xlu0 0
    %192 = vperm.xlu0 %191, %v68
    %v193 = vpop.permute.xlu0 %192
    %196 = vset.pattern.permute.xlu0 0
    %197 = vperm.xlu0 %196, %v69
    %v198 = vpop.permute.xlu0 %197
    %201 = vset.pattern.permute.xlu0 0
    %202 = vperm.xlu0 %201, %v70
    %v203 = vpop.permute.xlu0 %202
    %206 = vset.pattern.permute.xlu0 0
    %207 = vperm.xlu0 %206, %v71
    %v208 = vpop.permute.xlu0 %207
    %211 = vset.pattern.permute.xlu0 0
    %212 = vperm.xlu0 %211, %v72
    %v213 = vpop.permute.xlu0 %212
    %216 = vset.pattern.permute.xlu0 0
    %217 = vperm.xlu0 %216, %v73
    %v218 = vpop.permute.xlu0 %217
    %221 = vset.pattern.permute.xlu0 0
    %222 = vperm.xlu0 %221, %v74
    %v223 = vpop.permute.xlu0 %222
    %226 = vset.pattern.permute.xlu0 0
    %227 = vperm.xlu0 %226, %v75
    %v228 = vpop.permute.xlu0 %227
    %231 = vset.pattern.permute.xlu0 0
    %232 = vperm.xlu0 %231, %v76
    %v233 = vpop.permute.xlu0 %232
    %236 = vset.pattern.permute.xlu0 0
    %237 = vperm.xlu0 %236, %v77
    %v238 = vpop.permute.xlu0 %237
    %241 = vset.pattern.permute.xlu0 0
    %242 = vperm.xlu0 %241, %v78
    %v243 = vpop.permute.xlu0 %242
    %246 = vset.pattern.permute.xlu0 0
    %247 = vperm.xlu0 %246, %v79
    %v248 = vpop.permute.xlu0 %247
    %251 = vset.pattern.permute.xlu0 0
    %252 = vperm.xlu0 %251, %v80
    %v253 = vpop.permute.xlu0 %252
    %256 = vset.pattern.permute.xlu0 0
    %257 = vperm.xlu0 %256, %v81
    %v258 = vpop.permute.xlu0 %257
    %261 = vset.pattern.permute.xlu0 0
    %262 = vperm.xlu0 %261, %v82
    %v263 = vpop.permute.xlu0 %262
    %266 = vset.pattern.permute.xlu0 0
    %267 = vperm.xlu0 %266, %v83
    %v268 = vpop.permute.xlu0 %267
    %271 = vset.pattern.permute.xlu0 0
    %272 = vperm.xlu0 %271, %v84
    %v273 = vpop.permute.xlu0 %272
    %276 = vset.pattern.permute.xlu0 0
    %277 = vperm.xlu0 %276, %v85
    %v278 = vpop.permute.xlu0 %277
    %281 = vset.pattern.permute.xlu0 0
    %282 = vperm.xlu0 %281, %v86
    %v283 = vpop.permute.xlu0 %282
    %286 = vset.pattern.permute.xlu0 0
    %287 = vperm.xlu0 %286, %v87
    %v288 = vpop.permute.xlu0 %287
    %v290 = vlaneseq
    %v291 = vshrl.u32 %v290, 7
    %v292 = vsub.s32 0, %v291
    %v293 = vrot.slane %v89, %v292
    %v294 = vmul.f32 %v93, %v293
    %v295 = vmul.f32 %v98, %v293
    %v296 = vmul.f32 %v103, %v293
    %v297 = vmul.f32 %v108, %v293
    %v298 = vmul.f32 %v113, %v293
    %v299 = vmul.f32 %v118, %v293
    %v300 = vmul.f32 %v123, %v293
    %v301 = vmul.f32 %v128, %v293
    %v302 = vmul.f32 %v133, %v293
    %v303 = vmul.f32 %v138, %v293
    %v304 = vmul.f32 %v143, %v293
    %v305 = vmul.f32 %v148, %v293
    %v306 = vmul.f32 %v153, %v293
    %v307 = vmul.f32 %v158, %v293
    %v308 = vmul.f32 %v163, %v293
    %v309 = vmul.f32 %v168, %v293
    %v310 = vmul.f32 %v173, %v293
    %v311 = vmul.f32 %v178, %v293
    %v312 = vmul.f32 %v183, %v293
    %v313 = vmul.f32 %v188, %v293
    %v314 = vmul.f32 %v193, %v293
    %v315 = vmul.f32 %v198, %v293
    %v316 = vmul.f32 %v203, %v293
    %v317 = vmul.f32 %v208, %v293
    %v318 = vmul.f32 %v213, %v293
    %v319 = vmul.f32 %v218, %v293
    %v320 = vmul.f32 %v223, %v293
    %v321 = vmul.f32 %v228, %v293
    %v322 = vmul.f32 %v233, %v293
    %v323 = vmul.f32 %v238, %v293
    %v324 = vmul.f32 %v243, %v293
    %v325 = vmul.f32 %v248, %v293
    %v326 = vmul.f32 %v253, %v293
    %v327 = vmul.f32 %v258, %v293
    %v328 = vmul.f32 %v263, %v293
    %v329 = vmul.f32 %v268, %v293
    %v330 = vmul.f32 %v273, %v293
    %v331 = vmul.f32 %v278, %v293
    %v332 = vmul.f32 %v283, %v293
    %v333 = vmul.f32 %v288, %v293
    %v335 = vlaneseq
    %v336 = vshrl.u32 %v335, 7
    %v337 = vsub.s32 0, %v336
    %v338 = vrot.slane %v88, %v337
    %v340 = vadd.f32 %v338, %v294
    %v341 = vadd.f32 %v338, %v295
    %v342 = vadd.f32 %v338, %v296
    %v343 = vadd.f32 %v338, %v297
    %v344 = vadd.f32 %v338, %v298
    %v345 = vadd.f32 %v338, %v299
    %v346 = vadd.f32 %v338, %v300
    %v347 = vadd.f32 %v338, %v301
    %v348 = vadd.f32 %v338, %v302
    %v349 = vadd.f32 %v338, %v303
    %v350 = vadd.f32 %v338, %v304
    %v351 = vadd.f32 %v338, %v305
    %v352 = vadd.f32 %v338, %v306
    %v353 = vadd.f32 %v338, %v307
    %v354 = vadd.f32 %v338, %v308
    %v355 = vadd.f32 %v338, %v309
    %v356 = vadd.f32 %v338, %v310
    %v357 = vadd.f32 %v338, %v311
    %v358 = vadd.f32 %v338, %v312
    %v359 = vadd.f32 %v338, %v313
    %v360 = vadd.f32 %v338, %v314
    %v361 = vadd.f32 %v338, %v315
    %v362 = vadd.f32 %v338, %v316
    %v363 = vadd.f32 %v338, %v317
    %v364 = vadd.f32 %v338, %v318
    %v365 = vadd.f32 %v338, %v319
    %v366 = vadd.f32 %v338, %v320
    %v367 = vadd.f32 %v338, %v321
    %v368 = vadd.f32 %v338, %v322
    %v369 = vadd.f32 %v338, %v323
    %v370 = vadd.f32 %v338, %v324
    %v371 = vadd.f32 %v338, %v325
    %v372 = vadd.f32 %v338, %v326
    %v373 = vadd.f32 %v338, %v327
    %v374 = vadd.f32 %v338, %v328
    %v375 = vadd.f32 %v338, %v329
    %v376 = vadd.f32 %v338, %v330
    %v377 = vadd.f32 %v338, %v331
    %v378 = vadd.f32 %v338, %v332
    %v379 = vadd.f32 %v338, %v333
    %v380 = vld [vmem:[%s2 + $0x1] sm:$0x1]
    %381 = vset.pattern.permute.xlu0 1
    %382 = vperm.xlu0 %381, %v48
    %v383 = vpop.permute.xlu0 %382
    %385 = vset.pattern.permute.xlu0 1
    %386 = vperm.xlu0 %385, %v49
    %v387 = vpop.permute.xlu0 %386
    %389 = vset.pattern.permute.xlu0 1
    %390 = vperm.xlu0 %389, %v50
    %v391 = vpop.permute.xlu0 %390
    %393 = vset.pattern.permute.xlu0 1
    %394 = vperm.xlu0 %393, %v51
    %v395 = vpop.permute.xlu0 %394
    %397 = vset.pattern.permute.xlu0 1
    %398 = vperm.xlu0 %397, %v52
    %v399 = vpop.permute.xlu0 %398
    %401 = vset.pattern.permute.xlu0 1
    %402 = vperm.xlu0 %401, %v53
    %v403 = vpop.permute.xlu0 %402
    %405 = vset.pattern.permute.xlu0 1
    %406 = vperm.xlu0 %405, %v54
    %v407 = vpop.permute.xlu0 %406
    %409 = vset.pattern.permute.xlu0 1
    %410 = vperm.xlu0 %409, %v55
    %v411 = vpop.permute.xlu0 %410
    %413 = vset.pattern.permute.xlu0 1
    %414 = vperm.xlu0 %413, %v56
    %v415 = vpop.permute.xlu0 %414
    %417 = vset.pattern.permute.xlu0 1
    %418 = vperm.xlu0 %417, %v57
    %v419 = vpop.permute.xlu0 %418
    %421 = vset.pattern.permute.xlu0 1
    %422 = vperm.xlu0 %421, %v58
    %v423 = vpop.permute.xlu0 %422
    %425 = vset.pattern.permute.xlu0 1
    %426 = vperm.xlu0 %425, %v59
    %v427 = vpop.permute.xlu0 %426
    %429 = vset.pattern.permute.xlu0 1
    %430 = vperm.xlu0 %429, %v60
    %v431 = vpop.permute.xlu0 %430
    %433 = vset.pattern.permute.xlu0 1
    %434 = vperm.xlu0 %433, %v61
    %v435 = vpop.permute.xlu0 %434
    %437 = vset.pattern.permute.xlu0 1
    %438 = vperm.xlu0 %437, %v62
    %v439 = vpop.permute.xlu0 %438
    %441 = vset.pattern.permute.xlu0 1
    %442 = vperm.xlu0 %441, %v63
    %v443 = vpop.permute.xlu0 %442
    %445 = vset.pattern.permute.xlu0 1
    %446 = vperm.xlu0 %445, %v64
    %v447 = vpop.permute.xlu0 %446
    %449 = vset.pattern.permute.xlu0 1
    %450 = vperm.xlu0 %449, %v65
    %v451 = vpop.permute.xlu0 %450
    %453 = vset.pattern.permute.xlu0 1
    %454 = vperm.xlu0 %453, %v66
    %v455 = vpop.permute.xlu0 %454
    %457 = vset.pattern.permute.xlu0 1
    %458 = vperm.xlu0 %457, %v67
    %v459 = vpop.permute.xlu0 %458
    %461 = vset.pattern.permute.xlu0 1
    %462 = vperm.xlu0 %461, %v68
    %v463 = vpop.permute.xlu0 %462
    %465 = vset.pattern.permute.xlu0 1
    %466 = vperm.xlu0 %465, %v69
    %v467 = vpop.permute.xlu0 %466
    %469 = vset.pattern.permute.xlu0 1
    %470 = vperm.xlu0 %469, %v70
    %v471 = vpop.permute.xlu0 %470
    %473 = vset.pattern.permute.xlu0 1
    %474 = vperm.xlu0 %473, %v71
    %v475 = vpop.permute.xlu0 %474
    %477 = vset.pattern.permute.xlu0 1
    %478 = vperm.xlu0 %477, %v72
    %v479 = vpop.permute.xlu0 %478
    %481 = vset.pattern.permute.xlu0 1
    %482 = vperm.xlu0 %481, %v73
    %v483 = vpop.permute.xlu0 %482
    %485 = vset.pattern.permute.xlu0 1
    %486 = vperm.xlu0 %485, %v74
    %v487 = vpop.permute.xlu0 %486
    %489 = vset.pattern.permute.xlu0 1
    %490 = vperm.xlu0 %489, %v75
    %v491 = vpop.permute.xlu0 %490
    %493 = vset.pattern.permute.xlu0 1
    %494 = vperm.xlu0 %493, %v76
    %v495 = vpop.permute.xlu0 %494
    %497 = vset.pattern.permute.xlu0 1
    %498 = vperm.xlu0 %497, %v77
    %v499 = vpop.permute.xlu0 %498
    %501 = vset.pattern.permute.xlu0 1
    %502 = vperm.xlu0 %501, %v78
    %v503 = vpop.permute.xlu0 %502
    %505 = vset.pattern.permute.xlu0 1
    %506 = vperm.xlu0 %505, %v79
    %v507 = vpop.permute.xlu0 %506
    %509 = vset.pattern.permute.xlu0 1
    %510 = vperm.xlu0 %509, %v80
    %v511 = vpop.permute.xlu0 %510
    %513 = vset.pattern.permute.xlu0 1
    %514 = vperm.xlu0 %513, %v81
    %v515 = vpop.permute.xlu0 %514
    %517 = vset.pattern.permute.xlu0 1
    %518 = vperm.xlu0 %517, %v82
    %v519 = vpop.permute.xlu0 %518
    %521 = vset.pattern.permute.xlu0 1
    %522 = vperm.xlu0 %521, %v83
    %v523 = vpop.permute.xlu0 %522
    %525 = vset.pattern.permute.xlu0 1
    %526 = vperm.xlu0 %525, %v84
    %v527 = vpop.permute.xlu0 %526
    %529 = vset.pattern.permute.xlu0 1
    %530 = vperm.xlu0 %529, %v85
    %v531 = vpop.permute.xlu0 %530
    %533 = vset.pattern.permute.xlu0 1
    %534 = vperm.xlu0 %533, %v86
    %v535 = vpop.permute.xlu0 %534
    %537 = vset.pattern.permute.xlu0 1
    %538 = vperm.xlu0 %537, %v87
    %v539 = vpop.permute.xlu0 %538
    %v541 = vlaneseq
    %v542 = vshrl.u32 %v541, 7
    %v543 = vsub.s32 0, %v542
    %v544 = vrot.slane %v380, %v543
    %v545 = vmul.f32 %v383, %v544
    %v546 = vmul.f32 %v387, %v544
    %v547 = vmul.f32 %v391, %v544
    %v548 = vmul.f32 %v395, %v544
    %v549 = vmul.f32 %v399, %v544
    %v550 = vmul.f32 %v403, %v544
    %v551 = vmul.f32 %v407, %v544
    %v552 = vmul.f32 %v411, %v544
    %v553 = vmul.f32 %v415, %v544
    %v554 = vmul.f32 %v419, %v544
    %v555 = vmul.f32 %v423, %v544
    %v556 = vmul.f32 %v427, %v544
    %v557 = vmul.f32 %v431, %v544
    %v558 = vmul.f32 %v435, %v544
    %v559 = vmul.f32 %v439, %v544
    %v560 = vmul.f32 %v443, %v544
    %v561 = vmul.f32 %v447, %v544
    %v562 = vmul.f32 %v451, %v544
    %v563 = vmul.f32 %v455, %v544
    %v564 = vmul.f32 %v459, %v544
    %v565 = vmul.f32 %v463, %v544
    %v566 = vmul.f32 %v467, %v544
    %v567 = vmul.f32 %v471, %v544
    %v568 = vmul.f32 %v475, %v544
    %v569 = vmul.f32 %v479, %v544
    %v570 = vmul.f32 %v483, %v544
    %v571 = vmul.f32 %v487, %v544
    %v572 = vmul.f32 %v491, %v544
    %v573 = vmul.f32 %v495, %v544
    %v574 = vmul.f32 %v499, %v544
    %v575 = vmul.f32 %v503, %v544
    %v576 = vmul.f32 %v507, %v544
    %v577 = vmul.f32 %v511, %v544
    %v578 = vmul.f32 %v515, %v544
    %v579 = vmul.f32 %v519, %v544
    %v580 = vmul.f32 %v523, %v544
    %v581 = vmul.f32 %v527, %v544
    %v582 = vmul.f32 %v531, %v544
    %v583 = vmul.f32 %v535, %v544
    %v584 = vmul.f32 %v539, %v544
    %v585 = vadd.f32 %v340, %v545
    %v586 = vadd.f32 %v341, %v546
    %v587 = vadd.f32 %v342, %v547
    %v588 = vadd.f32 %v343, %v548
    %v589 = vadd.f32 %v344, %v549
    %v590 = vadd.f32 %v345, %v550
    %v591 = vadd.f32 %v346, %v551
    %v592 = vadd.f32 %v347, %v552
    %v593 = vadd.f32 %v348, %v553
    %v594 = vadd.f32 %v349, %v554
    %v595 = vadd.f32 %v350, %v555
    %v596 = vadd.f32 %v351, %v556
    %v597 = vadd.f32 %v352, %v557
    %v598 = vadd.f32 %v353, %v558
    %v599 = vadd.f32 %v354, %v559
    %v600 = vadd.f32 %v355, %v560
    %v601 = vadd.f32 %v356, %v561
    %v602 = vadd.f32 %v357, %v562
    %v603 = vadd.f32 %v358, %v563
    %v604 = vadd.f32 %v359, %v564
    %v605 = vadd.f32 %v360, %v565
    %v606 = vadd.f32 %v361, %v566
    %v607 = vadd.f32 %v362, %v567
    %v608 = vadd.f32 %v363, %v568
    %v609 = vadd.f32 %v364, %v569
    %v610 = vadd.f32 %v365, %v570
    %v611 = vadd.f32 %v366, %v571
    %v612 = vadd.f32 %v367, %v572
    %v613 = vadd.f32 %v368, %v573
    %v614 = vadd.f32 %v369, %v574
    %v615 = vadd.f32 %v370, %v575
    %v616 = vadd.f32 %v371, %v576
    %v617 = vadd.f32 %v372, %v577
    %v618 = vadd.f32 %v373, %v578
    %v619 = vadd.f32 %v374, %v579
    %v620 = vadd.f32 %v375, %v580
    %v621 = vadd.f32 %v376, %v581
    %v622 = vadd.f32 %v377, %v582
    %v623 = vadd.f32 %v378, %v583
    %v624 = vadd.f32 %v379, %v584
    %v625 = vld [vmem:[%s2 + $0x2] sm:$0x1]
    %626 = vset.pattern.permute.xlu0 2
    %627 = vperm.xlu0 %626, %v48
    %v628 = vpop.permute.xlu0 %627
    %630 = vset.pattern.permute.xlu0 2
    %631 = vperm.xlu0 %630, %v49
    %v632 = vpop.permute.xlu0 %631
    %634 = vset.pattern.permute.xlu0 2
    %635 = vperm.xlu0 %634, %v50
    %v636 = vpop.permute.xlu0 %635
    %638 = vset.pattern.permute.xlu0 2
    %639 = vperm.xlu0 %638, %v51
    %v640 = vpop.permute.xlu0 %639
    %642 = vset.pattern.permute.xlu0 2
    %643 = vperm.xlu0 %642, %v52
    %v644 = vpop.permute.xlu0 %643
    %646 = vset.pattern.permute.xlu0 2
    %647 = vperm.xlu0 %646, %v53
    %v648 = vpop.permute.xlu0 %647
    %650 = vset.pattern.permute.xlu0 2
    %651 = vperm.xlu0 %650, %v54
    %v652 = vpop.permute.xlu0 %651
    %654 = vset.pattern.permute.xlu0 2
    %655 = vperm.xlu0 %654, %v55
    %v656 = vpop.permute.xlu0 %655
    %658 = vset.pattern.permute.xlu0 2
    %659 = vperm.xlu0 %658, %v56
    %v660 = vpop.permute.xlu0 %659
    %662 = vset.pattern.permute.xlu0 2
    %663 = vperm.xlu0 %662, %v57
    %v664 = vpop.permute.xlu0 %663
    %666 = vset.pattern.permute.xlu0 2
    %667 = vperm.xlu0 %666, %v58
    %v668 = vpop.permute.xlu0 %667
    %670 = vset.pattern.permute.xlu0 2
    %671 = vperm.xlu0 %670, %v59
    %v672 = vpop.permute.xlu0 %671
    %674 = vset.pattern.permute.xlu0 2
    %675 = vperm.xlu0 %674, %v60
    %v676 = vpop.permute.xlu0 %675
    %678 = vset.pattern.permute.xlu0 2
    %679 = vperm.xlu0 %678, %v61
    %v680 = vpop.permute.xlu0 %679
    %682 = vset.pattern.permute.xlu0 2
    %683 = vperm.xlu0 %682, %v62
    %v684 = vpop.permute.xlu0 %683
    %686 = vset.pattern.permute.xlu0 2
    %687 = vperm.xlu0 %686, %v63
    %v688 = vpop.permute.xlu0 %687
    %690 = vset.pattern.permute.xlu0 2
    %691 = vperm.xlu0 %690, %v64
    %v692 = vpop.permute.xlu0 %691
    %694 = vset.pattern.permute.xlu0 2
    %695 = vperm.xlu0 %694, %v65
    %v696 = vpop.permute.xlu0 %695
    %698 = vset.pattern.permute.xlu0 2
    %699 = vperm.xlu0 %698, %v66
    %v700 = vpop.permute.xlu0 %699
    %702 = vset.pattern.permute.xlu0 2
    %703 = vperm.xlu0 %702, %v67
    %v704 = vpop.permute.xlu0 %703
    %706 = vset.pattern.permute.xlu0 2
    %707 = vperm.xlu0 %706, %v68
    %v708 = vpop.permute.xlu0 %707
    %710 = vset.pattern.permute.xlu0 2
    %711 = vperm.xlu0 %710, %v69
    %v712 = vpop.permute.xlu0 %711
    %714 = vset.pattern.permute.xlu0 2
    %715 = vperm.xlu0 %714, %v70
    %v716 = vpop.permute.xlu0 %715
    %718 = vset.pattern.permute.xlu0 2
    %719 = vperm.xlu0 %718, %v71
    %v720 = vpop.permute.xlu0 %719
    %722 = vset.pattern.permute.xlu0 2
    %723 = vperm.xlu0 %722, %v72
    %v724 = vpop.permute.xlu0 %723
    %726 = vset.pattern.permute.xlu0 2
    %727 = vperm.xlu0 %726, %v73
    %v728 = vpop.permute.xlu0 %727
    %730 = vset.pattern.permute.xlu0 2
    %731 = vperm.xlu0 %730, %v74
    %v732 = vpop.permute.xlu0 %731
    %734 = vset.pattern.permute.xlu0 2
    %735 = vperm.xlu0 %734, %v75
    %v736 = vpop.permute.xlu0 %735
    %738 = vset.pattern.permute.xlu0 2
    %739 = vperm.xlu0 %738, %v76
    %v740 = vpop.permute.xlu0 %739
    %742 = vset.pattern.permute.xlu0 2
    %743 = vperm.xlu0 %742, %v77
    %v744 = vpop.permute.xlu0 %743
    %746 = vset.pattern.permute.xlu0 2
    %747 = vperm.xlu0 %746, %v78
    %v748 = vpop.permute.xlu0 %747
    %750 = vset.pattern.permute.xlu0 2
    %751 = vperm.xlu0 %750, %v79
    %v752 = vpop.permute.xlu0 %751
    %754 = vset.pattern.permute.xlu0 2
    %755 = vperm.xlu0 %754, %v80
    %v756 = vpop.permute.xlu0 %755
    %758 = vset.pattern.permute.xlu0 2
    %759 = vperm.xlu0 %758, %v81
    %v760 = vpop.permute.xlu0 %759
    %762 = vset.pattern.permute.xlu0 2
    %763 = vperm.xlu0 %762, %v82
    %v764 = vpop.permute.xlu0 %763
    %766 = vset.pattern.permute.xlu0 2
    %767 = vperm.xlu0 %766, %v83
    %v768 = vpop.permute.xlu0 %767
    %770 = vset.pattern.permute.xlu0 2
    %771 = vperm.xlu0 %770, %v84
    %v772 = vpop.permute.xlu0 %771
    %774 = vset.pattern.permute.xlu0 2
    %775 = vperm.xlu0 %774, %v85
    %v776 = vpop.permute.xlu0 %775
    %778 = vset.pattern.permute.xlu0 2
    %779 = vperm.xlu0 %778, %v86
    %v780 = vpop.permute.xlu0 %779
    %782 = vset.pattern.permute.xlu0 2
    %783 = vperm.xlu0 %782, %v87
    %v784 = vpop.permute.xlu0 %783
    %v786 = vlaneseq
    %v787 = vshrl.u32 %v786, 7
    %v788 = vsub.s32 0, %v787
    %v789 = vrot.slane %v625, %v788
    %v790 = vmul.f32 %v628, %v789
    %v791 = vmul.f32 %v632, %v789
    %v792 = vmul.f32 %v636, %v789
    %v793 = vmul.f32 %v640, %v789
    %v794 = vmul.f32 %v644, %v789
    %v795 = vmul.f32 %v648, %v789
    %v796 = vmul.f32 %v652, %v789
    %v797 = vmul.f32 %v656, %v789
    %v798 = vmul.f32 %v660, %v789
    %v799 = vmul.f32 %v664, %v789
    %v800 = vmul.f32 %v668, %v789
    %v801 = vmul.f32 %v672, %v789
    %v802 = vmul.f32 %v676, %v789
    %v803 = vmul.f32 %v680, %v789
    %v804 = vmul.f32 %v684, %v789
    %v805 = vmul.f32 %v688, %v789
    %v806 = vmul.f32 %v692, %v789
    %v807 = vmul.f32 %v696, %v789
    %v808 = vmul.f32 %v700, %v789
    %v809 = vmul.f32 %v704, %v789
    %v810 = vmul.f32 %v708, %v789
    %v811 = vmul.f32 %v712, %v789
    %v812 = vmul.f32 %v716, %v789
    %v813 = vmul.f32 %v720, %v789
    %v814 = vmul.f32 %v724, %v789
    %v815 = vmul.f32 %v728, %v789
    %v816 = vmul.f32 %v732, %v789
    %v817 = vmul.f32 %v736, %v789
    %v818 = vmul.f32 %v740, %v789
    %v819 = vmul.f32 %v744, %v789
    %v820 = vmul.f32 %v748, %v789
    %v821 = vmul.f32 %v752, %v789
    %v822 = vmul.f32 %v756, %v789
    %v823 = vmul.f32 %v760, %v789
    %v824 = vmul.f32 %v764, %v789
    %v825 = vmul.f32 %v768, %v789
    %v826 = vmul.f32 %v772, %v789
    %v827 = vmul.f32 %v776, %v789
    %v828 = vmul.f32 %v780, %v789
    %v829 = vmul.f32 %v784, %v789
    %v830 = vadd.f32 %v585, %v790
    %v831 = vadd.f32 %v586, %v791
    %v832 = vadd.f32 %v587, %v792
    %v833 = vadd.f32 %v588, %v793
    %v834 = vadd.f32 %v589, %v794
    %v835 = vadd.f32 %v590, %v795
    %v836 = vadd.f32 %v591, %v796
    %v837 = vadd.f32 %v592, %v797
    %v838 = vadd.f32 %v593, %v798
    %v839 = vadd.f32 %v594, %v799
    %v840 = vadd.f32 %v595, %v800
    %v841 = vadd.f32 %v596, %v801
    %v842 = vadd.f32 %v597, %v802
    %v843 = vadd.f32 %v598, %v803
    %v844 = vadd.f32 %v599, %v804
    %v845 = vadd.f32 %v600, %v805
    %v846 = vadd.f32 %v601, %v806
    %v847 = vadd.f32 %v602, %v807
    %v848 = vadd.f32 %v603, %v808
    %v849 = vadd.f32 %v604, %v809
    %v850 = vadd.f32 %v605, %v810
    %v851 = vadd.f32 %v606, %v811
    %v852 = vadd.f32 %v607, %v812
    %v853 = vadd.f32 %v608, %v813
    %v854 = vadd.f32 %v609, %v814
    %v855 = vadd.f32 %v610, %v815
    %v856 = vadd.f32 %v611, %v816
    %v857 = vadd.f32 %v612, %v817
    %v858 = vadd.f32 %v613, %v818
    %v859 = vadd.f32 %v614, %v819
    %v860 = vadd.f32 %v615, %v820
    %v861 = vadd.f32 %v616, %v821
    %v862 = vadd.f32 %v617, %v822
    %v863 = vadd.f32 %v618, %v823
    %v864 = vadd.f32 %v619, %v824
    %v865 = vadd.f32 %v620, %v825
    %v866 = vadd.f32 %v621, %v826
    %v867 = vadd.f32 %v622, %v827
    %v868 = vadd.f32 %v623, %v828
    %v869 = vadd.f32 %v624, %v829
    %v870 = vmax.f32 %v830, 0.0
    %v871 = vmax.f32 %v831, 0.0
    %v872 = vmax.f32 %v832, 0.0
    %v873 = vmax.f32 %v833, 0.0
    %v874 = vmax.f32 %v834, 0.0
    %v875 = vmax.f32 %v835, 0.0
    %v876 = vmax.f32 %v836, 0.0
    %v877 = vmax.f32 %v837, 0.0
    %v878 = vmax.f32 %v838, 0.0
    %v879 = vmax.f32 %v839, 0.0
    %v880 = vmax.f32 %v840, 0.0
    %v881 = vmax.f32 %v841, 0.0
    %v882 = vmax.f32 %v842, 0.0
    %v883 = vmax.f32 %v843, 0.0
    %v884 = vmax.f32 %v844, 0.0
    %v885 = vmax.f32 %v845, 0.0
    %v886 = vmax.f32 %v846, 0.0
    %v887 = vmax.f32 %v847, 0.0
    %v888 = vmax.f32 %v848, 0.0
    %v889 = vmax.f32 %v849, 0.0
    %v890 = vmax.f32 %v850, 0.0
    %v891 = vmax.f32 %v851, 0.0
    %v892 = vmax.f32 %v852, 0.0
    %v893 = vmax.f32 %v853, 0.0
    %v894 = vmax.f32 %v854, 0.0
    %v895 = vmax.f32 %v855, 0.0
    %v896 = vmax.f32 %v856, 0.0
    %v897 = vmax.f32 %v857, 0.0
    %v898 = vmax.f32 %v858, 0.0
    %v899 = vmax.f32 %v859, 0.0
    %v900 = vmax.f32 %v860, 0.0
    %v901 = vmax.f32 %v861, 0.0
    %v902 = vmax.f32 %v862, 0.0
    %v903 = vmax.f32 %v863, 0.0
    %v904 = vmax.f32 %v864, 0.0
    %v905 = vmax.f32 %v865, 0.0
    %v906 = vmax.f32 %v866, 0.0
    %v907 = vmax.f32 %v867, 0.0
    %v908 = vmax.f32 %v868, 0.0
    %v909 = vmax.f32 %v869, 0.0
    %vm910 = vcmask 261120
    %911 = vst.msk [vmem:[#allocation2] sm:$0xff] %vm910, %v870
    %912 = vst.msk [vmem:[#allocation2 + $0x8] sm:$0xff] %vm910, %v871
    %913 = vst.msk [vmem:[#allocation2 + $0x10] sm:$0xff] %vm910, %v872
    %914 = vst.msk [vmem:[#allocation2 + $0x18] sm:$0xff] %vm910, %v873
    %915 = vst.msk [vmem:[#allocation2 + $0x20] sm:$0xff] %vm910, %v874
    %916 = vst.msk [vmem:[#allocation2 + $0x28] sm:$0xff] %vm910, %v875
    %917 = vst.msk [vmem:[#allocation2 + $0x30] sm:$0xff] %vm910, %v876
    %918 = vst.msk [vmem:[#allocation2 + $0x38] sm:$0xff] %vm910, %v877
    %919 = vst.msk [vmem:[#allocation2 + $0x40] sm:$0xff] %vm910, %v878
    %920 = vst.msk [vmem:[#allocation2 + $0x48] sm:$0xff] %vm910, %v879
    %921 = vst.msk [vmem:[#allocation2 + $0x50] sm:$0xff] %vm910, %v880
    %922 = vst.msk [vmem:[#allocation2 + $0x58] sm:$0xff] %vm910, %v881
    %923 = vst.msk [vmem:[#allocation2 + $0x60] sm:$0xff] %vm910, %v882
    %924 = vst.msk [vmem:[#allocation2 + $0x68] sm:$0xff] %vm910, %v883
    %925 = vst.msk [vmem:[#allocation2 + $0x70] sm:$0xff] %vm910, %v884
    %926 = vst.msk [vmem:[#allocation2 + $0x78] sm:$0xff] %vm910, %v885
    %927 = vst.msk [vmem:[#allocation2 + $0x80] sm:$0xff] %vm910, %v886
    %928 = vst.msk [vmem:[#allocation2 + $0x88] sm:$0xff] %vm910, %v887
    %929 = vst.msk [vmem:[#allocation2 + $0x90] sm:$0xff] %vm910, %v888
    %930 = vst.msk [vmem:[#allocation2 + $0x98] sm:$0xff] %vm910, %v889
    %931 = vst.msk [vmem:[#allocation2 + $0xa0] sm:$0xff] %vm910, %v890
    %932 = vst.msk [vmem:[#allocation2 + $0xa8] sm:$0xff] %vm910, %v891
    %933 = vst.msk [vmem:[#allocation2 + $0xb0] sm:$0xff] %vm910, %v892
    %934 = vst.msk [vmem:[#allocation2 + $0xb8] sm:$0xff] %vm910, %v893
    %935 = vst.msk [vmem:[#allocation2 + $0xc0] sm:$0xff] %vm910, %v894
    %936 = vst.msk [vmem:[#allocation2 + $0xc8] sm:$0xff] %vm910, %v895
    %937 = vst.msk [vmem:[#allocation2 + $0xd0] sm:$0xff] %vm910, %v896
    %938 = vst.msk [vmem:[#allocation2 + $0xd8] sm:$0xff] %vm910, %v897
    %939 = vst.msk [vmem:[#allocation2 + $0xe0] sm:$0xff] %vm910, %v898
    %940 = vst.msk [vmem:[#allocation2 + $0xe8] sm:$0xff] %vm910, %v899
    %941 = vst.msk [vmem:[#allocation2 + $0xf0] sm:$0xff] %vm910, %v900
    %942 = vst.msk [vmem:[#allocation2 + $0xf8] sm:$0xff] %vm910, %v901
    %943 = vst.msk [vmem:[#allocation2 + $0x100] sm:$0xff] %vm910, %v902
    %944 = vst.msk [vmem:[#allocation2 + $0x108] sm:$0xff] %vm910, %v903
    %945 = vst.msk [vmem:[#allocation2 + $0x110] sm:$0xff] %vm910, %v904
    %946 = vst.msk [vmem:[#allocation2 + $0x118] sm:$0xff] %vm910, %v905
    %947 = vst.msk [vmem:[#allocation2 + $0x120] sm:$0xff] %vm910, %v906
    %948 = vst.msk [vmem:[#allocation2 + $0x128] sm:$0xff] %vm910, %v907
    %949 = vst.msk [vmem:[#allocation2 + $0x130] sm:$0xff] %vm910, %v908
    %950 = vst.msk [vmem:[#allocation2 + $0x138] sm:$0xff] %vm910, %v909
    %v951 = vld [vmem:[#allocation2] ss:$2 sm:$0xff]
    %s952 = scalar_lea.vmem [#allocation2], 16
    %v953 = vld [vmem:[%s952] ss:$2 sm:$0xff]
    %s954 = scalar_lea.vmem [#allocation2], 32
    %v955 = vld [vmem:[%s954] ss:$2 sm:$0xff]
    %s956 = scalar_lea.vmem [#allocation2], 48
    %v957 = vld [vmem:[%s956] ss:$2 sm:$0xff]
    %s958 = scalar_lea.vmem [#allocation2], 64
    %v959 = vld [vmem:[%s958] ss:$2 sm:$0xff]
    %s960 = scalar_lea.vmem [#allocation2], 80
    %v961 = vld [vmem:[%s960] ss:$2 sm:$0xff]
    %s962 = scalar_lea.vmem [#allocation2], 96
    %v963 = vld [vmem:[%s962] ss:$2 sm:$0xff]
    %s964 = scalar_lea.vmem [#allocation2], 112
    %v965 = vld [vmem:[%s964] ss:$2 sm:$0xff]
    %s966 = scalar_lea.vmem [#allocation2], 128
    %v967 = vld [vmem:[%s966] ss:$2 sm:$0xff]
    %s968 = scalar_lea.vmem [#allocation2], 144
    %v969 = vld [vmem:[%s968] ss:$2 sm:$0xf]
    %s970 = scalar_lea.vmem [#allocation2], 1
    %v971 = vld [vmem:[%s970] ss:$2 sm:$0xff]
    %s972 = scalar_lea.vmem [#allocation2], 17
    %v973 = vld [vmem:[%s972] ss:$2 sm:$0xff]
    %s974 = scalar_lea.vmem [#allocation2], 33
    %v975 = vld [vmem:[%s974] ss:$2 sm:$0xff]
    %s976 = scalar_lea.vmem [#allocation2], 49
    %v977 = vld [vmem:[%s976] ss:$2 sm:$0xff]
    %s978 = scalar_lea.vmem [#allocation2], 65
    %v979 = vld [vmem:[%s978] ss:$2 sm:$0xff]
    %s980 = scalar_lea.vmem [#allocation2], 81
    %v981 = vld [vmem:[%s980] ss:$2 sm:$0xff]
    %s982 = scalar_lea.vmem [#allocation2], 97
    %v983 = vld [vmem:[%s982] ss:$2 sm:$0xff]
    %s984 = scalar_lea.vmem [#allocation2], 113
    %v985 = vld [vmem:[%s984] ss:$2 sm:$0xff]
    %s986 = scalar_lea.vmem [#allocation2], 129
    %v987 = vld [vmem:[%s986] ss:$2 sm:$0xff]
    %s988 = scalar_lea.vmem [#allocation2], 145
    %v989 = vld [vmem:[%s988] ss:$2 sm:$0xf]
    %v990 = vmax.f32 %v951, %v971
    %v991 = vmax.f32 %v953, %v973
    %v992 = vmax.f32 %v955, %v975
    %v993 = vmax.f32 %v957, %v977
    %v994 = vmax.f32 %v959, %v979
    %v995 = vmax.f32 %v961, %v981
    %v996 = vmax.f32 %v963, %v983
    %v997 = vmax.f32 %v965, %v985
    %v998 = vmax.f32 %v967, %v987
    %v999 = vmax.f32 %v969, %v989
    %1000 = vst.msk [vmem:[#allocation3 + $0x1] sm:$0xff] %vm910, %v990
    %1001 = vst.msk [vmem:[#allocation3 + $0x9] sm:$0xff] %vm910, %v991
    %1002 = vst.msk [vmem:[#allocation3 + $0x11] sm:$0xff] %vm910, %v992
    %1003 = vst.msk [vmem:[#allocation3 + $0x19] sm:$0xff] %vm910, %v993
    %1004 = vst.msk [vmem:[#allocation3 + $0x21] sm:$0xff] %vm910, %v994
    %1005 = vst.msk [vmem:[#allocation3 + $0x29] sm:$0xff] %vm910, %v995
    %1006 = vst.msk [vmem:[#allocation3 + $0x31] sm:$0xff] %vm910, %v996
    %1007 = vst.msk [vmem:[#allocation3 + $0x39] sm:$0xff] %vm910, %v997
    %1008 = vst.msk [vmem:[#allocation3 + $0x41] sm:$0xff] %vm910, %v998
    %vm1009 = vcmask 257024
    %1010 = vst.msk [vmem:[#allocation3 + $0x49] sm:$0xf] %vm1009, %v999
    %vm1011 = vcmask 253952
    %1012 = vst.msk [vmem:[#allocation3] sm:$0x1] %vm1011, 0.0
    %1013 = vst.msk [vmem:[#allocation3 + $0x4d] sm:$0x1] %vm1011, 0.0
    %s1014 = scalar_lea.vmem [#allocation2], 160
    %v1015 = vld [vmem:[%s1014] ss:$2 sm:$0xff]
    %s1016 = scalar_lea.vmem [#allocation2], 176
    %v1017 = vld [vmem:[%s1016] ss:$2 sm:$0xff]
    %s1018 = scalar_lea.vmem [#allocation2], 192
    %v1019 = vld [vmem:[%s1018] ss:$2 sm:$0xff]
    %s1020 = scalar_lea.vmem [#allocation2], 208
    %v1021 = vld [vmem:[%s1020] ss:$2 sm:$0xff]
    %s1022 = scalar_lea.vmem [#allocation2], 224
    %v1023 = vld [vmem:[%s1022] ss:$2 sm:$0xff]
    %s1024 = scalar_lea.vmem [#allocation2], 240
    %v1025 = vld [vmem:[%s1024] ss:$2 sm:$0xff]
    %s1026 = scalar_lea.vmem [#allocation2], 256
    %v1027 = vld [vmem:[%s1026] ss:$2 sm:$0xff]
    %s1028 = scalar_lea.vmem [#allocation2], 272
    %v1029 = vld [vmem:[%s1028] ss:$2 sm:$0xff]
    %s1030 = scalar_lea.vmem [#allocation2], 288
    %v1031 = vld [vmem:[%s1030] ss:$2 sm:$0xff]
    %s1032 = scalar_lea.vmem [#allocation2], 304
    %v1033 = vld [vmem:[%s1032] ss:$2 sm:$0xf]
    %s1034 = scalar_lea.vmem [#allocation2], 161
    %v1035 = vld [vmem:[%s1034] ss:$2 sm:$0xff]
    %s1036 = scalar_lea.vmem [#allocation2], 177
    %v1037 = vld [vmem:[%s1036] ss:$2 sm:$0xff]
    %s1038 = scalar_lea.vmem [#allocation2], 193
    %v1039 = vld [vmem:[%s1038] ss:$2 sm:$0xff]
    %s1040 = scalar_lea.vmem [#allocation2], 209
    %v1041 = vld [vmem:[%s1040] ss:$2 sm:$0xff]
    %s1042 = scalar_lea.vmem [#allocation2], 225
    %v1043 = vld [vmem:[%s1042] ss:$2 sm:$0xff]
    %s1044 = scalar_lea.vmem [#allocation2], 241
    %v1045 = vld [vmem:[%s1044] ss:$2 sm:$0xff]
    %s1046 = scalar_lea.vmem [#allocation2], 257
    %v1047 = vld [vmem:[%s1046] ss:$2 sm:$0xff]
    %s1048 = scalar_lea.vmem [#allocation2], 273
    %v1049 = vld [vmem:[%s1048] ss:$2 sm:$0xff]
    %s1050 = scalar_lea.vmem [#allocation2], 289
    %v1051 = vld [vmem:[%s1050] ss:$2 sm:$0xff]
    %s1052 = scalar_lea.vmem [#allocation2], 305
    %v1053 = vld [vmem:[%s1052] ss:$2 sm:$0xf]
    %v1054 = vmax.f32 %v1015, %v1035
    %v1055 = vmax.f32 %v1017, %v1037
    %v1056 = vmax.f32 %v1019, %v1039
    %v1057 = vmax.f32 %v1021, %v1041
    %v1058 = vmax.f32 %v1023, %v1043
    %v1059 = vmax.f32 %v1025, %v1045
    %v1060 = vmax.f32 %v1027, %v1047
    %v1061 = vmax.f32 %v1029, %v1049
    %v1062 = vmax.f32 %v1031, %v1051
    %v1063 = vmax.f32 %v1033, %v1053
    %1064 = vst.msk [vmem:[#allocation3 + $0x51] sm:$0xff] %vm910, %v1054
    %1065 = vst.msk [vmem:[#allocation3 + $0x59] sm:$0xff] %vm910, %v1055
    %1066 = vst.msk [vmem:[#allocation3 + $0x61] sm:$0xff] %vm910, %v1056
    %1067 = vst.msk [vmem:[#allocation3 + $0x69] sm:$0xff] %vm910, %v1057
    %1068 = vst.msk [vmem:[#allocation3 + $0x71] sm:$0xff] %vm910, %v1058
    %1069 = vst.msk [vmem:[#allocation3 + $0x79] sm:$0xff] %vm910, %v1059
    %1070 = vst.msk [vmem:[#allocation3 + $0x81] sm:$0xff] %vm910, %v1060
    %1071 = vst.msk [vmem:[#allocation3 + $0x89] sm:$0xff] %vm910, %v1061
    %1072 = vst.msk [vmem:[#allocation3 + $0x91] sm:$0xff] %vm910, %v1062
    %1073 = vst.msk [vmem:[#allocation3 + $0x99] sm:$0xf] %vm1009, %v1063
    %1074 = vst.msk [vmem:[#allocation3 + $0x50] sm:$0x1] %vm1011, 0.0
    %1075 = vst.msk [vmem:[#allocation3 + $0x9d] sm:$0x1] %vm1011, 0.0
    %v1076 = vld [vmem:[#allocation3] sm:$0xff]
    %v1077 = vld [vmem:[#allocation3 + $0x8] sm:$0xff]
    %v1078 = vld [vmem:[#allocation3 + $0x10] sm:$0xff]
    %v1079 = vld [vmem:[#allocation3 + $0x18] sm:$0xff]
    %v1080 = vld [vmem:[#allocation3 + $0x20] sm:$0xff]
    %v1081 = vld [vmem:[#allocation3 + $0x28] sm:$0xff]
    %v1082 = vld [vmem:[#allocation3 + $0x30] sm:$0xff]
    %v1083 = vld [vmem:[#allocation3 + $0x38] sm:$0xff]
    %v1084 = vld [vmem:[#allocation3 + $0x40] sm:$0xff]
    %v1085 = vld [vmem:[#allocation3 + $0x48] sm:$0xf]
    %1086 = vst.msk [vmem:[#allocation4] sm:$0xff] %vm910, %v1076
    %1087 = vst.msk [vmem:[#allocation4 + $0x8] sm:$0xff] %vm910, %v1077
    %1088 = vst.msk [vmem:[#allocation4 + $0x10] sm:$0xff] %vm910, %v1078
    %1089 = vst.msk [vmem:[#allocation4 + $0x18] sm:$0xff] %vm910, %v1079
    %1090 = vst.msk [vmem:[#allocation4 + $0x20] sm:$0xff] %vm910, %v1080
    %1091 = vst.msk [vmem:[#allocation4 + $0x28] sm:$0xff] %vm910, %v1081
    %1092 = vst.msk [vmem:[#allocation4 + $0x30] sm:$0xff] %vm910, %v1082
    %1093 = vst.msk [vmem:[#allocation4 + $0x38] sm:$0xff] %vm910, %v1083
    %1094 = vst.msk [vmem:[#allocation4 + $0x40] sm:$0xff] %vm910, %v1084
    %1095 = vst.msk [vmem:[#allocation4 + $0x48] sm:$0xf] %vm1009, %v1085
    %v1096 = vld [vmem:[#allocation3 + $0x1] sm:$0xff]
    %v1097 = vld [vmem:[#allocation3 + $0x9] sm:$0xff]
    %v1098 = vld [vmem:[#allocation3 + $0x11] sm:$0xff]
    %v1099 = vld [vmem:[#allocation3 + $0x19] sm:$0xff]
    %v1100 = vld [vmem:[#allocation3 + $0x21] sm:$0xff]
    %v1101 = vld [vmem:[#allocation3 + $0x29] sm:$0xff]
    %v1102 = vld [vmem:[#allocation3 + $0x31] sm:$0xff]
    %v1103 = vld [vmem:[#allocation3 + $0x39] sm:$0xff]
    %v1104 = vld [vmem:[#allocation3 + $0x41] sm:$0xff]
    %v1105 = vld [vmem:[#allocation3 + $0x49] sm:$0xf]
    %1116 = vrot.lane.b32.xlu0 %v1096, 32
    %v1117 = vpop.permute.xlu0 %1116
    %1118 = vrot.lane.b32.xlu0 %v1097, 32
    %v1119 = vpop.permute.xlu0 %1118
    %1120 = vrot.lane.b32.xlu0 %v1098, 32
    %v1121 = vpop.permute.xlu0 %1120
    %1122 = vrot.lane.b32.xlu0 %v1099, 32
    %v1123 = vpop.permute.xlu0 %1122
    %1124 = vrot.lane.b32.xlu0 %v1100, 32
    %v1125 = vpop.permute.xlu0 %1124
    %1126 = vrot.lane.b32.xlu0 %v1101, 32
    %v1127 = vpop.permute.xlu0 %1126
    %1128 = vrot.lane.b32.xlu0 %v1102, 32
    %v1129 = vpop.permute.xlu0 %1128
    %1130 = vrot.lane.b32.xlu0 %v1103, 32
    %v1131 = vpop.permute.xlu0 %1130
    %1132 = vrot.lane.b32.xlu0 %v1104, 32
    %v1133 = vpop.permute.xlu0 %1132
    %1134 = vrot.lane.b32.xlu0 %v1105, 32
    %v1135 = vpop.permute.xlu0 %1134
    %vm1146 = vcmask 523520
    %1147 = vst.msk [vmem:[#allocation4] sm:$0xff] %vm1146, %v1117
    %1148 = vst.msk [vmem:[#allocation4 + $0x8] sm:$0xff] %vm1146, %v1119
    %1149 = vst.msk [vmem:[#allocation4 + $0x10] sm:$0xff] %vm1146, %v1121
    %1150 = vst.msk [vmem:[#allocation4 + $0x18] sm:$0xff] %vm1146, %v1123
    %1151 = vst.msk [vmem:[#allocation4 + $0x20] sm:$0xff] %vm1146, %v1125
    %1152 = vst.msk [vmem:[#allocation4 + $0x28] sm:$0xff] %vm1146, %v1127
    %1153 = vst.msk [vmem:[#allocation4 + $0x30] sm:$0xff] %vm1146, %v1129
    %1154 = vst.msk [vmem:[#allocation4 + $0x38] sm:$0xff] %vm1146, %v1131
    %1155 = vst.msk [vmem:[#allocation4 + $0x40] sm:$0xff] %vm1146, %v1133
    %vm1156 = vcmask 519424
    %1157 = vst.msk [vmem:[#allocation4 + $0x48] sm:$0xf] %vm1156, %v1135
    %v1158 = vld [vmem:[#allocation3 + $0x2] sm:$0xff]
    %v1159 = vld [vmem:[#allocation3 + $0xa] sm:$0xff]
    %v1160 = vld [vmem:[#allocation3 + $0x12] sm:$0xff]
    %v1161 = vld [vmem:[#allocation3 + $0x1a] sm:$0xff]
    %v1162 = vld [vmem:[#allocation3 + $0x22] sm:$0xff]
    %v1163 = vld [vmem:[#allocation3 + $0x2a] sm:$0xff]
    %v1164 = vld [vmem:[#allocation3 + $0x32] sm:$0xff]
    %v1165 = vld [vmem:[#allocation3 + $0x3a] sm:$0xff]
    %v1166 = vld [vmem:[#allocation3 + $0x42] sm:$0xff]
    %v1167 = vld [vmem:[#allocation3 + $0x4a] sm:$0xf]
    %1178 = vrot.lane.b32.xlu0 %v1158, 64
    %v1179 = vpop.permute.xlu0 %1178
    %1180 = vrot.lane.b32.xlu0 %v1159, 64
    %v1181 = vpop.permute.xlu0 %1180
    %1182 = vrot.lane.b32.xlu0 %v1160, 64
    %v1183 = vpop.permute.xlu0 %1182
    %1184 = vrot.lane.b32.xlu0 %v1161, 64
    %v1185 = vpop.permute.xlu0 %1184
    %1186 = vrot.lane.b32.xlu0 %v1162, 64
    %v1187 = vpop.permute.xlu0 %1186
    %1188 = vrot.lane.b32.xlu0 %v1163, 64
    %v1189 = vpop.permute.xlu0 %1188
    %1190 = vrot.lane.b32.xlu0 %v1164, 64
    %v1191 = vpop.permute.xlu0 %1190
    %1192 = vrot.lane.b32.xlu0 %v1165, 64
    %v1193 = vpop.permute.xlu0 %1192
    %1194 = vrot.lane.b32.xlu0 %v1166, 64
    %v1195 = vpop.permute.xlu0 %1194
    %1196 = vrot.lane.b32.xlu0 %v1167, 64
    %v1197 = vpop.permute.xlu0 %1196
    %vm1208 = vcmask 785920
    %1209 = vst.msk [vmem:[#allocation4] sm:$0xff] %vm1208, %v1179
    %1210 = vst.msk [vmem:[#allocation4 + $0x8] sm:$0xff] %vm1208, %v1181
    %1211 = vst.msk [vmem:[#allocation4 + $0x10] sm:$0xff] %vm1208, %v1183
    %1212 = vst.msk [vmem:[#allocation4 + $0x18] sm:$0xff] %vm1208, %v1185
    %1213 = vst.msk [vmem:[#allocation4 + $0x20] sm:$0xff] %vm1208, %v1187
    %1214 = vst.msk [vmem:[#allocation4 + $0x28] sm:$0xff] %vm1208, %v1189
    %1215 = vst.msk [vmem:[#allocation4 + $0x30] sm:$0xff] %vm1208, %v1191
    %1216 = vst.msk [vmem:[#allocation4 + $0x38] sm:$0xff] %vm1208, %v1193
    %1217 = vst.msk [vmem:[#allocation4 + $0x40] sm:$0xff] %vm1208, %v1195
    %vm1218 = vcmask 781824
    %1219 = vst.msk [vmem:[#allocation4 + $0x48] sm:$0xf] %vm1218, %v1197
    %vm1220 = vcmask 781312
    %1221 = vst.msk [vmem:[#allocation4 + $0x4c] sm:$0xf] %vm1220, 0.0
    %v1222 = vld [vmem:[#allocation3 + $0x50] sm:$0xff]
    %v1223 = vld [vmem:[#allocation3 + $0x58] sm:$0xff]
    %v1224 = vld [vmem:[#allocation3 + $0x60] sm:$0xff]
    %v1225 = vld [vmem:[#allocation3 + $0x68] sm:$0xff]
    %v1226 = vld [vmem:[#allocation3 + $0x70] sm:$0xff]
    %v1227 = vld [vmem:[#allocation3 + $0x78] sm:$0xff]
    %v1228 = vld [vmem:[#allocation3 + $0x80] sm:$0xff]
    %v1229 = vld [vmem:[#allocation3 + $0x88] sm:$0xff]
    %v1230 = vld [vmem:[#allocation3 + $0x90] sm:$0xff]
    %v1231 = vld [vmem:[#allocation3 + $0x98] sm:$0xf]
    %1232 = vst.msk [vmem:[#allocation4 + $0x50] sm:$0xff] %vm910, %v1222
    %1233 = vst.msk [vmem:[#allocation4 + $0x58] sm:$0xff] %vm910, %v1223
    %1234 = vst.msk [vmem:[#allocation4 + $0x60] sm:$0xff] %vm910, %v1224
    %1235 = vst.msk [vmem:[#allocation4 + $0x68] sm:$0xff] %vm910, %v1225
    %1236 = vst.msk [vmem:[#allocation4 + $0x70] sm:$0xff] %vm910, %v1226
    %1237 = vst.msk [vmem:[#allocation4 + $0x78] sm:$0xff] %vm910, %v1227
    %1238 = vst.msk [vmem:[#allocation4 + $0x80] sm:$0xff] %vm910, %v1228
    %1239 = vst.msk [vmem:[#allocation4 + $0x88] sm:$0xff] %vm910, %v1229
    %1240 = vst.msk [vmem:[#allocation4 + $0x90] sm:$0xff] %vm910, %v1230
    %1241 = vst.msk [vmem:[#allocation4 + $0x98] sm:$0xf] %vm1009, %v1231
    %v1242 = vld [vmem:[#allocation3 + $0x51] sm:$0xff]
    %v1243 = vld [vmem:[#allocation3 + $0x59] sm:$0xff]
    %v1244 = vld [vmem:[#allocation3 + $0x61] sm:$0xff]
    %v1245 = vld [vmem:[#allocation3 + $0x69] sm:$0xff]
    %v1246 = vld [vmem:[#allocation3 + $0x71] sm:$0xff]
    %v1247 = vld [vmem:[#allocation3 + $0x79] sm:$0xff]
    %v1248 = vld [vmem:[#allocation3 + $0x81] sm:$0xff]
    %v1249 = vld [vmem:[#allocation3 + $0x89] sm:$0xff]
    %v1250 = vld [vmem:[#allocation3 + $0x91] sm:$0xff]
    %v1251 = vld [vmem:[#allocation3 + $0x99] sm:$0xf]
    %1262 = vrot.lane.b32.xlu0 %v1242, 32
    %v1263 = vpop.permute.xlu0 %1262
    %1264 = vrot.lane.b32.xlu0 %v1243, 32
    %v1265 = vpop.permute.xlu0 %1264
    %1266 = vrot.lane.b32.xlu0 %v1244, 32
    %v1267 = vpop.permute.xlu0 %1266
    %1268 = vrot.lane.b32.xlu0 %v1245, 32
    %v1269 = vpop.permute.xlu0 %1268
    %1270 = vrot.lane.b32.xlu0 %v1246, 32
    %v1271 = vpop.permute.xlu0 %1270
    %1272 = vrot.lane.b32.xlu0 %v1247, 32
    %v1273 = vpop.permute.xlu0 %1272
    %1274 = vrot.lane.b32.xlu0 %v1248, 32
    %v1275 = vpop.permute.xlu0 %1274
    %1276 = vrot.lane.b32.xlu0 %v1249, 32
    %v1277 = vpop.permute.xlu0 %1276
    %1278 = vrot.lane.b32.xlu0 %v1250, 32
    %v1279 = vpop.permute.xlu0 %1278
    %1280 = vrot.lane.b32.xlu0 %v1251, 32
    %v1281 = vpop.permute.xlu0 %1280
    %1292 = vst.msk [vmem:[#allocation4 + $0x50] sm:$0xff] %vm1146, %v1263
    %1293 = vst.msk [vmem:[#allocation4 + $0x58] sm:$0xff] %vm1146, %v1265
    %1294 = vst.msk [vmem:[#allocation4 + $0x60] sm:$0xff] %vm1146, %v1267
    %1295 = vst.msk [vmem:[#allocation4 + $0x68] sm:$0xff] %vm1146, %v1269
    %1296 = vst.msk [vmem:[#allocation4 + $0x70] sm:$0xff] %vm1146, %v1271
    %1297 = vst.msk [vmem:[#allocation4 + $0x78] sm:$0xff] %vm1146, %v1273
    %1298 = vst.msk [vmem:[#allocation4 + $0x80] sm:$0xff] %vm1146, %v1275
    %1299 = vst.msk [vmem:[#allocation4 + $0x88] sm:$0xff] %vm1146, %v1277
    %1300 = vst.msk [vmem:[#allocation4 + $0x90] sm:$0xff] %vm1146, %v1279
    %1301 = vst.msk [vmem:[#allocation4 + $0x98] sm:$0xf] %vm1156, %v1281
    %v1302 = vld [vmem:[#allocation3 + $0x52] sm:$0xff]
    %v1303 = vld [vmem:[#allocation3 + $0x5a] sm:$0xff]
    %v1304 = vld [vmem:[#allocation3 + $0x62] sm:$0xff]
    %v1305 = vld [vmem:[#allocation3 + $0x6a] sm:$0xff]
    %v1306 = vld [vmem:[#allocation3 + $0x72] sm:$0xff]
    %v1307 = vld [vmem:[#allocation3 + $0x7a] sm:$0xff]
    %v1308 = vld [vmem:[#allocation3 + $0x82] sm:$0xff]
    %v1309 = vld [vmem:[#allocation3 + $0x8a] sm:$0xff]
    %v1310 = vld [vmem:[#allocation3 + $0x92] sm:$0xff]
    %v1311 = vld [vmem:[#allocation3 + $0x9a] sm:$0xf]
    %1322 = vrot.lane.b32.xlu0 %v1302, 64
    %v1323 = vpop.permute.xlu0 %1322
    %1324 = vrot.lane.b32.xlu0 %v1303, 64
    %v1325 = vpop.permute.xlu0 %1324
    %1326 = vrot.lane.b32.xlu0 %v1304, 64
    %v1327 = vpop.permute.xlu0 %1326
    %1328 = vrot.lane.b32.xlu0 %v1305, 64
    %v1329 = vpop.permute.xlu0 %1328
    %1330 = vrot.lane.b32.xlu0 %v1306, 64
    %v1331 = vpop.permute.xlu0 %1330
    %1332 = vrot.lane.b32.xlu0 %v1307, 64
    %v1333 = vpop.permute.xlu0 %1332
    %1334 = vrot.lane.b32.xlu0 %v1308, 64
    %v1335 = vpop.permute.xlu0 %1334
    %1336 = vrot.lane.b32.xlu0 %v1309, 64
    %v1337 = vpop.permute.xlu0 %1336
    %1338 = vrot.lane.b32.xlu0 %v1310, 64
    %v1339 = vpop.permute.xlu0 %1338
    %1340 = vrot.lane.b32.xlu0 %v1311, 64
    %v1341 = vpop.permute.xlu0 %1340
    %1352 = vst.msk [vmem:[#allocation4 + $0x50] sm:$0xff] %vm1208, %v1323
    %1353 = vst.msk [vmem:[#allocation4 + $0x58] sm:$0xff] %vm1208, %v1325
    %1354 = vst.msk [vmem:[#allocation4 + $0x60] sm:$0xff] %vm1208, %v1327
    %1355 = vst.msk [vmem:[#allocation4 + $0x68] sm:$0xff] %vm1208, %v1329
    %1356 = vst.msk [vmem:[#allocation4 + $0x70] sm:$0xff] %vm1208, %v1331
    %1357 = vst.msk [vmem:[#allocation4 + $0x78] sm:$0xff] %vm1208, %v1333
    %1358 = vst.msk [vmem:[#allocation4 + $0x80] sm:$0xff] %vm1208, %v1335
    %1359 = vst.msk [vmem:[#allocation4 + $0x88] sm:$0xff] %vm1208, %v1337
    %1360 = vst.msk [vmem:[#allocation4 + $0x90] sm:$0xff] %vm1208, %v1339
    %1361 = vst.msk [vmem:[#allocation4 + $0x98] sm:$0xf] %vm1218, %v1341
    %1362 = vst.msk [vmem:[#allocation4 + $0x9c] sm:$0xf] %vm1220, 0.0
    %v1363 = vld [vmem:[#allocation4] sm:$0xff]
    %v1364 = vld [vmem:[#allocation4 + $0x8] sm:$0xff]
    %v1365 = vld [vmem:[#allocation4 + $0x10] sm:$0xff]
    %v1366 = vld [vmem:[#allocation4 + $0x18] sm:$0xff]
    %v1367 = vld [vmem:[#allocation4 + $0x20] sm:$0xff]
    %v1368 = vld [vmem:[#allocation4 + $0x28] sm:$0xff]
    %v1369 = vld [vmem:[#allocation4 + $0x30] sm:$0xff]
    %v1370 = vld [vmem:[#allocation4 + $0x38] sm:$0xff]
    %v1371 = vld [vmem:[#allocation4 + $0x40] sm:$0xff]
    %v1372 = vld [vmem:[#allocation4 + $0x48] sm:$0xff]
    %v1373 = vld [vmem:[#allocation4 + $0x50] sm:$0xff]
    %v1374 = vld [vmem:[#allocation4 + $0x58] sm:$0xff]
    %v1375 = vld [vmem:[#allocation4 + $0x60] sm:$0xff]
    %v1376 = vld [vmem:[#allocation4 + $0x68] sm:$0xff]
    %v1377 = vld [vmem:[#allocation4 + $0x70] sm:$0xff]
    %v1378 = vld [vmem:[#allocation4 + $0x78] sm:$0xff]
    %v1379 = vld [vmem:[#allocation4 + $0x80] sm:$0xff]
    %v1380 = vld [vmem:[#allocation4 + $0x88] sm:$0xff]
    %v1381 = vld [vmem:[#allocation4 + $0x90] sm:$0xff]
    %v1382 = vld [vmem:[#allocation4 + $0x98] sm:$0xff]
    %v1383 = vld [vmem:[%s4] sm:$0xff]
    %v1384 = vld [vmem:[%s4 + $0x8] sm:$0xff]
    %v1385 = vld [vmem:[%s4 + $0x10] sm:$0xff]
    %v1386 = vld [vmem:[%s4 + $0x18] sm:$0xff]
    %v1387 = vld [vmem:[%s4 + $0x20] sm:$0xff]
    %v1388 = vld [vmem:[%s4 + $0x28] sm:$0xff]
    %v1389 = vld [vmem:[%s4 + $0x30] sm:$0xff]
    %v1390 = vld [vmem:[%s4 + $0x38] sm:$0xff]
    %v1391 = vld [vmem:[%s4 + $0x40] sm:$0xff]
    %v1392 = vld [vmem:[%s4 + $0x48] sm:$0xff]
    %v1393 = vld [vmem:[%s4 + $0x50] sm:$0xff]
    %v1394 = vld [vmem:[%s4 + $0x58] sm:$0xff]
    %v1395 = vld [vmem:[%s5] sm:$0x1]
    %v1397 = vlaneseq
    %v1398 = vshrl.u32 %v1397, 7
    %v1399 = vsub.s32 0, %v1398
    %v1400 = vrot.slane %v1395, %v1399
    %vm1402 = vcmask 785408
    %v1404 = vsel %vm1402, %v1363, 0
    %v1407 = vsel %vm1402, %v1364, 0
    %v1410 = vsel %vm1402, %v1365, 0
    %v1413 = vsel %vm1402, %v1366, 0
    %v1416 = vsel %vm1402, %v1367, 0
    %v1419 = vsel %vm1402, %v1368, 0
    %v1422 = vsel %vm1402, %v1369, 0
    %v1425 = vsel %vm1402, %v1370, 0
    %v1428 = vsel %vm1402, %v1371, 0
    %v1431 = vsel %vm1402, %v1372, 0
    %v1434 = vsel %vm1402, %v1373, 0
    %v1437 = vsel %vm1402, %v1374, 0
    %v1440 = vsel %vm1402, %v1375, 0
    %v1443 = vsel %vm1402, %v1376, 0
    %v1446 = vsel %vm1402, %v1377, 0
    %v1449 = vsel %vm1402, %v1378, 0
    %v1452 = vsel %vm1402, %v1379, 0
    %v1455 = vsel %vm1402, %v1380, 0
    %v1458 = vsel %vm1402, %v1381, 0
    %v1461 = vsel %vm1402, %v1382, 0
    %1463 = vmatprep.subr.mxu0 0.0
    %1464 = vmatpush1.msra.mxu0 0.0
    %1465 = vmatprep.subr.mxu0 0.0
    %1466 = vmatpush1.msra.mxu0 0.0
    %1467 = vmatprep.subr.mxu0 0.0
    %1468 = vmatpush1.msra.mxu0 0.0
    %1469 = vmatprep.subr.mxu0 0.0
    %1470 = vmatpush1.msra.mxu0 0.0
    %1471 = vmatprep.subr.mxu0 0.0
    %1472 = vmatpush1.msra.mxu0 %v1394
    %1473 = vmatprep.subr.mxu0 0.0
    %1474 = vmatpush1.msra.mxu0 %v1393
    %1475 = vmatprep.subr.mxu0 0.0
    %1476 = vmatpush1.msra.mxu0 %v1392
    %1477 = vmatprep.subr.mxu0 0.0
    %1478 = vmatpush1.msra.mxu0 %v1391
    %1479 = vmatprep.subr.mxu0 0.0
    %1480 = vmatpush1.msra.mxu0 %v1390
    %1481 = vmatprep.subr.mxu0 0.0
    %1482 = vmatpush1.msra.mxu0 %v1389
    %1483 = vmatprep.subr.mxu0 0.0
    %1484 = vmatpush1.msra.mxu0 %v1388
    %1485 = vmatprep.subr.mxu0 0.0
    %1486 = vmatpush1.msra.mxu0 %v1387
    %1487 = vmatprep.subr.mxu0 0.0
    %1488 = vmatpush1.msra.mxu0 %v1386
    %1489 = vmatprep.subr.mxu0 0.0
    %1490 = vmatpush1.msra.mxu0 %v1385
    %1491 = vmatprep.subr.mxu0 0.0
    %1492 = vmatpush1.msra.mxu0 %v1384
    %1493 = vmatprep.subr.mxu0 0.0
    %1494 = vmatpush1.msra.mxu0 %v1383
    %1495 = vmatprep.subr.mxu0 0.0
    %1496 = vmatpush2.msra.mxu0 0.0
    %1497 = vmatprep.subr.mxu0 0.0
    %1498 = vmatpush2.msra.mxu0 0.0
    %1499 = vmatprep.subr.mxu0 0.0
    %1500 = vmatpush2.msra.mxu0 0.0
    %1501 = vmatprep.subr.mxu0 0.0
    %1502 = vmatpush2.msra.mxu0 0.0
    %1503 = vmatprep.subr.mxu0 0.0
    %1504 = vmatpush2.msra.mxu0 0.0
    %1505 = vmatprep.subr.mxu0 0.0
    %1506 = vmatpush2.msra.mxu0 0.0
    %1507 = vmatprep.subr.mxu0 0.0
    %1508 = vmatpush2.msra.mxu0 0.0
    %1509 = vmatprep.subr.mxu0 0.0
    %1510 = vmatpush2.msra.mxu0 0.0
    %1511 = vmatprep.subr.mxu0 0.0
    %1512 = vmatpush2.msra.mxu0 0.0
    %1513 = vmatprep.subr.mxu0 0.0
    %1514 = vmatpush2.msra.mxu0 0.0
    %1515 = vmatprep.subr.mxu0 0.0
    %1516 = vmatpush2.msra.mxu0 0.0
    %1517 = vmatprep.subr.mxu0 0.0
    %1518 = vmatpush2.msra.mxu0 0.0
    %1519 = vmatprep.subr.mxu0 0.0
    %1520 = vmatpush2.msra.mxu0 0.0
    %1521 = vmatprep.subr.mxu0 0.0
    %1522 = vmatpush2.msra.mxu0 0.0
    %1523 = vmatprep.subr.mxu0 0.0
    %1524 = vmatpush2.msra.mxu0 0.0
    %1525 = vmatprep.subr.mxu0 0.0
    %1526 = vmatpush2.msra.mxu0 0.0
    %1527 = vmatprep.mubr.f32.mxu0 0.0
    %1528 = vmatmul.mubr.f32.gmra.mxu0 %v1404
    %v1529 = vpop.f32.mrf.mxu0
    %v1530 = vadd.f32 %v1400, %v1529
    %v1531 = vpop.f32.mrf.mxu0
    %1532 = vmatprep.mubr.f32.mxu0 0.0
    %1533 = vmatmul.mubr.f32.gmra.mxu0 %v1407
    %v1534 = vpop.f32.mrf.mxu0
    %v1535 = vadd.f32 %v1400, %v1534
    %v1536 = vpop.f32.mrf.mxu0
    %1537 = vmatprep.mubr.f32.mxu0 0.0
    %1538 = vmatmul.mubr.f32.gmra.mxu0 %v1410
    %v1539 = vpop.f32.mrf.mxu0
    %v1540 = vadd.f32 %v1400, %v1539
    %v1541 = vpop.f32.mrf.mxu0
    %1542 = vmatprep.mubr.f32.mxu0 0.0
    %1543 = vmatmul.mubr.f32.gmra.mxu0 %v1413
    %v1544 = vpop.f32.mrf.mxu0
    %v1545 = vadd.f32 %v1400, %v1544
    %v1546 = vpop.f32.mrf.mxu0
    %1547 = vmatprep.mubr.f32.mxu0 0.0
    %1548 = vmatmul.mubr.f32.gmra.mxu0 %v1416
    %v1549 = vpop.f32.mrf.mxu0
    %v1550 = vadd.f32 %v1400, %v1549
    %v1551 = vpop.f32.mrf.mxu0
    %1552 = vmatprep.mubr.f32.mxu0 0.0
    %1553 = vmatmul.mubr.f32.gmra.mxu0 %v1419
    %v1554 = vpop.f32.mrf.mxu0
    %v1555 = vadd.f32 %v1400, %v1554
    %v1556 = vpop.f32.mrf.mxu0
    %1557 = vmatprep.mubr.f32.mxu0 0.0
    %1558 = vmatmul.mubr.f32.gmra.mxu0 %v1422
    %v1559 = vpop.f32.mrf.mxu0
    %v1560 = vadd.f32 %v1400, %v1559
    %v1561 = vpop.f32.mrf.mxu0
    %1562 = vmatprep.mubr.f32.mxu0 0.0
    %1563 = vmatmul.mubr.f32.gmra.mxu0 %v1425
    %v1564 = vpop.f32.mrf.mxu0
    %v1565 = vadd.f32 %v1400, %v1564
    %v1566 = vpop.f32.mrf.mxu0
    %1567 = vmatprep.mubr.f32.mxu0 0.0
    %1568 = vmatmul.mubr.f32.gmra.mxu0 %v1428
    %v1569 = vpop.f32.mrf.mxu0
    %v1570 = vadd.f32 %v1400, %v1569
    %v1571 = vpop.f32.mrf.mxu0
    %1572 = vmatprep.mubr.f32.mxu0 0.0
    %1573 = vmatmul.mubr.f32.gmra.mxu0 %v1431
    %v1574 = vpop.f32.mrf.mxu0
    %v1575 = vadd.f32 %v1400, %v1574
    %v1576 = vpop.f32.mrf.mxu0
    %1577 = vmatprep.mubr.f32.mxu0 0.0
    %1578 = vmatmul.mubr.f32.gmra.mxu0 %v1434
    %v1579 = vpop.f32.mrf.mxu0
    %v1580 = vadd.f32 %v1400, %v1579
    %v1581 = vpop.f32.mrf.mxu0
    %1582 = vmatprep.mubr.f32.mxu0 0.0
    %1583 = vmatmul.mubr.f32.gmra.mxu0 %v1437
    %v1584 = vpop.f32.mrf.mxu0
    %v1585 = vadd.f32 %v1400, %v1584
    %v1586 = vpop.f32.mrf.mxu0
    %1587 = vmatprep.mubr.f32.mxu0 0.0
    %1588 = vmatmul.mubr.f32.gmra.mxu0 %v1440
    %v1589 = vpop.f32.mrf.mxu0
    %v1590 = vadd.f32 %v1400, %v1589
    %v1591 = vpop.f32.mrf.mxu0
    %1592 = vmatprep.mubr.f32.mxu0 0.0
    %1593 = vmatmul.mubr.f32.gmra.mxu0 %v1443
    %v1594 = vpop.f32.mrf.mxu0
    %v1595 = vadd.f32 %v1400, %v1594
    %v1596 = vpop.f32.mrf.mxu0
    %1597 = vmatprep.mubr.f32.mxu0 0.0
    %1598 = vmatmul.mubr.f32.gmra.mxu0 %v1446
    %v1599 = vpop.f32.mrf.mxu0
    %v1600 = vadd.f32 %v1400, %v1599
    %v1601 = vpop.f32.mrf.mxu0
    %1602 = vmatprep.mubr.f32.mxu0 0.0
    %1603 = vmatmul.mubr.f32.gmra.mxu0 %v1449
    %v1604 = vpop.f32.mrf.mxu0
    %v1605 = vadd.f32 %v1400, %v1604
    %v1606 = vpop.f32.mrf.mxu0
    %1607 = vmatprep.mubr.f32.mxu0 0.0
    %1608 = vmatmul.mubr.f32.gmra.mxu0 %v1452
    %v1609 = vpop.f32.mrf.mxu0
    %v1610 = vadd.f32 %v1400, %v1609
    %v1611 = vpop.f32.mrf.mxu0
    %1612 = vmatprep.mubr.f32.mxu0 0.0
    %1613 = vmatmul.mubr.f32.gmra.mxu0 %v1455
    %v1614 = vpop.f32.mrf.mxu0
    %v1615 = vadd.f32 %v1400, %v1614
    %v1616 = vpop.f32.mrf.mxu0
    %1617 = vmatprep.mubr.f32.mxu0 0.0
    %1618 = vmatmul.mubr.f32.gmra.mxu0 %v1458
    %v1619 = vpop.f32.mrf.mxu0
    %v1620 = vadd.f32 %v1400, %v1619
    %v1621 = vpop.f32.mrf.mxu0
    %1622 = vmatprep.mubr.f32.mxu0 0.0
    %1623 = vmatmul.mubr.f32.gmra.mxu0 %v1461
    %v1624 = vpop.f32.mrf.mxu0
    %v1625 = vadd.f32 %v1400, %v1624
    %v1626 = vpop.f32.mrf.mxu0
    %1627 = vdwg.mxu0
    %v1628 = vmax.f32 %v1530, 0.0
    %v1629 = vmax.f32 %v1535, 0.0
    %v1630 = vmax.f32 %v1540, 0.0
    %v1631 = vmax.f32 %v1545, 0.0
    %v1632 = vmax.f32 %v1550, 0.0
    %v1633 = vmax.f32 %v1555, 0.0
    %v1634 = vmax.f32 %v1560, 0.0
    %v1635 = vmax.f32 %v1565, 0.0
    %v1636 = vmax.f32 %v1570, 0.0
    %v1637 = vmax.f32 %v1575, 0.0
    %v1638 = vmax.f32 %v1580, 0.0
    %v1639 = vmax.f32 %v1585, 0.0
    %v1640 = vmax.f32 %v1590, 0.0
    %v1641 = vmax.f32 %v1595, 0.0
    %v1642 = vmax.f32 %v1600, 0.0
    %v1643 = vmax.f32 %v1605, 0.0
    %v1644 = vmax.f32 %v1610, 0.0
    %v1645 = vmax.f32 %v1615, 0.0
    %v1646 = vmax.f32 %v1620, 0.0
    %v1647 = vmax.f32 %v1625, 0.0
    %1648 = vst.msk [vmem:[#allocation5] sm:$0xff] %vm910, %v1628
    %1649 = vst.msk [vmem:[#allocation5 + $0x8] sm:$0xff] %vm910, %v1629
    %1650 = vst.msk [vmem:[#allocation5 + $0x10] sm:$0xff] %vm910, %v1630
    %1651 = vst.msk [vmem:[#allocation5 + $0x18] sm:$0xff] %vm910, %v1631
    %1652 = vst.msk [vmem:[#allocation5 + $0x20] sm:$0xff] %vm910, %v1632
    %1653 = vst.msk [vmem:[#allocation5 + $0x28] sm:$0xff] %vm910, %v1633
    %1654 = vst.msk [vmem:[#allocation5 + $0x30] sm:$0xff] %vm910, %v1634
    %1655 = vst.msk [vmem:[#allocation5 + $0x38] sm:$0xff] %vm910, %v1635
    %1656 = vst.msk [vmem:[#allocation5 + $0x40] sm:$0xff] %vm910, %v1636
    %1657 = vst.msk [vmem:[#allocation5 + $0x48] sm:$0xff] %vm910, %v1637
    %1658 = vst.msk [vmem:[#allocation5 + $0x50] sm:$0xff] %vm910, %v1638
    %1659 = vst.msk [vmem:[#allocation5 + $0x58] sm:$0xff] %vm910, %v1639
    %1660 = vst.msk [vmem:[#allocation5 + $0x60] sm:$0xff] %vm910, %v1640
    %1661 = vst.msk [vmem:[#allocation5 + $0x68] sm:$0xff] %vm910, %v1641
    %1662 = vst.msk [vmem:[#allocation5 + $0x70] sm:$0xff] %vm910, %v1642
    %1663 = vst.msk [vmem:[#allocation5 + $0x78] sm:$0xff] %vm910, %v1643
    %1664 = vst.msk [vmem:[#allocation5 + $0x80] sm:$0xff] %vm910, %v1644
    %1665 = vst.msk [vmem:[#allocation5 + $0x88] sm:$0xff] %vm910, %v1645
    %1666 = vst.msk [vmem:[#allocation5 + $0x90] sm:$0xff] %vm910, %v1646
    %1667 = vst.msk [vmem:[#allocation5 + $0x98] sm:$0xff] %vm910, %v1647
    %v1668 = vld [vmem:[#allocation5] ss:$2 sm:$0xff]
    %s1669 = scalar_lea.vmem [#allocation5], 16
    %v1670 = vld [vmem:[%s1669] ss:$2 sm:$0xff]
    %s1671 = scalar_lea.vmem [#allocation5], 32
    %v1672 = vld [vmem:[%s1671] ss:$2 sm:$0xff]
    %s1673 = scalar_lea.vmem [#allocation5], 48
    %v1674 = vld [vmem:[%s1673] ss:$2 sm:$0xff]
    %s1675 = scalar_lea.vmem [#allocation5], 64
    %v1676 = vld [vmem:[%s1675] ss:$2 sm:$0x3f]
    %s1677 = scalar_lea.vmem [#allocation5], 1
    %v1678 = vld [vmem:[%s1677] ss:$2 sm:$0xff]
    %s1679 = scalar_lea.vmem [#allocation5], 17
    %v1680 = vld [vmem:[%s1679] ss:$2 sm:$0xff]
    %s1681 = scalar_lea.vmem [#allocation5], 33
    %v1682 = vld [vmem:[%s1681] ss:$2 sm:$0xff]
    %s1683 = scalar_lea.vmem [#allocation5], 49
    %v1684 = vld [vmem:[%s1683] ss:$2 sm:$0xff]
    %s1685 = scalar_lea.vmem [#allocation5], 65
    %v1686 = vld [vmem:[%s1685] ss:$2 sm:$0x3f]
    %v1687 = vmax.f32 %v1668, %v1678
    %v1688 = vmax.f32 %v1670, %v1680
    %v1689 = vmax.f32 %v1672, %v1682
    %v1690 = vmax.f32 %v1674, %v1684
    %v1691 = vmax.f32 %v1676, %v1686
    %1692 = vst.msk [vmem:[#allocation10] sm:$0xff] %vm910, %v1687
    %1693 = vst.msk [vmem:[#allocation10 + $0x8] sm:$0xff] %vm910, %v1688
    %1694 = vst.msk [vmem:[#allocation10 + $0x10] sm:$0xff] %vm910, %v1689
    %1695 = vst.msk [vmem:[#allocation10 + $0x18] sm:$0xff] %vm910, %v1690
    %vm1696 = vcmask 259072
    %1697 = vst.msk [vmem:[#allocation10 + $0x20] sm:$0x3f] %vm1696, %v1691
    %s1698 = scalar_lea.vmem [#allocation5], 80
    %v1699 = vld [vmem:[%s1698] ss:$2 sm:$0xff]
    %s1700 = scalar_lea.vmem [#allocation5], 96
    %v1701 = vld [vmem:[%s1700] ss:$2 sm:$0xff]
    %s1702 = scalar_lea.vmem [#allocation5], 112
    %v1703 = vld [vmem:[%s1702] ss:$2 sm:$0xff]
    %s1704 = scalar_lea.vmem [#allocation5], 128
    %v1705 = vld [vmem:[%s1704] ss:$2 sm:$0xff]
    %s1706 = scalar_lea.vmem [#allocation5], 144
    %v1707 = vld [vmem:[%s1706] ss:$2 sm:$0x3f]
    %s1708 = scalar_lea.vmem [#allocation5], 81
    %v1709 = vld [vmem:[%s1708] ss:$2 sm:$0xff]
    %s1710 = scalar_lea.vmem [#allocation5], 97
    %v1711 = vld [vmem:[%s1710] ss:$2 sm:$0xff]
    %s1712 = scalar_lea.vmem [#allocation5], 113
    %v1713 = vld [vmem:[%s1712] ss:$2 sm:$0xff]
    %s1714 = scalar_lea.vmem [#allocation5], 129
    %v1715 = vld [vmem:[%s1714] ss:$2 sm:$0xff]
    %s1716 = scalar_lea.vmem [#allocation5], 145
    %v1717 = vld [vmem:[%s1716] ss:$2 sm:$0x3f]
    %v1718 = vmax.f32 %v1699, %v1709
    %v1719 = vmax.f32 %v1701, %v1711
    %v1720 = vmax.f32 %v1703, %v1713
    %v1721 = vmax.f32 %v1705, %v1715
    %v1722 = vmax.f32 %v1707, %v1717
    %1723 = vst.msk [vmem:[#allocation10 + $0x53] sm:$0xff] %vm910, %v1718
    %1724 = vst.msk [vmem:[#allocation10 + $0x5b] sm:$0xff] %vm910, %v1719
    %1725 = vst.msk [vmem:[#allocation10 + $0x63] sm:$0xff] %vm910, %v1720
    %1726 = vst.msk [vmem:[#allocation10 + $0x6b] sm:$0xff] %vm910, %v1721
    %1727 = vst.msk [vmem:[#allocation10 + $0x73] sm:$0x3f] %vm1696, %v1722
    %v1728 = vld [vmem:[%s1] sm:$0xff]
    %v1729 = vld [vmem:[%s1 + $0x8] sm:$0xff]
    %v1730 = vld [vmem:[%s1 + $0x10] sm:$0xff]
    %v1731 = vld [vmem:[%s1 + $0x18] sm:$0xff]
    %v1732 = vld [vmem:[%s1 + $0x20] sm:$0xff]
    %v1733 = vld [vmem:[%s1 + $0x28] sm:$0xff]
    %v1734 = vld [vmem:[%s1 + $0x30] sm:$0xff]
    %v1735 = vld [vmem:[%s1 + $0x38] sm:$0xff]
    %v1736 = vld [vmem:[%s1 + $0x40] sm:$0xff]
    %v1737 = vld [vmem:[%s1 + $0x48] sm:$0xff]
    %v1738 = vld [vmem:[%s1 + $0x50] sm:$0xff]
    %v1739 = vld [vmem:[%s1 + $0x58] sm:$0xff]
    %v1740 = vld [vmem:[%s1 + $0x60] sm:$0xff]
    %v1741 = vld [vmem:[%s1 + $0x68] sm:$0xff]
    %v1742 = vld [vmem:[%s1 + $0x70] sm:$0xff]
    %v1743 = vld [vmem:[%s1 + $0x78] sm:$0xff]
    %v1744 = vld [vmem:[%s1 + $0x80] sm:$0xff]
    %v1745 = vld [vmem:[%s1 + $0x88] sm:$0xff]
    %v1746 = vld [vmem:[%s1 + $0x90] sm:$0xff]
    %v1747 = vld [vmem:[%s1 + $0x98] sm:$0xff]
    %v1748 = vld [vmem:[%s1 + $0xa0] sm:$0xff]
    %v1749 = vld [vmem:[%s1 + $0xa8] sm:$0xff]
    %v1750 = vld [vmem:[%s1 + $0xb0] sm:$0xff]
    %v1751 = vld [vmem:[%s1 + $0xb8] sm:$0xff]
    %v1752 = vld [vmem:[%s1 + $0xc0] sm:$0xff]
    %v1753 = vld [vmem:[%s1 + $0xc8] sm:$0xff]
    %v1754 = vld [vmem:[%s1 + $0xd0] sm:$0xff]
    %v1755 = vld [vmem:[%s1 + $0xd8] sm:$0xff]
    %v1756 = vld [vmem:[%s1 + $0xe0] sm:$0xff]
    %v1757 = vld [vmem:[%s1 + $0xe8] sm:$0xff]
    %v1758 = vld [vmem:[%s1 + $0xf0] sm:$0xff]
    %v1759 = vld [vmem:[%s1 + $0xf8] sm:$0xff]
    %v1760 = vld [vmem:[%s1 + $0x100] sm:$0xff]
    %v1761 = vld [vmem:[%s1 + $0x108] sm:$0xff]
    %v1762 = vld [vmem:[%s1 + $0x110] sm:$0xff]
    %v1763 = vld [vmem:[%s1 + $0x118] sm:$0xff]
    %v1764 = vld [vmem:[%s1 + $0x120] sm:$0xff]
    %v1765 = vld [vmem:[%s1 + $0x128] sm:$0xff]
    %v1766 = vld [vmem:[%s1 + $0x130] sm:$0xff]
    %v1767 = vld [vmem:[%s1 + $0x138] sm:$0xff]
    %v1768 = vld [vmem:[%s1 + $0x140] sm:$0xff]
    %v1769 = vld [vmem:[%s1 + $0x148] sm:$0xff]
    %v1770 = vld [vmem:[%s1 + $0x150] sm:$0xff]
    %v1771 = vld [vmem:[%s1 + $0x158] sm:$0xff]
    %v1772 = vld [vmem:[%s1 + $0x160] sm:$0xff]
    %v1773 = vld [vmem:[%s1 + $0x168] sm:$0xff]
    %v1774 = vld [vmem:[%s7] sm:$0x1]
    %v1775 = vld [vmem:[%s6] sm:$0x1]
    %1777 = vset.pattern.permute.xlu0 0
    %1778 = vperm.xlu0 %1777, %v1728
    %v1779 = vpop.permute.xlu0 %1778
    %1782 = vset.pattern.permute.xlu0 0
    %1783 = vperm.xlu0 %1782, %v1729
    %v1784 = vpop.permute.xlu0 %1783
    %1787 = vset.pattern.permute.xlu0 0
    %1788 = vperm.xlu0 %1787, %v1730
    %v1789 = vpop.permute.xlu0 %1788
    %1792 = vset.pattern.permute.xlu0 0
    %1793 = vperm.xlu0 %1792, %v1731
    %v1794 = vpop.permute.xlu0 %1793
    %1797 = vset.pattern.permute.xlu0 0
    %1798 = vperm.xlu0 %1797, %v1732
    %v1799 = vpop.permute.xlu0 %1798
    %1802 = vset.pattern.permute.xlu0 0
    %1803 = vperm.xlu0 %1802, %v1733
    %v1804 = vpop.permute.xlu0 %1803
    %1807 = vset.pattern.permute.xlu0 0
    %1808 = vperm.xlu0 %1807, %v1734
    %v1809 = vpop.permute.xlu0 %1808
    %1812 = vset.pattern.permute.xlu0 0
    %1813 = vperm.xlu0 %1812, %v1735
    %v1814 = vpop.permute.xlu0 %1813
    %1817 = vset.pattern.permute.xlu0 0
    %1818 = vperm.xlu0 %1817, %v1736
    %v1819 = vpop.permute.xlu0 %1818
    %1822 = vset.pattern.permute.xlu0 0
    %1823 = vperm.xlu0 %1822, %v1737
    %v1824 = vpop.permute.xlu0 %1823
    %1827 = vset.pattern.permute.xlu0 0
    %1828 = vperm.xlu0 %1827, %v1738
    %v1829 = vpop.permute.xlu0 %1828
    %1832 = vset.pattern.permute.xlu0 0
    %1833 = vperm.xlu0 %1832, %v1739
    %v1834 = vpop.permute.xlu0 %1833
    %1837 = vset.pattern.permute.xlu0 0
    %1838 = vperm.xlu0 %1837, %v1740
    %v1839 = vpop.permute.xlu0 %1838
    %1842 = vset.pattern.permute.xlu0 0
    %1843 = vperm.xlu0 %1842, %v1741
    %v1844 = vpop.permute.xlu0 %1843
    %1847 = vset.pattern.permute.xlu0 0
    %1848 = vperm.xlu0 %1847, %v1742
    %v1849 = vpop.permute.xlu0 %1848
    %1852 = vset.pattern.permute.xlu0 0
    %1853 = vperm.xlu0 %1852, %v1743
    %v1854 = vpop.permute.xlu0 %1853
    %1857 = vset.pattern.permute.xlu0 0
    %1858 = vperm.xlu0 %1857, %v1744
    %v1859 = vpop.permute.xlu0 %1858
    %1862 = vset.pattern.permute.xlu0 0
    %1863 = vperm.xlu0 %1862, %v1745
    %v1864 = vpop.permute.xlu0 %1863
    %1867 = vset.pattern.permute.xlu0 0
    %1868 = vperm.xlu0 %1867, %v1746
    %v1869 = vpop.permute.xlu0 %1868
    %1872 = vset.pattern.permute.xlu0 0
    %1873 = vperm.xlu0 %1872, %v1747
    %v1874 = vpop.permute.xlu0 %1873
    %1877 = vset.pattern.permute.xlu0 0
    %1878 = vperm.xlu0 %1877, %v1748
    %v1879 = vpop.permute.xlu0 %1878
    %1882 = vset.pattern.permute.xlu0 0
    %1883 = vperm.xlu0 %1882, %v1749
    %v1884 = vpop.permute.xlu0 %1883
    %1887 = vset.pattern.permute.xlu0 0
    %1888 = vperm.xlu0 %1887, %v1750
    %v1889 = vpop.permute.xlu0 %1888
    %1892 = vset.pattern.permute.xlu0 0
    %1893 = vperm.xlu0 %1892, %v1751
    %v1894 = vpop.permute.xlu0 %1893
    %1897 = vset.pattern.permute.xlu0 0
    %1898 = vperm.xlu0 %1897, %v1752
    %v1899 = vpop.permute.xlu0 %1898
    %1902 = vset.pattern.permute.xlu0 0
    %1903 = vperm.xlu0 %1902, %v1753
    %v1904 = vpop.permute.xlu0 %1903
    %1907 = vset.pattern.permute.xlu0 0
    %1908 = vperm.xlu0 %1907, %v1754
    %v1909 = vpop.permute.xlu0 %1908
    %1912 = vset.pattern.permute.xlu0 0
    %1913 = vperm.xlu0 %1912, %v1755
    %v1914 = vpop.permute.xlu0 %1913
    %1917 = vset.pattern.permute.xlu0 0
    %1918 = vperm.xlu0 %1917, %v1756
    %v1919 = vpop.permute.xlu0 %1918
    %1922 = vset.pattern.permute.xlu0 0
    %1923 = vperm.xlu0 %1922, %v1757
    %v1924 = vpop.permute.xlu0 %1923
    %1927 = vset.pattern.permute.xlu0 0
    %1928 = vperm.xlu0 %1927, %v1758
    %v1929 = vpop.permute.xlu0 %1928
    %1932 = vset.pattern.permute.xlu0 0
    %1933 = vperm.xlu0 %1932, %v1759
    %v1934 = vpop.permute.xlu0 %1933
    %1937 = vset.pattern.permute.xlu0 0
    %1938 = vperm.xlu0 %1937, %v1760
    %v1939 = vpop.permute.xlu0 %1938
    %1942 = vset.pattern.permute.xlu0 0
    %1943 = vperm.xlu0 %1942, %v1761
    %v1944 = vpop.permute.xlu0 %1943
    %1947 = vset.pattern.permute.xlu0 0
    %1948 = vperm.xlu0 %1947, %v1762
    %v1949 = vpop.permute.xlu0 %1948
    %1952 = vset.pattern.permute.xlu0 0
    %1953 = vperm.xlu0 %1952, %v1763
    %v1954 = vpop.permute.xlu0 %1953
    %1957 = vset.pattern.permute.xlu0 0
    %1958 = vperm.xlu0 %1957, %v1764
    %v1959 = vpop.permute.xlu0 %1958
    %1962 = vset.pattern.permute.xlu0 0
    %1963 = vperm.xlu0 %1962, %v1765
    %v1964 = vpop.permute.xlu0 %1963
    %1967 = vset.pattern.permute.xlu0 0
    %1968 = vperm.xlu0 %1967, %v1766
    %v1969 = vpop.permute.xlu0 %1968
    %1972 = vset.pattern.permute.xlu0 0
    %1973 = vperm.xlu0 %1972, %v1767
    %v1974 = vpop.permute.xlu0 %1973
    %1977 = vset.pattern.permute.xlu0 0
    %1978 = vperm.xlu0 %1977, %v1768
    %v1979 = vpop.permute.xlu0 %1978
    %1982 = vset.pattern.permute.xlu0 0
    %1983 = vperm.xlu0 %1982, %v1769
    %v1984 = vpop.permute.xlu0 %1983
    %1987 = vset.pattern.permute.xlu0 0
    %1988 = vperm.xlu0 %1987, %v1770
    %v1989 = vpop.permute.xlu0 %1988
    %1992 = vset.pattern.permute.xlu0 0
    %1993 = vperm.xlu0 %1992, %v1771
    %v1994 = vpop.permute.xlu0 %1993
    %1997 = vset.pattern.permute.xlu0 0
    %1998 = vperm.xlu0 %1997, %v1772
    %v1999 = vpop.permute.xlu0 %1998
    %2002 = vset.pattern.permute.xlu0 0
    %2003 = vperm.xlu0 %2002, %v1773
    %v2004 = vpop.permute.xlu0 %2003
    %v2006 = vlaneseq
    %v2007 = vshrl.u32 %v2006, 7
    %v2008 = vsub.s32 0, %v2007
    %v2009 = vrot.slane %v1775, %v2008
    %v2010 = vmul.f32 %v1779, %v2009
    %v2011 = vmul.f32 %v1784, %v2009
    %v2012 = vmul.f32 %v1789, %v2009
    %v2013 = vmul.f32 %v1794, %v2009
    %v2014 = vmul.f32 %v1799, %v2009
    %v2015 = vmul.f32 %v1804, %v2009
    %v2016 = vmul.f32 %v1809, %v2009
    %v2017 = vmul.f32 %v1814, %v2009
    %v2018 = vmul.f32 %v1819, %v2009
    %v2019 = vmul.f32 %v1824, %v2009
    %v2020 = vmul.f32 %v1829, %v2009
    %v2021 = vmul.f32 %v1834, %v2009
    %v2022 = vmul.f32 %v1839, %v2009
    %v2023 = vmul.f32 %v1844, %v2009
    %v2024 = vmul.f32 %v1849, %v2009
    %v2025 = vmul.f32 %v1854, %v2009
    %v2026 = vmul.f32 %v1859, %v2009
    %v2027 = vmul.f32 %v1864, %v2009
    %v2028 = vmul.f32 %v1869, %v2009
    %v2029 = vmul.f32 %v1874, %v2009
    %v2030 = vmul.f32 %v1879, %v2009
    %v2031 = vmul.f32 %v1884, %v2009
    %v2032 = vmul.f32 %v1889, %v2009
    %v2033 = vmul.f32 %v1894, %v2009
    %v2034 = vmul.f32 %v1899, %v2009
    %v2035 = vmul.f32 %v1904, %v2009
    %v2036 = vmul.f32 %v1909, %v2009
    %v2037 = vmul.f32 %v1914, %v2009
    %v2038 = vmul.f32 %v1919, %v2009
    %v2039 = vmul.f32 %v1924, %v2009
    %v2040 = vmul.f32 %v1929, %v2009
    %v2041 = vmul.f32 %v1934, %v2009
    %v2042 = vmul.f32 %v1939, %v2009
    %v2043 = vmul.f32 %v1944, %v2009
    %v2044 = vmul.f32 %v1949, %v2009
    %v2045 = vmul.f32 %v1954, %v2009
    %v2046 = vmul.f32 %v1959, %v2009
    %v2047 = vmul.f32 %v1964, %v2009
    %v2048 = vmul.f32 %v1969, %v2009
    %v2049 = vmul.f32 %v1974, %v2009
    %v2050 = vmul.f32 %v1979, %v2009
    %v2051 = vmul.f32 %v1984, %v2009
    %v2052 = vmul.f32 %v1989, %v2009
    %v2053 = vmul.f32 %v1994, %v2009
    %v2054 = vmul.f32 %v1999, %v2009
    %v2055 = vmul.f32 %v2004, %v2009
    %v2057 = vlaneseq
    %v2058 = vshrl.u32 %v2057, 7
    %v2059 = vsub.s32 0, %v2058
    %v2060 = vrot.slane %v1774, %v2059
    %v2062 = vadd.f32 %v2060, %v2010
    %v2063 = vadd.f32 %v2060, %v2011
    %v2064 = vadd.f32 %v2060, %v2012
    %v2065 = vadd.f32 %v2060, %v2013
    %v2066 = vadd.f32 %v2060, %v2014
    %v2067 = vadd.f32 %v2060, %v2015
    %v2068 = vadd.f32 %v2060, %v2016
    %v2069 = vadd.f32 %v2060, %v2017
    %v2070 = vadd.f32 %v2060, %v2018
    %v2071 = vadd.f32 %v2060, %v2019
    %v2072 = vadd.f32 %v2060, %v2020
    %v2073 = vadd.f32 %v2060, %v2021
    %v2074 = vadd.f32 %v2060, %v2022
    %v2075 = vadd.f32 %v2060, %v2023
    %v2076 = vadd.f32 %v2060, %v2024
    %v2077 = vadd.f32 %v2060, %v2025
    %v2078 = vadd.f32 %v2060, %v2026
    %v2079 = vadd.f32 %v2060, %v2027
    %v2080 = vadd.f32 %v2060, %v2028
    %v2081 = vadd.f32 %v2060, %v2029
    %v2082 = vadd.f32 %v2060, %v2030
    %v2083 = vadd.f32 %v2060, %v2031
    %v2084 = vadd.f32 %v2060, %v2032
    %v2085 = vadd.f32 %v2060, %v2033
    %v2086 = vadd.f32 %v2060, %v2034
    %v2087 = vadd.f32 %v2060, %v2035
    %v2088 = vadd.f32 %v2060, %v2036
    %v2089 = vadd.f32 %v2060, %v2037
    %v2090 = vadd.f32 %v2060, %v2038
    %v2091 = vadd.f32 %v2060, %v2039
    %v2092 = vadd.f32 %v2060, %v2040
    %v2093 = vadd.f32 %v2060, %v2041
    %v2094 = vadd.f32 %v2060, %v2042
    %v2095 = vadd.f32 %v2060, %v2043
    %v2096 = vadd.f32 %v2060, %v2044
    %v2097 = vadd.f32 %v2060, %v2045
    %v2098 = vadd.f32 %v2060, %v2046
    %v2099 = vadd.f32 %v2060, %v2047
    %v2100 = vadd.f32 %v2060, %v2048
    %v2101 = vadd.f32 %v2060, %v2049
    %v2102 = vadd.f32 %v2060, %v2050
    %v2103 = vadd.f32 %v2060, %v2051
    %v2104 = vadd.f32 %v2060, %v2052
    %v2105 = vadd.f32 %v2060, %v2053
    %v2106 = vadd.f32 %v2060, %v2054
    %v2107 = vadd.f32 %v2060, %v2055
    %v2108 = vld [vmem:[%s6 + $0x1] sm:$0x1]
    %2109 = vset.pattern.permute.xlu0 1
    %2110 = vperm.xlu0 %2109, %v1728
    %v2111 = vpop.permute.xlu0 %2110
    %2113 = vset.pattern.permute.xlu0 1
    %2114 = vperm.xlu0 %2113, %v1729
    %v2115 = vpop.permute.xlu0 %2114
    %2117 = vset.pattern.permute.xlu0 1
    %2118 = vperm.xlu0 %2117, %v1730
    %v2119 = vpop.permute.xlu0 %2118
    %2121 = vset.pattern.permute.xlu0 1
    %2122 = vperm.xlu0 %2121, %v1731
    %v2123 = vpop.permute.xlu0 %2122
    %2125 = vset.pattern.permute.xlu0 1
    %2126 = vperm.xlu0 %2125, %v1732
    %v2127 = vpop.permute.xlu0 %2126
    %2129 = vset.pattern.permute.xlu0 1
    %2130 = vperm.xlu0 %2129, %v1733
    %v2131 = vpop.permute.xlu0 %2130
    %2133 = vset.pattern.permute.xlu0 1
    %2134 = vperm.xlu0 %2133, %v1734
    %v2135 = vpop.permute.xlu0 %2134
    %2137 = vset.pattern.permute.xlu0 1
    %2138 = vperm.xlu0 %2137, %v1735
    %v2139 = vpop.permute.xlu0 %2138
    %2141 = vset.pattern.permute.xlu0 1
    %2142 = vperm.xlu0 %2141, %v1736
    %v2143 = vpop.permute.xlu0 %2142
    %2145 = vset.pattern.permute.xlu0 1
    %2146 = vperm.xlu0 %2145, %v1737
    %v2147 = vpop.permute.xlu0 %2146
    %2149 = vset.pattern.permute.xlu0 1
    %2150 = vperm.xlu0 %2149, %v1738
    %v2151 = vpop.permute.xlu0 %2150
    %2153 = vset.pattern.permute.xlu0 1
    %2154 = vperm.xlu0 %2153, %v1739
    %v2155 = vpop.permute.xlu0 %2154
    %2157 = vset.pattern.permute.xlu0 1
    %2158 = vperm.xlu0 %2157, %v1740
    %v2159 = vpop.permute.xlu0 %2158
    %2161 = vset.pattern.permute.xlu0 1
    %2162 = vperm.xlu0 %2161, %v1741
    %v2163 = vpop.permute.xlu0 %2162
    %2165 = vset.pattern.permute.xlu0 1
    %2166 = vperm.xlu0 %2165, %v1742
    %v2167 = vpop.permute.xlu0 %2166
    %2169 = vset.pattern.permute.xlu0 1
    %2170 = vperm.xlu0 %2169, %v1743
    %v2171 = vpop.permute.xlu0 %2170
    %2173 = vset.pattern.permute.xlu0 1
    %2174 = vperm.xlu0 %2173, %v1744
    %v2175 = vpop.permute.xlu0 %2174
    %2177 = vset.pattern.permute.xlu0 1
    %2178 = vperm.xlu0 %2177, %v1745
    %v2179 = vpop.permute.xlu0 %2178
    %2181 = vset.pattern.permute.xlu0 1
    %2182 = vperm.xlu0 %2181, %v1746
    %v2183 = vpop.permute.xlu0 %2182
    %2185 = vset.pattern.permute.xlu0 1
    %2186 = vperm.xlu0 %2185, %v1747
    %v2187 = vpop.permute.xlu0 %2186
    %2189 = vset.pattern.permute.xlu0 1
    %2190 = vperm.xlu0 %2189, %v1748
    %v2191 = vpop.permute.xlu0 %2190
    %2193 = vset.pattern.permute.xlu0 1
    %2194 = vperm.xlu0 %2193, %v1749
    %v2195 = vpop.permute.xlu0 %2194
    %2197 = vset.pattern.permute.xlu0 1
    %2198 = vperm.xlu0 %2197, %v1750
    %v2199 = vpop.permute.xlu0 %2198
    %2201 = vset.pattern.permute.xlu0 1
    %2202 = vperm.xlu0 %2201, %v1751
    %v2203 = vpop.permute.xlu0 %2202
    %2205 = vset.pattern.permute.xlu0 1
    %2206 = vperm.xlu0 %2205, %v1752
    %v2207 = vpop.permute.xlu0 %2206
    %2209 = vset.pattern.permute.xlu0 1
    %2210 = vperm.xlu0 %2209, %v1753
    %v2211 = vpop.permute.xlu0 %2210
    %2213 = vset.pattern.permute.xlu0 1
    %2214 = vperm.xlu0 %2213, %v1754
    %v2215 = vpop.permute.xlu0 %2214
    %2217 = vset.pattern.permute.xlu0 1
    %2218 = vperm.xlu0 %2217, %v1755
    %v2219 = vpop.permute.xlu0 %2218
    %2221 = vset.pattern.permute.xlu0 1
    %2222 = vperm.xlu0 %2221, %v1756
    %v2223 = vpop.permute.xlu0 %2222
    %2225 = vset.pattern.permute.xlu0 1
    %2226 = vperm.xlu0 %2225, %v1757
    %v2227 = vpop.permute.xlu0 %2226
    %2229 = vset.pattern.permute.xlu0 1
    %2230 = vperm.xlu0 %2229, %v1758
    %v2231 = vpop.permute.xlu0 %2230
    %2233 = vset.pattern.permute.xlu0 1
    %2234 = vperm.xlu0 %2233, %v1759
    %v2235 = vpop.permute.xlu0 %2234
    %2237 = vset.pattern.permute.xlu0 1
    %2238 = vperm.xlu0 %2237, %v1760
    %v2239 = vpop.permute.xlu0 %2238
    %2241 = vset.pattern.permute.xlu0 1
    %2242 = vperm.xlu0 %2241, %v1761
    %v2243 = vpop.permute.xlu0 %2242
    %2245 = vset.pattern.permute.xlu0 1
    %2246 = vperm.xlu0 %2245, %v1762
    %v2247 = vpop.permute.xlu0 %2246
    %2249 = vset.pattern.permute.xlu0 1
    %2250 = vperm.xlu0 %2249, %v1763
    %v2251 = vpop.permute.xlu0 %2250
    %2253 = vset.pattern.permute.xlu0 1
    %2254 = vperm.xlu0 %2253, %v1764
    %v2255 = vpop.permute.xlu0 %2254
    %2257 = vset.pattern.permute.xlu0 1
    %2258 = vperm.xlu0 %2257, %v1765
    %v2259 = vpop.permute.xlu0 %2258
    %2261 = vset.pattern.permute.xlu0 1
    %2262 = vperm.xlu0 %2261, %v1766
    %v2263 = vpop.permute.xlu0 %2262
    %2265 = vset.pattern.permute.xlu0 1
    %2266 = vperm.xlu0 %2265, %v1767
    %v2267 = vpop.permute.xlu0 %2266
    %2269 = vset.pattern.permute.xlu0 1
    %2270 = vperm.xlu0 %2269, %v1768
    %v2271 = vpop.permute.xlu0 %2270
    %2273 = vset.pattern.permute.xlu0 1
    %2274 = vperm.xlu0 %2273, %v1769
    %v2275 = vpop.permute.xlu0 %2274
    %2277 = vset.pattern.permute.xlu0 1
    %2278 = vperm.xlu0 %2277, %v1770
    %v2279 = vpop.permute.xlu0 %2278
    %2281 = vset.pattern.permute.xlu0 1
    %2282 = vperm.xlu0 %2281, %v1771
    %v2283 = vpop.permute.xlu0 %2282
    %2285 = vset.pattern.permute.xlu0 1
    %2286 = vperm.xlu0 %2285, %v1772
    %v2287 = vpop.permute.xlu0 %2286
    %2289 = vset.pattern.permute.xlu0 1
    %2290 = vperm.xlu0 %2289, %v1773
    %v2291 = vpop.permute.xlu0 %2290
    %v2293 = vlaneseq
    %v2294 = vshrl.u32 %v2293, 7
    %v2295 = vsub.s32 0, %v2294
    %v2296 = vrot.slane %v2108, %v2295
    %v2297 = vmul.f32 %v2111, %v2296
    %v2298 = vmul.f32 %v2115, %v2296
    %v2299 = vmul.f32 %v2119, %v2296
    %v2300 = vmul.f32 %v2123, %v2296
    %v2301 = vmul.f32 %v2127, %v2296
    %v2302 = vmul.f32 %v2131, %v2296
    %v2303 = vmul.f32 %v2135, %v2296
    %v2304 = vmul.f32 %v2139, %v2296
    %v2305 = vmul.f32 %v2143, %v2296
    %v2306 = vmul.f32 %v2147, %v2296
    %v2307 = vmul.f32 %v2151, %v2296
    %v2308 = vmul.f32 %v2155, %v2296
    %v2309 = vmul.f32 %v2159, %v2296
    %v2310 = vmul.f32 %v2163, %v2296
    %v2311 = vmul.f32 %v2167, %v2296
    %v2312 = vmul.f32 %v2171, %v2296
    %v2313 = vmul.f32 %v2175, %v2296
    %v2314 = vmul.f32 %v2179, %v2296
    %v2315 = vmul.f32 %v2183, %v2296
    %v2316 = vmul.f32 %v2187, %v2296
    %v2317 = vmul.f32 %v2191, %v2296
    %v2318 = vmul.f32 %v2195, %v2296
    %v2319 = vmul.f32 %v2199, %v2296
    %v2320 = vmul.f32 %v2203, %v2296
    %v2321 = vmul.f32 %v2207, %v2296
    %v2322 = vmul.f32 %v2211, %v2296
    %v2323 = vmul.f32 %v2215, %v2296
    %v2324 = vmul.f32 %v2219, %v2296
    %v2325 = vmul.f32 %v2223, %v2296
    %v2326 = vmul.f32 %v2227, %v2296
    %v2327 = vmul.f32 %v2231, %v2296
    %v2328 = vmul.f32 %v2235, %v2296
    %v2329 = vmul.f32 %v2239, %v2296
    %v2330 = vmul.f32 %v2243, %v2296
    %v2331 = vmul.f32 %v2247, %v2296
    %v2332 = vmul.f32 %v2251, %v2296
    %v2333 = vmul.f32 %v2255, %v2296
    %v2334 = vmul.f32 %v2259, %v2296
    %v2335 = vmul.f32 %v2263, %v2296
    %v2336 = vmul.f32 %v2267, %v2296
    %v2337 = vmul.f32 %v2271, %v2296
    %v2338 = vmul.f32 %v2275, %v2296
    %v2339 = vmul.f32 %v2279, %v2296
    %v2340 = vmul.f32 %v2283, %v2296
    %v2341 = vmul.f32 %v2287, %v2296
    %v2342 = vmul.f32 %v2291, %v2296
    %v2343 = vadd.f32 %v2062, %v2297
    %v2344 = vadd.f32 %v2063, %v2298
    %v2345 = vadd.f32 %v2064, %v2299
    %v2346 = vadd.f32 %v2065, %v2300
    %v2347 = vadd.f32 %v2066, %v2301
    %v2348 = vadd.f32 %v2067, %v2302
    %v2349 = vadd.f32 %v2068, %v2303
    %v2350 = vadd.f32 %v2069, %v2304
    %v2351 = vadd.f32 %v2070, %v2305
    %v2352 = vadd.f32 %v2071, %v2306
    %v2353 = vadd.f32 %v2072, %v2307
    %v2354 = vadd.f32 %v2073, %v2308
    %v2355 = vadd.f32 %v2074, %v2309
    %v2356 = vadd.f32 %v2075, %v2310
    %v2357 = vadd.f32 %v2076, %v2311
    %v2358 = vadd.f32 %v2077, %v2312
    %v2359 = vadd.f32 %v2078, %v2313
    %v2360 = vadd.f32 %v2079, %v2314
    %v2361 = vadd.f32 %v2080, %v2315
    %v2362 = vadd.f32 %v2081, %v2316
    %v2363 = vadd.f32 %v2082, %v2317
    %v2364 = vadd.f32 %v2083, %v2318
    %v2365 = vadd.f32 %v2084, %v2319
    %v2366 = vadd.f32 %v2085, %v2320
    %v2367 = vadd.f32 %v2086, %v2321
    %v2368 = vadd.f32 %v2087, %v2322
    %v2369 = vadd.f32 %v2088, %v2323
    %v2370 = vadd.f32 %v2089, %v2324
    %v2371 = vadd.f32 %v2090, %v2325
    %v2372 = vadd.f32 %v2091, %v2326
    %v2373 = vadd.f32 %v2092, %v2327
    %v2374 = vadd.f32 %v2093, %v2328
    %v2375 = vadd.f32 %v2094, %v2329
    %v2376 = vadd.f32 %v2095, %v2330
    %v2377 = vadd.f32 %v2096, %v2331
    %v2378 = vadd.f32 %v2097, %v2332
    %v2379 = vadd.f32 %v2098, %v2333
    %v2380 = vadd.f32 %v2099, %v2334
    %v2381 = vadd.f32 %v2100, %v2335
    %v2382 = vadd.f32 %v2101, %v2336
    %v2383 = vadd.f32 %v2102, %v2337
    %v2384 = vadd.f32 %v2103, %v2338
    %v2385 = vadd.f32 %v2104, %v2339
    %v2386 = vadd.f32 %v2105, %v2340
    %v2387 = vadd.f32 %v2106, %v2341
    %v2388 = vadd.f32 %v2107, %v2342
    %v2389 = vld [vmem:[%s6 + $0x2] sm:$0x1]
    %2390 = vset.pattern.permute.xlu0 2
    %2391 = vperm.xlu0 %2390, %v1728
    %v2392 = vpop.permute.xlu0 %2391
    %2394 = vset.pattern.permute.xlu0 2
    %2395 = vperm.xlu0 %2394, %v1729
    %v2396 = vpop.permute.xlu0 %2395
    %2398 = vset.pattern.permute.xlu0 2
    %2399 = vperm.xlu0 %2398, %v1730
    %v2400 = vpop.permute.xlu0 %2399
    %2402 = vset.pattern.permute.xlu0 2
    %2403 = vperm.xlu0 %2402, %v1731
    %v2404 = vpop.permute.xlu0 %2403
    %2406 = vset.pattern.permute.xlu0 2
    %2407 = vperm.xlu0 %2406, %v1732
    %v2408 = vpop.permute.xlu0 %2407
    %2410 = vset.pattern.permute.xlu0 2
    %2411 = vperm.xlu0 %2410, %v1733
    %v2412 = vpop.permute.xlu0 %2411
    %2414 = vset.pattern.permute.xlu0 2
    %2415 = vperm.xlu0 %2414, %v1734
    %v2416 = vpop.permute.xlu0 %2415
    %2418 = vset.pattern.permute.xlu0 2
    %2419 = vperm.xlu0 %2418, %v1735
    %v2420 = vpop.permute.xlu0 %2419
    %2422 = vset.pattern.permute.xlu0 2
    %2423 = vperm.xlu0 %2422, %v1736
    %v2424 = vpop.permute.xlu0 %2423
    %2426 = vset.pattern.permute.xlu0 2
    %2427 = vperm.xlu0 %2426, %v1737
    %v2428 = vpop.permute.xlu0 %2427
    %2430 = vset.pattern.permute.xlu0 2
    %2431 = vperm.xlu0 %2430, %v1738
    %v2432 = vpop.permute.xlu0 %2431
    %2434 = vset.pattern.permute.xlu0 2
    %2435 = vperm.xlu0 %2434, %v1739
    %v2436 = vpop.permute.xlu0 %2435
    %2438 = vset.pattern.permute.xlu0 2
    %2439 = vperm.xlu0 %2438, %v1740
    %v2440 = vpop.permute.xlu0 %2439
    %2442 = vset.pattern.permute.xlu0 2
    %2443 = vperm.xlu0 %2442, %v1741
    %v2444 = vpop.permute.xlu0 %2443
    %2446 = vset.pattern.permute.xlu0 2
    %2447 = vperm.xlu0 %2446, %v1742
    %v2448 = vpop.permute.xlu0 %2447
    %2450 = vset.pattern.permute.xlu0 2
    %2451 = vperm.xlu0 %2450, %v1743
    %v2452 = vpop.permute.xlu0 %2451
    %2454 = vset.pattern.permute.xlu0 2
    %2455 = vperm.xlu0 %2454, %v1744
    %v2456 = vpop.permute.xlu0 %2455
    %2458 = vset.pattern.permute.xlu0 2
    %2459 = vperm.xlu0 %2458, %v1745
    %v2460 = vpop.permute.xlu0 %2459
    %2462 = vset.pattern.permute.xlu0 2
    %2463 = vperm.xlu0 %2462, %v1746
    %v2464 = vpop.permute.xlu0 %2463
    %2466 = vset.pattern.permute.xlu0 2
    %2467 = vperm.xlu0 %2466, %v1747
    %v2468 = vpop.permute.xlu0 %2467
    %2470 = vset.pattern.permute.xlu0 2
    %2471 = vperm.xlu0 %2470, %v1748
    %v2472 = vpop.permute.xlu0 %2471
    %2474 = vset.pattern.permute.xlu0 2
    %2475 = vperm.xlu0 %2474, %v1749
    %v2476 = vpop.permute.xlu0 %2475
    %2478 = vset.pattern.permute.xlu0 2
    %2479 = vperm.xlu0 %2478, %v1750
    %v2480 = vpop.permute.xlu0 %2479
    %2482 = vset.pattern.permute.xlu0 2
    %2483 = vperm.xlu0 %2482, %v1751
    %v2484 = vpop.permute.xlu0 %2483
    %2486 = vset.pattern.permute.xlu0 2
    %2487 = vperm.xlu0 %2486, %v1752
    %v2488 = vpop.permute.xlu0 %2487
    %2490 = vset.pattern.permute.xlu0 2
    %2491 = vperm.xlu0 %2490, %v1753
    %v2492 = vpop.permute.xlu0 %2491
    %2494 = vset.pattern.permute.xlu0 2
    %2495 = vperm.xlu0 %2494, %v1754
    %v2496 = vpop.permute.xlu0 %2495
    %2498 = vset.pattern.permute.xlu0 2
    %2499 = vperm.xlu0 %2498, %v1755
    %v2500 = vpop.permute.xlu0 %2499
    %2502 = vset.pattern.permute.xlu0 2
    %2503 = vperm.xlu0 %2502, %v1756
    %v2504 = vpop.permute.xlu0 %2503
    %2506 = vset.pattern.permute.xlu0 2
    %2507 = vperm.xlu0 %2506, %v1757
    %v2508 = vpop.permute.xlu0 %2507
    %2510 = vset.pattern.permute.xlu0 2
    %2511 = vperm.xlu0 %2510, %v1758
    %v2512 = vpop.permute.xlu0 %2511
    %2514 = vset.pattern.permute.xlu0 2
    %2515 = vperm.xlu0 %2514, %v1759
    %v2516 = vpop.permute.xlu0 %2515
    %2518 = vset.pattern.permute.xlu0 2
    %2519 = vperm.xlu0 %2518, %v1760
    %v2520 = vpop.permute.xlu0 %2519
    %2522 = vset.pattern.permute.xlu0 2
    %2523 = vperm.xlu0 %2522, %v1761
    %v2524 = vpop.permute.xlu0 %2523
    %2526 = vset.pattern.permute.xlu0 2
    %2527 = vperm.xlu0 %2526, %v1762
    %v2528 = vpop.permute.xlu0 %2527
    %2530 = vset.pattern.permute.xlu0 2
    %2531 = vperm.xlu0 %2530, %v1763
    %v2532 = vpop.permute.xlu0 %2531
    %2534 = vset.pattern.permute.xlu0 2
    %2535 = vperm.xlu0 %2534, %v1764
    %v2536 = vpop.permute.xlu0 %2535
    %2538 = vset.pattern.permute.xlu0 2
    %2539 = vperm.xlu0 %2538, %v1765
    %v2540 = vpop.permute.xlu0 %2539
    %2542 = vset.pattern.permute.xlu0 2
    %2543 = vperm.xlu0 %2542, %v1766
    %v2544 = vpop.permute.xlu0 %2543
    %2546 = vset.pattern.permute.xlu0 2
    %2547 = vperm.xlu0 %2546, %v1767
    %v2548 = vpop.permute.xlu0 %2547
    %2550 = vset.pattern.permute.xlu0 2
    %2551 = vperm.xlu0 %2550, %v1768
    %v2552 = vpop.permute.xlu0 %2551
    %2554 = vset.pattern.permute.xlu0 2
    %2555 = vperm.xlu0 %2554, %v1769
    %v2556 = vpop.permute.xlu0 %2555
    %2558 = vset.pattern.permute.xlu0 2
    %2559 = vperm.xlu0 %2558, %v1770
    %v2560 = vpop.permute.xlu0 %2559
    %2562 = vset.pattern.permute.xlu0 2
    %2563 = vperm.xlu0 %2562, %v1771
    %v2564 = vpop.permute.xlu0 %2563
    %2566 = vset.pattern.permute.xlu0 2
    %2567 = vperm.xlu0 %2566, %v1772
    %v2568 = vpop.permute.xlu0 %2567
    %2570 = vset.pattern.permute.xlu0 2
    %2571 = vperm.xlu0 %2570, %v1773
    %v2572 = vpop.permute.xlu0 %2571
    %v2574 = vlaneseq
    %v2575 = vshrl.u32 %v2574, 7
    %v2576 = vsub.s32 0, %v2575
    %v2577 = vrot.slane %v2389, %v2576
    %v2578 = vmul.f32 %v2392, %v2577
    %v2579 = vmul.f32 %v2396, %v2577
    %v2580 = vmul.f32 %v2400, %v2577
    %v2581 = vmul.f32 %v2404, %v2577
    %v2582 = vmul.f32 %v2408, %v2577
    %v2583 = vmul.f32 %v2412, %v2577
    %v2584 = vmul.f32 %v2416, %v2577
    %v2585 = vmul.f32 %v2420, %v2577
    %v2586 = vmul.f32 %v2424, %v2577
    %v2587 = vmul.f32 %v2428, %v2577
    %v2588 = vmul.f32 %v2432, %v2577
    %v2589 = vmul.f32 %v2436, %v2577
    %v2590 = vmul.f32 %v2440, %v2577
    %v2591 = vmul.f32 %v2444, %v2577
    %v2592 = vmul.f32 %v2448, %v2577
    %v2593 = vmul.f32 %v2452, %v2577
    %v2594 = vmul.f32 %v2456, %v2577
    %v2595 = vmul.f32 %v2460, %v2577
    %v2596 = vmul.f32 %v2464, %v2577
    %v2597 = vmul.f32 %v2468, %v2577
    %v2598 = vmul.f32 %v2472, %v2577
    %v2599 = vmul.f32 %v2476, %v2577
    %v2600 = vmul.f32 %v2480, %v2577
    %v2601 = vmul.f32 %v2484, %v2577
    %v2602 = vmul.f32 %v2488, %v2577
    %v2603 = vmul.f32 %v2492, %v2577
    %v2604 = vmul.f32 %v2496, %v2577
    %v2605 = vmul.f32 %v2500, %v2577
    %v2606 = vmul.f32 %v2504, %v2577
    %v2607 = vmul.f32 %v2508, %v2577
    %v2608 = vmul.f32 %v2512, %v2577
    %v2609 = vmul.f32 %v2516, %v2577
    %v2610 = vmul.f32 %v2520, %v2577
    %v2611 = vmul.f32 %v2524, %v2577
    %v2612 = vmul.f32 %v2528, %v2577
    %v2613 = vmul.f32 %v2532, %v2577
    %v2614 = vmul.f32 %v2536, %v2577
    %v2615 = vmul.f32 %v2540, %v2577
    %v2616 = vmul.f32 %v2544, %v2577
    %v2617 = vmul.f32 %v2548, %v2577
    %v2618 = vmul.f32 %v2552, %v2577
    %v2619 = vmul.f32 %v2556, %v2577
    %v2620 = vmul.f32 %v2560, %v2577
    %v2621 = vmul.f32 %v2564, %v2577
    %v2622 = vmul.f32 %v2568, %v2577
    %v2623 = vmul.f32 %v2572, %v2577
    %v2624 = vadd.f32 %v2343, %v2578
    %v2625 = vadd.f32 %v2344, %v2579
    %v2626 = vadd.f32 %v2345, %v2580
    %v2627 = vadd.f32 %v2346, %v2581
    %v2628 = vadd.f32 %v2347, %v2582
    %v2629 = vadd.f32 %v2348, %v2583
    %v2630 = vadd.f32 %v2349, %v2584
    %v2631 = vadd.f32 %v2350, %v2585
    %v2632 = vadd.f32 %v2351, %v2586
    %v2633 = vadd.f32 %v2352, %v2587
    %v2634 = vadd.f32 %v2353, %v2588
    %v2635 = vadd.f32 %v2354, %v2589
    %v2636 = vadd.f32 %v2355, %v2590
    %v2637 = vadd.f32 %v2356, %v2591
    %v2638 = vadd.f32 %v2357, %v2592
    %v2639 = vadd.f32 %v2358, %v2593
    %v2640 = vadd.f32 %v2359, %v2594
    %v2641 = vadd.f32 %v2360, %v2595
    %v2642 = vadd.f32 %v2361, %v2596
    %v2643 = vadd.f32 %v2362, %v2597
    %v2644 = vadd.f32 %v2363, %v2598
    %v2645 = vadd.f32 %v2364, %v2599
    %v2646 = vadd.f32 %v2365, %v2600
    %v2647 = vadd.f32 %v2366, %v2601
    %v2648 = vadd.f32 %v2367, %v2602
    %v2649 = vadd.f32 %v2368, %v2603
    %v2650 = vadd.f32 %v2369, %v2604
    %v2651 = vadd.f32 %v2370, %v2605
    %v2652 = vadd.f32 %v2371, %v2606
    %v2653 = vadd.f32 %v2372, %v2607
    %v2654 = vadd.f32 %v2373, %v2608
    %v2655 = vadd.f32 %v2374, %v2609
    %v2656 = vadd.f32 %v2375, %v2610
    %v2657 = vadd.f32 %v2376, %v2611
    %v2658 = vadd.f32 %v2377, %v2612
    %v2659 = vadd.f32 %v2378, %v2613
    %v2660 = vadd.f32 %v2379, %v2614
    %v2661 = vadd.f32 %v2380, %v2615
    %v2662 = vadd.f32 %v2381, %v2616
    %v2663 = vadd.f32 %v2382, %v2617
    %v2664 = vadd.f32 %v2383, %v2618
    %v2665 = vadd.f32 %v2384, %v2619
    %v2666 = vadd.f32 %v2385, %v2620
    %v2667 = vadd.f32 %v2386, %v2621
    %v2668 = vadd.f32 %v2387, %v2622
    %v2669 = vadd.f32 %v2388, %v2623
    %v2670 = vmax.f32 %v2624, 0.0
    %v2671 = vmax.f32 %v2625, 0.0
    %v2672 = vmax.f32 %v2626, 0.0
    %v2673 = vmax.f32 %v2627, 0.0
    %v2674 = vmax.f32 %v2628, 0.0
    %v2675 = vmax.f32 %v2629, 0.0
    %v2676 = vmax.f32 %v2630, 0.0
    %v2677 = vmax.f32 %v2631, 0.0
    %v2678 = vmax.f32 %v2632, 0.0
    %v2679 = vmax.f32 %v2633, 0.0
    %v2680 = vmax.f32 %v2634, 0.0
    %v2681 = vmax.f32 %v2635, 0.0
    %v2682 = vmax.f32 %v2636, 0.0
    %v2683 = vmax.f32 %v2637, 0.0
    %v2684 = vmax.f32 %v2638, 0.0
    %v2685 = vmax.f32 %v2639, 0.0
    %v2686 = vmax.f32 %v2640, 0.0
    %v2687 = vmax.f32 %v2641, 0.0
    %v2688 = vmax.f32 %v2642, 0.0
    %v2689 = vmax.f32 %v2643, 0.0
    %v2690 = vmax.f32 %v2644, 0.0
    %v2691 = vmax.f32 %v2645, 0.0
    %v2692 = vmax.f32 %v2646, 0.0
    %v2693 = vmax.f32 %v2647, 0.0
    %v2694 = vmax.f32 %v2648, 0.0
    %v2695 = vmax.f32 %v2649, 0.0
    %v2696 = vmax.f32 %v2650, 0.0
    %v2697 = vmax.f32 %v2651, 0.0
    %v2698 = vmax.f32 %v2652, 0.0
    %v2699 = vmax.f32 %v2653, 0.0
    %v2700 = vmax.f32 %v2654, 0.0
    %v2701 = vmax.f32 %v2655, 0.0
    %v2702 = vmax.f32 %v2656, 0.0
    %v2703 = vmax.f32 %v2657, 0.0
    %v2704 = vmax.f32 %v2658, 0.0
    %v2705 = vmax.f32 %v2659, 0.0
    %v2706 = vmax.f32 %v2660, 0.0
    %v2707 = vmax.f32 %v2661, 0.0
    %v2708 = vmax.f32 %v2662, 0.0
    %v2709 = vmax.f32 %v2663, 0.0
    %v2710 = vmax.f32 %v2664, 0.0
    %v2711 = vmax.f32 %v2665, 0.0
    %v2712 = vmax.f32 %v2666, 0.0
    %v2713 = vmax.f32 %v2667, 0.0
    %v2714 = vmax.f32 %v2668, 0.0
    %v2715 = vmax.f32 %v2669, 0.0
    %2716 = vst.msk [vmem:[#allocation6] sm:$0xff] %vm910, %v2670
    %2717 = vst.msk [vmem:[#allocation6 + $0x8] sm:$0xff] %vm910, %v2671
    %2718 = vst.msk [vmem:[#allocation6 + $0x10] sm:$0xff] %vm910, %v2672
    %2719 = vst.msk [vmem:[#allocation6 + $0x18] sm:$0xff] %vm910, %v2673
    %2720 = vst.msk [vmem:[#allocation6 + $0x20] sm:$0xff] %vm910, %v2674
    %2721 = vst.msk [vmem:[#allocation6 + $0x28] sm:$0xff] %vm910, %v2675
    %2722 = vst.msk [vmem:[#allocation6 + $0x30] sm:$0xff] %vm910, %v2676
    %2723 = vst.msk [vmem:[#allocation6 + $0x38] sm:$0xff] %vm910, %v2677
    %2724 = vst.msk [vmem:[#allocation6 + $0x40] sm:$0xff] %vm910, %v2678
    %2725 = vst.msk [vmem:[#allocation6 + $0x48] sm:$0xff] %vm910, %v2679
    %2726 = vst.msk [vmem:[#allocation6 + $0x50] sm:$0xff] %vm910, %v2680
    %2727 = vst.msk [vmem:[#allocation6 + $0x58] sm:$0xff] %vm910, %v2681
    %2728 = vst.msk [vmem:[#allocation6 + $0x60] sm:$0xff] %vm910, %v2682
    %2729 = vst.msk [vmem:[#allocation6 + $0x68] sm:$0xff] %vm910, %v2683
    %2730 = vst.msk [vmem:[#allocation6 + $0x70] sm:$0xff] %vm910, %v2684
    %2731 = vst.msk [vmem:[#allocation6 + $0x78] sm:$0xff] %vm910, %v2685
    %2732 = vst.msk [vmem:[#allocation6 + $0x80] sm:$0xff] %vm910, %v2686
    %2733 = vst.msk [vmem:[#allocation6 + $0x88] sm:$0xff] %vm910, %v2687
    %2734 = vst.msk [vmem:[#allocation6 + $0x90] sm:$0xff] %vm910, %v2688
    %2735 = vst.msk [vmem:[#allocation6 + $0x98] sm:$0xff] %vm910, %v2689
    %2736 = vst.msk [vmem:[#allocation6 + $0xa0] sm:$0xff] %vm910, %v2690
    %2737 = vst.msk [vmem:[#allocation6 + $0xa8] sm:$0xff] %vm910, %v2691
    %2738 = vst.msk [vmem:[#allocation6 + $0xb0] sm:$0xff] %vm910, %v2692
    %2739 = vst.msk [vmem:[#allocation6 + $0xb8] sm:$0xff] %vm910, %v2693
    %2740 = vst.msk [vmem:[#allocation6 + $0xc0] sm:$0xff] %vm910, %v2694
    %2741 = vst.msk [vmem:[#allocation6 + $0xc8] sm:$0xff] %vm910, %v2695
    %2742 = vst.msk [vmem:[#allocation6 + $0xd0] sm:$0xff] %vm910, %v2696
    %2743 = vst.msk [vmem:[#allocation6 + $0xd8] sm:$0xff] %vm910, %v2697
    %2744 = vst.msk [vmem:[#allocation6 + $0xe0] sm:$0xff] %vm910, %v2698
    %2745 = vst.msk [vmem:[#allocation6 + $0xe8] sm:$0xff] %vm910, %v2699
    %2746 = vst.msk [vmem:[#allocation6 + $0xf0] sm:$0xff] %vm910, %v2700
    %2747 = vst.msk [vmem:[#allocation6 + $0xf8] sm:$0xff] %vm910, %v2701
    %2748 = vst.msk [vmem:[#allocation6 + $0x100] sm:$0xff] %vm910, %v2702
    %2749 = vst.msk [vmem:[#allocation6 + $0x108] sm:$0xff] %vm910, %v2703
    %2750 = vst.msk [vmem:[#allocation6 + $0x110] sm:$0xff] %vm910, %v2704
    %2751 = vst.msk [vmem:[#allocation6 + $0x118] sm:$0xff] %vm910, %v2705
    %2752 = vst.msk [vmem:[#allocation6 + $0x120] sm:$0xff] %vm910, %v2706
    %2753 = vst.msk [vmem:[#allocation6 + $0x128] sm:$0xff] %vm910, %v2707
    %2754 = vst.msk [vmem:[#allocation6 + $0x130] sm:$0xff] %vm910, %v2708
    %2755 = vst.msk [vmem:[#allocation6 + $0x138] sm:$0xff] %vm910, %v2709
    %2756 = vst.msk [vmem:[#allocation6 + $0x140] sm:$0xff] %vm910, %v2710
    %2757 = vst.msk [vmem:[#allocation6 + $0x148] sm:$0xff] %vm910, %v2711
    %2758 = vst.msk [vmem:[#allocation6 + $0x150] sm:$0xff] %vm910, %v2712
    %2759 = vst.msk [vmem:[#allocation6 + $0x158] sm:$0xff] %vm910, %v2713
    %2760 = vst.msk [vmem:[#allocation6 + $0x160] sm:$0xff] %vm910, %v2714
    %2761 = vst.msk [vmem:[#allocation6 + $0x168] sm:$0xff] %vm910, %v2715
    %v2762 = vld [vmem:[#allocation6] ss:$2 sm:$0xff]
    %s2763 = scalar_lea.vmem [#allocation6], 16
    %v2764 = vld [vmem:[%s2763] ss:$2 sm:$0xff]
    %s2765 = scalar_lea.vmem [#allocation6], 32
    %v2766 = vld [vmem:[%s2765] ss:$2 sm:$0xff]
    %s2767 = scalar_lea.vmem [#allocation6], 48
    %v2768 = vld [vmem:[%s2767] ss:$2 sm:$0xff]
    %s2769 = scalar_lea.vmem [#allocation6], 64
    %v2770 = vld [vmem:[%s2769] ss:$2 sm:$0xff]
    %s2771 = scalar_lea.vmem [#allocation6], 80
    %v2772 = vld [vmem:[%s2771] ss:$2 sm:$0xff]
    %s2773 = scalar_lea.vmem [#allocation6], 96
    %v2774 = vld [vmem:[%s2773] ss:$2 sm:$0xff]
    %s2775 = scalar_lea.vmem [#allocation6], 112
    %v2776 = vld [vmem:[%s2775] ss:$2 sm:$0xff]
    %s2777 = scalar_lea.vmem [#allocation6], 128
    %v2778 = vld [vmem:[%s2777] ss:$2 sm:$0xff]
    %s2779 = scalar_lea.vmem [#allocation6], 144
    %v2780 = vld [vmem:[%s2779] ss:$2 sm:$0xff]
    %s2781 = scalar_lea.vmem [#allocation6], 160
    %v2782 = vld [vmem:[%s2781] ss:$2 sm:$0xff]
    %s2783 = scalar_lea.vmem [#allocation6], 176
    %v2784 = vld [vmem:[%s2783] ss:$2 sm:$0x3]
    %s2785 = scalar_lea.vmem [#allocation6], 1
    %v2786 = vld [vmem:[%s2785] ss:$2 sm:$0xff]
    %s2787 = scalar_lea.vmem [#allocation6], 17
    %v2788 = vld [vmem:[%s2787] ss:$2 sm:$0xff]
    %s2789 = scalar_lea.vmem [#allocation6], 33
    %v2790 = vld [vmem:[%s2789] ss:$2 sm:$0xff]
    %s2791 = scalar_lea.vmem [#allocation6], 49
    %v2792 = vld [vmem:[%s2791] ss:$2 sm:$0xff]
    %s2793 = scalar_lea.vmem [#allocation6], 65
    %v2794 = vld [vmem:[%s2793] ss:$2 sm:$0xff]
    %s2795 = scalar_lea.vmem [#allocation6], 81
    %v2796 = vld [vmem:[%s2795] ss:$2 sm:$0xff]
    %s2797 = scalar_lea.vmem [#allocation6], 97
    %v2798 = vld [vmem:[%s2797] ss:$2 sm:$0xff]
    %s2799 = scalar_lea.vmem [#allocation6], 113
    %v2800 = vld [vmem:[%s2799] ss:$2 sm:$0xff]
    %s2801 = scalar_lea.vmem [#allocation6], 129
    %v2802 = vld [vmem:[%s2801] ss:$2 sm:$0xff]
    %s2803 = scalar_lea.vmem [#allocation6], 145
    %v2804 = vld [vmem:[%s2803] ss:$2 sm:$0xff]
    %s2805 = scalar_lea.vmem [#allocation6], 161
    %v2806 = vld [vmem:[%s2805] ss:$2 sm:$0xff]
    %s2807 = scalar_lea.vmem [#allocation6], 177
    %v2808 = vld [vmem:[%s2807] ss:$2 sm:$0x3]
    %v2809 = vmax.f32 %v2762, %v2786
    %v2810 = vmax.f32 %v2764, %v2788
    %v2811 = vmax.f32 %v2766, %v2790
    %v2812 = vmax.f32 %v2768, %v2792
    %v2813 = vmax.f32 %v2770, %v2794
    %v2814 = vmax.f32 %v2772, %v2796
    %v2815 = vmax.f32 %v2774, %v2798
    %v2816 = vmax.f32 %v2776, %v2800
    %v2817 = vmax.f32 %v2778, %v2802
    %v2818 = vmax.f32 %v2780, %v2804
    %v2819 = vmax.f32 %v2782, %v2806
    %v2820 = vmax.f32 %v2784, %v2808
    %2821 = vst.msk [vmem:[#allocation7 + $0x1] sm:$0xff] %vm910, %v2809
    %2822 = vst.msk [vmem:[#allocation7 + $0x9] sm:$0xff] %vm910, %v2810
    %2823 = vst.msk [vmem:[#allocation7 + $0x11] sm:$0xff] %vm910, %v2811
    %2824 = vst.msk [vmem:[#allocation7 + $0x19] sm:$0xff] %vm910, %v2812
    %2825 = vst.msk [vmem:[#allocation7 + $0x21] sm:$0xff] %vm910, %v2813
    %2826 = vst.msk [vmem:[#allocation7 + $0x29] sm:$0xff] %vm910, %v2814
    %2827 = vst.msk [vmem:[#allocation7 + $0x31] sm:$0xff] %vm910, %v2815
    %2828 = vst.msk [vmem:[#allocation7 + $0x39] sm:$0xff] %vm910, %v2816
    %2829 = vst.msk [vmem:[#allocation7 + $0x41] sm:$0xff] %vm910, %v2817
    %2830 = vst.msk [vmem:[#allocation7 + $0x49] sm:$0xff] %vm910, %v2818
    %2831 = vst.msk [vmem:[#allocation7 + $0x51] sm:$0xff] %vm910, %v2819
    %vm2832 = vcmask 254976
    %2833 = vst.msk [vmem:[#allocation7 + $0x59] sm:$0x3] %vm2832, %v2820
    %2834 = vst.msk [vmem:[#allocation7] sm:$0x1] %vm1011, 0.0
    %2835 = vst.msk [vmem:[#allocation7 + $0x5b] sm:$0x1] %vm1011, 0.0
    %s2836 = scalar_lea.vmem [#allocation6], 184
    %v2837 = vld [vmem:[%s2836] ss:$2 sm:$0xff]
    %s2838 = scalar_lea.vmem [#allocation6], 200
    %v2839 = vld [vmem:[%s2838] ss:$2 sm:$0xff]
    %s2840 = scalar_lea.vmem [#allocation6], 216
    %v2841 = vld [vmem:[%s2840] ss:$2 sm:$0xff]
    %s2842 = scalar_lea.vmem [#allocation6], 232
    %v2843 = vld [vmem:[%s2842] ss:$2 sm:$0xff]
    %s2844 = scalar_lea.vmem [#allocation6], 248
    %v2845 = vld [vmem:[%s2844] ss:$2 sm:$0xff]
    %s2846 = scalar_lea.vmem [#allocation6], 264
    %v2847 = vld [vmem:[%s2846] ss:$2 sm:$0xff]
    %s2848 = scalar_lea.vmem [#allocation6], 280
    %v2849 = vld [vmem:[%s2848] ss:$2 sm:$0xff]
    %s2850 = scalar_lea.vmem [#allocation6], 296
    %v2851 = vld [vmem:[%s2850] ss:$2 sm:$0xff]
    %s2852 = scalar_lea.vmem [#allocation6], 312
    %v2853 = vld [vmem:[%s2852] ss:$2 sm:$0xff]
    %s2854 = scalar_lea.vmem [#allocation6], 328
    %v2855 = vld [vmem:[%s2854] ss:$2 sm:$0xff]
    %s2856 = scalar_lea.vmem [#allocation6], 344
    %v2857 = vld [vmem:[%s2856] ss:$2 sm:$0xff]
    %s2858 = scalar_lea.vmem [#allocation6], 360
    %v2859 = vld [vmem:[%s2858] ss:$2 sm:$0x3]
    %s2860 = scalar_lea.vmem [#allocation6], 185
    %v2861 = vld [vmem:[%s2860] ss:$2 sm:$0xff]
    %s2862 = scalar_lea.vmem [#allocation6], 201
    %v2863 = vld [vmem:[%s2862] ss:$2 sm:$0xff]
    %s2864 = scalar_lea.vmem [#allocation6], 217
    %v2865 = vld [vmem:[%s2864] ss:$2 sm:$0xff]
    %s2866 = scalar_lea.vmem [#allocation6], 233
    %v2867 = vld [vmem:[%s2866] ss:$2 sm:$0xff]
    %s2868 = scalar_lea.vmem [#allocation6], 249
    %v2869 = vld [vmem:[%s2868] ss:$2 sm:$0xff]
    %s2870 = scalar_lea.vmem [#allocation6], 265
    %v2871 = vld [vmem:[%s2870] ss:$2 sm:$0xff]
    %s2872 = scalar_lea.vmem [#allocation6], 281
    %v2873 = vld [vmem:[%s2872] ss:$2 sm:$0xff]
    %s2874 = scalar_lea.vmem [#allocation6], 297
    %v2875 = vld [vmem:[%s2874] ss:$2 sm:$0xff]
    %s2876 = scalar_lea.vmem [#allocation6], 313
    %v2877 = vld [vmem:[%s2876] ss:$2 sm:$0xff]
    %s2878 = scalar_lea.vmem [#allocation6], 329
    %v2879 = vld [vmem:[%s2878] ss:$2 sm:$0xff]
    %s2880 = scalar_lea.vmem [#allocation6], 345
    %v2881 = vld [vmem:[%s2880] ss:$2 sm:$0xff]
    %s2882 = scalar_lea.vmem [#allocation6], 361
    %v2883 = vld [vmem:[%s2882] ss:$2 sm:$0x3]
    %v2884 = vmax.f32 %v2837, %v2861
    %v2885 = vmax.f32 %v2839, %v2863
    %v2886 = vmax.f32 %v2841, %v2865
    %v2887 = vmax.f32 %v2843, %v2867
    %v2888 = vmax.f32 %v2845, %v2869
    %v2889 = vmax.f32 %v2847, %v2871
    %v2890 = vmax.f32 %v2849, %v2873
    %v2891 = vmax.f32 %v2851, %v2875
    %v2892 = vmax.f32 %v2853, %v2877
    %v2893 = vmax.f32 %v2855, %v2879
    %v2894 = vmax.f32 %v2857, %v2881
    %v2895 = vmax.f32 %v2859, %v2883
    %2896 = vst.msk [vmem:[#allocation7 + $0x61] sm:$0xff] %vm910, %v2884
    %2897 = vst.msk [vmem:[#allocation7 + $0x69] sm:$0xff] %vm910, %v2885
    %2898 = vst.msk [vmem:[#allocation7 + $0x71] sm:$0xff] %vm910, %v2886
    %2899 = vst.msk [vmem:[#allocation7 + $0x79] sm:$0xff] %vm910, %v2887
    %2900 = vst.msk [vmem:[#allocation7 + $0x81] sm:$0xff] %vm910, %v2888
    %2901 = vst.msk [vmem:[#allocation7 + $0x89] sm:$0xff] %vm910, %v2889
    %2902 = vst.msk [vmem:[#allocation7 + $0x91] sm:$0xff] %vm910, %v2890
    %2903 = vst.msk [vmem:[#allocation7 + $0x99] sm:$0xff] %vm910, %v2891
    %2904 = vst.msk [vmem:[#allocation7 + $0xa1] sm:$0xff] %vm910, %v2892
    %2905 = vst.msk [vmem:[#allocation7 + $0xa9] sm:$0xff] %vm910, %v2893
    %2906 = vst.msk [vmem:[#allocation7 + $0xb1] sm:$0xff] %vm910, %v2894
    %2907 = vst.msk [vmem:[#allocation7 + $0xb9] sm:$0x3] %vm2832, %v2895
    %2908 = vst.msk [vmem:[#allocation7 + $0x60] sm:$0x1] %vm1011, 0.0
    %2909 = vst.msk [vmem:[#allocation7 + $0xbb] sm:$0x1] %vm1011, 0.0
    %v2910 = vld [vmem:[#allocation7] sm:$0xff]
    %v2911 = vld [vmem:[#allocation7 + $0x8] sm:$0xff]
    %v2912 = vld [vmem:[#allocation7 + $0x10] sm:$0xff]
    %v2913 = vld [vmem:[#allocation7 + $0x18] sm:$0xff]
    %v2914 = vld [vmem:[#allocation7 + $0x20] sm:$0xff]
    %v2915 = vld [vmem:[#allocation7 + $0x28] sm:$0xff]
    %v2916 = vld [vmem:[#allocation7 + $0x30] sm:$0xff]
    %v2917 = vld [vmem:[#allocation7 + $0x38] sm:$0xff]
    %v2918 = vld [vmem:[#allocation7 + $0x40] sm:$0xff]
    %v2919 = vld [vmem:[#allocation7 + $0x48] sm:$0xff]
    %v2920 = vld [vmem:[#allocation7 + $0x50] sm:$0xff]
    %v2921 = vld [vmem:[#allocation7 + $0x58] sm:$0x3]
    %2922 = vst.msk [vmem:[#allocation8] sm:$0xff] %vm910, %v2910
    %2923 = vst.msk [vmem:[#allocation8 + $0x8] sm:$0xff] %vm910, %v2911
    %2924 = vst.msk [vmem:[#allocation8 + $0x10] sm:$0xff] %vm910, %v2912
    %2925 = vst.msk [vmem:[#allocation8 + $0x18] sm:$0xff] %vm910, %v2913
    %2926 = vst.msk [vmem:[#allocation8 + $0x20] sm:$0xff] %vm910, %v2914
    %2927 = vst.msk [vmem:[#allocation8 + $0x28] sm:$0xff] %vm910, %v2915
    %2928 = vst.msk [vmem:[#allocation8 + $0x30] sm:$0xff] %vm910, %v2916
    %2929 = vst.msk [vmem:[#allocation8 + $0x38] sm:$0xff] %vm910, %v2917
    %2930 = vst.msk [vmem:[#allocation8 + $0x40] sm:$0xff] %vm910, %v2918
    %2931 = vst.msk [vmem:[#allocation8 + $0x48] sm:$0xff] %vm910, %v2919
    %2932 = vst.msk [vmem:[#allocation8 + $0x50] sm:$0xff] %vm910, %v2920
    %2933 = vst.msk [vmem:[#allocation8 + $0x58] sm:$0x3] %vm2832, %v2921
    %v2934 = vld [vmem:[#allocation7 + $0x1] sm:$0xff]
    %v2935 = vld [vmem:[#allocation7 + $0x9] sm:$0xff]
    %v2936 = vld [vmem:[#allocation7 + $0x11] sm:$0xff]
    %v2937 = vld [vmem:[#allocation7 + $0x19] sm:$0xff]
    %v2938 = vld [vmem:[#allocation7 + $0x21] sm:$0xff]
    %v2939 = vld [vmem:[#allocation7 + $0x29] sm:$0xff]
    %v2940 = vld [vmem:[#allocation7 + $0x31] sm:$0xff]
    %v2941 = vld [vmem:[#allocation7 + $0x39] sm:$0xff]
    %v2942 = vld [vmem:[#allocation7 + $0x41] sm:$0xff]
    %v2943 = vld [vmem:[#allocation7 + $0x49] sm:$0xff]
    %v2944 = vld [vmem:[#allocation7 + $0x51] sm:$0xff]
    %v2945 = vld [vmem:[#allocation7 + $0x59] sm:$0x3]
    %2958 = vrot.lane.b32.xlu0 %v2934, 32
    %v2959 = vpop.permute.xlu0 %2958
    %2960 = vrot.lane.b32.xlu0 %v2935, 32
    %v2961 = vpop.permute.xlu0 %2960
    %2962 = vrot.lane.b32.xlu0 %v2936, 32
    %v2963 = vpop.permute.xlu0 %2962
    %2964 = vrot.lane.b32.xlu0 %v2937, 32
    %v2965 = vpop.permute.xlu0 %2964
    %2966 = vrot.lane.b32.xlu0 %v2938, 32
    %v2967 = vpop.permute.xlu0 %2966
    %2968 = vrot.lane.b32.xlu0 %v2939, 32
    %v2969 = vpop.permute.xlu0 %2968
    %2970 = vrot.lane.b32.xlu0 %v2940, 32
    %v2971 = vpop.permute.xlu0 %2970
    %2972 = vrot.lane.b32.xlu0 %v2941, 32
    %v2973 = vpop.permute.xlu0 %2972
    %2974 = vrot.lane.b32.xlu0 %v2942, 32
    %v2975 = vpop.permute.xlu0 %2974
    %2976 = vrot.lane.b32.xlu0 %v2943, 32
    %v2977 = vpop.permute.xlu0 %2976
    %2978 = vrot.lane.b32.xlu0 %v2944, 32
    %v2979 = vpop.permute.xlu0 %2978
    %2980 = vrot.lane.b32.xlu0 %v2945, 32
    %v2981 = vpop.permute.xlu0 %2980
    %2994 = vst.msk [vmem:[#allocation8] sm:$0xff] %vm1146, %v2959
    %2995 = vst.msk [vmem:[#allocation8 + $0x8] sm:$0xff] %vm1146, %v2961
    %2996 = vst.msk [vmem:[#allocation8 + $0x10] sm:$0xff] %vm1146, %v2963
    %2997 = vst.msk [vmem:[#allocation8 + $0x18] sm:$0xff] %vm1146, %v2965
    %2998 = vst.msk [vmem:[#allocation8 + $0x20] sm:$0xff] %vm1146, %v2967
    %2999 = vst.msk [vmem:[#allocation8 + $0x28] sm:$0xff] %vm1146, %v2969
    %3000 = vst.msk [vmem:[#allocation8 + $0x30] sm:$0xff] %vm1146, %v2971
    %3001 = vst.msk [vmem:[#allocation8 + $0x38] sm:$0xff] %vm1146, %v2973
    %3002 = vst.msk [vmem:[#allocation8 + $0x40] sm:$0xff] %vm1146, %v2975
    %3003 = vst.msk [vmem:[#allocation8 + $0x48] sm:$0xff] %vm1146, %v2977
    %3004 = vst.msk [vmem:[#allocation8 + $0x50] sm:$0xff] %vm1146, %v2979
    %vm3005 = vcmask 517376
    %3006 = vst.msk [vmem:[#allocation8 + $0x58] sm:$0x3] %vm3005, %v2981
    %v3007 = vld [vmem:[#allocation7 + $0x2] sm:$0xff]
    %v3008 = vld [vmem:[#allocation7 + $0xa] sm:$0xff]
    %v3009 = vld [vmem:[#allocation7 + $0x12] sm:$0xff]
    %v3010 = vld [vmem:[#allocation7 + $0x1a] sm:$0xff]
    %v3011 = vld [vmem:[#allocation7 + $0x22] sm:$0xff]
    %v3012 = vld [vmem:[#allocation7 + $0x2a] sm:$0xff]
    %v3013 = vld [vmem:[#allocation7 + $0x32] sm:$0xff]
    %v3014 = vld [vmem:[#allocation7 + $0x3a] sm:$0xff]
    %v3015 = vld [vmem:[#allocation7 + $0x42] sm:$0xff]
    %v3016 = vld [vmem:[#allocation7 + $0x4a] sm:$0xff]
    %v3017 = vld [vmem:[#allocation7 + $0x52] sm:$0xff]
    %v3018 = vld [vmem:[#allocation7 + $0x5a] sm:$0x3]
    %3031 = vrot.lane.b32.xlu0 %v3007, 64
    %v3032 = vpop.permute.xlu0 %3031
    %3033 = vrot.lane.b32.xlu0 %v3008, 64
    %v3034 = vpop.permute.xlu0 %3033
    %3035 = vrot.lane.b32.xlu0 %v3009, 64
    %v3036 = vpop.permute.xlu0 %3035
    %3037 = vrot.lane.b32.xlu0 %v3010, 64
    %v3038 = vpop.permute.xlu0 %3037
    %3039 = vrot.lane.b32.xlu0 %v3011, 64
    %v3040 = vpop.permute.xlu0 %3039
    %3041 = vrot.lane.b32.xlu0 %v3012, 64
    %v3042 = vpop.permute.xlu0 %3041
    %3043 = vrot.lane.b32.xlu0 %v3013, 64
    %v3044 = vpop.permute.xlu0 %3043
    %3045 = vrot.lane.b32.xlu0 %v3014, 64
    %v3046 = vpop.permute.xlu0 %3045
    %3047 = vrot.lane.b32.xlu0 %v3015, 64
    %v3048 = vpop.permute.xlu0 %3047
    %3049 = vrot.lane.b32.xlu0 %v3016, 64
    %v3050 = vpop.permute.xlu0 %3049
    %3051 = vrot.lane.b32.xlu0 %v3017, 64
    %v3052 = vpop.permute.xlu0 %3051
    %3053 = vrot.lane.b32.xlu0 %v3018, 64
    %v3054 = vpop.permute.xlu0 %3053
    %3067 = vst.msk [vmem:[#allocation8] sm:$0xff] %vm1208, %v3032
    %3068 = vst.msk [vmem:[#allocation8 + $0x8] sm:$0xff] %vm1208, %v3034
    %3069 = vst.msk [vmem:[#allocation8 + $0x10] sm:$0xff] %vm1208, %v3036
    %3070 = vst.msk [vmem:[#allocation8 + $0x18] sm:$0xff] %vm1208, %v3038
    %3071 = vst.msk [vmem:[#allocation8 + $0x20] sm:$0xff] %vm1208, %v3040
    %3072 = vst.msk [vmem:[#allocation8 + $0x28] sm:$0xff] %vm1208, %v3042
    %3073 = vst.msk [vmem:[#allocation8 + $0x30] sm:$0xff] %vm1208, %v3044
    %3074 = vst.msk [vmem:[#allocation8 + $0x38] sm:$0xff] %vm1208, %v3046
    %3075 = vst.msk [vmem:[#allocation8 + $0x40] sm:$0xff] %vm1208, %v3048
    %3076 = vst.msk [vmem:[#allocation8 + $0x48] sm:$0xff] %vm1208, %v3050
    %3077 = vst.msk [vmem:[#allocation8 + $0x50] sm:$0xff] %vm1208, %v3052
    %vm3078 = vcmask 779776
    %3079 = vst.msk [vmem:[#allocation8 + $0x58] sm:$0x3] %vm3078, %v3054
    %vm3080 = vcmask 783360
    %3081 = vst.msk [vmem:[#allocation8 + $0x5a] sm:$0x3f] %vm3080, 0.0
    %v3082 = vld [vmem:[#allocation7 + $0x60] sm:$0xff]
    %v3083 = vld [vmem:[#allocation7 + $0x68] sm:$0xff]
    %v3084 = vld [vmem:[#allocation7 + $0x70] sm:$0xff]
    %v3085 = vld [vmem:[#allocation7 + $0x78] sm:$0xff]
    %v3086 = vld [vmem:[#allocation7 + $0x80] sm:$0xff]
    %v3087 = vld [vmem:[#allocation7 + $0x88] sm:$0xff]
    %v3088 = vld [vmem:[#allocation7 + $0x90] sm:$0xff]
    %v3089 = vld [vmem:[#allocation7 + $0x98] sm:$0xff]
    %v3090 = vld [vmem:[#allocation7 + $0xa0] sm:$0xff]
    %v3091 = vld [vmem:[#allocation7 + $0xa8] sm:$0xff]
    %v3092 = vld [vmem:[#allocation7 + $0xb0] sm:$0xff]
    %v3093 = vld [vmem:[#allocation7 + $0xb8] sm:$0x3]
    %3094 = vst.msk [vmem:[#allocation8 + $0x60] sm:$0xff] %vm910, %v3082
    %3095 = vst.msk [vmem:[#allocation8 + $0x68] sm:$0xff] %vm910, %v3083
    %3096 = vst.msk [vmem:[#allocation8 + $0x70] sm:$0xff] %vm910, %v3084
    %3097 = vst.msk [vmem:[#allocation8 + $0x78] sm:$0xff] %vm910, %v3085
    %3098 = vst.msk [vmem:[#allocation8 + $0x80] sm:$0xff] %vm910, %v3086
    %3099 = vst.msk [vmem:[#allocation8 + $0x88] sm:$0xff] %vm910, %v3087
    %3100 = vst.msk [vmem:[#allocation8 + $0x90] sm:$0xff] %vm910, %v3088
    %3101 = vst.msk [vmem:[#allocation8 + $0x98] sm:$0xff] %vm910, %v3089
    %3102 = vst.msk [vmem:[#allocation8 + $0xa0] sm:$0xff] %vm910, %v3090
    %3103 = vst.msk [vmem:[#allocation8 + $0xa8] sm:$0xff] %vm910, %v3091
    %3104 = vst.msk [vmem:[#allocation8 + $0xb0] sm:$0xff] %vm910, %v3092
    %3105 = vst.msk [vmem:[#allocation8 + $0xb8] sm:$0x3] %vm2832, %v3093
    %v3106 = vld [vmem:[#allocation7 + $0x61] sm:$0xff]
    %v3107 = vld [vmem:[#allocation7 + $0x69] sm:$0xff]
    %v3108 = vld [vmem:[#allocation7 + $0x71] sm:$0xff]
    %v3109 = vld [vmem:[#allocation7 + $0x79] sm:$0xff]
    %v3110 = vld [vmem:[#allocation7 + $0x81] sm:$0xff]
    %v3111 = vld [vmem:[#allocation7 + $0x89] sm:$0xff]
    %v3112 = vld [vmem:[#allocation7 + $0x91] sm:$0xff]
    %v3113 = vld [vmem:[#allocation7 + $0x99] sm:$0xff]
    %v3114 = vld [vmem:[#allocation7 + $0xa1] sm:$0xff]
    %v3115 = vld [vmem:[#allocation7 + $0xa9] sm:$0xff]
    %v3116 = vld [vmem:[#allocation7 + $0xb1] sm:$0xff]
    %v3117 = vld [vmem:[#allocation7 + $0xb9] sm:$0x3]
    %3130 = vrot.lane.b32.xlu0 %v3106, 32
    %v3131 = vpop.permute.xlu0 %3130
    %3132 = vrot.lane.b32.xlu0 %v3107, 32
    %v3133 = vpop.permute.xlu0 %3132
    %3134 = vrot.lane.b32.xlu0 %v3108, 32
    %v3135 = vpop.permute.xlu0 %3134
    %3136 = vrot.lane.b32.xlu0 %v3109, 32
    %v3137 = vpop.permute.xlu0 %3136
    %3138 = vrot.lane.b32.xlu0 %v3110, 32
    %v3139 = vpop.permute.xlu0 %3138
    %3140 = vrot.lane.b32.xlu0 %v3111, 32
    %v3141 = vpop.permute.xlu0 %3140
    %3142 = vrot.lane.b32.xlu0 %v3112, 32
    %v3143 = vpop.permute.xlu0 %3142
    %3144 = vrot.lane.b32.xlu0 %v3113, 32
    %v3145 = vpop.permute.xlu0 %3144
    %3146 = vrot.lane.b32.xlu0 %v3114, 32
    %v3147 = vpop.permute.xlu0 %3146
    %3148 = vrot.lane.b32.xlu0 %v3115, 32
    %v3149 = vpop.permute.xlu0 %3148
    %3150 = vrot.lane.b32.xlu0 %v3116, 32
    %v3151 = vpop.permute.xlu0 %3150
    %3152 = vrot.lane.b32.xlu0 %v3117, 32
    %v3153 = vpop.permute.xlu0 %3152
    %3166 = vst.msk [vmem:[#allocation8 + $0x60] sm:$0xff] %vm1146, %v3131
    %3167 = vst.msk [vmem:[#allocation8 + $0x68] sm:$0xff] %vm1146, %v3133
    %3168 = vst.msk [vmem:[#allocation8 + $0x70] sm:$0xff] %vm1146, %v3135
    %3169 = vst.msk [vmem:[#allocation8 + $0x78] sm:$0xff] %vm1146, %v3137
    %3170 = vst.msk [vmem:[#allocation8 + $0x80] sm:$0xff] %vm1146, %v3139
    %3171 = vst.msk [vmem:[#allocation8 + $0x88] sm:$0xff] %vm1146, %v3141
    %3172 = vst.msk [vmem:[#allocation8 + $0x90] sm:$0xff] %vm1146, %v3143
    %3173 = vst.msk [vmem:[#allocation8 + $0x98] sm:$0xff] %vm1146, %v3145
    %3174 = vst.msk [vmem:[#allocation8 + $0xa0] sm:$0xff] %vm1146, %v3147
    %3175 = vst.msk [vmem:[#allocation8 + $0xa8] sm:$0xff] %vm1146, %v3149
    %3176 = vst.msk [vmem:[#allocation8 + $0xb0] sm:$0xff] %vm1146, %v3151
    %3177 = vst.msk [vmem:[#allocation8 + $0xb8] sm:$0x3] %vm3005, %v3153
    %v3178 = vld [vmem:[#allocation7 + $0x62] sm:$0xff]
    %v3179 = vld [vmem:[#allocation7 + $0x6a] sm:$0xff]
    %v3180 = vld [vmem:[#allocation7 + $0x72] sm:$0xff]
    %v3181 = vld [vmem:[#allocation7 + $0x7a] sm:$0xff]
    %v3182 = vld [vmem:[#allocation7 + $0x82] sm:$0xff]
    %v3183 = vld [vmem:[#allocation7 + $0x8a] sm:$0xff]
    %v3184 = vld [vmem:[#allocation7 + $0x92] sm:$0xff]
    %v3185 = vld [vmem:[#allocation7 + $0x9a] sm:$0xff]
    %v3186 = vld [vmem:[#allocation7 + $0xa2] sm:$0xff]
    %v3187 = vld [vmem:[#allocation7 + $0xaa] sm:$0xff]
    %v3188 = vld [vmem:[#allocation7 + $0xb2] sm:$0xff]
    %v3189 = vld [vmem:[#allocation7 + $0xba] sm:$0x3]
    %3202 = vrot.lane.b32.xlu0 %v3178, 64
    %v3203 = vpop.permute.xlu0 %3202
    %3204 = vrot.lane.b32.xlu0 %v3179, 64
    %v3205 = vpop.permute.xlu0 %3204
    %3206 = vrot.lane.b32.xlu0 %v3180, 64
    %v3207 = vpop.permute.xlu0 %3206
    %3208 = vrot.lane.b32.xlu0 %v3181, 64
    %v3209 = vpop.permute.xlu0 %3208
    %3210 = vrot.lane.b32.xlu0 %v3182, 64
    %v3211 = vpop.permute.xlu0 %3210
    %3212 = vrot.lane.b32.xlu0 %v3183, 64
    %v3213 = vpop.permute.xlu0 %3212
    %3214 = vrot.lane.b32.xlu0 %v3184, 64
    %v3215 = vpop.permute.xlu0 %3214
    %3216 = vrot.lane.b32.xlu0 %v3185, 64
    %v3217 = vpop.permute.xlu0 %3216
    %3218 = vrot.lane.b32.xlu0 %v3186, 64
    %v3219 = vpop.permute.xlu0 %3218
    %3220 = vrot.lane.b32.xlu0 %v3187, 64
    %v3221 = vpop.permute.xlu0 %3220
    %3222 = vrot.lane.b32.xlu0 %v3188, 64
    %v3223 = vpop.permute.xlu0 %3222
    %3224 = vrot.lane.b32.xlu0 %v3189, 64
    %v3225 = vpop.permute.xlu0 %3224
    %3238 = vst.msk [vmem:[#allocation8 + $0x60] sm:$0xff] %vm1208, %v3203
    %3239 = vst.msk [vmem:[#allocation8 + $0x68] sm:$0xff] %vm1208, %v3205
    %3240 = vst.msk [vmem:[#allocation8 + $0x70] sm:$0xff] %vm1208, %v3207
    %3241 = vst.msk [vmem:[#allocation8 + $0x78] sm:$0xff] %vm1208, %v3209
    %3242 = vst.msk [vmem:[#allocation8 + $0x80] sm:$0xff] %vm1208, %v3211
    %3243 = vst.msk [vmem:[#allocation8 + $0x88] sm:$0xff] %vm1208, %v3213
    %3244 = vst.msk [vmem:[#allocation8 + $0x90] sm:$0xff] %vm1208, %v3215
    %3245 = vst.msk [vmem:[#allocation8 + $0x98] sm:$0xff] %vm1208, %v3217
    %3246 = vst.msk [vmem:[#allocation8 + $0xa0] sm:$0xff] %vm1208, %v3219
    %3247 = vst.msk [vmem:[#allocation8 + $0xa8] sm:$0xff] %vm1208, %v3221
    %3248 = vst.msk [vmem:[#allocation8 + $0xb0] sm:$0xff] %vm1208, %v3223
    %3249 = vst.msk [vmem:[#allocation8 + $0xb8] sm:$0x3] %vm3078, %v3225
    %3250 = vst.msk [vmem:[#allocation8 + $0xba] sm:$0x3f] %vm3080, 0.0
    %v3251 = vld [vmem:[#allocation8] sm:$0xff]
    %v3252 = vld [vmem:[#allocation8 + $0x8] sm:$0xff]
    %v3253 = vld [vmem:[#allocation8 + $0x10] sm:$0xff]
    %v3254 = vld [vmem:[#allocation8 + $0x18] sm:$0xff]
    %v3255 = vld [vmem:[#allocation8 + $0x20] sm:$0xff]
    %v3256 = vld [vmem:[#allocation8 + $0x28] sm:$0xff]
    %v3257 = vld [vmem:[#allocation8 + $0x30] sm:$0xff]
    %v3258 = vld [vmem:[#allocation8 + $0x38] sm:$0xff]
    %v3259 = vld [vmem:[#allocation8 + $0x40] sm:$0xff]
    %v3260 = vld [vmem:[#allocation8 + $0x48] sm:$0xff]
    %v3261 = vld [vmem:[#allocation8 + $0x50] sm:$0xff]
    %v3262 = vld [vmem:[#allocation8 + $0x58] sm:$0xff]
    %v3263 = vld [vmem:[#allocation8 + $0x60] sm:$0xff]
    %v3264 = vld [vmem:[#allocation8 + $0x68] sm:$0xff]
    %v3265 = vld [vmem:[#allocation8 + $0x70] sm:$0xff]
    %v3266 = vld [vmem:[#allocation8 + $0x78] sm:$0xff]
    %v3267 = vld [vmem:[#allocation8 + $0x80] sm:$0xff]
    %v3268 = vld [vmem:[#allocation8 + $0x88] sm:$0xff]
    %v3269 = vld [vmem:[#allocation8 + $0x90] sm:$0xff]
    %v3270 = vld [vmem:[#allocation8 + $0x98] sm:$0xff]
    %v3271 = vld [vmem:[#allocation8 + $0xa0] sm:$0xff]
    %v3272 = vld [vmem:[#allocation8 + $0xa8] sm:$0xff]
    %v3273 = vld [vmem:[#allocation8 + $0xb0] sm:$0xff]
    %v3274 = vld [vmem:[#allocation8 + $0xb8] sm:$0xff]
    %v3275 = vld [vmem:[%s8] sm:$0xff]
    %v3276 = vld [vmem:[%s8 + $0x8] sm:$0xff]
    %v3277 = vld [vmem:[%s8 + $0x10] sm:$0xff]
    %v3278 = vld [vmem:[%s8 + $0x18] sm:$0xff]
    %v3279 = vld [vmem:[%s8 + $0x20] sm:$0xff]
    %v3280 = vld [vmem:[%s8 + $0x28] sm:$0xff]
    %v3281 = vld [vmem:[%s8 + $0x30] sm:$0xff]
    %v3282 = vld [vmem:[%s8 + $0x38] sm:$0xff]
    %v3283 = vld [vmem:[%s8 + $0x40] sm:$0xff]
    %v3284 = vld [vmem:[%s8 + $0x48] sm:$0xff]
    %v3285 = vld [vmem:[%s8 + $0x50] sm:$0xff]
    %v3286 = vld [vmem:[%s8 + $0x58] sm:$0xff]
    %v3287 = vld [vmem:[%s9] sm:$0x1]
    %v3289 = vlaneseq
    %v3290 = vshrl.u32 %v3289, 7
    %v3291 = vsub.s32 0, %v3290
    %v3292 = vrot.slane %v3287, %v3291
    %v3295 = vsel %vm1402, %v3251, 0
    %v3298 = vsel %vm1402, %v3252, 0
    %v3301 = vsel %vm1402, %v3253, 0
    %v3304 = vsel %vm1402, %v3254, 0
    %v3307 = vsel %vm1402, %v3255, 0
    %v3310 = vsel %vm1402, %v3256, 0
    %v3313 = vsel %vm1402, %v3257, 0
    %v3316 = vsel %vm1402, %v3258, 0
    %v3319 = vsel %vm1402, %v3259, 0
    %v3322 = vsel %vm1402, %v3260, 0
    %v3325 = vsel %vm1402, %v3261, 0
    %v3328 = vsel %vm1402, %v3262, 0
    %v3331 = vsel %vm1402, %v3263, 0
    %v3334 = vsel %vm1402, %v3264, 0
    %v3337 = vsel %vm1402, %v3265, 0
    %v3340 = vsel %vm1402, %v3266, 0
    %v3343 = vsel %vm1402, %v3267, 0
    %v3346 = vsel %vm1402, %v3268, 0
    %v3349 = vsel %vm1402, %v3269, 0
    %v3352 = vsel %vm1402, %v3270, 0
    %v3355 = vsel %vm1402, %v3271, 0
    %v3358 = vsel %vm1402, %v3272, 0
    %v3361 = vsel %vm1402, %v3273, 0
    %v3364 = vsel %vm1402, %v3274, 0
    %3366 = vmatprep.subr.mxu0 0.0
    %3367 = vmatpush1.msra.mxu0 0.0
    %3368 = vmatprep.subr.mxu0 0.0
    %3369 = vmatpush1.msra.mxu0 0.0
    %3370 = vmatprep.subr.mxu0 0.0
    %3371 = vmatpush1.msra.mxu0 0.0
    %3372 = vmatprep.subr.mxu0 0.0
    %3373 = vmatpush1.msra.mxu0 0.0
    %3374 = vmatprep.subr.mxu0 0.0
    %3375 = vmatpush1.msra.mxu0 %v3286
    %3376 = vmatprep.subr.mxu0 0.0
    %3377 = vmatpush1.msra.mxu0 %v3285
    %3378 = vmatprep.subr.mxu0 0.0
    %3379 = vmatpush1.msra.mxu0 %v3284
    %3380 = vmatprep.subr.mxu0 0.0
    %3381 = vmatpush1.msra.mxu0 %v3283
    %3382 = vmatprep.subr.mxu0 0.0
    %3383 = vmatpush1.msra.mxu0 %v3282
    %3384 = vmatprep.subr.mxu0 0.0
    %3385 = vmatpush1.msra.mxu0 %v3281
    %3386 = vmatprep.subr.mxu0 0.0
    %3387 = vmatpush1.msra.mxu0 %v3280
    %3388 = vmatprep.subr.mxu0 0.0
    %3389 = vmatpush1.msra.mxu0 %v3279
    %3390 = vmatprep.subr.mxu0 0.0
    %3391 = vmatpush1.msra.mxu0 %v3278
    %3392 = vmatprep.subr.mxu0 0.0
    %3393 = vmatpush1.msra.mxu0 %v3277
    %3394 = vmatprep.subr.mxu0 0.0
    %3395 = vmatpush1.msra.mxu0 %v3276
    %3396 = vmatprep.subr.mxu0 0.0
    %3397 = vmatpush1.msra.mxu0 %v3275
    %3398 = vmatprep.subr.mxu0 0.0
    %3399 = vmatpush2.msra.mxu0 0.0
    %3400 = vmatprep.subr.mxu0 0.0
    %3401 = vmatpush2.msra.mxu0 0.0
    %3402 = vmatprep.subr.mxu0 0.0
    %3403 = vmatpush2.msra.mxu0 0.0
    %3404 = vmatprep.subr.mxu0 0.0
    %3405 = vmatpush2.msra.mxu0 0.0
    %3406 = vmatprep.subr.mxu0 0.0
    %3407 = vmatpush2.msra.mxu0 0.0
    %3408 = vmatprep.subr.mxu0 0.0
    %3409 = vmatpush2.msra.mxu0 0.0
    %3410 = vmatprep.subr.mxu0 0.0
    %3411 = vmatpush2.msra.mxu0 0.0
    %3412 = vmatprep.subr.mxu0 0.0
    %3413 = vmatpush2.msra.mxu0 0.0
    %3414 = vmatprep.subr.mxu0 0.0
    %3415 = vmatpush2.msra.mxu0 0.0
    %3416 = vmatprep.subr.mxu0 0.0
    %3417 = vmatpush2.msra.mxu0 0.0
    %3418 = vmatprep.subr.mxu0 0.0
    %3419 = vmatpush2.msra.mxu0 0.0
    %3420 = vmatprep.subr.mxu0 0.0
    %3421 = vmatpush2.msra.mxu0 0.0
    %3422 = vmatprep.subr.mxu0 0.0
    %3423 = vmatpush2.msra.mxu0 0.0
    %3424 = vmatprep.subr.mxu0 0.0
    %3425 = vmatpush2.msra.mxu0 0.0
    %3426 = vmatprep.subr.mxu0 0.0
    %3427 = vmatpush2.msra.mxu0 0.0
    %3428 = vmatprep.subr.mxu0 0.0
    %3429 = vmatpush2.msra.mxu0 0.0
    %3430 = vmatprep.mubr.f32.mxu0 0.0
    %3431 = vmatmul.mubr.f32.gmra.mxu0 %v3295
    %v3432 = vpop.f32.mrf.mxu0
    %v3433 = vadd.f32 %v3292, %v3432
    %v3434 = vpop.f32.mrf.mxu0
    %3435 = vmatprep.mubr.f32.mxu0 0.0
    %3436 = vmatmul.mubr.f32.gmra.mxu0 %v3298
    %v3437 = vpop.f32.mrf.mxu0
    %v3438 = vadd.f32 %v3292, %v3437
    %v3439 = vpop.f32.mrf.mxu0
    %3440 = vmatprep.mubr.f32.mxu0 0.0
    %3441 = vmatmul.mubr.f32.gmra.mxu0 %v3301
    %v3442 = vpop.f32.mrf.mxu0
    %v3443 = vadd.f32 %v3292, %v3442
    %v3444 = vpop.f32.mrf.mxu0
    %3445 = vmatprep.mubr.f32.mxu0 0.0
    %3446 = vmatmul.mubr.f32.gmra.mxu0 %v3304
    %v3447 = vpop.f32.mrf.mxu0
    %v3448 = vadd.f32 %v3292, %v3447
    %v3449 = vpop.f32.mrf.mxu0
    %3450 = vmatprep.mubr.f32.mxu0 0.0
    %3451 = vmatmul.mubr.f32.gmra.mxu0 %v3307
    %v3452 = vpop.f32.mrf.mxu0
    %v3453 = vadd.f32 %v3292, %v3452
    %v3454 = vpop.f32.mrf.mxu0
    %3455 = vmatprep.mubr.f32.mxu0 0.0
    %3456 = vmatmul.mubr.f32.gmra.mxu0 %v3310
    %v3457 = vpop.f32.mrf.mxu0
    %v3458 = vadd.f32 %v3292, %v3457
    %v3459 = vpop.f32.mrf.mxu0
    %3460 = vmatprep.mubr.f32.mxu0 0.0
    %3461 = vmatmul.mubr.f32.gmra.mxu0 %v3313
    %v3462 = vpop.f32.mrf.mxu0
    %v3463 = vadd.f32 %v3292, %v3462
    %v3464 = vpop.f32.mrf.mxu0
    %3465 = vmatprep.mubr.f32.mxu0 0.0
    %3466 = vmatmul.mubr.f32.gmra.mxu0 %v3316
    %v3467 = vpop.f32.mrf.mxu0
    %v3468 = vadd.f32 %v3292, %v3467
    %v3469 = vpop.f32.mrf.mxu0
    %3470 = vmatprep.mubr.f32.mxu0 0.0
    %3471 = vmatmul.mubr.f32.gmra.mxu0 %v3319
    %v3472 = vpop.f32.mrf.mxu0
    %v3473 = vadd.f32 %v3292, %v3472
    %v3474 = vpop.f32.mrf.mxu0
    %3475 = vmatprep.mubr.f32.mxu0 0.0
    %3476 = vmatmul.mubr.f32.gmra.mxu0 %v3322
    %v3477 = vpop.f32.mrf.mxu0
    %v3478 = vadd.f32 %v3292, %v3477
    %v3479 = vpop.f32.mrf.mxu0
    %3480 = vmatprep.mubr.f32.mxu0 0.0
    %3481 = vmatmul.mubr.f32.gmra.mxu0 %v3325
    %v3482 = vpop.f32.mrf.mxu0
    %v3483 = vadd.f32 %v3292, %v3482
    %v3484 = vpop.f32.mrf.mxu0
    %3485 = vmatprep.mubr.f32.mxu0 0.0
    %3486 = vmatmul.mubr.f32.gmra.mxu0 %v3328
    %v3487 = vpop.f32.mrf.mxu0
    %v3488 = vadd.f32 %v3292, %v3487
    %v3489 = vpop.f32.mrf.mxu0
    %3490 = vmatprep.mubr.f32.mxu0 0.0
    %3491 = vmatmul.mubr.f32.gmra.mxu0 %v3331
    %v3492 = vpop.f32.mrf.mxu0
    %v3493 = vadd.f32 %v3292, %v3492
    %v3494 = vpop.f32.mrf.mxu0
    %3495 = vmatprep.mubr.f32.mxu0 0.0
    %3496 = vmatmul.mubr.f32.gmra.mxu0 %v3334
    %v3497 = vpop.f32.mrf.mxu0
    %v3498 = vadd.f32 %v3292, %v3497
    %v3499 = vpop.f32.mrf.mxu0
    %3500 = vmatprep.mubr.f32.mxu0 0.0
    %3501 = vmatmul.mubr.f32.gmra.mxu0 %v3337
    %v3502 = vpop.f32.mrf.mxu0
    %v3503 = vadd.f32 %v3292, %v3502
    %v3504 = vpop.f32.mrf.mxu0
    %3505 = vmatprep.mubr.f32.mxu0 0.0
    %3506 = vmatmul.mubr.f32.gmra.mxu0 %v3340
    %v3507 = vpop.f32.mrf.mxu0
    %v3508 = vadd.f32 %v3292, %v3507
    %v3509 = vpop.f32.mrf.mxu0
    %3510 = vmatprep.mubr.f32.mxu0 0.0
    %3511 = vmatmul.mubr.f32.gmra.mxu0 %v3343
    %v3512 = vpop.f32.mrf.mxu0
    %v3513 = vadd.f32 %v3292, %v3512
    %v3514 = vpop.f32.mrf.mxu0
    %3515 = vmatprep.mubr.f32.mxu0 0.0
    %3516 = vmatmul.mubr.f32.gmra.mxu0 %v3346
    %v3517 = vpop.f32.mrf.mxu0
    %v3518 = vadd.f32 %v3292, %v3517
    %v3519 = vpop.f32.mrf.mxu0
    %3520 = vmatprep.mubr.f32.mxu0 0.0
    %3521 = vmatmul.mubr.f32.gmra.mxu0 %v3349
    %v3522 = vpop.f32.mrf.mxu0
    %v3523 = vadd.f32 %v3292, %v3522
    %v3524 = vpop.f32.mrf.mxu0
    %3525 = vmatprep.mubr.f32.mxu0 0.0
    %3526 = vmatmul.mubr.f32.gmra.mxu0 %v3352
    %v3527 = vpop.f32.mrf.mxu0
    %v3528 = vadd.f32 %v3292, %v3527
    %v3529 = vpop.f32.mrf.mxu0
    %3530 = vmatprep.mubr.f32.mxu0 0.0
    %3531 = vmatmul.mubr.f32.gmra.mxu0 %v3355
    %v3532 = vpop.f32.mrf.mxu0
    %v3533 = vadd.f32 %v3292, %v3532
    %v3534 = vpop.f32.mrf.mxu0
    %3535 = vmatprep.mubr.f32.mxu0 0.0
    %3536 = vmatmul.mubr.f32.gmra.mxu0 %v3358
    %v3537 = vpop.f32.mrf.mxu0
    %v3538 = vadd.f32 %v3292, %v3537
    %v3539 = vpop.f32.mrf.mxu0
    %3540 = vmatprep.mubr.f32.mxu0 0.0
    %3541 = vmatmul.mubr.f32.gmra.mxu0 %v3361
    %v3542 = vpop.f32.mrf.mxu0
    %v3543 = vadd.f32 %v3292, %v3542
    %v3544 = vpop.f32.mrf.mxu0
    %3545 = vmatprep.mubr.f32.mxu0 0.0
    %3546 = vmatmul.mubr.f32.gmra.mxu0 %v3364
    %v3547 = vpop.f32.mrf.mxu0
    %v3548 = vadd.f32 %v3292, %v3547
    %v3549 = vpop.f32.mrf.mxu0
    %3550 = vdwg.mxu0
    %v3551 = vmax.f32 %v3433, 0.0
    %v3552 = vmax.f32 %v3438, 0.0
    %v3553 = vmax.f32 %v3443, 0.0
    %v3554 = vmax.f32 %v3448, 0.0
    %v3555 = vmax.f32 %v3453, 0.0
    %v3556 = vmax.f32 %v3458, 0.0
    %v3557 = vmax.f32 %v3463, 0.0
    %v3558 = vmax.f32 %v3468, 0.0
    %v3559 = vmax.f32 %v3473, 0.0
    %v3560 = vmax.f32 %v3478, 0.0
    %v3561 = vmax.f32 %v3483, 0.0
    %v3562 = vmax.f32 %v3488, 0.0
    %v3563 = vmax.f32 %v3493, 0.0
    %v3564 = vmax.f32 %v3498, 0.0
    %v3565 = vmax.f32 %v3503, 0.0
    %v3566 = vmax.f32 %v3508, 0.0
    %v3567 = vmax.f32 %v3513, 0.0
    %v3568 = vmax.f32 %v3518, 0.0
    %v3569 = vmax.f32 %v3523, 0.0
    %v3570 = vmax.f32 %v3528, 0.0
    %v3571 = vmax.f32 %v3533, 0.0
    %v3572 = vmax.f32 %v3538, 0.0
    %v3573 = vmax.f32 %v3543, 0.0
    %v3574 = vmax.f32 %v3548, 0.0
    %3575 = vst.msk [vmem:[#allocation9] sm:$0xff] %vm910, %v3551
    %3576 = vst.msk [vmem:[#allocation9 + $0x8] sm:$0xff] %vm910, %v3552
    %3577 = vst.msk [vmem:[#allocation9 + $0x10] sm:$0xff] %vm910, %v3553
    %3578 = vst.msk [vmem:[#allocation9 + $0x18] sm:$0xff] %vm910, %v3554
    %3579 = vst.msk [vmem:[#allocation9 + $0x20] sm:$0xff] %vm910, %v3555
    %3580 = vst.msk [vmem:[#allocation9 + $0x28] sm:$0xff] %vm910, %v3556
    %3581 = vst.msk [vmem:[#allocation9 + $0x30] sm:$0xff] %vm910, %v3557
    %3582 = vst.msk [vmem:[#allocation9 + $0x38] sm:$0xff] %vm910, %v3558
    %3583 = vst.msk [vmem:[#allocation9 + $0x40] sm:$0xff] %vm910, %v3559
    %3584 = vst.msk [vmem:[#allocation9 + $0x48] sm:$0xff] %vm910, %v3560
    %3585 = vst.msk [vmem:[#allocation9 + $0x50] sm:$0xff] %vm910, %v3561
    %3586 = vst.msk [vmem:[#allocation9 + $0x58] sm:$0xff] %vm910, %v3562
    %3587 = vst.msk [vmem:[#allocation9 + $0x60] sm:$0xff] %vm910, %v3563
    %3588 = vst.msk [vmem:[#allocation9 + $0x68] sm:$0xff] %vm910, %v3564
    %3589 = vst.msk [vmem:[#allocation9 + $0x70] sm:$0xff] %vm910, %v3565
    %3590 = vst.msk [vmem:[#allocation9 + $0x78] sm:$0xff] %vm910, %v3566
    %3591 = vst.msk [vmem:[#allocation9 + $0x80] sm:$0xff] %vm910, %v3567
    %3592 = vst.msk [vmem:[#allocation9 + $0x88] sm:$0xff] %vm910, %v3568
    %3593 = vst.msk [vmem:[#allocation9 + $0x90] sm:$0xff] %vm910, %v3569
    %3594 = vst.msk [vmem:[#allocation9 + $0x98] sm:$0xff] %vm910, %v3570
    %3595 = vst.msk [vmem:[#allocation9 + $0xa0] sm:$0xff] %vm910, %v3571
    %3596 = vst.msk [vmem:[#allocation9 + $0xa8] sm:$0xff] %vm910, %v3572
    %3597 = vst.msk [vmem:[#allocation9 + $0xb0] sm:$0xff] %vm910, %v3573
    %3598 = vst.msk [vmem:[#allocation9 + $0xb8] sm:$0xff] %vm910, %v3574
    %v3599 = vld [vmem:[#allocation9] ss:$2 sm:$0xff]
    %s3600 = scalar_lea.vmem [#allocation9], 16
    %v3601 = vld [vmem:[%s3600] ss:$2 sm:$0xff]
    %s3602 = scalar_lea.vmem [#allocation9], 32
    %v3603 = vld [vmem:[%s3602] ss:$2 sm:$0xff]
    %s3604 = scalar_lea.vmem [#allocation9], 48
    %v3605 = vld [vmem:[%s3604] ss:$2 sm:$0xff]
    %s3606 = scalar_lea.vmem [#allocation9], 64
    %v3607 = vld [vmem:[%s3606] ss:$2 sm:$0xff]
    %s3608 = scalar_lea.vmem [#allocation9], 80
    %v3609 = vld [vmem:[%s3608] ss:$2 sm:$0x1f]
    %s3610 = scalar_lea.vmem [#allocation9], 1
    %v3611 = vld [vmem:[%s3610] ss:$2 sm:$0xff]
    %s3612 = scalar_lea.vmem [#allocation9], 17
    %v3613 = vld [vmem:[%s3612] ss:$2 sm:$0xff]
    %s3614 = scalar_lea.vmem [#allocation9], 33
    %v3615 = vld [vmem:[%s3614] ss:$2 sm:$0xff]
    %s3616 = scalar_lea.vmem [#allocation9], 49
    %v3617 = vld [vmem:[%s3616] ss:$2 sm:$0xff]
    %s3618 = scalar_lea.vmem [#allocation9], 65
    %v3619 = vld [vmem:[%s3618] ss:$2 sm:$0xff]
    %s3620 = scalar_lea.vmem [#allocation9], 81
    %v3621 = vld [vmem:[%s3620] ss:$2 sm:$0x1f]
    %v3622 = vmax.f32 %v3599, %v3611
    %v3623 = vmax.f32 %v3601, %v3613
    %v3624 = vmax.f32 %v3603, %v3615
    %v3625 = vmax.f32 %v3605, %v3617
    %v3626 = vmax.f32 %v3607, %v3619
    %v3627 = vmax.f32 %v3609, %v3621
    %3628 = vst.msk [vmem:[#allocation10 + $0x26] sm:$0xff] %vm910, %v3622
    %3629 = vst.msk [vmem:[#allocation10 + $0x2e] sm:$0xff] %vm910, %v3623
    %3630 = vst.msk [vmem:[#allocation10 + $0x36] sm:$0xff] %vm910, %v3624
    %3631 = vst.msk [vmem:[#allocation10 + $0x3e] sm:$0xff] %vm910, %v3625
    %3632 = vst.msk [vmem:[#allocation10 + $0x46] sm:$0xff] %vm910, %v3626
    %vm3633 = vcmask 258048
    %3634 = vst.msk [vmem:[#allocation10 + $0x4e] sm:$0x1f] %vm3633, %v3627
    %s3635 = scalar_lea.vmem [#allocation9], 96
    %v3636 = vld [vmem:[%s3635] ss:$2 sm:$0xff]
    %s3637 = scalar_lea.vmem [#allocation9], 112
    %v3638 = vld [vmem:[%s3637] ss:$2 sm:$0xff]
    %s3639 = scalar_lea.vmem [#allocation9], 128
    %v3640 = vld [vmem:[%s3639] ss:$2 sm:$0xff]
    %s3641 = scalar_lea.vmem [#allocation9], 144
    %v3642 = vld [vmem:[%s3641] ss:$2 sm:$0xff]
    %s3643 = scalar_lea.vmem [#allocation9], 160
    %v3644 = vld [vmem:[%s3643] ss:$2 sm:$0xff]
    %s3645 = scalar_lea.vmem [#allocation9], 176
    %v3646 = vld [vmem:[%s3645] ss:$2 sm:$0x1f]
    %s3647 = scalar_lea.vmem [#allocation9], 97
    %v3648 = vld [vmem:[%s3647] ss:$2 sm:$0xff]
    %s3649 = scalar_lea.vmem [#allocation9], 113
    %v3650 = vld [vmem:[%s3649] ss:$2 sm:$0xff]
    %s3651 = scalar_lea.vmem [#allocation9], 129
    %v3652 = vld [vmem:[%s3651] ss:$2 sm:$0xff]
    %s3653 = scalar_lea.vmem [#allocation9], 145
    %v3654 = vld [vmem:[%s3653] ss:$2 sm:$0xff]
    %s3655 = scalar_lea.vmem [#allocation9], 161
    %v3656 = vld [vmem:[%s3655] ss:$2 sm:$0xff]
    %s3657 = scalar_lea.vmem [#allocation9], 177
    %v3658 = vld [vmem:[%s3657] ss:$2 sm:$0x1f]
    %v3659 = vmax.f32 %v3636, %v3648
    %v3660 = vmax.f32 %v3638, %v3650
    %v3661 = vmax.f32 %v3640, %v3652
    %v3662 = vmax.f32 %v3642, %v3654
    %v3663 = vmax.f32 %v3644, %v3656
    %v3664 = vmax.f32 %v3646, %v3658
    %3665 = vst.msk [vmem:[#allocation10 + $0x79] sm:$0xff] %vm910, %v3659
    %3666 = vst.msk [vmem:[#allocation10 + $0x81] sm:$0xff] %vm910, %v3660
    %3667 = vst.msk [vmem:[#allocation10 + $0x89] sm:$0xff] %vm910, %v3661
    %3668 = vst.msk [vmem:[#allocation10 + $0x91] sm:$0xff] %vm910, %v3662
    %3669 = vst.msk [vmem:[#allocation10 + $0x99] sm:$0xff] %vm910, %v3663
    %3670 = vst.msk [vmem:[#allocation10 + $0xa1] sm:$0x1f] %vm3633, %v3664
    %v3671 = vld [vmem:[#allocation10] sm:$0x1]
    %v3672 = vld [vmem:[#allocation10 + $0x53] sm:$0x1]
    %v3674 = vrot.slane %v3672, 7
    %vm3676 = vcmask 1040384
    %v3677 = vsel %vm3676, %v3671, %v3674
    %3678 = vst.msk [vmem:[#allocation11] sm:$0x3] %vm2832, %v3677
    %v3679 = vld [vmem:[#allocation10 + $0x1] sm:$0x1]
    %v3680 = vld [vmem:[#allocation10 + $0x54] sm:$0x1]
    %v3682 = vrot.slane %v3680, 7
    %v3684 = vsel %vm3676, %v3679, %v3682
    %v3687 = vunpack.c.l.s4 1983009808
    %v3688 = vunpack.c.0.s8 %v3687
    %v3689 = vlaneseq
    %v3690 = vshrl.u32 %v3689, 7
    %v3691 = vsub.s32 %v3688, %v3690
    %v3692 = vrot.slane %v3684, %v3691
    %3693 = vrot.lane.b32.xlu0 %v3692, 32
    %v3694 = vpop.permute.xlu0 %3693
    %3696 = vst.msk [vmem:[#allocation11] sm:$0x3] %vm3005, %v3694
    %v3697 = vld [vmem:[#allocation10 + $0x2] sm:$0x1]
    %v3698 = vld [vmem:[#allocation10 + $0x55] sm:$0x1]
    %v3700 = vrot.slane %v3698, 7
    %v3702 = vsel %vm3676, %v3697, %v3700
    %v3705 = vunpack.c.l.s4 1983009808
    %v3706 = vunpack.c.0.s8 %v3705
    %v3707 = vlaneseq
    %v3708 = vshrl.u32 %v3707, 7
    %v3709 = vsub.s32 %v3706, %v3708
    %v3710 = vrot.slane %v3702, %v3709
    %3711 = vrot.lane.b32.xlu0 %v3710, 64
    %v3712 = vpop.permute.xlu0 %3711
    %3714 = vst.msk [vmem:[#allocation11] sm:$0x3] %vm3078, %v3712
    %v3715 = vld [vmem:[#allocation10 + $0x3] sm:$0x1]
    %v3716 = vld [vmem:[#allocation10 + $0x56] sm:$0x1]
    %v3718 = vrot.slane %v3716, 7
    %v3720 = vsel %vm3676, %v3715, %v3718
    %v3723 = vunpack.c.l.s4 1983009808
    %v3724 = vunpack.c.0.s8 %v3723
    %v3725 = vlaneseq
    %v3726 = vshrl.u32 %v3725, 7
    %v3727 = vsub.s32 %v3724, %v3726
    %v3728 = vrot.slane %v3720, %v3727
    %3729 = vrot.lane.b32.xlu0 %v3728, 96
    %v3730 = vpop.permute.xlu0 %3729
    %vm3732 = vcmask 1042176
    %3733 = vst.msk [vmem:[#allocation11] sm:$0x3] %vm3732, %v3730
    %v3734 = vld [vmem:[#allocation10 + $0x4] sm:$0x1]
    %v3735 = vld [vmem:[#allocation10 + $0x57] sm:$0x1]
    %v3737 = vrot.slane %v3735, 7
    %v3739 = vsel %vm3676, %v3734, %v3737
    %3740 = vst.msk [vmem:[#allocation11 + $0x2] sm:$0x3] %vm2832, %v3739
    %v3741 = vld [vmem:[#allocation10 + $0x5] sm:$0x1]
    %v3742 = vld [vmem:[#allocation10 + $0x58] sm:$0x1]
    %v3744 = vrot.slane %v3742, 7
    %v3746 = vsel %vm3676, %v3741, %v3744
    %v3749 = vunpack.c.l.s4 1983009808
    %v3750 = vunpack.c.0.s8 %v3749
    %v3751 = vlaneseq
    %v3752 = vshrl.u32 %v3751, 7
    %v3753 = vsub.s32 %v3750, %v3752
    %v3754 = vrot.slane %v3746, %v3753
    %3755 = vrot.lane.b32.xlu0 %v3754, 32
    %v3756 = vpop.permute.xlu0 %3755
    %3758 = vst.msk [vmem:[#allocation11 + $0x2] sm:$0x3] %vm3005, %v3756
    %v3759 = vld [vmem:[#allocation10 + $0x6] sm:$0x1]
    %v3760 = vld [vmem:[#allocation10 + $0x59] sm:$0x1]
    %v3762 = vrot.slane %v3760, 7
    %v3764 = vsel %vm3676, %v3759, %v3762
    %v3767 = vunpack.c.l.s4 1983009808
    %v3768 = vunpack.c.0.s8 %v3767
    %v3769 = vlaneseq
    %v3770 = vshrl.u32 %v3769, 7
    %v3771 = vsub.s32 %v3768, %v3770
    %v3772 = vrot.slane %v3764, %v3771
    %3773 = vrot.lane.b32.xlu0 %v3772, 64
    %v3774 = vpop.permute.xlu0 %3773
    %3776 = vst.msk [vmem:[#allocation11 + $0x2] sm:$0x3] %vm3078, %v3774
    %v3777 = vld [vmem:[#allocation10 + $0x7] sm:$0x1]
    %v3778 = vld [vmem:[#allocation10 + $0x5a] sm:$0x1]
    %v3780 = vrot.slane %v3778, 7
    %v3782 = vsel %vm3676, %v3777, %v3780
    %v3785 = vunpack.c.l.s4 1983009808
    %v3786 = vunpack.c.0.s8 %v3785
    %v3787 = vlaneseq
    %v3788 = vshrl.u32 %v3787, 7
    %v3789 = vsub.s32 %v3786, %v3788
    %v3790 = vrot.slane %v3782, %v3789
    %3791 = vrot.lane.b32.xlu0 %v3790, 96
    %v3792 = vpop.permute.xlu0 %3791
    %3794 = vst.msk [vmem:[#allocation11 + $0x2] sm:$0x3] %vm3732, %v3792
    %v3795 = vld [vmem:[#allocation10 + $0x8] sm:$0x1]
    %v3796 = vld [vmem:[#allocation10 + $0x5b] sm:$0x1]
    %v3798 = vrot.slane %v3796, 7
    %v3800 = vsel %vm3676, %v3795, %v3798
    %3801 = vst.msk [vmem:[#allocation11 + $0x4] sm:$0x3] %vm2832, %v3800
    %v3802 = vld [vmem:[#allocation10 + $0x9] sm:$0x1]
    %v3803 = vld [vmem:[#allocation10 + $0x5c] sm:$0x1]
    %v3805 = vrot.slane %v3803, 7
    %v3807 = vsel %vm3676, %v3802, %v3805
    %v3810 = vunpack.c.l.s4 1983009808
    %v3811 = vunpack.c.0.s8 %v3810
    %v3812 = vlaneseq
    %v3813 = vshrl.u32 %v3812, 7
    %v3814 = vsub.s32 %v3811, %v3813
    %v3815 = vrot.slane %v3807, %v3814
    %3816 = vrot.lane.b32.xlu0 %v3815, 32
    %v3817 = vpop.permute.xlu0 %3816
    %3819 = vst.msk [vmem:[#allocation11 + $0x4] sm:$0x3] %vm3005, %v3817
    %v3820 = vld [vmem:[#allocation10 + $0xa] sm:$0x1]
    %v3821 = vld [vmem:[#allocation10 + $0x5d] sm:$0x1]
    %v3823 = vrot.slane %v3821, 7
    %v3825 = vsel %vm3676, %v3820, %v3823
    %v3828 = vunpack.c.l.s4 1983009808
    %v3829 = vunpack.c.0.s8 %v3828
    %v3830 = vlaneseq
    %v3831 = vshrl.u32 %v3830, 7
    %v3832 = vsub.s32 %v3829, %v3831
    %v3833 = vrot.slane %v3825, %v3832
    %3834 = vrot.lane.b32.xlu0 %v3833, 64
    %v3835 = vpop.permute.xlu0 %3834
    %3837 = vst.msk [vmem:[#allocation11 + $0x4] sm:$0x3] %vm3078, %v3835
    %v3838 = vld [vmem:[#allocation10 + $0xb] sm:$0x1]
    %v3839 = vld [vmem:[#allocation10 + $0x5e] sm:$0x1]
    %v3841 = vrot.slane %v3839, 7
    %v3843 = vsel %vm3676, %v3838, %v3841
    %v3846 = vunpack.c.l.s4 1983009808
    %v3847 = vunpack.c.0.s8 %v3846
    %v3848 = vlaneseq
    %v3849 = vshrl.u32 %v3848, 7
    %v3850 = vsub.s32 %v3847, %v3849
    %v3851 = vrot.slane %v3843, %v3850
    %3852 = vrot.lane.b32.xlu0 %v3851, 96
    %v3853 = vpop.permute.xlu0 %3852
    %3855 = vst.msk [vmem:[#allocation11 + $0x4] sm:$0x3] %vm3732, %v3853
    %v3856 = vld [vmem:[#allocation10 + $0xc] sm:$0x1]
    %v3857 = vld [vmem:[#allocation10 + $0x5f] sm:$0x1]
    %v3859 = vrot.slane %v3857, 7
    %v3861 = vsel %vm3676, %v3856, %v3859
    %3862 = vst.msk [vmem:[#allocation11 + $0x6] sm:$0x3] %vm2832, %v3861
    %v3863 = vld [vmem:[#allocation10 + $0xd] sm:$0x1]
    %v3864 = vld [vmem:[#allocation10 + $0x60] sm:$0x1]
    %v3866 = vrot.slane %v3864, 7
    %v3868 = vsel %vm3676, %v3863, %v3866
    %v3871 = vunpack.c.l.s4 1983009808
    %v3872 = vunpack.c.0.s8 %v3871
    %v3873 = vlaneseq
    %v3874 = vshrl.u32 %v3873, 7
    %v3875 = vsub.s32 %v3872, %v3874
    %v3876 = vrot.slane %v3868, %v3875
    %3877 = vrot.lane.b32.xlu0 %v3876, 32
    %v3878 = vpop.permute.xlu0 %3877
    %3880 = vst.msk [vmem:[#allocation11 + $0x6] sm:$0x3] %vm3005, %v3878
    %v3881 = vld [vmem:[#allocation10 + $0xe] sm:$0x1]
    %v3882 = vld [vmem:[#allocation10 + $0x61] sm:$0x1]
    %v3884 = vrot.slane %v3882, 7
    %v3886 = vsel %vm3676, %v3881, %v3884
    %v3889 = vunpack.c.l.s4 1983009808
    %v3890 = vunpack.c.0.s8 %v3889
    %v3891 = vlaneseq
    %v3892 = vshrl.u32 %v3891, 7
    %v3893 = vsub.s32 %v3890, %v3892
    %v3894 = vrot.slane %v3886, %v3893
    %3895 = vrot.lane.b32.xlu0 %v3894, 64
    %v3896 = vpop.permute.xlu0 %3895
    %3898 = vst.msk [vmem:[#allocation11 + $0x6] sm:$0x3] %vm3078, %v3896
    %v3899 = vld [vmem:[#allocation10 + $0xf] sm:$0x1]
    %v3900 = vld [vmem:[#allocation10 + $0x62] sm:$0x1]
    %v3902 = vrot.slane %v3900, 7
    %v3904 = vsel %vm3676, %v3899, %v3902
    %v3907 = vunpack.c.l.s4 1983009808
    %v3908 = vunpack.c.0.s8 %v3907
    %v3909 = vlaneseq
    %v3910 = vshrl.u32 %v3909, 7
    %v3911 = vsub.s32 %v3908, %v3910
    %v3912 = vrot.slane %v3904, %v3911
    %3913 = vrot.lane.b32.xlu0 %v3912, 96
    %v3914 = vpop.permute.xlu0 %3913
    %3916 = vst.msk [vmem:[#allocation11 + $0x6] sm:$0x3] %vm3732, %v3914
    %v3917 = vld [vmem:[#allocation10 + $0x10] sm:$0x1]
    %v3918 = vld [vmem:[#allocation10 + $0x63] sm:$0x1]
    %v3920 = vrot.slane %v3918, 7
    %v3922 = vsel %vm3676, %v3917, %v3920
    %3923 = vst.msk [vmem:[#allocation11 + $0x8] sm:$0x3] %vm2832, %v3922
    %v3924 = vld [vmem:[#allocation10 + $0x11] sm:$0x1]
    %v3925 = vld [vmem:[#allocation10 + $0x64] sm:$0x1]
    %v3927 = vrot.slane %v3925, 7
    %v3929 = vsel %vm3676, %v3924, %v3927
    %v3932 = vunpack.c.l.s4 1983009808
    %v3933 = vunpack.c.0.s8 %v3932
    %v3934 = vlaneseq
    %v3935 = vshrl.u32 %v3934, 7
    %v3936 = vsub.s32 %v3933, %v3935
    %v3937 = vrot.slane %v3929, %v3936
    %3938 = vrot.lane.b32.xlu0 %v3937, 32
    %v3939 = vpop.permute.xlu0 %3938
    %3941 = vst.msk [vmem:[#allocation11 + $0x8] sm:$0x3] %vm3005, %v3939
    %v3942 = vld [vmem:[#allocation10 + $0x12] sm:$0x1]
    %v3943 = vld [vmem:[#allocation10 + $0x65] sm:$0x1]
    %v3945 = vrot.slane %v3943, 7
    %v3947 = vsel %vm3676, %v3942, %v3945
    %v3950 = vunpack.c.l.s4 1983009808
    %v3951 = vunpack.c.0.s8 %v3950
    %v3952 = vlaneseq
    %v3953 = vshrl.u32 %v3952, 7
    %v3954 = vsub.s32 %v3951, %v3953
    %v3955 = vrot.slane %v3947, %v3954
    %3956 = vrot.lane.b32.xlu0 %v3955, 64
    %v3957 = vpop.permute.xlu0 %3956
    %3959 = vst.msk [vmem:[#allocation11 + $0x8] sm:$0x3] %vm3078, %v3957
    %v3960 = vld [vmem:[#allocation10 + $0x13] sm:$0x1]
    %v3961 = vld [vmem:[#allocation10 + $0x66] sm:$0x1]
    %v3963 = vrot.slane %v3961, 7
    %v3965 = vsel %vm3676, %v3960, %v3963
    %v3968 = vunpack.c.l.s4 1983009808
    %v3969 = vunpack.c.0.s8 %v3968
    %v3970 = vlaneseq
    %v3971 = vshrl.u32 %v3970, 7
    %v3972 = vsub.s32 %v3969, %v3971
    %v3973 = vrot.slane %v3965, %v3972
    %3974 = vrot.lane.b32.xlu0 %v3973, 96
    %v3975 = vpop.permute.xlu0 %3974
    %3977 = vst.msk [vmem:[#allocation11 + $0x8] sm:$0x3] %vm3732, %v3975
    %v3978 = vld [vmem:[#allocation10 + $0x14] sm:$0x1]
    %v3979 = vld [vmem:[#allocation10 + $0x67] sm:$0x1]
    %v3981 = vrot.slane %v3979, 7
    %v3983 = vsel %vm3676, %v3978, %v3981
    %3984 = vst.msk [vmem:[#allocation11 + $0xa] sm:$0x3] %vm2832, %v3983
    %v3985 = vld [vmem:[#allocation10 + $0x15] sm:$0x1]
    %v3986 = vld [vmem:[#allocation10 + $0x68] sm:$0x1]
    %v3988 = vrot.slane %v3986, 7
    %v3990 = vsel %vm3676, %v3985, %v3988
    %v3993 = vunpack.c.l.s4 1983009808
    %v3994 = vunpack.c.0.s8 %v3993
    %v3995 = vlaneseq
    %v3996 = vshrl.u32 %v3995, 7
    %v3997 = vsub.s32 %v3994, %v3996
    %v3998 = vrot.slane %v3990, %v3997
    %3999 = vrot.lane.b32.xlu0 %v3998, 32
    %v4000 = vpop.permute.xlu0 %3999
    %4002 = vst.msk [vmem:[#allocation11 + $0xa] sm:$0x3] %vm3005, %v4000
    %v4003 = vld [vmem:[#allocation10 + $0x16] sm:$0x1]
    %v4004 = vld [vmem:[#allocation10 + $0x69] sm:$0x1]
    %v4006 = vrot.slane %v4004, 7
    %v4008 = vsel %vm3676, %v4003, %v4006
    %v4011 = vunpack.c.l.s4 1983009808
    %v4012 = vunpack.c.0.s8 %v4011
    %v4013 = vlaneseq
    %v4014 = vshrl.u32 %v4013, 7
    %v4015 = vsub.s32 %v4012, %v4014
    %v4016 = vrot.slane %v4008, %v4015
    %4017 = vrot.lane.b32.xlu0 %v4016, 64
    %v4018 = vpop.permute.xlu0 %4017
    %4020 = vst.msk [vmem:[#allocation11 + $0xa] sm:$0x3] %vm3078, %v4018
    %v4021 = vld [vmem:[#allocation10 + $0x17] sm:$0x1]
    %v4022 = vld [vmem:[#allocation10 + $0x6a] sm:$0x1]
    %v4024 = vrot.slane %v4022, 7
    %v4026 = vsel %vm3676, %v4021, %v4024
    %v4029 = vunpack.c.l.s4 1983009808
    %v4030 = vunpack.c.0.s8 %v4029
    %v4031 = vlaneseq
    %v4032 = vshrl.u32 %v4031, 7
    %v4033 = vsub.s32 %v4030, %v4032
    %v4034 = vrot.slane %v4026, %v4033
    %4035 = vrot.lane.b32.xlu0 %v4034, 96
    %v4036 = vpop.permute.xlu0 %4035
    %4038 = vst.msk [vmem:[#allocation11 + $0xa] sm:$0x3] %vm3732, %v4036
    %v4039 = vld [vmem:[#allocation10 + $0x18] sm:$0x1]
    %v4040 = vld [vmem:[#allocation10 + $0x6b] sm:$0x1]
    %v4042 = vrot.slane %v4040, 7
    %v4044 = vsel %vm3676, %v4039, %v4042
    %4045 = vst.msk [vmem:[#allocation11 + $0xc] sm:$0x3] %vm2832, %v4044
    %v4046 = vld [vmem:[#allocation10 + $0x19] sm:$0x1]
    %v4047 = vld [vmem:[#allocation10 + $0x6c] sm:$0x1]
    %v4049 = vrot.slane %v4047, 7
    %v4051 = vsel %vm3676, %v4046, %v4049
    %v4054 = vunpack.c.l.s4 1983009808
    %v4055 = vunpack.c.0.s8 %v4054
    %v4056 = vlaneseq
    %v4057 = vshrl.u32 %v4056, 7
    %v4058 = vsub.s32 %v4055, %v4057
    %v4059 = vrot.slane %v4051, %v4058
    %4060 = vrot.lane.b32.xlu0 %v4059, 32
    %v4061 = vpop.permute.xlu0 %4060
    %4063 = vst.msk [vmem:[#allocation11 + $0xc] sm:$0x3] %vm3005, %v4061
    %v4064 = vld [vmem:[#allocation10 + $0x1a] sm:$0x1]
    %v4065 = vld [vmem:[#allocation10 + $0x6d] sm:$0x1]
    %v4067 = vrot.slane %v4065, 7
    %v4069 = vsel %vm3676, %v4064, %v4067
    %v4072 = vunpack.c.l.s4 1983009808
    %v4073 = vunpack.c.0.s8 %v4072
    %v4074 = vlaneseq
    %v4075 = vshrl.u32 %v4074, 7
    %v4076 = vsub.s32 %v4073, %v4075
    %v4077 = vrot.slane %v4069, %v4076
    %4078 = vrot.lane.b32.xlu0 %v4077, 64
    %v4079 = vpop.permute.xlu0 %4078
    %4081 = vst.msk [vmem:[#allocation11 + $0xc] sm:$0x3] %vm3078, %v4079
    %v4082 = vld [vmem:[#allocation10 + $0x1b] sm:$0x1]
    %v4083 = vld [vmem:[#allocation10 + $0x6e] sm:$0x1]
    %v4085 = vrot.slane %v4083, 7
    %v4087 = vsel %vm3676, %v4082, %v4085
    %v4090 = vunpack.c.l.s4 1983009808
    %v4091 = vunpack.c.0.s8 %v4090
    %v4092 = vlaneseq
    %v4093 = vshrl.u32 %v4092, 7
    %v4094 = vsub.s32 %v4091, %v4093
    %v4095 = vrot.slane %v4087, %v4094
    %4096 = vrot.lane.b32.xlu0 %v4095, 96
    %v4097 = vpop.permute.xlu0 %4096
    %4099 = vst.msk [vmem:[#allocation11 + $0xc] sm:$0x3] %vm3732, %v4097
    %v4100 = vld [vmem:[#allocation10 + $0x1c] sm:$0x1]
    %v4101 = vld [vmem:[#allocation10 + $0x6f] sm:$0x1]
    %v4103 = vrot.slane %v4101, 7
    %v4105 = vsel %vm3676, %v4100, %v4103
    %4106 = vst.msk [vmem:[#allocation11 + $0xe] sm:$0x3] %vm2832, %v4105
    %v4107 = vld [vmem:[#allocation10 + $0x1d] sm:$0x1]
    %v4108 = vld [vmem:[#allocation10 + $0x70] sm:$0x1]
    %v4110 = vrot.slane %v4108, 7
    %v4112 = vsel %vm3676, %v4107, %v4110
    %v4115 = vunpack.c.l.s4 1983009808
    %v4116 = vunpack.c.0.s8 %v4115
    %v4117 = vlaneseq
    %v4118 = vshrl.u32 %v4117, 7
    %v4119 = vsub.s32 %v4116, %v4118
    %v4120 = vrot.slane %v4112, %v4119
    %4121 = vrot.lane.b32.xlu0 %v4120, 32
    %v4122 = vpop.permute.xlu0 %4121
    %4124 = vst.msk [vmem:[#allocation11 + $0xe] sm:$0x3] %vm3005, %v4122
    %v4125 = vld [vmem:[#allocation10 + $0x1e] sm:$0x1]
    %v4126 = vld [vmem:[#allocation10 + $0x71] sm:$0x1]
    %v4128 = vrot.slane %v4126, 7
    %v4130 = vsel %vm3676, %v4125, %v4128
    %v4133 = vunpack.c.l.s4 1983009808
    %v4134 = vunpack.c.0.s8 %v4133
    %v4135 = vlaneseq
    %v4136 = vshrl.u32 %v4135, 7
    %v4137 = vsub.s32 %v4134, %v4136
    %v4138 = vrot.slane %v4130, %v4137
    %4139 = vrot.lane.b32.xlu0 %v4138, 64
    %v4140 = vpop.permute.xlu0 %4139
    %4142 = vst.msk [vmem:[#allocation11 + $0xe] sm:$0x3] %vm3078, %v4140
    %v4143 = vld [vmem:[#allocation10 + $0x1f] sm:$0x1]
    %v4144 = vld [vmem:[#allocation10 + $0x72] sm:$0x1]
    %v4146 = vrot.slane %v4144, 7
    %v4148 = vsel %vm3676, %v4143, %v4146
    %v4151 = vunpack.c.l.s4 1983009808
    %v4152 = vunpack.c.0.s8 %v4151
    %v4153 = vlaneseq
    %v4154 = vshrl.u32 %v4153, 7
    %v4155 = vsub.s32 %v4152, %v4154
    %v4156 = vrot.slane %v4148, %v4155
    %4157 = vrot.lane.b32.xlu0 %v4156, 96
    %v4158 = vpop.permute.xlu0 %4157
    %4160 = vst.msk [vmem:[#allocation11 + $0xe] sm:$0x3] %vm3732, %v4158
    %v4161 = vld [vmem:[#allocation10 + $0x20] sm:$0x1]
    %v4162 = vld [vmem:[#allocation10 + $0x73] sm:$0x1]
    %v4164 = vrot.slane %v4162, 7
    %v4166 = vsel %vm3676, %v4161, %v4164
    %4167 = vst.msk [vmem:[#allocation11 + $0x10] sm:$0x3] %vm2832, %v4166
    %v4168 = vld [vmem:[#allocation10 + $0x21] sm:$0x1]
    %v4169 = vld [vmem:[#allocation10 + $0x74] sm:$0x1]
    %v4171 = vrot.slane %v4169, 7
    %v4173 = vsel %vm3676, %v4168, %v4171
    %v4176 = vunpack.c.l.s4 1983009808
    %v4177 = vunpack.c.0.s8 %v4176
    %v4178 = vlaneseq
    %v4179 = vshrl.u32 %v4178, 7
    %v4180 = vsub.s32 %v4177, %v4179
    %v4181 = vrot.slane %v4173, %v4180
    %4182 = vrot.lane.b32.xlu0 %v4181, 32
    %v4183 = vpop.permute.xlu0 %4182
    %4185 = vst.msk [vmem:[#allocation11 + $0x10] sm:$0x3] %vm3005, %v4183
    %v4186 = vld [vmem:[#allocation10 + $0x22] sm:$0x1]
    %v4187 = vld [vmem:[#allocation10 + $0x75] sm:$0x1]
    %v4189 = vrot.slane %v4187, 7
    %v4191 = vsel %vm3676, %v4186, %v4189
    %v4194 = vunpack.c.l.s4 1983009808
    %v4195 = vunpack.c.0.s8 %v4194
    %v4196 = vlaneseq
    %v4197 = vshrl.u32 %v4196, 7
    %v4198 = vsub.s32 %v4195, %v4197
    %v4199 = vrot.slane %v4191, %v4198
    %4200 = vrot.lane.b32.xlu0 %v4199, 64
    %v4201 = vpop.permute.xlu0 %4200
    %4203 = vst.msk [vmem:[#allocation11 + $0x10] sm:$0x3] %vm3078, %v4201
    %v4204 = vld [vmem:[#allocation10 + $0x23] sm:$0x1]
    %v4205 = vld [vmem:[#allocation10 + $0x76] sm:$0x1]
    %v4207 = vrot.slane %v4205, 7
    %v4209 = vsel %vm3676, %v4204, %v4207
    %v4212 = vunpack.c.l.s4 1983009808
    %v4213 = vunpack.c.0.s8 %v4212
    %v4214 = vlaneseq
    %v4215 = vshrl.u32 %v4214, 7
    %v4216 = vsub.s32 %v4213, %v4215
    %v4217 = vrot.slane %v4209, %v4216
    %4218 = vrot.lane.b32.xlu0 %v4217, 96
    %v4219 = vpop.permute.xlu0 %4218
    %4221 = vst.msk [vmem:[#allocation11 + $0x10] sm:$0x3] %vm3732, %v4219
    %v4222 = vld [vmem:[#allocation10 + $0x24] sm:$0x1]
    %v4223 = vld [vmem:[#allocation10 + $0x77] sm:$0x1]
    %v4225 = vrot.slane %v4223, 7
    %v4227 = vsel %vm3676, %v4222, %v4225
    %4228 = vst.msk [vmem:[#allocation11 + $0x12] sm:$0x3] %vm2832, %v4227
    %v4229 = vld [vmem:[#allocation10 + $0x25] sm:$0x1]
    %v4230 = vld [vmem:[#allocation10 + $0x78] sm:$0x1]
    %v4232 = vrot.slane %v4230, 7
    %v4234 = vsel %vm3676, %v4229, %v4232
    %v4237 = vunpack.c.l.s4 1983009808
    %v4238 = vunpack.c.0.s8 %v4237
    %v4239 = vlaneseq
    %v4240 = vshrl.u32 %v4239, 7
    %v4241 = vsub.s32 %v4238, %v4240
    %v4242 = vrot.slane %v4234, %v4241
    %4243 = vrot.lane.b32.xlu0 %v4242, 32
    %v4244 = vpop.permute.xlu0 %4243
    %4246 = vst.msk [vmem:[#allocation11 + $0x12] sm:$0x3] %vm3005, %v4244
    %v4247 = vld [vmem:[#allocation10 + $0x26] sm:$0x1]
    %v4248 = vld [vmem:[#allocation10 + $0x79] sm:$0x1]
    %v4250 = vrot.slane %v4248, 7
    %v4252 = vsel %vm3676, %v4247, %v4250
    %v4255 = vunpack.c.l.s4 1983009808
    %v4256 = vunpack.c.0.s8 %v4255
    %v4257 = vlaneseq
    %v4258 = vshrl.u32 %v4257, 7
    %v4259 = vsub.s32 %v4256, %v4258
    %v4260 = vrot.slane %v4252, %v4259
    %4261 = vrot.lane.b32.xlu0 %v4260, 64
    %v4262 = vpop.permute.xlu0 %4261
    %4264 = vst.msk [vmem:[#allocation11 + $0x12] sm:$0x3] %vm3078, %v4262
    %v4265 = vld [vmem:[#allocation10 + $0x27] sm:$0x1]
    %v4266 = vld [vmem:[#allocation10 + $0x7a] sm:$0x1]
    %v4268 = vrot.slane %v4266, 7
    %v4270 = vsel %vm3676, %v4265, %v4268
    %v4273 = vunpack.c.l.s4 1983009808
    %v4274 = vunpack.c.0.s8 %v4273
    %v4275 = vlaneseq
    %v4276 = vshrl.u32 %v4275, 7
    %v4277 = vsub.s32 %v4274, %v4276
    %v4278 = vrot.slane %v4270, %v4277
    %4279 = vrot.lane.b32.xlu0 %v4278, 96
    %v4280 = vpop.permute.xlu0 %4279
    %4282 = vst.msk [vmem:[#allocation11 + $0x12] sm:$0x3] %vm3732, %v4280
    %v4283 = vld [vmem:[#allocation10 + $0x28] sm:$0x1]
    %v4284 = vld [vmem:[#allocation10 + $0x7b] sm:$0x1]
    %v4286 = vrot.slane %v4284, 7
    %v4288 = vsel %vm3676, %v4283, %v4286
    %4289 = vst.msk [vmem:[#allocation11 + $0x14] sm:$0x3] %vm2832, %v4288
    %v4290 = vld [vmem:[#allocation10 + $0x29] sm:$0x1]
    %v4291 = vld [vmem:[#allocation10 + $0x7c] sm:$0x1]
    %v4293 = vrot.slane %v4291, 7
    %v4295 = vsel %vm3676, %v4290, %v4293
    %v4298 = vunpack.c.l.s4 1983009808
    %v4299 = vunpack.c.0.s8 %v4298
    %v4300 = vlaneseq
    %v4301 = vshrl.u32 %v4300, 7
    %v4302 = vsub.s32 %v4299, %v4301
    %v4303 = vrot.slane %v4295, %v4302
    %4304 = vrot.lane.b32.xlu0 %v4303, 32
    %v4305 = vpop.permute.xlu0 %4304
    %4307 = vst.msk [vmem:[#allocation11 + $0x14] sm:$0x3] %vm3005, %v4305
    %v4308 = vld [vmem:[#allocation10 + $0x2a] sm:$0x1]
    %v4309 = vld [vmem:[#allocation10 + $0x7d] sm:$0x1]
    %v4311 = vrot.slane %v4309, 7
    %v4313 = vsel %vm3676, %v4308, %v4311
    %v4316 = vunpack.c.l.s4 1983009808
    %v4317 = vunpack.c.0.s8 %v4316
    %v4318 = vlaneseq
    %v4319 = vshrl.u32 %v4318, 7
    %v4320 = vsub.s32 %v4317, %v4319
    %v4321 = vrot.slane %v4313, %v4320
    %4322 = vrot.lane.b32.xlu0 %v4321, 64
    %v4323 = vpop.permute.xlu0 %4322
    %4325 = vst.msk [vmem:[#allocation11 + $0x14] sm:$0x3] %vm3078, %v4323
    %v4326 = vld [vmem:[#allocation10 + $0x2b] sm:$0x1]
    %v4327 = vld [vmem:[#allocation10 + $0x7e] sm:$0x1]
    %v4329 = vrot.slane %v4327, 7
    %v4331 = vsel %vm3676, %v4326, %v4329
    %v4334 = vunpack.c.l.s4 1983009808
    %v4335 = vunpack.c.0.s8 %v4334
    %v4336 = vlaneseq
    %v4337 = vshrl.u32 %v4336, 7
    %v4338 = vsub.s32 %v4335, %v4337
    %v4339 = vrot.slane %v4331, %v4338
    %4340 = vrot.lane.b32.xlu0 %v4339, 96
    %v4341 = vpop.permute.xlu0 %4340
    %4343 = vst.msk [vmem:[#allocation11 + $0x14] sm:$0x3] %vm3732, %v4341
    %v4344 = vld [vmem:[#allocation10 + $0x2c] sm:$0x1]
    %v4345 = vld [vmem:[#allocation10 + $0x7f] sm:$0x1]
    %v4347 = vrot.slane %v4345, 7
    %v4349 = vsel %vm3676, %v4344, %v4347
    %4350 = vst.msk [vmem:[#allocation11 + $0x16] sm:$0x3] %vm2832, %v4349
    %v4351 = vld [vmem:[#allocation10 + $0x2d] sm:$0x1]
    %v4352 = vld [vmem:[#allocation10 + $0x80] sm:$0x1]
    %v4354 = vrot.slane %v4352, 7
    %v4356 = vsel %vm3676, %v4351, %v4354
    %v4359 = vunpack.c.l.s4 1983009808
    %v4360 = vunpack.c.0.s8 %v4359
    %v4361 = vlaneseq
    %v4362 = vshrl.u32 %v4361, 7
    %v4363 = vsub.s32 %v4360, %v4362
    %v4364 = vrot.slane %v4356, %v4363
    %4365 = vrot.lane.b32.xlu0 %v4364, 32
    %v4366 = vpop.permute.xlu0 %4365
    %4368 = vst.msk [vmem:[#allocation11 + $0x16] sm:$0x3] %vm3005, %v4366
    %v4369 = vld [vmem:[#allocation10 + $0x2e] sm:$0x1]
    %v4370 = vld [vmem:[#allocation10 + $0x81] sm:$0x1]
    %v4372 = vrot.slane %v4370, 7
    %v4374 = vsel %vm3676, %v4369, %v4372
    %v4377 = vunpack.c.l.s4 1983009808
    %v4378 = vunpack.c.0.s8 %v4377
    %v4379 = vlaneseq
    %v4380 = vshrl.u32 %v4379, 7
    %v4381 = vsub.s32 %v4378, %v4380
    %v4382 = vrot.slane %v4374, %v4381
    %4383 = vrot.lane.b32.xlu0 %v4382, 64
    %v4384 = vpop.permute.xlu0 %4383
    %4386 = vst.msk [vmem:[#allocation11 + $0x16] sm:$0x3] %vm3078, %v4384
    %v4387 = vld [vmem:[#allocation10 + $0x2f] sm:$0x1]
    %v4388 = vld [vmem:[#allocation10 + $0x82] sm:$0x1]
    %v4390 = vrot.slane %v4388, 7
    %v4392 = vsel %vm3676, %v4387, %v4390
    %v4395 = vunpack.c.l.s4 1983009808
    %v4396 = vunpack.c.0.s8 %v4395
    %v4397 = vlaneseq
    %v4398 = vshrl.u32 %v4397, 7
    %v4399 = vsub.s32 %v4396, %v4398
    %v4400 = vrot.slane %v4392, %v4399
    %4401 = vrot.lane.b32.xlu0 %v4400, 96
    %v4402 = vpop.permute.xlu0 %4401
    %4404 = vst.msk [vmem:[#allocation11 + $0x16] sm:$0x3] %vm3732, %v4402
    %v4405 = vld [vmem:[#allocation10 + $0x30] sm:$0x1]
    %v4406 = vld [vmem:[#allocation10 + $0x83] sm:$0x1]
    %v4408 = vrot.slane %v4406, 7
    %v4410 = vsel %vm3676, %v4405, %v4408
    %4411 = vst.msk [vmem:[#allocation11 + $0x18] sm:$0x3] %vm2832, %v4410
    %v4412 = vld [vmem:[#allocation10 + $0x31] sm:$0x1]
    %v4413 = vld [vmem:[#allocation10 + $0x84] sm:$0x1]
    %v4415 = vrot.slane %v4413, 7
    %v4417 = vsel %vm3676, %v4412, %v4415
    %v4420 = vunpack.c.l.s4 1983009808
    %v4421 = vunpack.c.0.s8 %v4420
    %v4422 = vlaneseq
    %v4423 = vshrl.u32 %v4422, 7
    %v4424 = vsub.s32 %v4421, %v4423
    %v4425 = vrot.slane %v4417, %v4424
    %4426 = vrot.lane.b32.xlu0 %v4425, 32
    %v4427 = vpop.permute.xlu0 %4426
    %4429 = vst.msk [vmem:[#allocation11 + $0x18] sm:$0x3] %vm3005, %v4427
    %v4430 = vld [vmem:[#allocation10 + $0x32] sm:$0x1]
    %v4431 = vld [vmem:[#allocation10 + $0x85] sm:$0x1]
    %v4433 = vrot.slane %v4431, 7
    %v4435 = vsel %vm3676, %v4430, %v4433
    %v4438 = vunpack.c.l.s4 1983009808
    %v4439 = vunpack.c.0.s8 %v4438
    %v4440 = vlaneseq
    %v4441 = vshrl.u32 %v4440, 7
    %v4442 = vsub.s32 %v4439, %v4441
    %v4443 = vrot.slane %v4435, %v4442
    %4444 = vrot.lane.b32.xlu0 %v4443, 64
    %v4445 = vpop.permute.xlu0 %4444
    %4447 = vst.msk [vmem:[#allocation11 + $0x18] sm:$0x3] %vm3078, %v4445
    %v4448 = vld [vmem:[#allocation10 + $0x33] sm:$0x1]
    %v4449 = vld [vmem:[#allocation10 + $0x86] sm:$0x1]
    %v4451 = vrot.slane %v4449, 7
    %v4453 = vsel %vm3676, %v4448, %v4451
    %v4456 = vunpack.c.l.s4 1983009808
    %v4457 = vunpack.c.0.s8 %v4456
    %v4458 = vlaneseq
    %v4459 = vshrl.u32 %v4458, 7
    %v4460 = vsub.s32 %v4457, %v4459
    %v4461 = vrot.slane %v4453, %v4460
    %4462 = vrot.lane.b32.xlu0 %v4461, 96
    %v4463 = vpop.permute.xlu0 %4462
    %4465 = vst.msk [vmem:[#allocation11 + $0x18] sm:$0x3] %vm3732, %v4463
    %v4466 = vld [vmem:[#allocation10 + $0x34] sm:$0x1]
    %v4467 = vld [vmem:[#allocation10 + $0x87] sm:$0x1]
    %v4469 = vrot.slane %v4467, 7
    %v4471 = vsel %vm3676, %v4466, %v4469
    %4472 = vst.msk [vmem:[#allocation11 + $0x1a] sm:$0x3] %vm2832, %v4471
    %v4473 = vld [vmem:[#allocation10 + $0x35] sm:$0x1]
    %v4474 = vld [vmem:[#allocation10 + $0x88] sm:$0x1]
    %v4476 = vrot.slane %v4474, 7
    %v4478 = vsel %vm3676, %v4473, %v4476
    %v4481 = vunpack.c.l.s4 1983009808
    %v4482 = vunpack.c.0.s8 %v4481
    %v4483 = vlaneseq
    %v4484 = vshrl.u32 %v4483, 7
    %v4485 = vsub.s32 %v4482, %v4484
    %v4486 = vrot.slane %v4478, %v4485
    %4487 = vrot.lane.b32.xlu0 %v4486, 32
    %v4488 = vpop.permute.xlu0 %4487
    %4490 = vst.msk [vmem:[#allocation11 + $0x1a] sm:$0x3] %vm3005, %v4488
    %v4491 = vld [vmem:[#allocation10 + $0x36] sm:$0x1]
    %v4492 = vld [vmem:[#allocation10 + $0x89] sm:$0x1]
    %v4494 = vrot.slane %v4492, 7
    %v4496 = vsel %vm3676, %v4491, %v4494
    %v4499 = vunpack.c.l.s4 1983009808
    %v4500 = vunpack.c.0.s8 %v4499
    %v4501 = vlaneseq
    %v4502 = vshrl.u32 %v4501, 7
    %v4503 = vsub.s32 %v4500, %v4502
    %v4504 = vrot.slane %v4496, %v4503
    %4505 = vrot.lane.b32.xlu0 %v4504, 64
    %v4506 = vpop.permute.xlu0 %4505
    %4508 = vst.msk [vmem:[#allocation11 + $0x1a] sm:$0x3] %vm3078, %v4506
    %v4509 = vld [vmem:[#allocation10 + $0x37] sm:$0x1]
    %v4510 = vld [vmem:[#allocation10 + $0x8a] sm:$0x1]
    %v4512 = vrot.slane %v4510, 7
    %v4514 = vsel %vm3676, %v4509, %v4512
    %v4517 = vunpack.c.l.s4 1983009808
    %v4518 = vunpack.c.0.s8 %v4517
    %v4519 = vlaneseq
    %v4520 = vshrl.u32 %v4519, 7
    %v4521 = vsub.s32 %v4518, %v4520
    %v4522 = vrot.slane %v4514, %v4521
    %4523 = vrot.lane.b32.xlu0 %v4522, 96
    %v4524 = vpop.permute.xlu0 %4523
    %4526 = vst.msk [vmem:[#allocation11 + $0x1a] sm:$0x3] %vm3732, %v4524
    %v4527 = vld [vmem:[#allocation10 + $0x38] sm:$0x1]
    %v4528 = vld [vmem:[#allocation10 + $0x8b] sm:$0x1]
    %v4530 = vrot.slane %v4528, 7
    %v4532 = vsel %vm3676, %v4527, %v4530
    %4533 = vst.msk [vmem:[#allocation11 + $0x1c] sm:$0x3] %vm2832, %v4532
    %v4534 = vld [vmem:[#allocation10 + $0x39] sm:$0x1]
    %v4535 = vld [vmem:[#allocation10 + $0x8c] sm:$0x1]
    %v4537 = vrot.slane %v4535, 7
    %v4539 = vsel %vm3676, %v4534, %v4537
    %v4542 = vunpack.c.l.s4 1983009808
    %v4543 = vunpack.c.0.s8 %v4542
    %v4544 = vlaneseq
    %v4545 = vshrl.u32 %v4544, 7
    %v4546 = vsub.s32 %v4543, %v4545
    %v4547 = vrot.slane %v4539, %v4546
    %4548 = vrot.lane.b32.xlu0 %v4547, 32
    %v4549 = vpop.permute.xlu0 %4548
    %4551 = vst.msk [vmem:[#allocation11 + $0x1c] sm:$0x3] %vm3005, %v4549
    %v4552 = vld [vmem:[#allocation10 + $0x3a] sm:$0x1]
    %v4553 = vld [vmem:[#allocation10 + $0x8d] sm:$0x1]
    %v4555 = vrot.slane %v4553, 7
    %v4557 = vsel %vm3676, %v4552, %v4555
    %v4560 = vunpack.c.l.s4 1983009808
    %v4561 = vunpack.c.0.s8 %v4560
    %v4562 = vlaneseq
    %v4563 = vshrl.u32 %v4562, 7
    %v4564 = vsub.s32 %v4561, %v4563
    %v4565 = vrot.slane %v4557, %v4564
    %4566 = vrot.lane.b32.xlu0 %v4565, 64
    %v4567 = vpop.permute.xlu0 %4566
    %4569 = vst.msk [vmem:[#allocation11 + $0x1c] sm:$0x3] %vm3078, %v4567
    %v4570 = vld [vmem:[#allocation10 + $0x3b] sm:$0x1]
    %v4571 = vld [vmem:[#allocation10 + $0x8e] sm:$0x1]
    %v4573 = vrot.slane %v4571, 7
    %v4575 = vsel %vm3676, %v4570, %v4573
    %v4578 = vunpack.c.l.s4 1983009808
    %v4579 = vunpack.c.0.s8 %v4578
    %v4580 = vlaneseq
    %v4581 = vshrl.u32 %v4580, 7
    %v4582 = vsub.s32 %v4579, %v4581
    %v4583 = vrot.slane %v4575, %v4582
    %4584 = vrot.lane.b32.xlu0 %v4583, 96
    %v4585 = vpop.permute.xlu0 %4584
    %4587 = vst.msk [vmem:[#allocation11 + $0x1c] sm:$0x3] %vm3732, %v4585
    %v4588 = vld [vmem:[#allocation10 + $0x3c] sm:$0x1]
    %v4589 = vld [vmem:[#allocation10 + $0x8f] sm:$0x1]
    %v4591 = vrot.slane %v4589, 7
    %v4593 = vsel %vm3676, %v4588, %v4591
    %4594 = vst.msk [vmem:[#allocation11 + $0x1e] sm:$0x3] %vm2832, %v4593
    %v4595 = vld [vmem:[#allocation10 + $0x3d] sm:$0x1]
    %v4596 = vld [vmem:[#allocation10 + $0x90] sm:$0x1]
    %v4598 = vrot.slane %v4596, 7
    %v4600 = vsel %vm3676, %v4595, %v4598
    %v4603 = vunpack.c.l.s4 1983009808
    %v4604 = vunpack.c.0.s8 %v4603
    %v4605 = vlaneseq
    %v4606 = vshrl.u32 %v4605, 7
    %v4607 = vsub.s32 %v4604, %v4606
    %v4608 = vrot.slane %v4600, %v4607
    %4609 = vrot.lane.b32.xlu0 %v4608, 32
    %v4610 = vpop.permute.xlu0 %4609
    %4612 = vst.msk [vmem:[#allocation11 + $0x1e] sm:$0x3] %vm3005, %v4610
    %v4613 = vld [vmem:[#allocation10 + $0x3e] sm:$0x1]
    %v4614 = vld [vmem:[#allocation10 + $0x91] sm:$0x1]
    %v4616 = vrot.slane %v4614, 7
    %v4618 = vsel %vm3676, %v4613, %v4616
    %v4621 = vunpack.c.l.s4 1983009808
    %v4622 = vunpack.c.0.s8 %v4621
    %v4623 = vlaneseq
    %v4624 = vshrl.u32 %v4623, 7
    %v4625 = vsub.s32 %v4622, %v4624
    %v4626 = vrot.slane %v4618, %v4625
    %4627 = vrot.lane.b32.xlu0 %v4626, 64
    %v4628 = vpop.permute.xlu0 %4627
    %4630 = vst.msk [vmem:[#allocation11 + $0x1e] sm:$0x3] %vm3078, %v4628
    %v4631 = vld [vmem:[#allocation10 + $0x3f] sm:$0x1]
    %v4632 = vld [vmem:[#allocation10 + $0x92] sm:$0x1]
    %v4634 = vrot.slane %v4632, 7
    %v4636 = vsel %vm3676, %v4631, %v4634
    %v4639 = vunpack.c.l.s4 1983009808
    %v4640 = vunpack.c.0.s8 %v4639
    %v4641 = vlaneseq
    %v4642 = vshrl.u32 %v4641, 7
    %v4643 = vsub.s32 %v4640, %v4642
    %v4644 = vrot.slane %v4636, %v4643
    %4645 = vrot.lane.b32.xlu0 %v4644, 96
    %v4646 = vpop.permute.xlu0 %4645
    %4648 = vst.msk [vmem:[#allocation11 + $0x1e] sm:$0x3] %vm3732, %v4646
    %v4649 = vld [vmem:[#allocation10 + $0x40] sm:$0x1]
    %v4650 = vld [vmem:[#allocation10 + $0x93] sm:$0x1]
    %v4652 = vrot.slane %v4650, 7
    %v4654 = vsel %vm3676, %v4649, %v4652
    %4655 = vst.msk [vmem:[#allocation11 + $0x20] sm:$0x3] %vm2832, %v4654
    %v4656 = vld [vmem:[#allocation10 + $0x41] sm:$0x1]
    %v4657 = vld [vmem:[#allocation10 + $0x94] sm:$0x1]
    %v4659 = vrot.slane %v4657, 7
    %v4661 = vsel %vm3676, %v4656, %v4659
    %v4664 = vunpack.c.l.s4 1983009808
    %v4665 = vunpack.c.0.s8 %v4664
    %v4666 = vlaneseq
    %v4667 = vshrl.u32 %v4666, 7
    %v4668 = vsub.s32 %v4665, %v4667
    %v4669 = vrot.slane %v4661, %v4668
    %4670 = vrot.lane.b32.xlu0 %v4669, 32
    %v4671 = vpop.permute.xlu0 %4670
    %4673 = vst.msk [vmem:[#allocation11 + $0x20] sm:$0x3] %vm3005, %v4671
    %v4674 = vld [vmem:[#allocation10 + $0x42] sm:$0x1]
    %v4675 = vld [vmem:[#allocation10 + $0x95] sm:$0x1]
    %v4677 = vrot.slane %v4675, 7
    %v4679 = vsel %vm3676, %v4674, %v4677
    %v4682 = vunpack.c.l.s4 1983009808
    %v4683 = vunpack.c.0.s8 %v4682
    %v4684 = vlaneseq
    %v4685 = vshrl.u32 %v4684, 7
    %v4686 = vsub.s32 %v4683, %v4685
    %v4687 = vrot.slane %v4679, %v4686
    %4688 = vrot.lane.b32.xlu0 %v4687, 64
    %v4689 = vpop.permute.xlu0 %4688
    %4691 = vst.msk [vmem:[#allocation11 + $0x20] sm:$0x3] %vm3078, %v4689
    %v4692 = vld [vmem:[#allocation10 + $0x43] sm:$0x1]
    %v4693 = vld [vmem:[#allocation10 + $0x96] sm:$0x1]
    %v4695 = vrot.slane %v4693, 7
    %v4697 = vsel %vm3676, %v4692, %v4695
    %v4700 = vunpack.c.l.s4 1983009808
    %v4701 = vunpack.c.0.s8 %v4700
    %v4702 = vlaneseq
    %v4703 = vshrl.u32 %v4702, 7
    %v4704 = vsub.s32 %v4701, %v4703
    %v4705 = vrot.slane %v4697, %v4704
    %4706 = vrot.lane.b32.xlu0 %v4705, 96
    %v4707 = vpop.permute.xlu0 %4706
    %4709 = vst.msk [vmem:[#allocation11 + $0x20] sm:$0x3] %vm3732, %v4707
    %v4710 = vld [vmem:[#allocation10 + $0x44] sm:$0x1]
    %v4711 = vld [vmem:[#allocation10 + $0x97] sm:$0x1]
    %v4713 = vrot.slane %v4711, 7
    %v4715 = vsel %vm3676, %v4710, %v4713
    %4716 = vst.msk [vmem:[#allocation11 + $0x22] sm:$0x3] %vm2832, %v4715
    %v4717 = vld [vmem:[#allocation10 + $0x45] sm:$0x1]
    %v4718 = vld [vmem:[#allocation10 + $0x98] sm:$0x1]
    %v4720 = vrot.slane %v4718, 7
    %v4722 = vsel %vm3676, %v4717, %v4720
    %v4725 = vunpack.c.l.s4 1983009808
    %v4726 = vunpack.c.0.s8 %v4725
    %v4727 = vlaneseq
    %v4728 = vshrl.u32 %v4727, 7
    %v4729 = vsub.s32 %v4726, %v4728
    %v4730 = vrot.slane %v4722, %v4729
    %4731 = vrot.lane.b32.xlu0 %v4730, 32
    %v4732 = vpop.permute.xlu0 %4731
    %4734 = vst.msk [vmem:[#allocation11 + $0x22] sm:$0x3] %vm3005, %v4732
    %v4735 = vld [vmem:[#allocation10 + $0x46] sm:$0x1]
    %v4736 = vld [vmem:[#allocation10 + $0x99] sm:$0x1]
    %v4738 = vrot.slane %v4736, 7
    %v4740 = vsel %vm3676, %v4735, %v4738
    %v4743 = vunpack.c.l.s4 1983009808
    %v4744 = vunpack.c.0.s8 %v4743
    %v4745 = vlaneseq
    %v4746 = vshrl.u32 %v4745, 7
    %v4747 = vsub.s32 %v4744, %v4746
    %v4748 = vrot.slane %v4740, %v4747
    %4749 = vrot.lane.b32.xlu0 %v4748, 64
    %v4750 = vpop.permute.xlu0 %4749
    %4752 = vst.msk [vmem:[#allocation11 + $0x22] sm:$0x3] %vm3078, %v4750
    %v4753 = vld [vmem:[#allocation10 + $0x47] sm:$0x1]
    %v4754 = vld [vmem:[#allocation10 + $0x9a] sm:$0x1]
    %v4756 = vrot.slane %v4754, 7
    %v4758 = vsel %vm3676, %v4753, %v4756
    %v4761 = vunpack.c.l.s4 1983009808
    %v4762 = vunpack.c.0.s8 %v4761
    %v4763 = vlaneseq
    %v4764 = vshrl.u32 %v4763, 7
    %v4765 = vsub.s32 %v4762, %v4764
    %v4766 = vrot.slane %v4758, %v4765
    %4767 = vrot.lane.b32.xlu0 %v4766, 96
    %v4768 = vpop.permute.xlu0 %4767
    %4770 = vst.msk [vmem:[#allocation11 + $0x22] sm:$0x3] %vm3732, %v4768
    %v4771 = vld [vmem:[#allocation10 + $0x48] sm:$0x1]
    %v4772 = vld [vmem:[#allocation10 + $0x9b] sm:$0x1]
    %v4774 = vrot.slane %v4772, 7
    %v4776 = vsel %vm3676, %v4771, %v4774
    %4777 = vst.msk [vmem:[#allocation11 + $0x24] sm:$0x3] %vm2832, %v4776
    %v4778 = vld [vmem:[#allocation10 + $0x49] sm:$0x1]
    %v4779 = vld [vmem:[#allocation10 + $0x9c] sm:$0x1]
    %v4781 = vrot.slane %v4779, 7
    %v4783 = vsel %vm3676, %v4778, %v4781
    %v4786 = vunpack.c.l.s4 1983009808
    %v4787 = vunpack.c.0.s8 %v4786
    %v4788 = vlaneseq
    %v4789 = vshrl.u32 %v4788, 7
    %v4790 = vsub.s32 %v4787, %v4789
    %v4791 = vrot.slane %v4783, %v4790
    %4792 = vrot.lane.b32.xlu0 %v4791, 32
    %v4793 = vpop.permute.xlu0 %4792
    %4795 = vst.msk [vmem:[#allocation11 + $0x24] sm:$0x3] %vm3005, %v4793
    %v4796 = vld [vmem:[#allocation10 + $0x4a] sm:$0x1]
    %v4797 = vld [vmem:[#allocation10 + $0x9d] sm:$0x1]
    %v4799 = vrot.slane %v4797, 7
    %v4801 = vsel %vm3676, %v4796, %v4799
    %v4804 = vunpack.c.l.s4 1983009808
    %v4805 = vunpack.c.0.s8 %v4804
    %v4806 = vlaneseq
    %v4807 = vshrl.u32 %v4806, 7
    %v4808 = vsub.s32 %v4805, %v4807
    %v4809 = vrot.slane %v4801, %v4808
    %4810 = vrot.lane.b32.xlu0 %v4809, 64
    %v4811 = vpop.permute.xlu0 %4810
    %4813 = vst.msk [vmem:[#allocation11 + $0x24] sm:$0x3] %vm3078, %v4811
    %v4814 = vld [vmem:[#allocation10 + $0x4b] sm:$0x1]
    %v4815 = vld [vmem:[#allocation10 + $0x9e] sm:$0x1]
    %v4817 = vrot.slane %v4815, 7
    %v4819 = vsel %vm3676, %v4814, %v4817
    %v4822 = vunpack.c.l.s4 1983009808
    %v4823 = vunpack.c.0.s8 %v4822
    %v4824 = vlaneseq
    %v4825 = vshrl.u32 %v4824, 7
    %v4826 = vsub.s32 %v4823, %v4825
    %v4827 = vrot.slane %v4819, %v4826
    %4828 = vrot.lane.b32.xlu0 %v4827, 96
    %v4829 = vpop.permute.xlu0 %4828
    %4831 = vst.msk [vmem:[#allocation11 + $0x24] sm:$0x3] %vm3732, %v4829
    %v4832 = vld [vmem:[#allocation10 + $0x4c] sm:$0x1]
    %v4833 = vld [vmem:[#allocation10 + $0x9f] sm:$0x1]
    %v4835 = vrot.slane %v4833, 7
    %v4837 = vsel %vm3676, %v4832, %v4835
    %4838 = vst.msk [vmem:[#allocation11 + $0x26] sm:$0x3] %vm2832, %v4837
    %v4839 = vld [vmem:[#allocation10 + $0x4d] sm:$0x1]
    %v4840 = vld [vmem:[#allocation10 + $0xa0] sm:$0x1]
    %v4842 = vrot.slane %v4840, 7
    %v4844 = vsel %vm3676, %v4839, %v4842
    %v4847 = vunpack.c.l.s4 1983009808
    %v4848 = vunpack.c.0.s8 %v4847
    %v4849 = vlaneseq
    %v4850 = vshrl.u32 %v4849, 7
    %v4851 = vsub.s32 %v4848, %v4850
    %v4852 = vrot.slane %v4844, %v4851
    %4853 = vrot.lane.b32.xlu0 %v4852, 32
    %v4854 = vpop.permute.xlu0 %4853
    %4856 = vst.msk [vmem:[#allocation11 + $0x26] sm:$0x3] %vm3005, %v4854
    %v4857 = vld [vmem:[#allocation10 + $0x4e] sm:$0x1]
    %v4858 = vld [vmem:[#allocation10 + $0xa1] sm:$0x1]
    %v4860 = vrot.slane %v4858, 7
    %v4862 = vsel %vm3676, %v4857, %v4860
    %v4865 = vunpack.c.l.s4 1983009808
    %v4866 = vunpack.c.0.s8 %v4865
    %v4867 = vlaneseq
    %v4868 = vshrl.u32 %v4867, 7
    %v4869 = vsub.s32 %v4866, %v4868
    %v4870 = vrot.slane %v4862, %v4869
    %4871 = vrot.lane.b32.xlu0 %v4870, 64
    %v4872 = vpop.permute.xlu0 %4871
    %4874 = vst.msk [vmem:[#allocation11 + $0x26] sm:$0x3] %vm3078, %v4872
    %v4875 = vld [vmem:[#allocation10 + $0x4f] sm:$0x1]
    %v4876 = vld [vmem:[#allocation10 + $0xa2] sm:$0x1]
    %v4878 = vrot.slane %v4876, 7
    %v4880 = vsel %vm3676, %v4875, %v4878
    %v4883 = vunpack.c.l.s4 1983009808
    %v4884 = vunpack.c.0.s8 %v4883
    %v4885 = vlaneseq
    %v4886 = vshrl.u32 %v4885, 7
    %v4887 = vsub.s32 %v4884, %v4886
    %v4888 = vrot.slane %v4880, %v4887
    %4889 = vrot.lane.b32.xlu0 %v4888, 96
    %v4890 = vpop.permute.xlu0 %4889
    %4892 = vst.msk [vmem:[#allocation11 + $0x26] sm:$0x3] %vm3732, %v4890
    %v4893 = vld [vmem:[#allocation10 + $0x50] sm:$0x1]
    %v4894 = vld [vmem:[#allocation10 + $0xa3] sm:$0x1]
    %v4896 = vrot.slane %v4894, 7
    %v4898 = vsel %vm3676, %v4893, %v4896
    %4899 = vst.msk [vmem:[#allocation11 + $0x28] sm:$0x3] %vm2832, %v4898
    %v4900 = vld [vmem:[#allocation10 + $0x51] sm:$0x1]
    %v4901 = vld [vmem:[#allocation10 + $0xa4] sm:$0x1]
    %v4903 = vrot.slane %v4901, 7
    %v4905 = vsel %vm3676, %v4900, %v4903
    %v4908 = vunpack.c.l.s4 1983009808
    %v4909 = vunpack.c.0.s8 %v4908
    %v4910 = vlaneseq
    %v4911 = vshrl.u32 %v4910, 7
    %v4912 = vsub.s32 %v4909, %v4911
    %v4913 = vrot.slane %v4905, %v4912
    %4914 = vrot.lane.b32.xlu0 %v4913, 32
    %v4915 = vpop.permute.xlu0 %4914
    %4917 = vst.msk [vmem:[#allocation11 + $0x28] sm:$0x3] %vm3005, %v4915
    %v4918 = vld [vmem:[#allocation10 + $0x52] sm:$0x1]
    %v4919 = vld [vmem:[#allocation10 + $0xa5] sm:$0x1]
    %v4921 = vrot.slane %v4919, 7
    %v4923 = vsel %vm3676, %v4918, %v4921
    %v4926 = vunpack.c.l.s4 1983009808
    %v4927 = vunpack.c.0.s8 %v4926
    %v4928 = vlaneseq
    %v4929 = vshrl.u32 %v4928, 7
    %v4930 = vsub.s32 %v4927, %v4929
    %v4931 = vrot.slane %v4923, %v4930
    %4932 = vrot.lane.b32.xlu0 %v4931, 64
    %v4933 = vpop.permute.xlu0 %4932
    %4935 = vst.msk [vmem:[#allocation11 + $0x28] sm:$0x3] %vm3078, %v4933
    %v4936 = vld [vmem:[#allocation11] sm:$0xff]
    %v4937 = vld [vmem:[#allocation11 + $0x8] sm:$0xff]
    %v4938 = vld [vmem:[#allocation11 + $0x10] sm:$0xff]
    %v4939 = vld [vmem:[#allocation11 + $0x18] sm:$0xff]
    %v4940 = vld [vmem:[#allocation11 + $0x20] sm:$0xff]
    %v4941 = vld [vmem:[#allocation11 + $0x28] sm:$0x3]
    %v4942 = vld [vmem:[%s10] sm:$0xff]
    %v4943 = vld [vmem:[%s10 + $0x8] sm:$0xff]
    %v4944 = vld [vmem:[%s10 + $0x10] sm:$0xff]
    %v4945 = vld [vmem:[%s10 + $0x18] sm:$0xff]
    %v4946 = vld [vmem:[%s10 + $0x20] sm:$0xff]
    %v4947 = vld [vmem:[%s10 + $0x28] sm:$0xff]
    %v4948 = vld [vmem:[%s10 + $0x30] sm:$0xff]
    %v4949 = vld [vmem:[%s10 + $0x38] sm:$0xff]
    %v4950 = vld [vmem:[%s10 + $0x40] sm:$0xff]
    %v4951 = vld [vmem:[%s10 + $0x48] sm:$0xff]
    %v4952 = vld [vmem:[%s10 + $0x50] sm:$0xff]
    %v4953 = vld [vmem:[%s10 + $0x58] sm:$0xff]
    %v4954 = vld [vmem:[%s10 + $0x60] sm:$0xff]
    %v4955 = vld [vmem:[%s10 + $0x68] sm:$0xff]
    %v4956 = vld [vmem:[%s10 + $0x70] sm:$0xff]
    %v4957 = vld [vmem:[%s10 + $0x78] sm:$0xff]
    %v4958 = vld [vmem:[%s10 + $0x80] sm:$0xff]
    %v4959 = vld [vmem:[%s10 + $0x88] sm:$0xff]
    %v4960 = vld [vmem:[%s10 + $0x90] sm:$0xff]
    %v4961 = vld [vmem:[%s10 + $0x98] sm:$0xff]
    %v4962 = vld [vmem:[%s10 + $0xa0] sm:$0xff]
    %v4963 = vld [vmem:[%s10 + $0xa8] sm:$0xff]
    %v4964 = vld [vmem:[%s10 + $0xb0] sm:$0xff]
    %v4965 = vld [vmem:[%s10 + $0xb8] sm:$0xff]
    %v4966 = vld [vmem:[%s10 + $0xc0] sm:$0xff]
    %v4967 = vld [vmem:[%s10 + $0xc8] sm:$0xff]
    %v4968 = vld [vmem:[%s10 + $0xd0] sm:$0xff]
    %v4969 = vld [vmem:[%s10 + $0xd8] sm:$0xff]
    %v4970 = vld [vmem:[%s10 + $0xe0] sm:$0xff]
    %v4971 = vld [vmem:[%s10 + $0xe8] sm:$0xff]
    %v4972 = vld [vmem:[%s10 + $0xf0] sm:$0xff]
    %v4973 = vld [vmem:[%s10 + $0xf8] sm:$0xff]
    %v4974 = vld [vmem:[%s10 + $0x100] sm:$0xff]
    %v4975 = vld [vmem:[%s10 + $0x108] sm:$0xff]
    %v4976 = vld [vmem:[%s10 + $0x110] sm:$0xff]
    %v4977 = vld [vmem:[%s10 + $0x118] sm:$0xff]
    %v4978 = vld [vmem:[%s10 + $0x120] sm:$0xff]
    %v4979 = vld [vmem:[%s10 + $0x128] sm:$0xff]
    %v4980 = vld [vmem:[%s10 + $0x130] sm:$0xff]
    %v4981 = vld [vmem:[%s10 + $0x138] sm:$0xff]
    %v4982 = vld [vmem:[%s10 + $0x140] sm:$0xff]
    %v4983 = vld [vmem:[%s10 + $0x148] sm:$0xff]
    %v4984 = vld [vmem:[%s10 + $0x150] sm:$0xff]
    %v4985 = vld [vmem:[%s10 + $0x158] sm:$0xff]
    %v4986 = vld [vmem:[%s10 + $0x160] sm:$0xff]
    %v4987 = vld [vmem:[%s10 + $0x168] sm:$0xff]
    %v4988 = vld [vmem:[%s10 + $0x170] sm:$0xff]
    %v4989 = vld [vmem:[%s10 + $0x178] sm:$0xff]
    %v4990 = vld [vmem:[%s10 + $0x180] sm:$0xff]
    %v4991 = vld [vmem:[%s10 + $0x188] sm:$0xff]
    %v4992 = vld [vmem:[%s10 + $0x190] sm:$0xff]
    %v4993 = vld [vmem:[%s10 + $0x198] sm:$0xff]
    %v4994 = vld [vmem:[%s10 + $0x1a0] sm:$0xff]
    %v4995 = vld [vmem:[%s10 + $0x1a8] sm:$0xff]
    %v4996 = vld [vmem:[%s10 + $0x1b0] sm:$0xff]
    %v4997 = vld [vmem:[%s10 + $0x1b8] sm:$0xff]
    %v4998 = vld [vmem:[%s10 + $0x1c0] sm:$0xff]
    %v4999 = vld [vmem:[%s10 + $0x1c8] sm:$0xff]
    %v5000 = vld [vmem:[%s10 + $0x1d0] sm:$0xff]
    %v5001 = vld [vmem:[%s10 + $0x1d8] sm:$0xff]
    %v5002 = vld [vmem:[%s10 + $0x1e0] sm:$0xff]
    %v5003 = vld [vmem:[%s10 + $0x1e8] sm:$0xff]
    %v5004 = vld [vmem:[%s10 + $0x1f0] sm:$0xff]
    %v5005 = vld [vmem:[%s10 + $0x1f8] sm:$0xff]
    %v5006 = vld [vmem:[%s10 + $0x200] sm:$0xff]
    %v5007 = vld [vmem:[%s10 + $0x208] sm:$0xff]
    %v5008 = vld [vmem:[%s10 + $0x210] sm:$0xff]
    %v5009 = vld [vmem:[%s10 + $0x218] sm:$0xff]
    %v5010 = vld [vmem:[%s10 + $0x220] sm:$0xff]
    %v5011 = vld [vmem:[%s10 + $0x228] sm:$0xff]
    %v5012 = vld [vmem:[%s10 + $0x230] sm:$0xff]
    %v5013 = vld [vmem:[%s10 + $0x238] sm:$0xff]
    %v5014 = vld [vmem:[%s10 + $0x240] sm:$0xff]
    %v5015 = vld [vmem:[%s10 + $0x248] sm:$0xff]
    %v5016 = vld [vmem:[%s10 + $0x250] sm:$0xff]
    %v5017 = vld [vmem:[%s10 + $0x258] sm:$0xff]
    %v5018 = vld [vmem:[%s10 + $0x260] sm:$0xff]
    %v5019 = vld [vmem:[%s10 + $0x268] sm:$0xff]
    %v5020 = vld [vmem:[%s10 + $0x270] sm:$0xff]
    %v5021 = vld [vmem:[%s10 + $0x278] sm:$0xff]
    %v5022 = vld [vmem:[%s10 + $0x280] sm:$0xff]
    %v5023 = vld [vmem:[%s10 + $0x288] sm:$0xff]
    %v5024 = vld [vmem:[%s10 + $0x290] sm:$0xff]
    %v5025 = vld [vmem:[%s10 + $0x298] sm:$0xff]
    %v5026 = vld [vmem:[%s10 + $0x2a0] sm:$0xff]
    %v5027 = vld [vmem:[%s10 + $0x2a8] sm:$0xff]
    %v5028 = vld [vmem:[%s10 + $0x2b0] sm:$0xff]
    %v5029 = vld [vmem:[%s10 + $0x2b8] sm:$0xff]
    %v5030 = vld [vmem:[%s10 + $0x2c0] sm:$0xff]
    %v5031 = vld [vmem:[%s10 + $0x2c8] sm:$0xff]
    %v5032 = vld [vmem:[%s10 + $0x2d0] sm:$0xff]
    %v5033 = vld [vmem:[%s10 + $0x2d8] sm:$0xff]
    %v5034 = vld [vmem:[%s10 + $0x2e0] sm:$0xff]
    %v5035 = vld [vmem:[%s10 + $0x2e8] sm:$0xff]
    %v5036 = vld [vmem:[%s10 + $0x2f0] sm:$0xff]
    %v5037 = vld [vmem:[%s10 + $0x2f8] sm:$0xff]
    %v5038 = vld [vmem:[%s10 + $0x300] sm:$0xff]
    %v5039 = vld [vmem:[%s10 + $0x308] sm:$0xff]
    %v5040 = vld [vmem:[%s10 + $0x310] sm:$0xff]
    %v5041 = vld [vmem:[%s10 + $0x318] sm:$0xff]
    %v5042 = vld [vmem:[%s10 + $0x320] sm:$0xff]
    %v5043 = vld [vmem:[%s10 + $0x328] sm:$0xff]
    %v5044 = vld [vmem:[%s10 + $0x330] sm:$0xff]
    %v5045 = vld [vmem:[%s10 + $0x338] sm:$0xff]
    %v5046 = vld [vmem:[%s10 + $0x340] sm:$0xff]
    %v5047 = vld [vmem:[%s10 + $0x348] sm:$0xff]
    %v5048 = vld [vmem:[%s10 + $0x350] sm:$0xff]
    %v5049 = vld [vmem:[%s10 + $0x358] sm:$0xff]
    %v5050 = vld [vmem:[%s10 + $0x360] sm:$0xff]
    %v5051 = vld [vmem:[%s10 + $0x368] sm:$0xff]
    %v5052 = vld [vmem:[%s10 + $0x370] sm:$0xff]
    %v5053 = vld [vmem:[%s10 + $0x378] sm:$0xff]
    %v5054 = vld [vmem:[%s10 + $0x380] sm:$0xff]
    %v5055 = vld [vmem:[%s10 + $0x388] sm:$0xff]
    %v5056 = vld [vmem:[%s10 + $0x390] sm:$0xff]
    %v5057 = vld [vmem:[%s10 + $0x398] sm:$0xff]
    %v5058 = vld [vmem:[%s10 + $0x3a0] sm:$0xff]
    %v5059 = vld [vmem:[%s10 + $0x3a8] sm:$0xff]
    %v5060 = vld [vmem:[%s10 + $0x3b0] sm:$0xff]
    %v5061 = vld [vmem:[%s10 + $0x3b8] sm:$0xff]
    %v5062 = vld [vmem:[%s10 + $0x3c0] sm:$0xff]
    %v5063 = vld [vmem:[%s10 + $0x3c8] sm:$0xff]
    %v5064 = vld [vmem:[%s10 + $0x3d0] sm:$0xff]
    %v5065 = vld [vmem:[%s10 + $0x3d8] sm:$0xff]
    %v5066 = vld [vmem:[%s10 + $0x3e0] sm:$0xff]
    %v5067 = vld [vmem:[%s10 + $0x3e8] sm:$0xff]
    %v5068 = vld [vmem:[%s10 + $0x3f0] sm:$0xff]
    %v5069 = vld [vmem:[%s10 + $0x3f8] sm:$0xff]
    %v5070 = vld [vmem:[%s10 + $0x400] sm:$0xff]
    %v5071 = vld [vmem:[%s10 + $0x408] sm:$0xff]
    %v5072 = vld [vmem:[%s10 + $0x410] sm:$0xff]
    %v5073 = vld [vmem:[%s10 + $0x418] sm:$0xff]
    %v5074 = vld [vmem:[%s10 + $0x420] sm:$0xff]
    %v5075 = vld [vmem:[%s10 + $0x428] sm:$0xff]
    %v5076 = vld [vmem:[%s10 + $0x430] sm:$0xff]
    %v5077 = vld [vmem:[%s10 + $0x438] sm:$0xff]
    %v5078 = vld [vmem:[%s10 + $0x440] sm:$0xff]
    %v5079 = vld [vmem:[%s10 + $0x448] sm:$0xff]
    %v5080 = vld [vmem:[%s10 + $0x450] sm:$0xff]
    %v5081 = vld [vmem:[%s10 + $0x458] sm:$0xff]
    %v5082 = vld [vmem:[%s10 + $0x460] sm:$0xff]
    %v5083 = vld [vmem:[%s10 + $0x468] sm:$0xff]
    %v5084 = vld [vmem:[%s10 + $0x470] sm:$0xff]
    %v5085 = vld [vmem:[%s10 + $0x478] sm:$0xff]
    %v5086 = vld [vmem:[%s10 + $0x480] sm:$0xff]
    %v5087 = vld [vmem:[%s10 + $0x488] sm:$0xff]
    %v5088 = vld [vmem:[%s10 + $0x490] sm:$0xff]
    %v5089 = vld [vmem:[%s10 + $0x498] sm:$0xff]
    %v5090 = vld [vmem:[%s10 + $0x4a0] sm:$0xff]
    %v5091 = vld [vmem:[%s10 + $0x4a8] sm:$0xff]
    %v5092 = vld [vmem:[%s10 + $0x4b0] sm:$0xff]
    %v5093 = vld [vmem:[%s10 + $0x4b8] sm:$0xff]
    %v5094 = vld [vmem:[%s10 + $0x4c0] sm:$0xff]
    %v5095 = vld [vmem:[%s10 + $0x4c8] sm:$0xff]
    %v5096 = vld [vmem:[%s10 + $0x4d0] sm:$0xff]
    %v5097 = vld [vmem:[%s10 + $0x4d8] sm:$0xff]
    %v5098 = vld [vmem:[%s10 + $0x4e0] sm:$0xff]
    %v5099 = vld [vmem:[%s10 + $0x4e8] sm:$0xff]
    %v5100 = vld [vmem:[%s10 + $0x4f0] sm:$0xff]
    %v5101 = vld [vmem:[%s10 + $0x4f8] sm:$0xff]
    %v5102 = vld [vmem:[%s10 + $0x500] sm:$0xff]
    %v5103 = vld [vmem:[%s10 + $0x508] sm:$0xff]
    %v5104 = vld [vmem:[%s10 + $0x510] sm:$0xff]
    %v5105 = vld [vmem:[%s10 + $0x518] sm:$0xff]
    %v5106 = vld [vmem:[%s10 + $0x520] sm:$0xff]
    %v5107 = vld [vmem:[%s10 + $0x528] sm:$0xff]
    %v5108 = vld [vmem:[%s10 + $0x530] sm:$0xff]
    %v5109 = vld [vmem:[%s10 + $0x538] sm:$0xff]
    %v5110 = vld [vmem:[%s10 + $0x540] sm:$0xff]
    %v5111 = vld [vmem:[%s10 + $0x548] sm:$0xff]
    %v5112 = vld [vmem:[%s10 + $0x550] sm:$0xff]
    %v5113 = vld [vmem:[%s10 + $0x558] sm:$0xff]
    %v5114 = vld [vmem:[%s10 + $0x560] sm:$0xff]
    %v5115 = vld [vmem:[%s10 + $0x568] sm:$0xff]
    %v5116 = vld [vmem:[%s10 + $0x570] sm:$0xff]
    %v5117 = vld [vmem:[%s10 + $0x578] sm:$0xff]
    %v5118 = vld [vmem:[%s10 + $0x580] sm:$0xff]
    %v5119 = vld [vmem:[%s10 + $0x588] sm:$0xff]
    %v5120 = vld [vmem:[%s10 + $0x590] sm:$0xff]
    %v5121 = vld [vmem:[%s10 + $0x598] sm:$0xff]
    %v5122 = vld [vmem:[%s10 + $0x5a0] sm:$0xff]
    %v5123 = vld [vmem:[%s10 + $0x5a8] sm:$0xff]
    %v5124 = vld [vmem:[%s10 + $0x5b0] sm:$0xff]
    %v5125 = vld [vmem:[%s10 + $0x5b8] sm:$0xff]
    %v5126 = vld [vmem:[%s10 + $0x5c0] sm:$0xff]
    %v5127 = vld [vmem:[%s10 + $0x5c8] sm:$0xff]
    %v5128 = vld [vmem:[%s10 + $0x5d0] sm:$0xff]
    %v5129 = vld [vmem:[%s10 + $0x5d8] sm:$0xff]
    %v5130 = vld [vmem:[%s10 + $0x5e0] sm:$0xff]
    %v5131 = vld [vmem:[%s10 + $0x5e8] sm:$0xff]
    %v5132 = vld [vmem:[%s10 + $0x5f0] sm:$0xff]
    %v5133 = vld [vmem:[%s10 + $0x5f8] sm:$0xff]
    %v5134 = vld [vmem:[%s10 + $0x600] sm:$0xff]
    %v5135 = vld [vmem:[%s10 + $0x608] sm:$0xff]
    %v5136 = vld [vmem:[%s10 + $0x610] sm:$0xff]
    %v5137 = vld [vmem:[%s10 + $0x618] sm:$0xff]
    %v5138 = vld [vmem:[%s10 + $0x620] sm:$0xff]
    %v5139 = vld [vmem:[%s10 + $0x628] sm:$0xff]
    %v5140 = vld [vmem:[%s10 + $0x630] sm:$0xff]
    %v5141 = vld [vmem:[%s10 + $0x638] sm:$0xff]
    %v5142 = vld [vmem:[%s10 + $0x640] sm:$0xff]
    %v5143 = vld [vmem:[%s10 + $0x648] sm:$0xff]
    %v5144 = vld [vmem:[%s10 + $0x650] sm:$0xff]
    %v5145 = vld [vmem:[%s10 + $0x658] sm:$0xff]
    %v5146 = vld [vmem:[%s10 + $0x660] sm:$0xff]
    %v5147 = vld [vmem:[%s10 + $0x668] sm:$0xff]
    %v5148 = vld [vmem:[%s10 + $0x670] sm:$0xff]
    %v5149 = vld [vmem:[%s10 + $0x678] sm:$0xff]
    %v5150 = vld [vmem:[%s10 + $0x680] sm:$0xff]
    %v5151 = vld [vmem:[%s10 + $0x688] sm:$0xff]
    %v5152 = vld [vmem:[%s10 + $0x690] sm:$0xff]
    %v5153 = vld [vmem:[%s10 + $0x698] sm:$0xff]
    %v5154 = vld [vmem:[%s10 + $0x6a0] sm:$0xff]
    %v5155 = vld [vmem:[%s10 + $0x6a8] sm:$0xff]
    %v5156 = vld [vmem:[%s10 + $0x6b0] sm:$0xff]
    %v5157 = vld [vmem:[%s10 + $0x6b8] sm:$0xff]
    %v5158 = vld [vmem:[%s10 + $0x6c0] sm:$0xff]
    %v5159 = vld [vmem:[%s10 + $0x6c8] sm:$0xff]
    %v5160 = vld [vmem:[%s10 + $0x6d0] sm:$0xff]
    %v5161 = vld [vmem:[%s10 + $0x6d8] sm:$0xff]
    %v5162 = vld [vmem:[%s10 + $0x6e0] sm:$0xff]
    %v5163 = vld [vmem:[%s10 + $0x6e8] sm:$0xff]
    %v5164 = vld [vmem:[%s10 + $0x6f0] sm:$0xff]
    %v5165 = vld [vmem:[%s10 + $0x6f8] sm:$0xff]
    %v5166 = vld [vmem:[%s10 + $0x700] sm:$0xff]
    %v5167 = vld [vmem:[%s10 + $0x708] sm:$0xff]
    %v5168 = vld [vmem:[%s10 + $0x710] sm:$0xff]
    %v5169 = vld [vmem:[%s10 + $0x718] sm:$0xff]
    %v5170 = vld [vmem:[%s10 + $0x720] sm:$0xff]
    %v5171 = vld [vmem:[%s10 + $0x728] sm:$0xff]
    %v5172 = vld [vmem:[%s10 + $0x730] sm:$0xff]
    %v5173 = vld [vmem:[%s10 + $0x738] sm:$0xff]
    %v5174 = vld [vmem:[%s10 + $0x740] sm:$0xff]
    %v5175 = vld [vmem:[%s10 + $0x748] sm:$0xff]
    %v5176 = vld [vmem:[%s10 + $0x750] sm:$0xff]
    %v5177 = vld [vmem:[%s10 + $0x758] sm:$0xff]
    %v5178 = vld [vmem:[%s10 + $0x760] sm:$0xff]
    %v5179 = vld [vmem:[%s10 + $0x768] sm:$0xff]
    %v5180 = vld [vmem:[%s10 + $0x770] sm:$0xff]
    %v5181 = vld [vmem:[%s10 + $0x778] sm:$0xff]
    %v5182 = vld [vmem:[%s10 + $0x780] sm:$0xff]
    %v5183 = vld [vmem:[%s10 + $0x788] sm:$0xff]
    %v5184 = vld [vmem:[%s10 + $0x790] sm:$0xff]
    %v5185 = vld [vmem:[%s10 + $0x798] sm:$0xff]
    %v5186 = vld [vmem:[%s10 + $0x7a0] sm:$0xff]
    %v5187 = vld [vmem:[%s10 + $0x7a8] sm:$0xff]
    %v5188 = vld [vmem:[%s10 + $0x7b0] sm:$0xff]
    %v5189 = vld [vmem:[%s10 + $0x7b8] sm:$0xff]
    %v5190 = vld [vmem:[%s10 + $0x7c0] sm:$0xff]
    %v5191 = vld [vmem:[%s10 + $0x7c8] sm:$0xff]
    %v5192 = vld [vmem:[%s10 + $0x7d0] sm:$0xff]
    %v5193 = vld [vmem:[%s10 + $0x7d8] sm:$0xff]
    %v5194 = vld [vmem:[%s10 + $0x7e0] sm:$0xff]
    %v5195 = vld [vmem:[%s10 + $0x7e8] sm:$0xff]
    %v5196 = vld [vmem:[%s10 + $0x7f0] sm:$0xff]
    %v5197 = vld [vmem:[%s10 + $0x7f8] sm:$0xff]
    %v5198 = vld [vmem:[%s10 + $0x800] sm:$0xff]
    %v5199 = vld [vmem:[%s10 + $0x808] sm:$0xff]
    %v5200 = vld [vmem:[%s10 + $0x810] sm:$0xff]
    %v5201 = vld [vmem:[%s10 + $0x818] sm:$0xff]
    %v5202 = vld [vmem:[%s10 + $0x820] sm:$0xff]
    %v5203 = vld [vmem:[%s10 + $0x828] sm:$0xff]
    %v5204 = vld [vmem:[%s10 + $0x830] sm:$0xff]
    %v5205 = vld [vmem:[%s10 + $0x838] sm:$0xff]
    %v5206 = vld [vmem:[%s10 + $0x840] sm:$0xff]
    %v5207 = vld [vmem:[%s10 + $0x848] sm:$0xff]
    %v5208 = vld [vmem:[%s10 + $0x850] sm:$0xff]
    %v5209 = vld [vmem:[%s10 + $0x858] sm:$0xff]
    %v5210 = vld [vmem:[%s10 + $0x860] sm:$0xff]
    %v5211 = vld [vmem:[%s10 + $0x868] sm:$0xff]
    %v5212 = vld [vmem:[%s10 + $0x870] sm:$0xff]
    %v5213 = vld [vmem:[%s10 + $0x878] sm:$0xff]
    %v5214 = vld [vmem:[%s10 + $0x880] sm:$0xff]
    %v5215 = vld [vmem:[%s10 + $0x888] sm:$0xff]
    %v5216 = vld [vmem:[%s10 + $0x890] sm:$0xff]
    %v5217 = vld [vmem:[%s10 + $0x898] sm:$0xff]
    %v5218 = vld [vmem:[%s10 + $0x8a0] sm:$0xff]
    %v5219 = vld [vmem:[%s10 + $0x8a8] sm:$0xff]
    %v5220 = vld [vmem:[%s10 + $0x8b0] sm:$0xff]
    %v5221 = vld [vmem:[%s10 + $0x8b8] sm:$0xff]
    %v5222 = vld [vmem:[%s10 + $0x8c0] sm:$0xff]
    %v5223 = vld [vmem:[%s10 + $0x8c8] sm:$0xff]
    %v5224 = vld [vmem:[%s10 + $0x8d0] sm:$0xff]
    %v5225 = vld [vmem:[%s10 + $0x8d8] sm:$0xff]
    %v5226 = vld [vmem:[%s10 + $0x8e0] sm:$0xff]
    %v5227 = vld [vmem:[%s10 + $0x8e8] sm:$0xff]
    %v5228 = vld [vmem:[%s10 + $0x8f0] sm:$0xff]
    %v5229 = vld [vmem:[%s10 + $0x8f8] sm:$0xff]
    %v5230 = vld [vmem:[%s10 + $0x900] sm:$0xff]
    %v5231 = vld [vmem:[%s10 + $0x908] sm:$0xff]
    %v5232 = vld [vmem:[%s10 + $0x910] sm:$0xff]
    %v5233 = vld [vmem:[%s10 + $0x918] sm:$0xff]
    %v5234 = vld [vmem:[%s10 + $0x920] sm:$0xff]
    %v5235 = vld [vmem:[%s10 + $0x928] sm:$0xff]
    %v5236 = vld [vmem:[%s10 + $0x930] sm:$0xff]
    %v5237 = vld [vmem:[%s10 + $0x938] sm:$0xff]
    %v5238 = vld [vmem:[%s10 + $0x940] sm:$0xff]
    %v5239 = vld [vmem:[%s10 + $0x948] sm:$0xff]
    %v5240 = vld [vmem:[%s10 + $0x950] sm:$0xff]
    %v5241 = vld [vmem:[%s10 + $0x958] sm:$0xff]
    %v5242 = vld [vmem:[%s10 + $0x960] sm:$0xff]
    %v5243 = vld [vmem:[%s10 + $0x968] sm:$0xff]
    %v5244 = vld [vmem:[%s10 + $0x970] sm:$0xff]
    %v5245 = vld [vmem:[%s10 + $0x978] sm:$0xff]
    %v5246 = vld [vmem:[%s10 + $0x980] sm:$0xff]
    %v5247 = vld [vmem:[%s10 + $0x988] sm:$0xff]
    %v5248 = vld [vmem:[%s10 + $0x990] sm:$0xff]
    %v5249 = vld [vmem:[%s10 + $0x998] sm:$0xff]
    %v5250 = vld [vmem:[%s10 + $0x9a0] sm:$0xff]
    %v5251 = vld [vmem:[%s10 + $0x9a8] sm:$0xff]
    %v5252 = vld [vmem:[%s10 + $0x9b0] sm:$0xff]
    %v5253 = vld [vmem:[%s10 + $0x9b8] sm:$0xff]
    %v5254 = vld [vmem:[%s10 + $0x9c0] sm:$0xff]
    %v5255 = vld [vmem:[%s10 + $0x9c8] sm:$0xff]
    %v5256 = vld [vmem:[%s10 + $0x9d0] sm:$0xff]
    %v5257 = vld [vmem:[%s10 + $0x9d8] sm:$0xff]
    %v5258 = vld [vmem:[%s10 + $0x9e0] sm:$0xff]
    %v5259 = vld [vmem:[%s10 + $0x9e8] sm:$0xff]
    %v5260 = vld [vmem:[%s10 + $0x9f0] sm:$0xff]
    %v5261 = vld [vmem:[%s10 + $0x9f8] sm:$0xff]
    %v5262 = vld [vmem:[%s10 + $0xa00] sm:$0xff]
    %v5263 = vld [vmem:[%s10 + $0xa08] sm:$0xff]
    %v5264 = vld [vmem:[%s10 + $0xa10] sm:$0xff]
    %v5265 = vld [vmem:[%s10 + $0xa18] sm:$0xff]
    %v5266 = vld [vmem:[%s10 + $0xa20] sm:$0xff]
    %v5267 = vld [vmem:[%s10 + $0xa28] sm:$0xff]
    %v5268 = vld [vmem:[%s10 + $0xa30] sm:$0xff]
    %v5269 = vld [vmem:[%s10 + $0xa38] sm:$0xff]
    %v5270 = vld [vmem:[%s10 + $0xa40] sm:$0xff]
    %v5271 = vld [vmem:[%s10 + $0xa48] sm:$0xff]
    %v5272 = vld [vmem:[%s10 + $0xa50] sm:$0xff]
    %v5273 = vld [vmem:[%s10 + $0xa58] sm:$0xff]
    %v5274 = vld [vmem:[%s11] sm:$0x1]
    %v5276 = vlaneseq
    %v5277 = vshrl.u32 %v5276, 7
    %v5278 = vsub.s32 0, %v5277
    %v5279 = vrot.slane %v5274, %v5278
    %v5287 = vcombine.high %v4936, %v4936
    %v5289 = vunpack.c.l.s4 1983009808
    %v5290 = vunpack.c.0.s8 %v5289
    %v5291 = vlaneseq
    %v5292 = vshrl.u32 %v5291, 7
    %v5293 = vsub.s32 %v5290, %v5292
    %v5294 = vrot.slane %v4936, %v5293
    %v5296 = vunpack.c.l.s4 1983009808
    %v5297 = vunpack.c.0.s8 %v5296
    %v5298 = vlaneseq
    %v5299 = vshrl.u32 %v5298, 7
    %v5300 = vsub.s32 %v5297, %v5299
    %v5301 = vrot.slane %v5287, %v5300
    %v5302 = vcombine.high %v5294, %v5294
    %v5303 = vcombine.high %v5301, %v5301
    %v5304 = vcombine.high %v4937, %v4937
    %v5306 = vunpack.c.l.s4 1983009808
    %v5307 = vunpack.c.0.s8 %v5306
    %v5308 = vlaneseq
    %v5309 = vshrl.u32 %v5308, 7
    %v5310 = vsub.s32 %v5307, %v5309
    %v5311 = vrot.slane %v4937, %v5310
    %v5313 = vunpack.c.l.s4 1983009808
    %v5314 = vunpack.c.0.s8 %v5313
    %v5315 = vlaneseq
    %v5316 = vshrl.u32 %v5315, 7
    %v5317 = vsub.s32 %v5314, %v5316
    %v5318 = vrot.slane %v5304, %v5317
    %v5319 = vcombine.high %v5311, %v5311
    %v5320 = vcombine.high %v5318, %v5318
    %v5321 = vcombine.high %v4938, %v4938
    %v5323 = vunpack.c.l.s4 1983009808
    %v5324 = vunpack.c.0.s8 %v5323
    %v5325 = vlaneseq
    %v5326 = vshrl.u32 %v5325, 7
    %v5327 = vsub.s32 %v5324, %v5326
    %v5328 = vrot.slane %v4938, %v5327
    %v5330 = vunpack.c.l.s4 1983009808
    %v5331 = vunpack.c.0.s8 %v5330
    %v5332 = vlaneseq
    %v5333 = vshrl.u32 %v5332, 7
    %v5334 = vsub.s32 %v5331, %v5333
    %v5335 = vrot.slane %v5321, %v5334
    %v5336 = vcombine.high %v5328, %v5328
    %v5337 = vcombine.high %v5335, %v5335
    %v5338 = vcombine.high %v4939, %v4939
    %v5340 = vunpack.c.l.s4 1983009808
    %v5341 = vunpack.c.0.s8 %v5340
    %v5342 = vlaneseq
    %v5343 = vshrl.u32 %v5342, 7
    %v5344 = vsub.s32 %v5341, %v5343
    %v5345 = vrot.slane %v4939, %v5344
    %v5347 = vunpack.c.l.s4 1983009808
    %v5348 = vunpack.c.0.s8 %v5347
    %v5349 = vlaneseq
    %v5350 = vshrl.u32 %v5349, 7
    %v5351 = vsub.s32 %v5348, %v5350
    %v5352 = vrot.slane %v5338, %v5351
    %v5353 = vcombine.high %v5345, %v5345
    %v5354 = vcombine.high %v5352, %v5352
    %v5355 = vcombine.high %v4940, %v4940
    %v5357 = vunpack.c.l.s4 1983009808
    %v5358 = vunpack.c.0.s8 %v5357
    %v5359 = vlaneseq
    %v5360 = vshrl.u32 %v5359, 7
    %v5361 = vsub.s32 %v5358, %v5360
    %v5362 = vrot.slane %v4940, %v5361
    %v5364 = vunpack.c.l.s4 1983009808
    %v5365 = vunpack.c.0.s8 %v5364
    %v5366 = vlaneseq
    %v5367 = vshrl.u32 %v5366, 7
    %v5368 = vsub.s32 %v5365, %v5367
    %v5369 = vrot.slane %v5355, %v5368
    %v5370 = vcombine.high %v5362, %v5362
    %v5371 = vcombine.high %v5369, %v5369
    %v5373 = vunpack.c.l.s4 1983009808
    %v5374 = vunpack.c.0.s8 %v5373
    %v5375 = vlaneseq
    %v5376 = vshrl.u32 %v5375, 7
    %v5377 = vsub.s32 %v5374, %v5376
    %v5378 = vrot.slane %v4941, %v5377
    %v5399 = vsel %vm1402, %v5378, 0
    %5401 = vmatprep.subr.mxu0 0.0
    %5402 = vmatpush1.msra.mxu0 %v4957
    %5403 = vmatprep.subr.mxu0 0.0
    %5404 = vmatpush1.msra.mxu0 %v4956
    %5405 = vmatprep.subr.mxu0 0.0
    %5406 = vmatpush1.msra.mxu0 %v4955
    %5407 = vmatprep.subr.mxu0 0.0
    %5408 = vmatpush1.msra.mxu0 %v4954
    %5409 = vmatprep.subr.mxu0 0.0
    %5410 = vmatpush1.msra.mxu0 %v4953
    %5411 = vmatprep.subr.mxu0 0.0
    %5412 = vmatpush1.msra.mxu0 %v4952
    %5413 = vmatprep.subr.mxu0 0.0
    %5414 = vmatpush1.msra.mxu0 %v4951
    %5415 = vmatprep.subr.mxu0 0.0
    %5416 = vmatpush1.msra.mxu0 %v4950
    %5417 = vmatprep.subr.mxu0 0.0
    %5418 = vmatpush1.msra.mxu0 %v4949
    %5419 = vmatprep.subr.mxu0 0.0
    %5420 = vmatpush1.msra.mxu0 %v4948
    %5421 = vmatprep.subr.mxu0 0.0
    %5422 = vmatpush1.msra.mxu0 %v4947
    %5423 = vmatprep.subr.mxu0 0.0
    %5424 = vmatpush1.msra.mxu0 %v4946
    %5425 = vmatprep.subr.mxu0 0.0
    %5426 = vmatpush1.msra.mxu0 %v4945
    %5427 = vmatprep.subr.mxu0 0.0
    %5428 = vmatpush1.msra.mxu0 %v4944
    %5429 = vmatprep.subr.mxu0 0.0
    %5430 = vmatpush1.msra.mxu0 %v4943
    %5431 = vmatprep.subr.mxu0 0.0
    %5432 = vmatpush1.msra.mxu0 %v4942
    %5433 = vmatprep.subr.mxu0 0.0
    %5434 = vmatpush2.msra.mxu0 %v4973
    %5435 = vmatprep.subr.mxu0 0.0
    %5436 = vmatpush2.msra.mxu0 %v4972
    %5437 = vmatprep.subr.mxu0 0.0
    %5438 = vmatpush2.msra.mxu0 %v4971
    %5439 = vmatprep.subr.mxu0 0.0
    %5440 = vmatpush2.msra.mxu0 %v4970
    %5441 = vmatprep.subr.mxu0 0.0
    %5442 = vmatpush2.msra.mxu0 %v4969
    %5443 = vmatprep.subr.mxu0 0.0
    %5444 = vmatpush2.msra.mxu0 %v4968
    %5445 = vmatprep.subr.mxu0 0.0
    %5446 = vmatpush2.msra.mxu0 %v4967
    %5447 = vmatprep.subr.mxu0 0.0
    %5448 = vmatpush2.msra.mxu0 %v4966
    %5449 = vmatprep.subr.mxu0 0.0
    %5450 = vmatpush2.msra.mxu0 %v4965
    %5451 = vmatprep.subr.mxu0 0.0
    %5452 = vmatpush2.msra.mxu0 %v4964
    %5453 = vmatprep.subr.mxu0 0.0
    %5454 = vmatpush2.msra.mxu0 %v4963
    %5455 = vmatprep.subr.mxu0 0.0
    %5456 = vmatpush2.msra.mxu0 %v4962
    %5457 = vmatprep.subr.mxu0 0.0
    %5458 = vmatpush2.msra.mxu0 %v4961
    %5459 = vmatprep.subr.mxu0 0.0
    %5460 = vmatpush2.msra.mxu0 %v4960
    %5461 = vmatprep.subr.mxu0 0.0
    %5462 = vmatpush2.msra.mxu0 %v4959
    %5463 = vmatprep.subr.mxu0 0.0
    %5464 = vmatpush2.msra.mxu0 %v4958
    %5465 = vmatprep.mubr.f32.mxu0 %v5302
    %5466 = vmatmul.mubr.f32.gmra.mxu0 %v5294
    %v5467 = vpop.f32.mrf.mxu0
    %v5468 = vadd.f32 %v5279, %v5467
    %v5469 = vpop.f32.mrf.mxu0
    %5470 = vdwg.mxu0
    %5471 = vmatprep.subr.mxu0 0.0
    %5472 = vmatpush1.msra.mxu0 %v4989
    %5473 = vmatprep.subr.mxu0 0.0
    %5474 = vmatpush1.msra.mxu0 %v4988
    %5475 = vmatprep.subr.mxu0 0.0
    %5476 = vmatpush1.msra.mxu0 %v4987
    %5477 = vmatprep.subr.mxu0 0.0
    %5478 = vmatpush1.msra.mxu0 %v4986
    %5479 = vmatprep.subr.mxu0 0.0
    %5480 = vmatpush1.msra.mxu0 %v4985
    %5481 = vmatprep.subr.mxu0 0.0
    %5482 = vmatpush1.msra.mxu0 %v4984
    %5483 = vmatprep.subr.mxu0 0.0
    %5484 = vmatpush1.msra.mxu0 %v4983
    %5485 = vmatprep.subr.mxu0 0.0
    %5486 = vmatpush1.msra.mxu0 %v4982
    %5487 = vmatprep.subr.mxu0 0.0
    %5488 = vmatpush1.msra.mxu0 %v4981
    %5489 = vmatprep.subr.mxu0 0.0
    %5490 = vmatpush1.msra.mxu0 %v4980
    %5491 = vmatprep.subr.mxu0 0.0
    %5492 = vmatpush1.msra.mxu0 %v4979
    %5493 = vmatprep.subr.mxu0 0.0
    %5494 = vmatpush1.msra.mxu0 %v4978
    %5495 = vmatprep.subr.mxu0 0.0
    %5496 = vmatpush1.msra.mxu0 %v4977
    %5497 = vmatprep.subr.mxu0 0.0
    %5498 = vmatpush1.msra.mxu0 %v4976
    %5499 = vmatprep.subr.mxu0 0.0
    %5500 = vmatpush1.msra.mxu0 %v4975
    %5501 = vmatprep.subr.mxu0 0.0
    %5502 = vmatpush1.msra.mxu0 %v4974
    %5503 = vmatprep.subr.mxu0 0.0
    %5504 = vmatpush2.msra.mxu0 %v5005
    %5505 = vmatprep.subr.mxu0 0.0
    %5506 = vmatpush2.msra.mxu0 %v5004
    %5507 = vmatprep.subr.mxu0 0.0
    %5508 = vmatpush2.msra.mxu0 %v5003
    %5509 = vmatprep.subr.mxu0 0.0
    %5510 = vmatpush2.msra.mxu0 %v5002
    %5511 = vmatprep.subr.mxu0 0.0
    %5512 = vmatpush2.msra.mxu0 %v5001
    %5513 = vmatprep.subr.mxu0 0.0
    %5514 = vmatpush2.msra.mxu0 %v5000
    %5515 = vmatprep.subr.mxu0 0.0
    %5516 = vmatpush2.msra.mxu0 %v4999
    %5517 = vmatprep.subr.mxu0 0.0
    %5518 = vmatpush2.msra.mxu0 %v4998
    %5519 = vmatprep.subr.mxu0 0.0
    %5520 = vmatpush2.msra.mxu0 %v4997
    %5521 = vmatprep.subr.mxu0 0.0
    %5522 = vmatpush2.msra.mxu0 %v4996
    %5523 = vmatprep.subr.mxu0 0.0
    %5524 = vmatpush2.msra.mxu0 %v4995
    %5525 = vmatprep.subr.mxu0 0.0
    %5526 = vmatpush2.msra.mxu0 %v4994
    %5527 = vmatprep.subr.mxu0 0.0
    %5528 = vmatpush2.msra.mxu0 %v4993
    %5529 = vmatprep.subr.mxu0 0.0
    %5530 = vmatpush2.msra.mxu0 %v4992
    %5531 = vmatprep.subr.mxu0 0.0
    %5532 = vmatpush2.msra.mxu0 %v4991
    %5533 = vmatprep.subr.mxu0 0.0
    %5534 = vmatpush2.msra.mxu0 %v4990
    %5535 = vmatprep.mubr.f32.mxu0 %v5303
    %5536 = vmatmul.mubr.f32.gmra.mxu0 %v5301
    %v5537 = vpop.f32.mrf.mxu0
    %v5538 = vadd.f32 %v5468, %v5537
    %v5539 = vpop.f32.mrf.mxu0
    %5540 = vdwg.mxu0
    %5541 = vmatprep.subr.mxu0 0.0
    %5542 = vmatpush1.msra.mxu0 %v5021
    %5543 = vmatprep.subr.mxu0 0.0
    %5544 = vmatpush1.msra.mxu0 %v5020
    %5545 = vmatprep.subr.mxu0 0.0
    %5546 = vmatpush1.msra.mxu0 %v5019
    %5547 = vmatprep.subr.mxu0 0.0
    %5548 = vmatpush1.msra.mxu0 %v5018
    %5549 = vmatprep.subr.mxu0 0.0
    %5550 = vmatpush1.msra.mxu0 %v5017
    %5551 = vmatprep.subr.mxu0 0.0
    %5552 = vmatpush1.msra.mxu0 %v5016
    %5553 = vmatprep.subr.mxu0 0.0
    %5554 = vmatpush1.msra.mxu0 %v5015
    %5555 = vmatprep.subr.mxu0 0.0
    %5556 = vmatpush1.msra.mxu0 %v5014
    %5557 = vmatprep.subr.mxu0 0.0
    %5558 = vmatpush1.msra.mxu0 %v5013
    %5559 = vmatprep.subr.mxu0 0.0
    %5560 = vmatpush1.msra.mxu0 %v5012
    %5561 = vmatprep.subr.mxu0 0.0
    %5562 = vmatpush1.msra.mxu0 %v5011
    %5563 = vmatprep.subr.mxu0 0.0
    %5564 = vmatpush1.msra.mxu0 %v5010
    %5565 = vmatprep.subr.mxu0 0.0
    %5566 = vmatpush1.msra.mxu0 %v5009
    %5567 = vmatprep.subr.mxu0 0.0
    %5568 = vmatpush1.msra.mxu0 %v5008
    %5569 = vmatprep.subr.mxu0 0.0
    %5570 = vmatpush1.msra.mxu0 %v5007
    %5571 = vmatprep.subr.mxu0 0.0
    %5572 = vmatpush1.msra.mxu0 %v5006
    %5573 = vmatprep.subr.mxu0 0.0
    %5574 = vmatpush2.msra.mxu0 %v5037
    %5575 = vmatprep.subr.mxu0 0.0
    %5576 = vmatpush2.msra.mxu0 %v5036
    %5577 = vmatprep.subr.mxu0 0.0
    %5578 = vmatpush2.msra.mxu0 %v5035
    %5579 = vmatprep.subr.mxu0 0.0
    %5580 = vmatpush2.msra.mxu0 %v5034
    %5581 = vmatprep.subr.mxu0 0.0
    %5582 = vmatpush2.msra.mxu0 %v5033
    %5583 = vmatprep.subr.mxu0 0.0
    %5584 = vmatpush2.msra.mxu0 %v5032
    %5585 = vmatprep.subr.mxu0 0.0
    %5586 = vmatpush2.msra.mxu0 %v5031
    %5587 = vmatprep.subr.mxu0 0.0
    %5588 = vmatpush2.msra.mxu0 %v5030
    %5589 = vmatprep.subr.mxu0 0.0
    %5590 = vmatpush2.msra.mxu0 %v5029
    %5591 = vmatprep.subr.mxu0 0.0
    %5592 = vmatpush2.msra.mxu0 %v5028
    %5593 = vmatprep.subr.mxu0 0.0
    %5594 = vmatpush2.msra.mxu0 %v5027
    %5595 = vmatprep.subr.mxu0 0.0
    %5596 = vmatpush2.msra.mxu0 %v5026
    %5597 = vmatprep.subr.mxu0 0.0
    %5598 = vmatpush2.msra.mxu0 %v5025
    %5599 = vmatprep.subr.mxu0 0.0
    %5600 = vmatpush2.msra.mxu0 %v5024
    %5601 = vmatprep.subr.mxu0 0.0
    %5602 = vmatpush2.msra.mxu0 %v5023
    %5603 = vmatprep.subr.mxu0 0.0
    %5604 = vmatpush2.msra.mxu0 %v5022
    %5605 = vmatprep.mubr.f32.mxu0 %v5319
    %5606 = vmatmul.mubr.f32.gmra.mxu0 %v5311
    %v5607 = vpop.f32.mrf.mxu0
    %v5608 = vadd.f32 %v5538, %v5607
    %v5609 = vpop.f32.mrf.mxu0
    %5610 = vdwg.mxu0
    %5611 = vmatprep.subr.mxu0 0.0
    %5612 = vmatpush1.msra.mxu0 %v5053
    %5613 = vmatprep.subr.mxu0 0.0
    %5614 = vmatpush1.msra.mxu0 %v5052
    %5615 = vmatprep.subr.mxu0 0.0
    %5616 = vmatpush1.msra.mxu0 %v5051
    %5617 = vmatprep.subr.mxu0 0.0
    %5618 = vmatpush1.msra.mxu0 %v5050
    %5619 = vmatprep.subr.mxu0 0.0
    %5620 = vmatpush1.msra.mxu0 %v5049
    %5621 = vmatprep.subr.mxu0 0.0
    %5622 = vmatpush1.msra.mxu0 %v5048
    %5623 = vmatprep.subr.mxu0 0.0
    %5624 = vmatpush1.msra.mxu0 %v5047
    %5625 = vmatprep.subr.mxu0 0.0
    %5626 = vmatpush1.msra.mxu0 %v5046
    %5627 = vmatprep.subr.mxu0 0.0
    %5628 = vmatpush1.msra.mxu0 %v5045
    %5629 = vmatprep.subr.mxu0 0.0
    %5630 = vmatpush1.msra.mxu0 %v5044
    %5631 = vmatprep.subr.mxu0 0.0
    %5632 = vmatpush1.msra.mxu0 %v5043
    %5633 = vmatprep.subr.mxu0 0.0
    %5634 = vmatpush1.msra.mxu0 %v5042
    %5635 = vmatprep.subr.mxu0 0.0
    %5636 = vmatpush1.msra.mxu0 %v5041
    %5637 = vmatprep.subr.mxu0 0.0
    %5638 = vmatpush1.msra.mxu0 %v5040
    %5639 = vmatprep.subr.mxu0 0.0
    %5640 = vmatpush1.msra.mxu0 %v5039
    %5641 = vmatprep.subr.mxu0 0.0
    %5642 = vmatpush1.msra.mxu0 %v5038
    %5643 = vmatprep.subr.mxu0 0.0
    %5644 = vmatpush2.msra.mxu0 %v5069
    %5645 = vmatprep.subr.mxu0 0.0
    %5646 = vmatpush2.msra.mxu0 %v5068
    %5647 = vmatprep.subr.mxu0 0.0
    %5648 = vmatpush2.msra.mxu0 %v5067
    %5649 = vmatprep.subr.mxu0 0.0
    %5650 = vmatpush2.msra.mxu0 %v5066
    %5651 = vmatprep.subr.mxu0 0.0
    %5652 = vmatpush2.msra.mxu0 %v5065
    %5653 = vmatprep.subr.mxu0 0.0
    %5654 = vmatpush2.msra.mxu0 %v5064
    %5655 = vmatprep.subr.mxu0 0.0
    %5656 = vmatpush2.msra.mxu0 %v5063
    %5657 = vmatprep.subr.mxu0 0.0
    %5658 = vmatpush2.msra.mxu0 %v5062
    %5659 = vmatprep.subr.mxu0 0.0
    %5660 = vmatpush2.msra.mxu0 %v5061
    %5661 = vmatprep.subr.mxu0 0.0
    %5662 = vmatpush2.msra.mxu0 %v5060
    %5663 = vmatprep.subr.mxu0 0.0
    %5664 = vmatpush2.msra.mxu0 %v5059
    %5665 = vmatprep.subr.mxu0 0.0
    %5666 = vmatpush2.msra.mxu0 %v5058
    %5667 = vmatprep.subr.mxu0 0.0
    %5668 = vmatpush2.msra.mxu0 %v5057
    %5669 = vmatprep.subr.mxu0 0.0
    %5670 = vmatpush2.msra.mxu0 %v5056
    %5671 = vmatprep.subr.mxu0 0.0
    %5672 = vmatpush2.msra.mxu0 %v5055
    %5673 = vmatprep.subr.mxu0 0.0
    %5674 = vmatpush2.msra.mxu0 %v5054
    %5675 = vmatprep.mubr.f32.mxu0 %v5320
    %5676 = vmatmul.mubr.f32.gmra.mxu0 %v5318
    %v5677 = vpop.f32.mrf.mxu0
    %v5678 = vadd.f32 %v5608, %v5677
    %v5679 = vpop.f32.mrf.mxu0
    %5680 = vdwg.mxu0
    %5681 = vmatprep.subr.mxu0 0.0
    %5682 = vmatpush1.msra.mxu0 %v5085
    %5683 = vmatprep.subr.mxu0 0.0
    %5684 = vmatpush1.msra.mxu0 %v5084
    %5685 = vmatprep.subr.mxu0 0.0
    %5686 = vmatpush1.msra.mxu0 %v5083
    %5687 = vmatprep.subr.mxu0 0.0
    %5688 = vmatpush1.msra.mxu0 %v5082
    %5689 = vmatprep.subr.mxu0 0.0
    %5690 = vmatpush1.msra.mxu0 %v5081
    %5691 = vmatprep.subr.mxu0 0.0
    %5692 = vmatpush1.msra.mxu0 %v5080
    %5693 = vmatprep.subr.mxu0 0.0
    %5694 = vmatpush1.msra.mxu0 %v5079
    %5695 = vmatprep.subr.mxu0 0.0
    %5696 = vmatpush1.msra.mxu0 %v5078
    %5697 = vmatprep.subr.mxu0 0.0
    %5698 = vmatpush1.msra.mxu0 %v5077
    %5699 = vmatprep.subr.mxu0 0.0
    %5700 = vmatpush1.msra.mxu0 %v5076
    %5701 = vmatprep.subr.mxu0 0.0
    %5702 = vmatpush1.msra.mxu0 %v5075
    %5703 = vmatprep.subr.mxu0 0.0
    %5704 = vmatpush1.msra.mxu0 %v5074
    %5705 = vmatprep.subr.mxu0 0.0
    %5706 = vmatpush1.msra.mxu0 %v5073
    %5707 = vmatprep.subr.mxu0 0.0
    %5708 = vmatpush1.msra.mxu0 %v5072
    %5709 = vmatprep.subr.mxu0 0.0
    %5710 = vmatpush1.msra.mxu0 %v5071
    %5711 = vmatprep.subr.mxu0 0.0
    %5712 = vmatpush1.msra.mxu0 %v5070
    %5713 = vmatprep.subr.mxu0 0.0
    %5714 = vmatpush2.msra.mxu0 %v5101
    %5715 = vmatprep.subr.mxu0 0.0
    %5716 = vmatpush2.msra.mxu0 %v5100
    %5717 = vmatprep.subr.mxu0 0.0
    %5718 = vmatpush2.msra.mxu0 %v5099
    %5719 = vmatprep.subr.mxu0 0.0
    %5720 = vmatpush2.msra.mxu0 %v5098
    %5721 = vmatprep.subr.mxu0 0.0
    %5722 = vmatpush2.msra.mxu0 %v5097
    %5723 = vmatprep.subr.mxu0 0.0
    %5724 = vmatpush2.msra.mxu0 %v5096
    %5725 = vmatprep.subr.mxu0 0.0
    %5726 = vmatpush2.msra.mxu0 %v5095
    %5727 = vmatprep.subr.mxu0 0.0
    %5728 = vmatpush2.msra.mxu0 %v5094
    %5729 = vmatprep.subr.mxu0 0.0
    %5730 = vmatpush2.msra.mxu0 %v5093
    %5731 = vmatprep.subr.mxu0 0.0
    %5732 = vmatpush2.msra.mxu0 %v5092
    %5733 = vmatprep.subr.mxu0 0.0
    %5734 = vmatpush2.msra.mxu0 %v5091
    %5735 = vmatprep.subr.mxu0 0.0
    %5736 = vmatpush2.msra.mxu0 %v5090
    %5737 = vmatprep.subr.mxu0 0.0
    %5738 = vmatpush2.msra.mxu0 %v5089
    %5739 = vmatprep.subr.mxu0 0.0
    %5740 = vmatpush2.msra.mxu0 %v5088
    %5741 = vmatprep.subr.mxu0 0.0
    %5742 = vmatpush2.msra.mxu0 %v5087
    %5743 = vmatprep.subr.mxu0 0.0
    %5744 = vmatpush2.msra.mxu0 %v5086
    %5745 = vmatprep.mubr.f32.mxu0 %v5336
    %5746 = vmatmul.mubr.f32.gmra.mxu0 %v5328
    %v5747 = vpop.f32.mrf.mxu0
    %v5748 = vadd.f32 %v5678, %v5747
    %v5749 = vpop.f32.mrf.mxu0
    %5750 = vdwg.mxu0
    %5751 = vmatprep.subr.mxu0 0.0
    %5752 = vmatpush1.msra.mxu0 %v5117
    %5753 = vmatprep.subr.mxu0 0.0
    %5754 = vmatpush1.msra.mxu0 %v5116
    %5755 = vmatprep.subr.mxu0 0.0
    %5756 = vmatpush1.msra.mxu0 %v5115
    %5757 = vmatprep.subr.mxu0 0.0
    %5758 = vmatpush1.msra.mxu0 %v5114
    %5759 = vmatprep.subr.mxu0 0.0
    %5760 = vmatpush1.msra.mxu0 %v5113
    %5761 = vmatprep.subr.mxu0 0.0
    %5762 = vmatpush1.msra.mxu0 %v5112
    %5763 = vmatprep.subr.mxu0 0.0
    %5764 = vmatpush1.msra.mxu0 %v5111
    %5765 = vmatprep.subr.mxu0 0.0
    %5766 = vmatpush1.msra.mxu0 %v5110
    %5767 = vmatprep.subr.mxu0 0.0
    %5768 = vmatpush1.msra.mxu0 %v5109
    %5769 = vmatprep.subr.mxu0 0.0
    %5770 = vmatpush1.msra.mxu0 %v5108
    %5771 = vmatprep.subr.mxu0 0.0
    %5772 = vmatpush1.msra.mxu0 %v5107
    %5773 = vmatprep.subr.mxu0 0.0
    %5774 = vmatpush1.msra.mxu0 %v5106
    %5775 = vmatprep.subr.mxu0 0.0
    %5776 = vmatpush1.msra.mxu0 %v5105
    %5777 = vmatprep.subr.mxu0 0.0
    %5778 = vmatpush1.msra.mxu0 %v5104
    %5779 = vmatprep.subr.mxu0 0.0
    %5780 = vmatpush1.msra.mxu0 %v5103
    %5781 = vmatprep.subr.mxu0 0.0
    %5782 = vmatpush1.msra.mxu0 %v5102
    %5783 = vmatprep.subr.mxu0 0.0
    %5784 = vmatpush2.msra.mxu0 %v5133
    %5785 = vmatprep.subr.mxu0 0.0
    %5786 = vmatpush2.msra.mxu0 %v5132
    %5787 = vmatprep.subr.mxu0 0.0
    %5788 = vmatpush2.msra.mxu0 %v5131
    %5789 = vmatprep.subr.mxu0 0.0
    %5790 = vmatpush2.msra.mxu0 %v5130
    %5791 = vmatprep.subr.mxu0 0.0
    %5792 = vmatpush2.msra.mxu0 %v5129
    %5793 = vmatprep.subr.mxu0 0.0
    %5794 = vmatpush2.msra.mxu0 %v5128
    %5795 = vmatprep.subr.mxu0 0.0
    %5796 = vmatpush2.msra.mxu0 %v5127
    %5797 = vmatprep.subr.mxu0 0.0
    %5798 = vmatpush2.msra.mxu0 %v5126
    %5799 = vmatprep.subr.mxu0 0.0
    %5800 = vmatpush2.msra.mxu0 %v5125
    %5801 = vmatprep.subr.mxu0 0.0
    %5802 = vmatpush2.msra.mxu0 %v5124
    %5803 = vmatprep.subr.mxu0 0.0
    %5804 = vmatpush2.msra.mxu0 %v5123
    %5805 = vmatprep.subr.mxu0 0.0
    %5806 = vmatpush2.msra.mxu0 %v5122
    %5807 = vmatprep.subr.mxu0 0.0
    %5808 = vmatpush2.msra.mxu0 %v5121
    %5809 = vmatprep.subr.mxu0 0.0
    %5810 = vmatpush2.msra.mxu0 %v5120
    %5811 = vmatprep.subr.mxu0 0.0
    %5812 = vmatpush2.msra.mxu0 %v5119
    %5813 = vmatprep.subr.mxu0 0.0
    %5814 = vmatpush2.msra.mxu0 %v5118
    %5815 = vmatprep.mubr.f32.mxu0 %v5337
    %5816 = vmatmul.mubr.f32.gmra.mxu0 %v5335
    %v5817 = vpop.f32.mrf.mxu0
    %v5818 = vadd.f32 %v5748, %v5817
    %v5819 = vpop.f32.mrf.mxu0
    %5820 = vdwg.mxu0
    %5821 = vmatprep.subr.mxu0 0.0
    %5822 = vmatpush1.msra.mxu0 %v5149
    %5823 = vmatprep.subr.mxu0 0.0
    %5824 = vmatpush1.msra.mxu0 %v5148
    %5825 = vmatprep.subr.mxu0 0.0
    %5826 = vmatpush1.msra.mxu0 %v5147
    %5827 = vmatprep.subr.mxu0 0.0
    %5828 = vmatpush1.msra.mxu0 %v5146
    %5829 = vmatprep.subr.mxu0 0.0
    %5830 = vmatpush1.msra.mxu0 %v5145
    %5831 = vmatprep.subr.mxu0 0.0
    %5832 = vmatpush1.msra.mxu0 %v5144
    %5833 = vmatprep.subr.mxu0 0.0
    %5834 = vmatpush1.msra.mxu0 %v5143
    %5835 = vmatprep.subr.mxu0 0.0
    %5836 = vmatpush1.msra.mxu0 %v5142
    %5837 = vmatprep.subr.mxu0 0.0
    %5838 = vmatpush1.msra.mxu0 %v5141
    %5839 = vmatprep.subr.mxu0 0.0
    %5840 = vmatpush1.msra.mxu0 %v5140
    %5841 = vmatprep.subr.mxu0 0.0
    %5842 = vmatpush1.msra.mxu0 %v5139
    %5843 = vmatprep.subr.mxu0 0.0
    %5844 = vmatpush1.msra.mxu0 %v5138
    %5845 = vmatprep.subr.mxu0 0.0
    %5846 = vmatpush1.msra.mxu0 %v5137
    %5847 = vmatprep.subr.mxu0 0.0
    %5848 = vmatpush1.msra.mxu0 %v5136
    %5849 = vmatprep.subr.mxu0 0.0
    %5850 = vmatpush1.msra.mxu0 %v5135
    %5851 = vmatprep.subr.mxu0 0.0
    %5852 = vmatpush1.msra.mxu0 %v5134
    %5853 = vmatprep.subr.mxu0 0.0
    %5854 = vmatpush2.msra.mxu0 %v5165
    %5855 = vmatprep.subr.mxu0 0.0
    %5856 = vmatpush2.msra.mxu0 %v5164
    %5857 = vmatprep.subr.mxu0 0.0
    %5858 = vmatpush2.msra.mxu0 %v5163
    %5859 = vmatprep.subr.mxu0 0.0
    %5860 = vmatpush2.msra.mxu0 %v5162
    %5861 = vmatprep.subr.mxu0 0.0
    %5862 = vmatpush2.msra.mxu0 %v5161
    %5863 = vmatprep.subr.mxu0 0.0
    %5864 = vmatpush2.msra.mxu0 %v5160
    %5865 = vmatprep.subr.mxu0 0.0
    %5866 = vmatpush2.msra.mxu0 %v5159
    %5867 = vmatprep.subr.mxu0 0.0
    %5868 = vmatpush2.msra.mxu0 %v5158
    %5869 = vmatprep.subr.mxu0 0.0
    %5870 = vmatpush2.msra.mxu0 %v5157
    %5871 = vmatprep.subr.mxu0 0.0
    %5872 = vmatpush2.msra.mxu0 %v5156
    %5873 = vmatprep.subr.mxu0 0.0
    %5874 = vmatpush2.msra.mxu0 %v5155
    %5875 = vmatprep.subr.mxu0 0.0
    %5876 = vmatpush2.msra.mxu0 %v5154
    %5877 = vmatprep.subr.mxu0 0.0
    %5878 = vmatpush2.msra.mxu0 %v5153
    %5879 = vmatprep.subr.mxu0 0.0
    %5880 = vmatpush2.msra.mxu0 %v5152
    %5881 = vmatprep.subr.mxu0 0.0
    %5882 = vmatpush2.msra.mxu0 %v5151
    %5883 = vmatprep.subr.mxu0 0.0
    %5884 = vmatpush2.msra.mxu0 %v5150
    %5885 = vmatprep.mubr.f32.mxu0 %v5353
    %5886 = vmatmul.mubr.f32.gmra.mxu0 %v5345
    %v5887 = vpop.f32.mrf.mxu0
    %v5888 = vadd.f32 %v5818, %v5887
    %v5889 = vpop.f32.mrf.mxu0
    %5890 = vdwg.mxu0
    %5891 = vmatprep.subr.mxu0 0.0
    %5892 = vmatpush1.msra.mxu0 %v5181
    %5893 = vmatprep.subr.mxu0 0.0
    %5894 = vmatpush1.msra.mxu0 %v5180
    %5895 = vmatprep.subr.mxu0 0.0
    %5896 = vmatpush1.msra.mxu0 %v5179
    %5897 = vmatprep.subr.mxu0 0.0
    %5898 = vmatpush1.msra.mxu0 %v5178
    %5899 = vmatprep.subr.mxu0 0.0
    %5900 = vmatpush1.msra.mxu0 %v5177
    %5901 = vmatprep.subr.mxu0 0.0
    %5902 = vmatpush1.msra.mxu0 %v5176
    %5903 = vmatprep.subr.mxu0 0.0
    %5904 = vmatpush1.msra.mxu0 %v5175
    %5905 = vmatprep.subr.mxu0 0.0
    %5906 = vmatpush1.msra.mxu0 %v5174
    %5907 = vmatprep.subr.mxu0 0.0
    %5908 = vmatpush1.msra.mxu0 %v5173
    %5909 = vmatprep.subr.mxu0 0.0
    %5910 = vmatpush1.msra.mxu0 %v5172
    %5911 = vmatprep.subr.mxu0 0.0
    %5912 = vmatpush1.msra.mxu0 %v5171
    %5913 = vmatprep.subr.mxu0 0.0
    %5914 = vmatpush1.msra.mxu0 %v5170
    %5915 = vmatprep.subr.mxu0 0.0
    %5916 = vmatpush1.msra.mxu0 %v5169
    %5917 = vmatprep.subr.mxu0 0.0
    %5918 = vmatpush1.msra.mxu0 %v5168
    %5919 = vmatprep.subr.mxu0 0.0
    %5920 = vmatpush1.msra.mxu0 %v5167
    %5921 = vmatprep.subr.mxu0 0.0
    %5922 = vmatpush1.msra.mxu0 %v5166
    %5923 = vmatprep.subr.mxu0 0.0
    %5924 = vmatpush2.msra.mxu0 %v5197
    %5925 = vmatprep.subr.mxu0 0.0
    %5926 = vmatpush2.msra.mxu0 %v5196
    %5927 = vmatprep.subr.mxu0 0.0
    %5928 = vmatpush2.msra.mxu0 %v5195
    %5929 = vmatprep.subr.mxu0 0.0
    %5930 = vmatpush2.msra.mxu0 %v5194
    %5931 = vmatprep.subr.mxu0 0.0
    %5932 = vmatpush2.msra.mxu0 %v5193
    %5933 = vmatprep.subr.mxu0 0.0
    %5934 = vmatpush2.msra.mxu0 %v5192
    %5935 = vmatprep.subr.mxu0 0.0
    %5936 = vmatpush2.msra.mxu0 %v5191
    %5937 = vmatprep.subr.mxu0 0.0
    %5938 = vmatpush2.msra.mxu0 %v5190
    %5939 = vmatprep.subr.mxu0 0.0
    %5940 = vmatpush2.msra.mxu0 %v5189
    %5941 = vmatprep.subr.mxu0 0.0
    %5942 = vmatpush2.msra.mxu0 %v5188
    %5943 = vmatprep.subr.mxu0 0.0
    %5944 = vmatpush2.msra.mxu0 %v5187
    %5945 = vmatprep.subr.mxu0 0.0
    %5946 = vmatpush2.msra.mxu0 %v5186
    %5947 = vmatprep.subr.mxu0 0.0
    %5948 = vmatpush2.msra.mxu0 %v5185
    %5949 = vmatprep.subr.mxu0 0.0
    %5950 = vmatpush2.msra.mxu0 %v5184
    %5951 = vmatprep.subr.mxu0 0.0
    %5952 = vmatpush2.msra.mxu0 %v5183
    %5953 = vmatprep.subr.mxu0 0.0
    %5954 = vmatpush2.msra.mxu0 %v5182
    %5955 = vmatprep.mubr.f32.mxu0 %v5354
    %5956 = vmatmul.mubr.f32.gmra.mxu0 %v5352
    %v5957 = vpop.f32.mrf.mxu0
    %v5958 = vadd.f32 %v5888, %v5957
    %v5959 = vpop.f32.mrf.mxu0
    %5960 = vdwg.mxu0
    %5961 = vmatprep.subr.mxu0 0.0
    %5962 = vmatpush1.msra.mxu0 %v5213
    %5963 = vmatprep.subr.mxu0 0.0
    %5964 = vmatpush1.msra.mxu0 %v5212
    %5965 = vmatprep.subr.mxu0 0.0
    %5966 = vmatpush1.msra.mxu0 %v5211
    %5967 = vmatprep.subr.mxu0 0.0
    %5968 = vmatpush1.msra.mxu0 %v5210
    %5969 = vmatprep.subr.mxu0 0.0
    %5970 = vmatpush1.msra.mxu0 %v5209
    %5971 = vmatprep.subr.mxu0 0.0
    %5972 = vmatpush1.msra.mxu0 %v5208
    %5973 = vmatprep.subr.mxu0 0.0
    %5974 = vmatpush1.msra.mxu0 %v5207
    %5975 = vmatprep.subr.mxu0 0.0
    %5976 = vmatpush1.msra.mxu0 %v5206
    %5977 = vmatprep.subr.mxu0 0.0
    %5978 = vmatpush1.msra.mxu0 %v5205
    %5979 = vmatprep.subr.mxu0 0.0
    %5980 = vmatpush1.msra.mxu0 %v5204
    %5981 = vmatprep.subr.mxu0 0.0
    %5982 = vmatpush1.msra.mxu0 %v5203
    %5983 = vmatprep.subr.mxu0 0.0
    %5984 = vmatpush1.msra.mxu0 %v5202
    %5985 = vmatprep.subr.mxu0 0.0
    %5986 = vmatpush1.msra.mxu0 %v5201
    %5987 = vmatprep.subr.mxu0 0.0
    %5988 = vmatpush1.msra.mxu0 %v5200
    %5989 = vmatprep.subr.mxu0 0.0
    %5990 = vmatpush1.msra.mxu0 %v5199
    %5991 = vmatprep.subr.mxu0 0.0
    %5992 = vmatpush1.msra.mxu0 %v5198
    %5993 = vmatprep.subr.mxu0 0.0
    %5994 = vmatpush2.msra.mxu0 %v5229
    %5995 = vmatprep.subr.mxu0 0.0
    %5996 = vmatpush2.msra.mxu0 %v5228
    %5997 = vmatprep.subr.mxu0 0.0
    %5998 = vmatpush2.msra.mxu0 %v5227
    %5999 = vmatprep.subr.mxu0 0.0
    %6000 = vmatpush2.msra.mxu0 %v5226
    %6001 = vmatprep.subr.mxu0 0.0
    %6002 = vmatpush2.msra.mxu0 %v5225
    %6003 = vmatprep.subr.mxu0 0.0
    %6004 = vmatpush2.msra.mxu0 %v5224
    %6005 = vmatprep.subr.mxu0 0.0
    %6006 = vmatpush2.msra.mxu0 %v5223
    %6007 = vmatprep.subr.mxu0 0.0
    %6008 = vmatpush2.msra.mxu0 %v5222
    %6009 = vmatprep.subr.mxu0 0.0
    %6010 = vmatpush2.msra.mxu0 %v5221
    %6011 = vmatprep.subr.mxu0 0.0
    %6012 = vmatpush2.msra.mxu0 %v5220
    %6013 = vmatprep.subr.mxu0 0.0
    %6014 = vmatpush2.msra.mxu0 %v5219
    %6015 = vmatprep.subr.mxu0 0.0
    %6016 = vmatpush2.msra.mxu0 %v5218
    %6017 = vmatprep.subr.mxu0 0.0
    %6018 = vmatpush2.msra.mxu0 %v5217
    %6019 = vmatprep.subr.mxu0 0.0
    %6020 = vmatpush2.msra.mxu0 %v5216
    %6021 = vmatprep.subr.mxu0 0.0
    %6022 = vmatpush2.msra.mxu0 %v5215
    %6023 = vmatprep.subr.mxu0 0.0
    %6024 = vmatpush2.msra.mxu0 %v5214
    %6025 = vmatprep.mubr.f32.mxu0 %v5370
    %6026 = vmatmul.mubr.f32.gmra.mxu0 %v5362
    %v6027 = vpop.f32.mrf.mxu0
    %v6028 = vadd.f32 %v5958, %v6027
    %v6029 = vpop.f32.mrf.mxu0
    %6030 = vdwg.mxu0
    %6031 = vmatprep.subr.mxu0 0.0
    %6032 = vmatpush1.msra.mxu0 %v5245
    %6033 = vmatprep.subr.mxu0 0.0
    %6034 = vmatpush1.msra.mxu0 %v5244
    %6035 = vmatprep.subr.mxu0 0.0
    %6036 = vmatpush1.msra.mxu0 %v5243
    %6037 = vmatprep.subr.mxu0 0.0
    %6038 = vmatpush1.msra.mxu0 %v5242
    %6039 = vmatprep.subr.mxu0 0.0
    %6040 = vmatpush1.msra.mxu0 %v5241
    %6041 = vmatprep.subr.mxu0 0.0
    %6042 = vmatpush1.msra.mxu0 %v5240
    %6043 = vmatprep.subr.mxu0 0.0
    %6044 = vmatpush1.msra.mxu0 %v5239
    %6045 = vmatprep.subr.mxu0 0.0
    %6046 = vmatpush1.msra.mxu0 %v5238
    %6047 = vmatprep.subr.mxu0 0.0
    %6048 = vmatpush1.msra.mxu0 %v5237
    %6049 = vmatprep.subr.mxu0 0.0
    %6050 = vmatpush1.msra.mxu0 %v5236
    %6051 = vmatprep.subr.mxu0 0.0
    %6052 = vmatpush1.msra.mxu0 %v5235
    %6053 = vmatprep.subr.mxu0 0.0
    %6054 = vmatpush1.msra.mxu0 %v5234
    %6055 = vmatprep.subr.mxu0 0.0
    %6056 = vmatpush1.msra.mxu0 %v5233
    %6057 = vmatprep.subr.mxu0 0.0
    %6058 = vmatpush1.msra.mxu0 %v5232
    %6059 = vmatprep.subr.mxu0 0.0
    %6060 = vmatpush1.msra.mxu0 %v5231
    %6061 = vmatprep.subr.mxu0 0.0
    %6062 = vmatpush1.msra.mxu0 %v5230
    %6063 = vmatprep.subr.mxu0 0.0
    %6064 = vmatpush2.msra.mxu0 %v5261
    %6065 = vmatprep.subr.mxu0 0.0
    %6066 = vmatpush2.msra.mxu0 %v5260
    %6067 = vmatprep.subr.mxu0 0.0
    %6068 = vmatpush2.msra.mxu0 %v5259
    %6069 = vmatprep.subr.mxu0 0.0
    %6070 = vmatpush2.msra.mxu0 %v5258
    %6071 = vmatprep.subr.mxu0 0.0
    %6072 = vmatpush2.msra.mxu0 %v5257
    %6073 = vmatprep.subr.mxu0 0.0
    %6074 = vmatpush2.msra.mxu0 %v5256
    %6075 = vmatprep.subr.mxu0 0.0
    %6076 = vmatpush2.msra.mxu0 %v5255
    %6077 = vmatprep.subr.mxu0 0.0
    %6078 = vmatpush2.msra.mxu0 %v5254
    %6079 = vmatprep.subr.mxu0 0.0
    %6080 = vmatpush2.msra.mxu0 %v5253
    %6081 = vmatprep.subr.mxu0 0.0
    %6082 = vmatpush2.msra.mxu0 %v5252
    %6083 = vmatprep.subr.mxu0 0.0
    %6084 = vmatpush2.msra.mxu0 %v5251
    %6085 = vmatprep.subr.mxu0 0.0
    %6086 = vmatpush2.msra.mxu0 %v5250
    %6087 = vmatprep.subr.mxu0 0.0
    %6088 = vmatpush2.msra.mxu0 %v5249
    %6089 = vmatprep.subr.mxu0 0.0
    %6090 = vmatpush2.msra.mxu0 %v5248
    %6091 = vmatprep.subr.mxu0 0.0
    %6092 = vmatpush2.msra.mxu0 %v5247
    %6093 = vmatprep.subr.mxu0 0.0
    %6094 = vmatpush2.msra.mxu0 %v5246
    %6095 = vmatprep.mubr.f32.mxu0 %v5371
    %6096 = vmatmul.mubr.f32.gmra.mxu0 %v5369
    %v6097 = vpop.f32.mrf.mxu0
    %v6098 = vadd.f32 %v6028, %v6097
    %v6099 = vpop.f32.mrf.mxu0
    %6100 = vdwg.mxu0
    %6101 = vmatprep.subr.mxu0 0.0
    %6102 = vmatpush1.msra.mxu0 0.0
    %6103 = vmatprep.subr.mxu0 0.0
    %6104 = vmatpush1.msra.mxu0 0.0
    %6105 = vmatprep.subr.mxu0 0.0
    %6106 = vmatpush1.msra.mxu0 0.0
    %6107 = vmatprep.subr.mxu0 0.0
    %6108 = vmatpush1.msra.mxu0 0.0
    %6109 = vmatprep.subr.mxu0 0.0
    %6110 = vmatpush1.msra.mxu0 %v5273
    %6111 = vmatprep.subr.mxu0 0.0
    %6112 = vmatpush1.msra.mxu0 %v5272
    %6113 = vmatprep.subr.mxu0 0.0
    %6114 = vmatpush1.msra.mxu0 %v5271
    %6115 = vmatprep.subr.mxu0 0.0
    %6116 = vmatpush1.msra.mxu0 %v5270
    %6117 = vmatprep.subr.mxu0 0.0
    %6118 = vmatpush1.msra.mxu0 %v5269
    %6119 = vmatprep.subr.mxu0 0.0
    %6120 = vmatpush1.msra.mxu0 %v5268
    %6121 = vmatprep.subr.mxu0 0.0
    %6122 = vmatpush1.msra.mxu0 %v5267
    %6123 = vmatprep.subr.mxu0 0.0
    %6124 = vmatpush1.msra.mxu0 %v5266
    %6125 = vmatprep.subr.mxu0 0.0
    %6126 = vmatpush1.msra.mxu0 %v5265
    %6127 = vmatprep.subr.mxu0 0.0
    %6128 = vmatpush1.msra.mxu0 %v5264
    %6129 = vmatprep.subr.mxu0 0.0
    %6130 = vmatpush1.msra.mxu0 %v5263
    %6131 = vmatprep.subr.mxu0 0.0
    %6132 = vmatpush1.msra.mxu0 %v5262
    %6133 = vmatprep.subr.mxu0 0.0
    %6134 = vmatpush2.msra.mxu0 0.0
    %6135 = vmatprep.subr.mxu0 0.0
    %6136 = vmatpush2.msra.mxu0 0.0
    %6137 = vmatprep.subr.mxu0 0.0
    %6138 = vmatpush2.msra.mxu0 0.0
    %6139 = vmatprep.subr.mxu0 0.0
    %6140 = vmatpush2.msra.mxu0 0.0
    %6141 = vmatprep.subr.mxu0 0.0
    %6142 = vmatpush2.msra.mxu0 0.0
    %6143 = vmatprep.subr.mxu0 0.0
    %6144 = vmatpush2.msra.mxu0 0.0
    %6145 = vmatprep.subr.mxu0 0.0
    %6146 = vmatpush2.msra.mxu0 0.0
    %6147 = vmatprep.subr.mxu0 0.0
    %6148 = vmatpush2.msra.mxu0 0.0
    %6149 = vmatprep.subr.mxu0 0.0
    %6150 = vmatpush2.msra.mxu0 0.0
    %6151 = vmatprep.subr.mxu0 0.0
    %6152 = vmatpush2.msra.mxu0 0.0
    %6153 = vmatprep.subr.mxu0 0.0
    %6154 = vmatpush2.msra.mxu0 0.0
    %6155 = vmatprep.subr.mxu0 0.0
    %6156 = vmatpush2.msra.mxu0 0.0
    %6157 = vmatprep.subr.mxu0 0.0
    %6158 = vmatpush2.msra.mxu0 0.0
    %6159 = vmatprep.subr.mxu0 0.0
    %6160 = vmatpush2.msra.mxu0 0.0
    %6161 = vmatprep.subr.mxu0 0.0
    %6162 = vmatpush2.msra.mxu0 0.0
    %6163 = vmatprep.subr.mxu0 0.0
    %6164 = vmatpush2.msra.mxu0 0.0
    %6165 = vmatprep.mubr.f32.mxu0 0.0
    %6166 = vmatmul.mubr.f32.gmra.mxu0 %v5399
    %v6167 = vpop.f32.mrf.mxu0
    %v6168 = vadd.f32 %v6098, %v6167
    %v6169 = vpop.f32.mrf.mxu0
    %6170 = vdwg.mxu0
    %v6171 = vmax.f32 %v6168, 0.0
    %v6172 = vld [vmem:[%s12] sm:$0xff]
    %v6173 = vld [vmem:[%s12 + $0x8] sm:$0xff]
    %v6174 = vld [vmem:[%s12 + $0x10] sm:$0xff]
    %v6175 = vld [vmem:[%s12 + $0x18] sm:$0xff]
    %v6176 = vld [vmem:[%s13] sm:$0x1]
    %v6178 = vlaneseq
    %v6179 = vshrl.u32 %v6178, 7
    %v6180 = vsub.s32 0, %v6179
    %v6181 = vrot.slane %v6176, %v6180
    %v6184 = vsel %vm910, %v6171, 0
    %6186 = vmatprep.subr.mxu0 0.0
    %6187 = vmatpush1.msra.mxu0 0.0
    %6188 = vmatprep.subr.mxu0 0.0
    %6189 = vmatpush1.msra.mxu0 0.0
    %6190 = vmatprep.subr.mxu0 0.0
    %6191 = vmatpush1.msra.mxu0 0.0
    %6192 = vmatprep.subr.mxu0 0.0
    %6193 = vmatpush1.msra.mxu0 0.0
    %6194 = vmatprep.subr.mxu0 0.0
    %6195 = vmatpush1.msra.mxu0 0.0
    %6196 = vmatprep.subr.mxu0 0.0
    %6197 = vmatpush1.msra.mxu0 0.0
    %6198 = vmatprep.subr.mxu0 0.0
    %6199 = vmatpush1.msra.mxu0 0.0
    %6200 = vmatprep.subr.mxu0 0.0
    %6201 = vmatpush1.msra.mxu0 0.0
    %6202 = vmatprep.subr.mxu0 0.0
    %6203 = vmatpush1.msra.mxu0 0.0
    %6204 = vmatprep.subr.mxu0 0.0
    %6205 = vmatpush1.msra.mxu0 0.0
    %6206 = vmatprep.subr.mxu0 0.0
    %6207 = vmatpush1.msra.mxu0 0.0
    %6208 = vmatprep.subr.mxu0 0.0
    %6209 = vmatpush1.msra.mxu0 0.0
    %6210 = vmatprep.subr.mxu0 0.0
    %6211 = vmatpush1.msra.mxu0 %v6175
    %6212 = vmatprep.subr.mxu0 0.0
    %6213 = vmatpush1.msra.mxu0 %v6174
    %6214 = vmatprep.subr.mxu0 0.0
    %6215 = vmatpush1.msra.mxu0 %v6173
    %6216 = vmatprep.subr.mxu0 0.0
    %6217 = vmatpush1.msra.mxu0 %v6172
    %6218 = vmatprep.subr.mxu0 0.0
    %6219 = vmatpush2.msra.mxu0 0.0
    %6220 = vmatprep.subr.mxu0 0.0
    %6221 = vmatpush2.msra.mxu0 0.0
    %6222 = vmatprep.subr.mxu0 0.0
    %6223 = vmatpush2.msra.mxu0 0.0
    %6224 = vmatprep.subr.mxu0 0.0
    %6225 = vmatpush2.msra.mxu0 0.0
    %6226 = vmatprep.subr.mxu0 0.0
    %6227 = vmatpush2.msra.mxu0 0.0
    %6228 = vmatprep.subr.mxu0 0.0
    %6229 = vmatpush2.msra.mxu0 0.0
    %6230 = vmatprep.subr.mxu0 0.0
    %6231 = vmatpush2.msra.mxu0 0.0
    %6232 = vmatprep.subr.mxu0 0.0
    %6233 = vmatpush2.msra.mxu0 0.0
    %6234 = vmatprep.subr.mxu0 0.0
    %6235 = vmatpush2.msra.mxu0 0.0
    %6236 = vmatprep.subr.mxu0 0.0
    %6237 = vmatpush2.msra.mxu0 0.0
    %6238 = vmatprep.subr.mxu0 0.0
    %6239 = vmatpush2.msra.mxu0 0.0
    %6240 = vmatprep.subr.mxu0 0.0
    %6241 = vmatpush2.msra.mxu0 0.0
    %6242 = vmatprep.subr.mxu0 0.0
    %6243 = vmatpush2.msra.mxu0 0.0
    %6244 = vmatprep.subr.mxu0 0.0
    %6245 = vmatpush2.msra.mxu0 0.0
    %6246 = vmatprep.subr.mxu0 0.0
    %6247 = vmatpush2.msra.mxu0 0.0
    %6248 = vmatprep.subr.mxu0 0.0
    %6249 = vmatpush2.msra.mxu0 0.0
    %6250 = vmatprep.mubr.f32.mxu0 0.0
    %6251 = vmatmul.mubr.f32.gmra.mxu0 %v6184
    %v6252 = vpop.f32.mrf.mxu0
    %v6253 = vadd.f32 %v6181, %v6252
    %v6254 = vpop.f32.mrf.mxu0
    %6255 = vdwg.mxu0
    %vm6256 = vcmask 25600
    %6257 = vst.msk [vmem:[#allocation12] sm:$0x3] %vm6256, %v6253
    // Predicated region
    $region58: #{cnn_model_forward.1} parent=1 // pred_check
      _
    $region59: #{cnn_model_forward.1} parent=1 // pred_check_branch
      %6259 = sbr.rel (0) target = $region61
    $region60: #{cnn_model_forward.1} parent=1 // pred_region
      %s6261 = ssub.s32 32, 32
      %6262 = vsyncadd [#allocation13], %s6261
      %s6264 = sshll.u32 [#allocation12], 4
      %s6265 = int_to_ptr.vmem [resolvable:$true] %s6264
      %6267 = dma.vmem_to_hbm [thread:$0]  %s6265, 32, %s14, [#allocation13]
    $region61: #{cnn_model_forward.1} parent=1 // pred_fallthru
      _
    // Predicated region
    $region62: #{cnn_model_forward.1} parent=1 // pred_check
      _
    $region63: #{cnn_model_forward.1} parent=1 // pred_check_branch
      %6269 = sbr.rel (0) target = $region65
    $region64: #{cnn_model_forward.1} parent=1 // pred_region
      %6270 = dma.done [#allocation13], 32
    $region65: #{cnn_model_forward.1} parent=1 // pred_fallthru
      _
    %6271 = vsyncpa [#allocation13], 1

</llo_original>
